<compile_context>
chip_gen: v7x
topology: tpu7x:2x2x1
jax: 0.10.0
libtpu: 0.0.40
codegen_flags: <defaults>
</compile_context>

<pallas_src>
import functools

import jax
import jax.numpy as jnp
from jax.experimental import pallas as pl
from jax.experimental.pallas import tpu as pltpu


# ----------------------------- Pallas kernels ------------------------------ #

def _dense_relu_kernel(x_ref, w_ref, b_ref, o_ref, *, relu):
    """conv1_1 as one MXU dot: (rows, K) @ (K, Cout) + bias (+ReLU).

    x_ref: (1, th, Wp, K)  bf16; K = 64 (two 27-elem RGB patches, zero padded).
    w_ref: (K, Cout) bf16.  b_ref: (1, Cout) f32.  o_ref: (1, th, Wp, Cout).
    """
    _, th, wp, cin = x_ref.shape
    cout = o_ref.shape[-1]
    lhs = x_ref[0].reshape(th * wp, cin)                       # layout-clean (Wp % 8 == 0)
    acc = jnp.dot(lhs, w_ref[...], preferred_element_type=jnp.float32)
    acc += b_ref[...]
    if relu:
        acc = jnp.maximum(acc, 0.0)
    o_ref[0] = acc.reshape(th, wp, cout).astype(o_ref.dtype)


def _conv3x3_kernel(x_ref, w_ref, b_ref, o_ref, xp_ref, *,
                    H, Wp, Cin, Cout, relu, pool, tc):
    """3x3 conv with kx folded into K: 3 bf16 dots (K = 3*Cin) per row chunk.

    x_ref : (1, H, Wp, Cin)   bf16 image (one batch element per grid step).
    w_ref : (3, 3*Cin, Cout)  bf16 K-folded weights.
    b_ref : (1, Cout)         f32 bias.
    o_ref : (1, Ho, Wp, Co)   Ho = H//2, Co = Cout//2 if pool else (H, Cout).
    xp_ref: (H+2, Wp+2, Cin)  bf16 VMEM scratch: zero-padded image (halo built in-kernel,
                              no HBM pad/stack passes in the wrapper).
    """
    xp_ref[...] = jnp.zeros_like(xp_ref)
    xp_ref[1:H + 1, 1:Wp + 1, :] = x_ref[0]

    bias = b_ref[...]
    for ci in range(H // tc):                        # static row chunks bound transient VMEM
        r0 = ci * tc
        acc = jnp.zeros((tc * Wp, Cout), jnp.float32)
        for ky in range(3):                          # 3 dots / chunk (not 9), adjacent chain
            lhs = jnp.concatenate(
                [xp_ref[r0 + ky:r0 + ky + tc, kx:kx + Wp, :] for kx in range(3)],
                axis=-1).reshape(tc * Wp, 3 * Cin)
            acc += jnp.dot(lhs, w_ref[ky], preferred_element_type=jnp.float32)
        acc += bias
        if relu:
            acc = jnp.maximum(acc, 0.0)
        y = acc.reshape(tc, Wp, Cout)
        if pool:
            # Fused 2x2 maxpool: H = adjacent-row max, W = packed channel-half max
            # (channels [0:64] = even column, [64:128] = odd column; both real data).
            y = y.reshape(tc // 2, 2, Wp, Cout)
            y = jnp.maximum(y[:, 0], y[:, 1])
            c = Cout // 2
            y = jnp.maximum(y[..., :c], y[..., c:])
            o_ref[0, r0 // 2:r0 // 2 + tc // 2] = y.astype(o_ref.dtype)
        else:
            o_ref[0, r0:r0 + tc] = y.astype(o_ref.dtype)


def _mse_kernel(a_ref, b_ref, o_ref, acc_ref, *, inv_n):
    """Tiled mean-squared-error reduction into a (1,1) SMEM scalar (f32 accumulate)."""
    @pl.when(pl.program_id(0) == 0)
    def _init():
        acc_ref[0] = jnp.float32(0.0)

    d = a_ref[...].astype(jnp.float32) - b_ref[...].astype(jnp.float32)
    acc_ref[0] += jnp.sum(d * d)
    o_ref[0, 0] = acc_ref[0] * inv_n                 # final step holds the mean


# ------------------------------ layer wrappers ----------------------------- #

def _chunk_rows(h, wp, *, even, target=2048):
    """Largest divisor of h (even if required) with rows * wp <= target."""
    step = 2 if even else 1
    cap = max(step, target // max(wp, 1))
    best = None
    for t in range(step, h + 1, step):
        if h % t == 0 and t <= cap:
            best = t
    return best if best is not None else h


def conv1_1(x, w, b, *, rows_target=4096):
    """Layer 1 (patch-folded): x (B, H, Wp, 64) bf16, w (64, 128), b (1, 128)."""
    B, H, Wp, Cin = x.shape
    Cout = w.shape[1]
    assert Wp % 8 == 0
    th = _chunk_rows(H, Wp, even=False, target=rows_target)
    nblk = H // th

    flops = 2 * B * H * Wp * Cin * Cout
    bytes_accessed = int(x.size * 2 + w.size * 2 + b.size * 4 + B * H * Wp * Cout * 2)
    return pl.pallas_call(
        functools.partial(_dense_relu_kernel, relu=True),
        out_shape=jax.ShapeDtypeStruct((B, H, Wp, Cout), jnp.bfloat16),
        grid=(B, nblk),
        in_specs=[pl.BlockSpec((1, th, Wp, Cin), lambda n, i: (n, i, 0, 0)),
                  pl.BlockSpec((Cin, Cout), lambda n, i: (0, 0)),
                  pl.BlockSpec((1, Cout), lambda n, i: (0, 0))],
        out_specs=pl.BlockSpec((1, th, Wp, Cout), lambda n, i: (n, i, 0, 0)),
        compiler_params=pltpu.CompilerParams(
            dimension_semantics=("parallel", "parallel"),
            vmem_limit_bytes=32 * 1024 * 1024),
        cost_estimate=pl.CostEstimate(flops=flops, transcendentals=0,
                                      bytes_accessed=bytes_accessed),
    )(x, w, b)


def conv3x3(x, wk, b, *, relu, pool, out_dtype=jnp.bfloat16, rows_target=2048):
    """3x3 conv (stride 1, pad 1) with K-folded weights; optional fused 2x2 maxpool.

    x : (B, H, Wp, Cin) bf16. wk: (3, 3*Cin, Cout) bf16. b: (1, Cout) f32.
    Output: (B, H//2, Wp, Cout//2) if pool (packed W-pair channels collapsed)
            else (B, H, Wp, Cout).
    """
    B, H, Wp, Cin = x.shape
    _, K3, Cout = wk.shape
    assert K3 == 3 * Cin and Wp % 8 == 0
    if pool:
        assert H % 2 == 0 and Cout % 2 == 0
        Ho, Co = H // 2, Cout // 2
    else:
        Ho, Co = H, Cout
    tc = _chunk_rows(H, Wp, even=pool, target=rows_target)

    flops = 2 * 9 * B * H * Wp * Cin * Cout
    bytes_accessed = int(x.size * 2 + wk.size * 2 + b.size * 4
                         + B * Ho * Wp * Co * jnp.dtype(out_dtype).itemsize)
    kernel = functools.partial(_conv3x3_kernel, H=H, Wp=Wp, Cin=Cin, Cout=Cout,
                               relu=relu, pool=pool, tc=tc)
    return pl.pallas_call(
        kernel,
        out_shape=jax.ShapeDtypeStruct((B, Ho, Wp, Co), out_dtype),
        grid=(B,),
        in_specs=[pl.BlockSpec((1, H, Wp, Cin), lambda n: (n, 0, 0, 0)),
                  pl.BlockSpec((3, 3 * Cin, Cout), lambda n: (0, 0, 0)),
                  pl.BlockSpec((1, Cout), lambda n: (0, 0))],
        out_specs=pl.BlockSpec((1, Ho, Wp, Co), lambda n: (n, 0, 0, 0)),
        scratch_shapes=[pltpu.VMEM((H + 2, Wp + 2, Cin), jnp.bfloat16)],
        compiler_params=pltpu.CompilerParams(
            dimension_semantics=("parallel",),
            vmem_limit_bytes=32 * 1024 * 1024),
        cost_estimate=pl.CostEstimate(flops=flops, transcendentals=0,
                                      bytes_accessed=bytes_accessed),
    )(x, wk, b)


def _mse_tile(m, c, itemsize, budget=8 * 1024 * 1024):
    """Largest multiple-of-8 divisor of m whose block (2 inputs x 2 buffers) fits budget."""
    cap = max(8, budget // (4 * c * itemsize))
    best = None
    for t in range(8, min(m, cap) + 1, 8):
        if m % t == 0:
            best = t
    return best if best is not None else m


def mse(a, b):
    assert a.shape == b.shape
    a2 = a.reshape(-1, a.shape[-1])
    b2 = b.reshape(-1, b.shape[-1])
    M, C = a2.shape
    tm = _mse_tile(M, C, a2.dtype.itemsize)
    inv_n = 1.0 / float(M * C)
    out = pl.pallas_call(
        functools.partial(_mse_kernel, inv_n=inv_n),
        out_shape=jax.ShapeDtypeStruct((1, 1), jnp.float32),
        grid=(M // tm,),
        in_specs=[pl.BlockSpec((tm, C), lambda i: (i, 0)),
                  pl.BlockSpec((tm, C), lambda i: (i, 0))],
        out_specs=pl.BlockSpec(memory_space=pltpu.MemorySpace.SMEM),
        scratch_shapes=[pltpu.SMEM((1,), jnp.float32)],
        compiler_params=pltpu.CompilerParams(
            dimension_semantics=("arbitrary",),
            vmem_limit_bytes=32 * 1024 * 1024),
        cost_estimate=pl.CostEstimate(
            flops=3 * M * C, transcendentals=0,
            bytes_accessed=int(2 * M * C * a2.dtype.itemsize + 4)),
    )(a2, b2)
    return out[0, 0]


# ------------------------- weights & wrapper plumbing ----------------------- #

_VGG22_SHAPES = [(3, 3, 3, 64), (3, 3, 64, 64), (3, 3, 64, 128), (3, 3, 128, 128)]


def init_vgg22_params(key):
    # TODO(synk): synthetic He-init stand-ins; the reference loads pretrained vgg19.pth.
    params = []
    for i, s in enumerate(_VGG22_SHAPES):
        kw, kb = jax.random.split(jax.random.fold_in(key, i))
        fan_in = s[0] * s[1] * s[2]
        w = jax.random.normal(kw, s, dtype=jnp.float32) * (2.0 / fan_in) ** 0.5
        b = jax.random.normal(kb, (s[-1],), dtype=jnp.float32) * 0.01
        params.append((w, b))
    return params


def prepare_vgg22_params(params):
    """Re-pack raw HWIO weights for the W-pair-packed, K-folded kernels.

    Packed channel convention for layers 1-2: block [0:64] = column 2j, [64:128] = 2j+1.
    """
    (w1, b1), (w2, b2), (w3, b3), (w4, b4) = params

    # conv1_1: (27, 64) patch weight placed twice for the even/odd output columns.
    w1f = w1.reshape(27, 64)
    wc1 = jnp.zeros((64, 128), jnp.float32)
    wc1 = wc1.at[0:27, 0:64].set(w1f).at[27:54, 64:128].set(w1f)
    bc1 = jnp.concatenate([b1, b1])

    # conv1_2 on the W-pair-packed representation: (3, pk, 128, 128) structured weight.
    wp2 = jnp.zeros((3, 3, 128, 128), jnp.float32)
    wp2 = wp2.at[:, 0, 64:128, 0:64].set(w2[:, 0])     # col 2j-1 -> even output
    wp2 = wp2.at[:, 1, 0:64, 0:64].set(w2[:, 1])       # col 2j   -> even output
    wp2 = wp2.at[:, 1, 64:128, 0:64].set(w2[:, 2])     # col 2j+1 -> even output
    wp2 = wp2.at[:, 1, 0:64, 64:128].set(w2[:, 0])     # col 2j   -> odd output
    wp2 = wp2.at[:, 1, 64:128, 64:128].set(w2[:, 1])   # col 2j+1 -> odd output
    wp2 = wp2.at[:, 2, 0:64, 64:128].set(w2[:, 2])     # col 2j+2 -> odd output
    wk2 = wp2.reshape(3, 3 * 128, 128)                 # fold kx into K
    bc2 = jnp.concatenate([b2, b2])

    wk3 = w3.reshape(3, 3 * 64, 128)                   # plain K-fold, Cin = 64
    wk4 = w4.reshape(3, 3 * 128, 128)                  # plain K-fold, Cin = 128

    return dict(
        wc1=wc1.astype(jnp.bfloat16), bc1=bc1.reshape(1, -1).astype(jnp.float32),
        wk2=wk2.astype(jnp.bfloat16), bc2=bc2.reshape(1, -1).astype(jnp.float32),
        wk3=wk3.astype(jnp.bfloat16), b3=b3.reshape(1, -1).astype(jnp.float32),
        wk4=wk4.astype(jnp.bfloat16), b4=b4.reshape(1, -1).astype(jnp.float32))


def _im2col_pack_rgb(x):
    """(B, H, W, 3) -> (B, H, W/2, 64) bf16: W-pair-packed 3x3 RGB patches.

    Channels: [0:27] = patch at even column 2j (ky,kx,c order), [27:54] = odd column,
    [54:64] = zero pad. Input is only 3 channels, so this wrapper-side slab is tiny.
    """
    B, H, W, _ = x.shape
    xp = jnp.pad(x, ((0, 0), (1, 1), (1, 1), (0, 0)))
    patches = jnp.concatenate(
        [xp[:, ky:ky + H, kx:kx + W, :] for ky in range(3) for kx in range(3)],
        axis=-1)                                        # (B, H, W, 27)
    packed = patches.reshape(B, H, W // 2, 54)
    packed = jnp.pad(packed, ((0, 0), (0, 0), (0, 0), (0, 10)))
    return packed.astype(jnp.bfloat16)


# --------------------------- VGG('22') forward pass ------------------------ #

def vgg22_features(x_nchw, params):
    """vgg19.features[:8] (ends at conv2_2, pre-ReLU). Returns (B, H/2, W/2, 128) bf16."""
    x = jnp.transpose(x_nchw, (0, 2, 3, 1))             # NCHW -> NHWC
    _, H, W, _ = x.shape
    assert H % 2 == 0 and W % 16 == 0

    x1 = _im2col_pack_rgb(x)                                                 # (B,H,W/2,64)
    h = conv1_1(x1, params["wc1"], params["bc1"])                            # conv1_1+ReLU
    h = conv3x3(h, params["wk2"], params["bc2"], relu=True, pool=True)       # conv1_2+ReLU+pool
    h = conv3x3(h, params["wk3"], params["b3"], relu=True, pool=False)       # conv2_1+ReLU
    h = conv3x3(h, params["wk4"], params["b4"], relu=False, pool=False)      # conv2_2 (pre-ReLU)
    return h                                                                  # (B,H/2,W/2,128)


def vgg_loss(sr_nchw, hr_nchw, params):
    n = sr_nchw.shape[0]
    # Batch sr + (detached) hr through the stack in a single pass.
    x = jnp.concatenate([sr_nchw, jax.lax.stop_gradient(hr_nchw)], axis=0)
    f = vgg22_features(x, params)
    return mse(f[:n], f[n:])                             # == F.mse_loss (mean)


# ----------------------------------- main ---------------------------------- #

if __name__ == "__main__":
    key = jax.random.PRNGKey(0)
    k_sr, k_hr, k_p = jax.random.split(key, 3)
    # PyTorch-convention NCHW inputs (batch=2, 3 RGB channels, 16x16 spatial)
    sr = jax.random.uniform(k_sr, (2, 3, 16, 16), dtype=jnp.float32)
    hr = jax.random.uniform(k_hr, (2, 3, 16, 16), dtype=jnp.float32)
    params = prepare_vgg22_params(init_vgg22_params(k_p))

    loss_fn = jax.jit(lambda a, b: vgg_loss(a, b, params))
    loss = jax.block_until_ready(loss_fn(sr, hr))
    assert loss.shape == () and bool(jnp.isfinite(loss))
    print("KERNEL_OK")
</pallas_src>

<mosaic_0001>
module attributes {stable_mosaic.version = 11 : i64} {
  func.func @_dense_relu_kernel(%arg0: i32, %arg1: i32, %arg2: memref<1x16x8x64xbf16, #tpu.memory_space<vmem>>, %arg3: memref<64x128xbf16, #tpu.memory_space<vmem>>, %arg4: memref<1x128xf32, #tpu.memory_space<vmem>>, %arg5: memref<1x16x8x128xbf16, #tpu.memory_space<vmem>>) attributes {dimension_semantics = [#tpu.dimension_semantics<parallel>, #tpu.dimension_semantics<parallel>], iteration_bounds = array<i64: 4, 1>, scalar_prefetch = 0 : i64, scratch_operands = 0 : i64, tpu.core_type = #tpu.core_type<tc>, window_params = [{transform_indices = @transform_0, window_bounds = array<i64: 1, 16, 8, 64>}, {pipeline_mode = #tpu.pipeline_mode<synchronous>, transform_indices = @transform_1, window_bounds = array<i64: 64, 128>}, {pipeline_mode = #tpu.pipeline_mode<synchronous>, transform_indices = @transform_2, window_bounds = array<i64: 1, 128>}, {transform_indices = @transform_3, window_bounds = array<i64: 1, 16, 8, 128>}]} {
    %c0 = arith.constant 0 : index
    %c0_0 = arith.constant 0 : index
    %c0_1 = arith.constant 0 : index
    %c0_2 = arith.constant 0 : index
    %0 = vector.load %arg2[%c0, %c0_0, %c0_1, %c0_2] : memref<1x16x8x64xbf16, #tpu.memory_space<vmem>>, vector<1x16x8x64xbf16>
    %1 = vector.shape_cast %0 : vector<1x16x8x64xbf16> to vector<16x8x64xbf16>
    %2 = vector.shape_cast %1 : vector<16x8x64xbf16> to vector<128x64xbf16>
    %c0_3 = arith.constant 0 : index
    %c0_4 = arith.constant 0 : index
    %3 = vector.load %arg3[%c0_3, %c0_4] : memref<64x128xbf16, #tpu.memory_space<vmem>>, vector<64x128xbf16>
    %cst = arith.constant dense<0.000000e+00> : vector<128x128xf32>
    %4 = tpu.matmul %2, %3, %cst {dimension_numbers = #tpu.dot_dimension_numbers<[1], [0], [0], [1], [0, 0, 1, 1], [], []>} : vector<128x64xbf16>, vector<64x128xbf16>, vector<128x128xf32> -> vector<128x128xf32>
    %c0_5 = arith.constant 0 : index
    %c0_6 = arith.constant 0 : index
    %5 = vector.load %arg4[%c0_5, %c0_6] : memref<1x128xf32, #tpu.memory_space<vmem>>, vector<1x128xf32>
    %6 = vector.broadcast %5 : vector<1x128xf32> to vector<128x128xf32>
    %7 = arith.addf %4, %6 : vector<128x128xf32>
    %cst_7 = arith.constant 0.000000e+00 : f32
    %8 = vector.broadcast %cst_7 : f32 to vector<128x128xf32>
    %9 = arith.maximumf %7, %8 : vector<128x128xf32>
    %10 = vector.shape_cast %9 : vector<128x128xf32> to vector<16x8x128xf32>
    %11 = arith.truncf %10 : vector<16x8x128xf32> to vector<16x8x128xbf16>
    %c0_8 = arith.constant 0 : index
    %c0_9 = arith.constant 0 : index
    %c0_10 = arith.constant 0 : index
    %c0_11 = arith.constant 0 : index
    %12 = vector.load %arg5[%c0_8, %c0_9, %c0_10, %c0_11] : memref<1x16x8x128xbf16, #tpu.memory_space<vmem>>, vector<1x16x8x128xbf16>
    %13 = vector.shape_cast %12 : vector<1x16x8x128xbf16> to vector<16x8x128xbf16>
    %14 = vector.shape_cast %11 : vector<16x8x128xbf16> to vector<1x16x8x128xbf16>
    tpu.vector_store %arg5[%c0_8, %c0_9, %c0_10, %c0_11], %14 {strides = array<i32>} : memref<1x16x8x128xbf16, #tpu.memory_space<vmem>>, vector<1x16x8x128xbf16>,
    return
  }
  func.func @transform_0(%arg0: i32, %arg1: i32) -> (i32, i32, i32, i32) {
    %c0_i32 = arith.constant 0 : i32
    %c0_i32_0 = arith.constant 0 : i32
    %c0_i32_1 = arith.constant 0 : i32
    return %arg0, %arg1, %c0_i32, %c0_i32_0 : i32, i32, i32, i32
  }
  func.func @transform_1(%arg0: i32, %arg1: i32) -> (i32, i32) {
    %c0_i32 = arith.constant 0 : i32
    %c0_i32_0 = arith.constant 0 : i32
    %c0_i32_1 = arith.constant 0 : i32
    return %c0_i32, %c0_i32_0 : i32, i32
  }
  func.func @transform_2(%arg0: i32, %arg1: i32) -> (i32, i32) {
    %c0_i32 = arith.constant 0 : i32
    %c0_i32_0 = arith.constant 0 : i32
    %c0_i32_1 = arith.constant 0 : i32
    return %c0_i32, %c0_i32_0 : i32, i32
  }
  func.func @transform_3(%arg0: i32, %arg1: i32) -> (i32, i32, i32, i32) {
    %c0_i32 = arith.constant 0 : i32
    %c0_i32_0 = arith.constant 0 : i32
    %c0_i32_1 = arith.constant 0 : i32
    return %arg0, %arg1, %c0_i32, %c0_i32_0 : i32, i32, i32, i32
  }
}

module attributes {stable_mosaic.version = 11 : i64} {
  func.func @_conv3x3_kernel(%arg0: i32, %arg1: memref<1x16x8x128xbf16, #tpu.memory_space<vmem>>, %arg2: memref<3x384x128xbf16, #tpu.memory_space<vmem>>, %arg3: memref<1x128xf32, #tpu.memory_space<vmem>>, %arg4: memref<1x8x8x64xbf16, #tpu.memory_space<vmem>>, %arg5: memref<18x10x128xbf16, #tpu.memory_space<vmem>>) attributes {dimension_semantics = [#tpu.dimension_semantics<parallel>], iteration_bounds = array<i64: 4>, scalar_prefetch = 0 : i64, scratch_operands = 1 : i64, tpu.core_type = #tpu.core_type<tc>, window_params = [{transform_indices = @transform_0, window_bounds = array<i64: 1, 16, 8, 128>}, {pipeline_mode = #tpu.pipeline_mode<synchronous>, transform_indices = @transform_1, window_bounds = array<i64: 3, 384, 128>}, {pipeline_mode = #tpu.pipeline_mode<synchronous>, transform_indices = @transform_2, window_bounds = array<i64: 1, 128>}, {transform_indices = @transform_3, window_bounds = array<i64: 1, 8, 8, 64>}]} {
    %cst = arith.constant 0.000000e+00 : bf16
    %0 = vector.broadcast %cst : bf16 to vector<18x10x128xbf16>
    %c0 = arith.constant 0 : index
    %c0_0 = arith.constant 0 : index
    %c0_1 = arith.constant 0 : index
    %1 = vector.load %arg5[%c0, %c0_0, %c0_1] : memref<18x10x128xbf16, #tpu.memory_space<vmem>>, vector<18x10x128xbf16>
    tpu.vector_store %arg5[%c0, %c0_0, %c0_1], %0 {strides = array<i32>} : memref<18x10x128xbf16, #tpu.memory_space<vmem>>, vector<18x10x128xbf16>,
    %c0_2 = arith.constant 0 : index
    %c0_3 = arith.constant 0 : index
    %c0_4 = arith.constant 0 : index
    %c0_5 = arith.constant 0 : index
    %2 = vector.load %arg1[%c0_2, %c0_3, %c0_4, %c0_5] : memref<1x16x8x128xbf16, #tpu.memory_space<vmem>>, vector<1x16x8x128xbf16>
    %3 = vector.shape_cast %2 : vector<1x16x8x128xbf16> to vector<16x8x128xbf16>
    %c1 = arith.constant 1 : index
    %c1_6 = arith.constant 1 : index
    %c0_7 = arith.constant 0 : index
    %4 = vector.load %arg5[%c1, %c1_6, %c0_7] : memref<18x10x128xbf16, #tpu.memory_space<vmem>>, vector<16x8x128xbf16>
    tpu.vector_store %arg5[%c1, %c1_6, %c0_7], %3 {strides = array<i32>} : memref<18x10x128xbf16, #tpu.memory_space<vmem>>, vector<16x8x128xbf16>,
    %c0_8 = arith.constant 0 : index
    %c0_9 = arith.constant 0 : index
    %5 = vector.load %arg3[%c0_8, %c0_9] : memref<1x128xf32, #tpu.memory_space<vmem>>, vector<1x128xf32>
    %cst_10 = arith.constant 0.000000e+00 : f32
    %6 = vector.broadcast %cst_10 : f32 to vector<128x128xf32>
    %c0_11 = arith.constant 0 : index
    %c0_12 = arith.constant 0 : index
    %c0_13 = arith.constant 0 : index
    %7 = vector.load %arg5[%c0_11, %c0_12, %c0_13] : memref<18x10x128xbf16, #tpu.memory_space<vmem>>, vector<16x8x128xbf16>
    %c0_14 = arith.constant 0 : index
    %c1_15 = arith.constant 1 : index
    %c0_16 = arith.constant 0 : index
    %8 = vector.load %arg5[%c0_14, %c1_15, %c0_16] : memref<18x10x128xbf16, #tpu.memory_space<vmem>>, vector<16x8x128xbf16>
    %c0_17 = arith.constant 0 : index
    %c2 = arith.constant 2 : index
    %c0_18 = arith.constant 0 : index
    %9 = vector.load %arg5[%c0_17, %c2, %c0_18] : memref<18x10x128xbf16, #tpu.memory_space<vmem>>, vector<16x8x128xbf16>
    %10 = tpu.concatenate %7, %8, %9 in 2 : vector<16x8x128xbf16>, vector<16x8x128xbf16>, vector<16x8x128xbf16> -> vector<16x8x384xbf16>
    %11 = vector.shape_cast %10 : vector<16x8x384xbf16> to vector<128x384xbf16>
    %c0_19 = arith.constant 0 : index
    %c0_20 = arith.constant 0 : index
    %c0_21 = arith.constant 0 : index
    %12 = vector.load %arg2[%c0_19, %c0_20, %c0_21] : memref<3x384x128xbf16, #tpu.memory_space<vmem>>, vector<1x384x128xbf16>
    %13 = vector.shape_cast %12 : vector<1x384x128xbf16> to vector<384x128xbf16>
    %cst_22 = arith.constant dense<0.000000e+00> : vector<128x128xf32>
    %14 = tpu.matmul %11, %13, %cst_22 {dimension_numbers = #tpu.dot_dimension_numbers<[1], [0], [0], [1], [0, 0, 1, 1], [], []>} : vector<128x384xbf16>, vector<384x128xbf16>, vector<128x128xf32> -> vector<128x128xf32>
    %15 = arith.addf %6, %14 : vector<128x128xf32>
    %c1_23 = arith.constant 1 : index
    %c0_24 = arith.constant 0 : index
    %c0_25 = arith.constant 0 : index
    %16 = vector.load %arg5[%c1_23, %c0_24, %c0_25] : memref<18x10x128xbf16, #tpu.memory_space<vmem>>, vector<16x8x128xbf16>
    %c1_26 = arith.constant 1 : index
    %c1_27 = arith.constant 1 : index
    %c0_28 = arith.constant 0 : index
    %17 = vector.load %arg5[%c1_26, %c1_27, %c0_28] : memref<18x10x128xbf16, #tpu.memory_space<vmem>>, vector<16x8x128xbf16>
    %c1_29 = arith.constant 1 : index
    %c2_30 = arith.constant 2 : index
    %c0_31 = arith.constant 0 : index
    %18 = vector.load %arg5[%c1_29, %c2_30, %c0_31] : memref<18x10x128xbf16, #tpu.memory_space<vmem>>, vector<16x8x128xbf16>
    %19 = tpu.concatenate %16, %17, %18 in 2 : vector<16x8x128xbf16>, vector<16x8x128xbf16>, vector<16x8x128xbf16> -> vector<16x8x384xbf16>
    %20 = vector.shape_cast %19 : vector<16x8x384xbf16> to vector<128x384xbf16>
    %c1_32 = arith.constant 1 : index
    %c0_33 = arith.constant 0 : index
    %c0_34 = arith.constant 0 : index
    %21 = vector.load %arg2[%c1_32, %c0_33, %c0_34] : memref<3x384x128xbf16, #tpu.memory_space<vmem>>, vector<1x384x128xbf16>
    %22 = vector.shape_cast %21 : vector<1x384x128xbf16> to vector<384x128xbf16>
    %cst_35 = arith.constant dense<0.000000e+00> : vector<128x128xf32>
    %23 = tpu.matmul %20, %22, %cst_35 {dimension_numbers = #tpu.dot_dimension_numbers<[1], [0], [0], [1], [0, 0, 1, 1], [], []>} : vector<128x384xbf16>, vector<384x128xbf16>, vector<128x128xf32> -> vector<128x128xf32>
    %24 = arith.addf %15, %23 : vector<128x128xf32>
    %c2_36 = arith.constant 2 : index
    %c0_37 = arith.constant 0 : index
    %c0_38 = arith.constant 0 : index
    %25 = vector.load %arg5[%c2_36, %c0_37, %c0_38] : memref<18x10x128xbf16, #tpu.memory_space<vmem>>, vector<16x8x128xbf16>
    %c2_39 = arith.constant 2 : index
    %c1_40 = arith.constant 1 : index
    %c0_41 = arith.constant 0 : index
    %26 = vector.load %arg5[%c2_39, %c1_40, %c0_41] : memref<18x10x128xbf16, #tpu.memory_space<vmem>>, vector<16x8x128xbf16>
    %c2_42 = arith.constant 2 : index
    %c2_43 = arith.constant 2 : index
    %c0_44 = arith.constant 0 : index
    %27 = vector.load %arg5[%c2_42, %c2_43, %c0_44] : memref<18x10x128xbf16, #tpu.memory_space<vmem>>, vector<16x8x128xbf16>
    %28 = tpu.concatenate %25, %26, %27 in 2 : vector<16x8x128xbf16>, vector<16x8x128xbf16>, vector<16x8x128xbf16> -> vector<16x8x384xbf16>
    %29 = vector.shape_cast %28 : vector<16x8x384xbf16> to vector<128x384xbf16>
    %c2_45 = arith.constant 2 : index
    %c0_46 = arith.constant 0 : index
    %c0_47 = arith.constant 0 : index
    %30 = vector.load %arg2[%c2_45, %c0_46, %c0_47] : memref<3x384x128xbf16, #tpu.memory_space<vmem>>, vector<1x384x128xbf16>
    %31 = vector.shape_cast %30 : vector<1x384x128xbf16> to vector<384x128xbf16>
    %cst_48 = arith.constant dense<0.000000e+00> : vector<128x128xf32>
    %32 = tpu.matmul %29, %31, %cst_48 {dimension_numbers = #tpu.dot_dimension_numbers<[1], [0], [0], [1], [0, 0, 1, 1], [], []>} : vector<128x384xbf16>, vector<384x128xbf16>, vector<128x128xf32> -> vector<128x128xf32>
    %33 = arith.addf %24, %32 : vector<128x128xf32>
    %34 = vector.broadcast %5 : vector<1x128xf32> to vector<128x128xf32>
    %35 = arith.addf %33, %34 : vector<128x128xf32>
    %cst_49 = arith.constant 0.000000e+00 : f32
    %36 = vector.broadcast %cst_49 : f32 to vector<128x128xf32>
    %37 = arith.maximumf %35, %36 : vector<128x128xf32>
    %38 = vector.shape_cast %37 : vector<128x128xf32> to vector<16x8x128xf32>
    %39 = vector.shape_cast %38 : vector<16x8x128xf32> to vector<8x2x8x128xf32>
    %40 = vector.extract_strided_slice %39 {offsets = [0, 0, 0, 0], sizes = [8, 1, 8, 128], strides = [1, 1, 1, 1]} : vector<8x2x8x128xf32> to vector<8x1x8x128xf32>
    %41 = vector.shape_cast %40 : vector<8x1x8x128xf32> to vector<8x8x128xf32>
    %42 = vector.extract_strided_slice %39 {offsets = [0, 1, 0, 0], sizes = [8, 1, 8, 128], strides = [1, 1, 1, 1]} : vector<8x2x8x128xf32> to vector<8x1x8x128xf32>
    %43 = vector.shape_cast %42 : vector<8x1x8x128xf32> to vector<8x8x128xf32>
    %44 = arith.maximumf %41, %43 : vector<8x8x128xf32>
    %45 = vector.extract_strided_slice %44 {offsets = [0, 0, 0], sizes = [8, 8, 64], strides = [1, 1, 1]} : vector<8x8x128xf32> to vector<8x8x64xf32>
    %46 = vector.extract_strided_slice %44 {offsets = [0, 0, 64], sizes = [8, 8, 64], strides = [1, 1, 1]} : vector<8x8x128xf32> to vector<8x8x64xf32>
    %47 = arith.maximumf %45, %46 : vector<8x8x64xf32>
    %48 = arith.truncf %47 : vector<8x8x64xf32> to vector<8x8x64xbf16>
    %c0_50 = arith.constant 0 : index
    %c0_51 = arith.constant 0 : index
    %c0_52 = arith.constant 0 : index
    %c0_53 = arith.constant 0 : index
    %49 = vector.load %arg4[%c0_50, %c0_51, %c0_52, %c0_53] : memref<1x8x8x64xbf16, #tpu.memory_space<vmem>>, vector<1x8x8x64xbf16>
    %50 = vector.shape_cast %49 : vector<1x8x8x64xbf16> to vector<8x8x64xbf16>
    %51 = vector.shape_cast %48 : vector<8x8x64xbf16> to vector<1x8x8x64xbf16>
    tpu.vector_store %arg4[%c0_50, %c0_51, %c0_52, %c0_53], %51 {strides = array<i32>} : memref<1x8x8x64xbf16, #tpu.memory_space<vmem>>, vector<1x8x8x64xbf16>,
    return
  }
  func.func @transform_0(%arg0: i32) -> (i32, i32, i32, i32) {
    %c0_i32 = arith.constant 0 : i32
    %c0_i32_0 = arith.constant 0 : i32
    %c0_i32_1 = arith.constant 0 : i32
    %c0_i32_2 = arith.constant 0 : i32
    return %arg0, %c0_i32, %c0_i32_0, %c0_i32_1 : i32, i32, i32, i32
  }
  func.func @transform_1(%arg0: i32) -> (i32, i32, i32) {
    %c0_i32 = arith.constant 0 : i32
    %c0_i32_0 = arith.constant 0 : i32
    %c0_i32_1 = arith.constant 0 : i32
    %c0_i32_2 = arith.constant 0 : i32
    return %c0_i32, %c0_i32_0, %c0_i32_1 : i32, i32, i32
  }
  func.func @transform_2(%arg0: i32) -> (i32, i32) {
    %c0_i32 = arith.constant 0 : i32
    %c0_i32_0 = arith.constant 0 : i32
    %c0_i32_1 = arith.constant 0 : i32
    return %c0_i32, %c0_i32_0 : i32, i32
  }
  func.func @transform_3(%arg0: i32) -> (i32, i32, i32, i32) {
    %c0_i32 = arith.constant 0 : i32
    %c0_i32_0 = arith.constant 0 : i32
    %c0_i32_1 = arith.constant 0 : i32
    %c0_i32_2 = arith.constant 0 : i32
    return %arg0, %c0_i32, %c0_i32_0, %c0_i32_1 : i32, i32, i32, i32
  }
}

module attributes {stable_mosaic.version = 11 : i64} {
  func.func @_conv3x3_kernel(%arg0: i32, %arg1: memref<1x8x8x64xbf16, #tpu.memory_space<vmem>>, %arg2: memref<3x192x128xbf16, #tpu.memory_space<vmem>>, %arg3: memref<1x128xf32, #tpu.memory_space<vmem>>, %arg4: memref<1x8x8x128xbf16, #tpu.memory_space<vmem>>, %arg5: memref<10x10x64xbf16, #tpu.memory_space<vmem>>) attributes {dimension_semantics = [#tpu.dimension_semantics<parallel>], iteration_bounds = array<i64: 4>, scalar_prefetch = 0 : i64, scratch_operands = 1 : i64, tpu.core_type = #tpu.core_type<tc>, window_params = [{transform_indices = @transform_0, window_bounds = array<i64: 1, 8, 8, 64>}, {pipeline_mode = #tpu.pipeline_mode<synchronous>, transform_indices = @transform_1, window_bounds = array<i64: 3, 192, 128>}, {pipeline_mode = #tpu.pipeline_mode<synchronous>, transform_indices = @transform_2, window_bounds = array<i64: 1, 128>}, {transform_indices = @transform_3, window_bounds = array<i64: 1, 8, 8, 128>}]} {
    %cst = arith.constant 0.000000e+00 : bf16
    %0 = vector.broadcast %cst : bf16 to vector<10x10x64xbf16>
    %c0 = arith.constant 0 : index
    %c0_0 = arith.constant 0 : index
    %c0_1 = arith.constant 0 : index
    %1 = vector.load %arg5[%c0, %c0_0, %c0_1] : memref<10x10x64xbf16, #tpu.memory_space<vmem>>, vector<10x10x64xbf16>
    tpu.vector_store %arg5[%c0, %c0_0, %c0_1], %0 {strides = array<i32>} : memref<10x10x64xbf16, #tpu.memory_space<vmem>>, vector<10x10x64xbf16>,
    %c0_2 = arith.constant 0 : index
    %c0_3 = arith.constant 0 : index
    %c0_4 = arith.constant 0 : index
    %c0_5 = arith.constant 0 : index
    %2 = vector.load %arg1[%c0_2, %c0_3, %c0_4, %c0_5] : memref<1x8x8x64xbf16, #tpu.memory_space<vmem>>, vector<1x8x8x64xbf16>
    %3 = vector.shape_cast %2 : vector<1x8x8x64xbf16> to vector<8x8x64xbf16>
    %c1 = arith.constant 1 : index
    %c1_6 = arith.constant 1 : index
    %c0_7 = arith.constant 0 : index
    %4 = vector.load %arg5[%c1, %c1_6, %c0_7] : memref<10x10x64xbf16, #tpu.memory_space<vmem>>, vector<8x8x64xbf16>
    tpu.vector_store %arg5[%c1, %c1_6, %c0_7], %3 {strides = array<i32>} : memref<10x10x64xbf16, #tpu.memory_space<vmem>>, vector<8x8x64xbf16>,
    %c0_8 = arith.constant 0 : index
    %c0_9 = arith.constant 0 : index
    %5 = vector.load %arg3[%c0_8, %c0_9] : memref<1x128xf32, #tpu.memory_space<vmem>>, vector<1x128xf32>
    %cst_10 = arith.constant 0.000000e+00 : f32
    %6 = vector.broadcast %cst_10 : f32 to vector<64x128xf32>
    %c0_11 = arith.constant 0 : index
    %c0_12 = arith.constant 0 : index
    %c0_13 = arith.constant 0 : index
    %7 = vector.load %arg5[%c0_11, %c0_12, %c0_13] : memref<10x10x64xbf16, #tpu.memory_space<vmem>>, vector<8x8x64xbf16>
    %c0_14 = arith.constant 0 : index
    %c1_15 = arith.constant 1 : index
    %c0_16 = arith.constant 0 : index
    %8 = vector.load %arg5[%c0_14, %c1_15, %c0_16] : memref<10x10x64xbf16, #tpu.memory_space<vmem>>, vector<8x8x64xbf16>
    %c0_17 = arith.constant 0 : index
    %c2 = arith.constant 2 : index
    %c0_18 = arith.constant 0 : index
    %9 = vector.load %arg5[%c0_17, %c2, %c0_18] : memref<10x10x64xbf16, #tpu.memory_space<vmem>>, vector<8x8x64xbf16>
    %10 = tpu.concatenate %7, %8, %9 in 2 : vector<8x8x64xbf16>, vector<8x8x64xbf16>, vector<8x8x64xbf16> -> vector<8x8x192xbf16>
    %11 = vector.shape_cast %10 : vector<8x8x192xbf16> to vector<64x192xbf16>
    %c0_19 = arith.constant 0 : index
    %c0_20 = arith.constant 0 : index
    %c0_21 = arith.constant 0 : index
    %12 = vector.load %arg2[%c0_19, %c0_20, %c0_21] : memref<3x192x128xbf16, #tpu.memory_space<vmem>>, vector<1x192x128xbf16>
    %13 = vector.shape_cast %12 : vector<1x192x128xbf16> to vector<192x128xbf16>
    %cst_22 = arith.constant dense<0.000000e+00> : vector<64x128xf32>
    %14 = tpu.matmul %11, %13, %cst_22 {dimension_numbers = #tpu.dot_dimension_numbers<[1], [0], [0], [1], [0, 0, 1, 1], [], []>} : vector<64x192xbf16>, vector<192x128xbf16>, vector<64x128xf32> -> vector<64x128xf32>
    %15 = arith.addf %6, %14 : vector<64x128xf32>
    %c1_23 = arith.constant 1 : index
    %c0_24 = arith.constant 0 : index
    %c0_25 = arith.constant 0 : index
    %16 = vector.load %arg5[%c1_23, %c0_24, %c0_25] : memref<10x10x64xbf16, #tpu.memory_space<vmem>>, vector<8x8x64xbf16>
    %c1_26 = arith.constant 1 : index
    %c1_27 = arith.constant 1 : index
    %c0_28 = arith.constant 0 : index
    %17 = vector.load %arg5[%c1_26, %c1_27, %c0_28] : memref<10x10x64xbf16, #tpu.memory_space<vmem>>, vector<8x8x64xbf16>
    %c1_29 = arith.constant 1 : index
    %c2_30 = arith.constant 2 : index
    %c0_31 = arith.constant 0 : index
    %18 = vector.load %arg5[%c1_29, %c2_30, %c0_31] : memref<10x10x64xbf16, #tpu.memory_space<vmem>>, vector<8x8x64xbf16>
    %19 = tpu.concatenate %16, %17, %18 in 2 : vector<8x8x64xbf16>, vector<8x8x64xbf16>, vector<8x8x64xbf16> -> vector<8x8x192xbf16>
    %20 = vector.shape_cast %19 : vector<8x8x192xbf16> to vector<64x192xbf16>
    %c1_32 = arith.constant 1 : index
    %c0_33 = arith.constant 0 : index
    %c0_34 = arith.constant 0 : index
    %21 = vector.load %arg2[%c1_32, %c0_33, %c0_34] : memref<3x192x128xbf16, #tpu.memory_space<vmem>>, vector<1x192x128xbf16>
    %22 = vector.shape_cast %21 : vector<1x192x128xbf16> to vector<192x128xbf16>
    %cst_35 = arith.constant dense<0.000000e+00> : vector<64x128xf32>
    %23 = tpu.matmul %20, %22, %cst_35 {dimension_numbers = #tpu.dot_dimension_numbers<[1], [0], [0], [1], [0, 0, 1, 1], [], []>} : vector<64x192xbf16>, vector<192x128xbf16>, vector<64x128xf32> -> vector<64x128xf32>
    %24 = arith.addf %15, %23 : vector<64x128xf32>
    %c2_36 = arith.constant 2 : index
    %c0_37 = arith.constant 0 : index
    %c0_38 = arith.constant 0 : index
    %25 = vector.load %arg5[%c2_36, %c0_37, %c0_38] : memref<10x10x64xbf16, #tpu.memory_space<vmem>>, vector<8x8x64xbf16>
    %c2_39 = arith.constant 2 : index
    %c1_40 = arith.constant 1 : index
    %c0_41 = arith.constant 0 : index
    %26 = vector.load %arg5[%c2_39, %c1_40, %c0_41] : memref<10x10x64xbf16, #tpu.memory_space<vmem>>, vector<8x8x64xbf16>
    %c2_42 = arith.constant 2 : index
    %c2_43 = arith.constant 2 : index
    %c0_44 = arith.constant 0 : index
    %27 = vector.load %arg5[%c2_42, %c2_43, %c0_44] : memref<10x10x64xbf16, #tpu.memory_space<vmem>>, vector<8x8x64xbf16>
    %28 = tpu.concatenate %25, %26, %27 in 2 : vector<8x8x64xbf16>, vector<8x8x64xbf16>, vector<8x8x64xbf16> -> vector<8x8x192xbf16>
    %29 = vector.shape_cast %28 : vector<8x8x192xbf16> to vector<64x192xbf16>
    %c2_45 = arith.constant 2 : index
    %c0_46 = arith.constant 0 : index
    %c0_47 = arith.constant 0 : index
    %30 = vector.load %arg2[%c2_45, %c0_46, %c0_47] : memref<3x192x128xbf16, #tpu.memory_space<vmem>>, vector<1x192x128xbf16>
    %31 = vector.shape_cast %30 : vector<1x192x128xbf16> to vector<192x128xbf16>
    %cst_48 = arith.constant dense<0.000000e+00> : vector<64x128xf32>
    %32 = tpu.matmul %29, %31, %cst_48 {dimension_numbers = #tpu.dot_dimension_numbers<[1], [0], [0], [1], [0, 0, 1, 1], [], []>} : vector<64x192xbf16>, vector<192x128xbf16>, vector<64x128xf32> -> vector<64x128xf32>
    %33 = arith.addf %24, %32 : vector<64x128xf32>
    %34 = vector.broadcast %5 : vector<1x128xf32> to vector<64x128xf32>
    %35 = arith.addf %33, %34 : vector<64x128xf32>
    %cst_49 = arith.constant 0.000000e+00 : f32
    %36 = vector.broadcast %cst_49 : f32 to vector<64x128xf32>
    %37 = arith.maximumf %35, %36 : vector<64x128xf32>
    %38 = vector.shape_cast %37 : vector<64x128xf32> to vector<8x8x128xf32>
    %39 = arith.truncf %38 : vector<8x8x128xf32> to vector<8x8x128xbf16>
    %c0_50 = arith.constant 0 : index
    %c0_51 = arith.constant 0 : index
    %c0_52 = arith.constant 0 : index
    %c0_53 = arith.constant 0 : index
    %40 = vector.load %arg4[%c0_50, %c0_51, %c0_52, %c0_53] : memref<1x8x8x128xbf16, #tpu.memory_space<vmem>>, vector<1x8x8x128xbf16>
    %41 = vector.shape_cast %40 : vector<1x8x8x128xbf16> to vector<8x8x128xbf16>
    %42 = vector.shape_cast %39 : vector<8x8x128xbf16> to vector<1x8x8x128xbf16>
    tpu.vector_store %arg4[%c0_50, %c0_51, %c0_52, %c0_53], %42 {strides = array<i32>} : memref<1x8x8x128xbf16, #tpu.memory_space<vmem>>, vector<1x8x8x128xbf16>,
    return
  }
  func.func @transform_0(%arg0: i32) -> (i32, i32, i32, i32) {
    %c0_i32 = arith.constant 0 : i32
    %c0_i32_0 = arith.constant 0 : i32
    %c0_i32_1 = arith.constant 0 : i32
    %c0_i32_2 = arith.constant 0 : i32
    return %arg0, %c0_i32, %c0_i32_0, %c0_i32_1 : i32, i32, i32, i32
  }
  func.func @transform_1(%arg0: i32) -> (i32, i32, i32) {
    %c0_i32 = arith.constant 0 : i32
    %c0_i32_0 = arith.constant 0 : i32
    %c0_i32_1 = arith.constant 0 : i32
    %c0_i32_2 = arith.constant 0 : i32
    return %c0_i32, %c0_i32_0, %c0_i32_1 : i32, i32, i32
  }
  func.func @transform_2(%arg0: i32) -> (i32, i32) {
    %c0_i32 = arith.constant 0 : i32
    %c0_i32_0 = arith.constant 0 : i32
    %c0_i32_1 = arith.constant 0 : i32
    return %c0_i32, %c0_i32_0 : i32, i32
  }
  func.func @transform_3(%arg0: i32) -> (i32, i32, i32, i32) {
    %c0_i32 = arith.constant 0 : i32
    %c0_i32_0 = arith.constant 0 : i32
    %c0_i32_1 = arith.constant 0 : i32
    %c0_i32_2 = arith.constant 0 : i32
    return %arg0, %c0_i32, %c0_i32_0, %c0_i32_1 : i32, i32, i32, i32
  }
}

module attributes {stable_mosaic.version = 11 : i64} {
  func.func @_conv3x3_kernel(%arg0: i32, %arg1: memref<1x8x8x128xbf16, #tpu.memory_space<vmem>>, %arg2: memref<3x384x128xbf16, #tpu.memory_space<vmem>>, %arg3: memref<1x128xf32, #tpu.memory_space<vmem>>, %arg4: memref<1x8x8x128xbf16, #tpu.memory_space<vmem>>, %arg5: memref<10x10x128xbf16, #tpu.memory_space<vmem>>) attributes {dimension_semantics = [#tpu.dimension_semantics<parallel>], iteration_bounds = array<i64: 4>, scalar_prefetch = 0 : i64, scratch_operands = 1 : i64, tpu.core_type = #tpu.core_type<tc>, window_params = [{transform_indices = @transform_0, window_bounds = array<i64: 1, 8, 8, 128>}, {pipeline_mode = #tpu.pipeline_mode<synchronous>, transform_indices = @transform_1, window_bounds = array<i64: 3, 384, 128>}, {pipeline_mode = #tpu.pipeline_mode<synchronous>, transform_indices = @transform_2, window_bounds = array<i64: 1, 128>}, {transform_indices = @transform_3, window_bounds = array<i64: 1, 8, 8, 128>}]} {
    %cst = arith.constant 0.000000e+00 : bf16
    %0 = vector.broadcast %cst : bf16 to vector<10x10x128xbf16>
    %c0 = arith.constant 0 : index
    %c0_0 = arith.constant 0 : index
    %c0_1 = arith.constant 0 : index
    %1 = vector.load %arg5[%c0, %c0_0, %c0_1] : memref<10x10x128xbf16, #tpu.memory_space<vmem>>, vector<10x10x128xbf16>
    tpu.vector_store %arg5[%c0, %c0_0, %c0_1], %0 {strides = array<i32>} : memref<10x10x128xbf16, #tpu.memory_space<vmem>>, vector<10x10x128xbf16>,
    %c0_2 = arith.constant 0 : index
    %c0_3 = arith.constant 0 : index
    %c0_4 = arith.constant 0 : index
    %c0_5 = arith.constant 0 : index
    %2 = vector.load %arg1[%c0_2, %c0_3, %c0_4, %c0_5] : memref<1x8x8x128xbf16, #tpu.memory_space<vmem>>, vector<1x8x8x128xbf16>
    %3 = vector.shape_cast %2 : vector<1x8x8x128xbf16> to vector<8x8x128xbf16>
    %c1 = arith.constant 1 : index
    %c1_6 = arith.constant 1 : index
    %c0_7 = arith.constant 0 : index
    %4 = vector.load %arg5[%c1, %c1_6, %c0_7] : memref<10x10x128xbf16, #tpu.memory_space<vmem>>, vector<8x8x128xbf16>
    tpu.vector_store %arg5[%c1, %c1_6, %c0_7], %3 {strides = array<i32>} : memref<10x10x128xbf16, #tpu.memory_space<vmem>>, vector<8x8x128xbf16>,
    %c0_8 = arith.constant 0 : index
    %c0_9 = arith.constant 0 : index
    %5 = vector.load %arg3[%c0_8, %c0_9] : memref<1x128xf32, #tpu.memory_space<vmem>>, vector<1x128xf32>
    %cst_10 = arith.constant 0.000000e+00 : f32
    %6 = vector.broadcast %cst_10 : f32 to vector<64x128xf32>
    %c0_11 = arith.constant 0 : index
    %c0_12 = arith.constant 0 : index
    %c0_13 = arith.constant 0 : index
    %7 = vector.load %arg5[%c0_11, %c0_12, %c0_13] : memref<10x10x128xbf16, #tpu.memory_space<vmem>>, vector<8x8x128xbf16>
    %c0_14 = arith.constant 0 : index
    %c1_15 = arith.constant 1 : index
    %c0_16 = arith.constant 0 : index
    %8 = vector.load %arg5[%c0_14, %c1_15, %c0_16] : memref<10x10x128xbf16, #tpu.memory_space<vmem>>, vector<8x8x128xbf16>
    %c0_17 = arith.constant 0 : index
    %c2 = arith.constant 2 : index
    %c0_18 = arith.constant 0 : index
    %9 = vector.load %arg5[%c0_17, %c2, %c0_18] : memref<10x10x128xbf16, #tpu.memory_space<vmem>>, vector<8x8x128xbf16>
    %10 = tpu.concatenate %7, %8, %9 in 2 : vector<8x8x128xbf16>, vector<8x8x128xbf16>, vector<8x8x128xbf16> -> vector<8x8x384xbf16>
    %11 = vector.shape_cast %10 : vector<8x8x384xbf16> to vector<64x384xbf16>
    %c0_19 = arith.constant 0 : index
    %c0_20 = arith.constant 0 : index
    %c0_21 = arith.constant 0 : index
    %12 = vector.load %arg2[%c0_19, %c0_20, %c0_21] : memref<3x384x128xbf16, #tpu.memory_space<vmem>>, vector<1x384x128xbf16>
    %13 = vector.shape_cast %12 : vector<1x384x128xbf16> to vector<384x128xbf16>
    %cst_22 = arith.constant dense<0.000000e+00> : vector<64x128xf32>
    %14 = tpu.matmul %11, %13, %cst_22 {dimension_numbers = #tpu.dot_dimension_numbers<[1], [0], [0], [1], [0, 0, 1, 1], [], []>} : vector<64x384xbf16>, vector<384x128xbf16>, vector<64x128xf32> -> vector<64x128xf32>
    %15 = arith.addf %6, %14 : vector<64x128xf32>
    %c1_23 = arith.constant 1 : index
    %c0_24 = arith.constant 0 : index
    %c0_25 = arith.constant 0 : index
    %16 = vector.load %arg5[%c1_23, %c0_24, %c0_25] : memref<10x10x128xbf16, #tpu.memory_space<vmem>>, vector<8x8x128xbf16>
    %c1_26 = arith.constant 1 : index
    %c1_27 = arith.constant 1 : index
    %c0_28 = arith.constant 0 : index
    %17 = vector.load %arg5[%c1_26, %c1_27, %c0_28] : memref<10x10x128xbf16, #tpu.memory_space<vmem>>, vector<8x8x128xbf16>
    %c1_29 = arith.constant 1 : index
    %c2_30 = arith.constant 2 : index
    %c0_31 = arith.constant 0 : index
    %18 = vector.load %arg5[%c1_29, %c2_30, %c0_31] : memref<10x10x128xbf16, #tpu.memory_space<vmem>>, vector<8x8x128xbf16>
    %19 = tpu.concatenate %16, %17, %18 in 2 : vector<8x8x128xbf16>, vector<8x8x128xbf16>, vector<8x8x128xbf16> -> vector<8x8x384xbf16>
    %20 = vector.shape_cast %19 : vector<8x8x384xbf16> to vector<64x384xbf16>
    %c1_32 = arith.constant 1 : index
    %c0_33 = arith.constant 0 : index
    %c0_34 = arith.constant 0 : index
    %21 = vector.load %arg2[%c1_32, %c0_33, %c0_34] : memref<3x384x128xbf16, #tpu.memory_space<vmem>>, vector<1x384x128xbf16>
    %22 = vector.shape_cast %21 : vector<1x384x128xbf16> to vector<384x128xbf16>
    %cst_35 = arith.constant dense<0.000000e+00> : vector<64x128xf32>
    %23 = tpu.matmul %20, %22, %cst_35 {dimension_numbers = #tpu.dot_dimension_numbers<[1], [0], [0], [1], [0, 0, 1, 1], [], []>} : vector<64x384xbf16>, vector<384x128xbf16>, vector<64x128xf32> -> vector<64x128xf32>
    %24 = arith.addf %15, %23 : vector<64x128xf32>
    %c2_36 = arith.constant 2 : index
    %c0_37 = arith.constant 0 : index
    %c0_38 = arith.constant 0 : index
    %25 = vector.load %arg5[%c2_36, %c0_37, %c0_38] : memref<10x10x128xbf16, #tpu.memory_space<vmem>>, vector<8x8x128xbf16>
    %c2_39 = arith.constant 2 : index
    %c1_40 = arith.constant 1 : index
    %c0_41 = arith.constant 0 : index
    %26 = vector.load %arg5[%c2_39, %c1_40, %c0_41] : memref<10x10x128xbf16, #tpu.memory_space<vmem>>, vector<8x8x128xbf16>
    %c2_42 = arith.constant 2 : index
    %c2_43 = arith.constant 2 : index
    %c0_44 = arith.constant 0 : index
    %27 = vector.load %arg5[%c2_42, %c2_43, %c0_44] : memref<10x10x128xbf16, #tpu.memory_space<vmem>>, vector<8x8x128xbf16>
    %28 = tpu.concatenate %25, %26, %27 in 2 : vector<8x8x128xbf16>, vector<8x8x128xbf16>, vector<8x8x128xbf16> -> vector<8x8x384xbf16>
    %29 = vector.shape_cast %28 : vector<8x8x384xbf16> to vector<64x384xbf16>
    %c2_45 = arith.constant 2 : index
    %c0_46 = arith.constant 0 : index
    %c0_47 = arith.constant 0 : index
    %30 = vector.load %arg2[%c2_45, %c0_46, %c0_47] : memref<3x384x128xbf16, #tpu.memory_space<vmem>>, vector<1x384x128xbf16>
    %31 = vector.shape_cast %30 : vector<1x384x128xbf16> to vector<384x128xbf16>
    %cst_48 = arith.constant dense<0.000000e+00> : vector<64x128xf32>
    %32 = tpu.matmul %29, %31, %cst_48 {dimension_numbers = #tpu.dot_dimension_numbers<[1], [0], [0], [1], [0, 0, 1, 1], [], []>} : vector<64x384xbf16>, vector<384x128xbf16>, vector<64x128xf32> -> vector<64x128xf32>
    %33 = arith.addf %24, %32 : vector<64x128xf32>
    %34 = vector.broadcast %5 : vector<1x128xf32> to vector<64x128xf32>
    %35 = arith.addf %33, %34 : vector<64x128xf32>
    %36 = vector.shape_cast %35 : vector<64x128xf32> to vector<8x8x128xf32>
    %37 = arith.truncf %36 : vector<8x8x128xf32> to vector<8x8x128xbf16>
    %c0_49 = arith.constant 0 : index
    %c0_50 = arith.constant 0 : index
    %c0_51 = arith.constant 0 : index
    %c0_52 = arith.constant 0 : index
    %38 = vector.load %arg4[%c0_49, %c0_50, %c0_51, %c0_52] : memref<1x8x8x128xbf16, #tpu.memory_space<vmem>>, vector<1x8x8x128xbf16>
    %39 = vector.shape_cast %38 : vector<1x8x8x128xbf16> to vector<8x8x128xbf16>
    %40 = vector.shape_cast %37 : vector<8x8x128xbf16> to vector<1x8x8x128xbf16>
    tpu.vector_store %arg4[%c0_49, %c0_50, %c0_51, %c0_52], %40 {strides = array<i32>} : memref<1x8x8x128xbf16, #tpu.memory_space<vmem>>, vector<1x8x8x128xbf16>,
    return
  }
  func.func @transform_0(%arg0: i32) -> (i32, i32, i32, i32) {
    %c0_i32 = arith.constant 0 : i32
    %c0_i32_0 = arith.constant 0 : i32
    %c0_i32_1 = arith.constant 0 : i32
    %c0_i32_2 = arith.constant 0 : i32
    return %arg0, %c0_i32, %c0_i32_0, %c0_i32_1 : i32, i32, i32, i32
  }
  func.func @transform_1(%arg0: i32) -> (i32, i32, i32) {
    %c0_i32 = arith.constant 0 : i32
    %c0_i32_0 = arith.constant 0 : i32
    %c0_i32_1 = arith.constant 0 : i32
    %c0_i32_2 = arith.constant 0 : i32
    return %c0_i32, %c0_i32_0, %c0_i32_1 : i32, i32, i32
  }
  func.func @transform_2(%arg0: i32) -> (i32, i32) {
    %c0_i32 = arith.constant 0 : i32
    %c0_i32_0 = arith.constant 0 : i32
    %c0_i32_1 = arith.constant 0 : i32
    return %c0_i32, %c0_i32_0 : i32, i32
  }
  func.func @transform_3(%arg0: i32) -> (i32, i32, i32, i32) {
    %c0_i32 = arith.constant 0 : i32
    %c0_i32_0 = arith.constant 0 : i32
    %c0_i32_1 = arith.constant 0 : i32
    %c0_i32_2 = arith.constant 0 : i32
    return %arg0, %c0_i32, %c0_i32_0, %c0_i32_1 : i32, i32, i32, i32
  }
}

module attributes {stable_mosaic.version = 11 : i64} {
  func.func @_mse_kernel(%arg0: i32, %arg1: memref<128x128xbf16, #tpu.memory_space<vmem>>, %arg2: memref<128x128xbf16, #tpu.memory_space<vmem>>, %arg3: memref<1x1xf32, #tpu.memory_space<smem>>, %arg4: memref<1xf32, #tpu.memory_space<smem>>) attributes {dimension_semantics = [#tpu.dimension_semantics<arbitrary>], iteration_bounds = array<i64: 1>, scalar_prefetch = 0 : i64, scratch_operands = 1 : i64, tpu.core_type = #tpu.core_type<tc>, window_params = [{transform_indices = @transform_0, window_bounds = array<i64: 128, 128>}, {transform_indices = @transform_1, window_bounds = array<i64: 128, 128>}, {transform_indices = @transform_2, window_bounds = array<i64: 1, 1>}]} {
    %c0_i32 = arith.constant 0 : i32
    %0 = arith.cmpi eq, %arg0, %c0_i32 : i32
    %1 = arith.extui %0 : i1 to i32
    %c0_i32_0 = arith.constant 0 : i32
    %2 = arith.cmpi ne, %1, %c0_i32_0 : i32
    scf.if %2 {
      %cst_10 = arith.constant 0.000000e+00 : f32
      %c0_11 = arith.constant 0 : index
      %19 = memref.load %arg4[%c0_11] : memref<1xf32, #tpu.memory_space<smem>>
      memref.store %cst_10, %arg4[%c0_11] : memref<1xf32, #tpu.memory_space<smem>>
    } else {
    }
    %c0 = arith.constant 0 : index
    %c0_1 = arith.constant 0 : index
    %3 = vector.load %arg1[%c0, %c0_1] : memref<128x128xbf16, #tpu.memory_space<vmem>>, vector<128x128xbf16>
    %4 = arith.extf %3 : vector<128x128xbf16> to vector<128x128xf32>
    %c0_2 = arith.constant 0 : index
    %c0_3 = arith.constant 0 : index
    %5 = vector.load %arg2[%c0_2, %c0_3] : memref<128x128xbf16, #tpu.memory_space<vmem>>, vector<128x128xbf16>
    %6 = arith.extf %5 : vector<128x128xbf16> to vector<128x128xf32>
    %7 = arith.subf %4, %6 : vector<128x128xf32>
    %c0_4 = arith.constant 0 : index
    %8 = memref.load %arg4[%c0_4] : memref<1xf32, #tpu.memory_space<smem>>
    %9 = arith.mulf %7, %7 : vector<128x128xf32>
    %10 = vector.shape_cast %9 : vector<128x128xf32> to vector<1x128x128xf32>
    %cst = arith.constant dense<0.000000e+00> : vector<1xf32>
    %11 = vector.multi_reduction <add>, %10, %cst [1, 2] : vector<1x128x128xf32> to vector<1xf32>
    %12 = vector.shape_cast %11 : vector<1xf32> to vector<1x1x1xf32>
    %13 = vector.extract %12[0, 0, 0] : f32 from vector<1x1x1xf32>
    %14 = arith.addf %8, %13 : f32
    %c0_5 = arith.constant 0 : index
    %15 = memref.load %arg4[%c0_5] : memref<1xf32, #tpu.memory_space<smem>>
    memref.store %14, %arg4[%c0_5] : memref<1xf32, #tpu.memory_space<smem>>
    %c0_6 = arith.constant 0 : index
    %16 = memref.load %arg4[%c0_6] : memref<1xf32, #tpu.memory_space<smem>>
    %cst_7 = arith.constant 6.10351563E-5 : f32
    %17 = arith.mulf %16, %cst_7 : f32
    %c0_8 = arith.constant 0 : index
    %c0_9 = arith.constant 0 : index
    %18 = memref.load %arg3[%c0_8, %c0_9] : memref<1x1xf32, #tpu.memory_space<smem>>
    memref.store %17, %arg3[%c0_8, %c0_9] : memref<1x1xf32, #tpu.memory_space<smem>>
    return
  }
  func.func @transform_0(%arg0: i32) -> (i32, i32) {
    %c0_i32 = arith.constant 0 : i32
    %c0_i32_0 = arith.constant 0 : i32
    return %arg0, %c0_i32 : i32, i32
  }
  func.func @transform_1(%arg0: i32) -> (i32, i32) {
    %c0_i32 = arith.constant 0 : i32
    %c0_i32_0 = arith.constant 0 : i32
    return %arg0, %c0_i32 : i32, i32
  }
  func.func @transform_2(%arg0: i32) -> (i32, i32) {
    %c0_i32 = arith.constant 0 : i32
    %c0_i32_0 = arith.constant 0 : i32
    %c0_i32_1 = arith.constant 0 : i32
    return %c0_i32, %c0_i32_0 : i32, i32
  }
}

</mosaic_0001>

<llo_original>
// kernel: _lambda_.5
$region0: #{_lambda_.5}
  #allocation0 [shape = 'u32[]', space=smem, size = 0x4, offset = 0x4, fixed_abs, tag = 'smem constant byte address 0x4 - core index']
  #allocation1 [shape = 'u32[144,128]{1,0:T(1,128)}', space=vmem, size = 0x12000, scoped, tag = 'internal scratch']
  %s0 = inlined_call_operand.vmem [shape: bf16[4,16,8,64], index: 0, kind: input, shape index: {}]
  %s1 = inlined_call_operand.vmem [shape: bf16[64,128], index: 1, kind: input, shape index: {}]
  %s2 = inlined_call_operand.vmem [shape: f32[1,128], index: 2, kind: input, shape index: {}]
  %s3 = inlined_call_operand.vmem [shape: bf16[4,16,8,128], index: 3, kind: output, shape index: {}]
  %s4 = sld [smem:[#allocation0]]
  $region45: #{_lambda_.5} parent=0
    _
  %s6 = ssub.s32 1, %s4
  %s7 = scalar_select 0, %s6, %s4
  loop: start=0, step=1, limit=6
  $region2: #{_lambda_.5} parent=0 // loop_pre_header
    _
  $region3: #{_lambda_.5} parent=0 // loop_header
    %s9 = sphi 0, %s13
    %p10 = scmp.ge.s32.totalorder %s9, 6
    %s16 = sphi 0, %s28
    %s17 = sphi 0, %s24
    %s18 = sphi 0, %s16
    %s19 = sphi 0, %s17
    %s20 = sphi 0, %s18
    %s21 = sphi 0, %s19
    %s33 = sphi 0, %s35
    %s36 = sphi 0, %s33
    %s37 = sphi 0, %s36
    %s53 = sphi 0, %s37
    %s57 = sphi 0, %s57
    %s59 = sphi 0, %s57
    %s60 = sphi 0, %s59
    %s74 = sphi 0, %s60
    %s78 = sphi 0, %s78
    %s80 = sphi 0, %s78
    %s81 = sphi 0, %s80
    %s95 = sphi 0, %s81
    %s103 = sphi 0, %s105
    %s106 = sphi 0, %s103
    %s107 = sphi 0, %s106
    %s123 = sphi 0, %s107
  $region4: #{_lambda_.5} parent=0 // loop_header_branch
    %12 = sbr.rel (%p10) target = $region8
  $region5: #{_lambda_.5} parent=0 // loop_body
    %s14 = ssub.s32 %s9, 1
    %s15 = ssub.s32 %s9, 2
    %s22 = sadd.s32 1, %s17
    %p23 = scmp.ge.s32.totalorder %s22, 1
    %s24 = scalar_select %p23, 0, %s22
    %s25 = sadd.s32 1, %s16
    %s26 = scalar_select %p23, %s25, %s16
    %p27 = scmp.ge.s32.totalorder %s26, 4
    %s28 = scalar_select %p27, 0, %s26
    %s29 = ssub.s32 %s16, %s28
    %s30 = ssub.s32 %s17, %s24
    %s31 = sor.u32 %s29, %s30
    %p32 = scmp.eq.s32.totalorder %s31, 0
    %s34 = sadd.s32 %s33, 1
    %s35 = scalar_select %p32, %s33, %s34
    %p38 = pneg %p32
    %p39 = scmp.eq.s32.totalorder %s9, 3
    %p40 = por %p38, %p39
    %p41 = scmp.ne.s32.totalorder %s33, %s36
    %p42 = scmp.eq.s32.totalorder %s9, 0
    %p43 = por %p41, %p42
    %p44 = scmp.ne.s32.totalorder %s33, %s36
    %p45 = scmp.eq.s32.totalorder %s14, 3
    %p46 = por %p44, %p45
    %p47 = scmp.ne.s32.totalorder %s36, %s37
    %p48 = scmp.eq.s32.totalorder %s14, 0
    %p49 = por %p47, %p48
    %p50 = scmp.ne.s32.totalorder %s36, %s37
    %p51 = scmp.eq.s32.totalorder %s15, 3
    %p52 = por %p50, %p51
    %p54 = scmp.ne.s32.totalorder %s37, %s53
    %p55 = scmp.eq.s32.totalorder %s15, 0
    %p56 = por %p54, %p55
    %s58 = sadd.s32 %s57, 1
    %p61 = scmp.eq.s32.totalorder %s9, 3
    %p62 = scmp.ne.s32.totalorder %s57, %s59
    %p63 = scmp.eq.s32.totalorder %s9, 0
    %p64 = por %p62, %p63
    %p65 = scmp.ne.s32.totalorder %s57, %s59
    %p66 = scmp.eq.s32.totalorder %s14, 3
    %p67 = por %p65, %p66
    %p68 = scmp.ne.s32.totalorder %s59, %s60
    %p69 = scmp.eq.s32.totalorder %s14, 0
    %p70 = por %p68, %p69
    %p71 = scmp.ne.s32.totalorder %s59, %s60
    %p72 = scmp.eq.s32.totalorder %s15, 3
    %p73 = por %p71, %p72
    %p75 = scmp.ne.s32.totalorder %s60, %s74
    %p76 = scmp.eq.s32.totalorder %s15, 0
    %p77 = por %p75, %p76
    %s79 = sadd.s32 %s78, 1
    %p82 = scmp.eq.s32.totalorder %s9, 3
    %p83 = scmp.ne.s32.totalorder %s78, %s80
    %p84 = scmp.eq.s32.totalorder %s9, 0
    %p85 = por %p83, %p84
    %p86 = scmp.ne.s32.totalorder %s78, %s80
    %p87 = scmp.eq.s32.totalorder %s14, 3
    %p88 = por %p86, %p87
    %p89 = scmp.ne.s32.totalorder %s80, %s81
    %p90 = scmp.eq.s32.totalorder %s14, 0
    %p91 = por %p89, %p90
    %p92 = scmp.ne.s32.totalorder %s80, %s81
    %p93 = scmp.eq.s32.totalorder %s15, 3
    %p94 = por %p92, %p93
    %p96 = scmp.ne.s32.totalorder %s81, %s95
    %p97 = scmp.eq.s32.totalorder %s15, 0
    %p98 = por %p96, %p97
    %s99 = ssub.s32 %s16, %s28
    %s100 = ssub.s32 %s17, %s24
    %s101 = sor.u32 %s99, %s100
    %p102 = scmp.eq.s32.totalorder %s101, 0
    %s104 = sadd.s32 %s103, 1
    %s105 = scalar_select %p102, %s103, %s104
    %p108 = pneg %p102
    %p109 = scmp.eq.s32.totalorder %s9, 3
    %p110 = por %p108, %p109
    %p111 = scmp.ne.s32.totalorder %s103, %s106
    %p112 = scmp.eq.s32.totalorder %s9, 0
    %p113 = por %p111, %p112
    %p114 = scmp.ne.s32.totalorder %s103, %s106
    %p115 = scmp.eq.s32.totalorder %s14, 3
    %p116 = por %p114, %p115
    %p117 = scmp.ne.s32.totalorder %s106, %s107
    %p118 = scmp.eq.s32.totalorder %s14, 0
    %p119 = por %p117, %p118
    %p120 = scmp.ne.s32.totalorder %s106, %s107
    %p121 = scmp.eq.s32.totalorder %s15, 3
    %p122 = por %p120, %p121
    %p124 = scmp.ne.s32.totalorder %s107, %s123
    %p125 = scmp.eq.s32.totalorder %s15, 0
    %p126 = por %p124, %p125
    %p127 = scmp.le.s32.totalorder 1, %s9
    %p128 = scmp.lt.s32.totalorder %s9, 5
    %p129 = pnand %p127, %p128
    %p130 = pneg %p129
    // Predicated region
    $region9: #{_lambda_.5} parent=5 // pred_check
      _
    $region10: #{_lambda_.5} parent=5 // pred_check_branch
      %132 = sbr.rel (%p129) target = $region12
    $region11: #{_lambda_.5} parent=5 // pred_region
      %s133 = ssub.s32 %s9, 1
      // Predicated region
      $region13: #{_lambda_.5} parent=11 // pred_check
        %p134 = pneg %p70
      $region14: #{_lambda_.5} parent=11 // pred_check_branch
        %136 = sbr.rel (%p134) target = $region16
      $region15: #{_lambda_.5} parent=11 // pred_region
        _
      $region16: #{_lambda_.5} parent=11 // pred_fallthru
        _
      // Predicated region
      $region17: #{_lambda_.5} parent=11 // pred_check
        %p137 = pneg %p91
      $region18: #{_lambda_.5} parent=11 // pred_check_branch
        %139 = sbr.rel (%p137) target = $region20
      $region19: #{_lambda_.5} parent=11 // pred_region
        _
      $region20: #{_lambda_.5} parent=11 // pred_fallthru
        _
    $region12: #{_lambda_.5} parent=5 // pred_fallthru
      _
    %p140 = scmp.lt.s32.totalorder %s9, 4
    // Predicated region
    $region21: #{_lambda_.5} parent=5 // pred_check
      %p141 = pneg %p140
    $region22: #{_lambda_.5} parent=5 // pred_check_branch
      %143 = sbr.rel (%p141) target = $region24
    $region23: #{_lambda_.5} parent=5 // pred_region
      // Predicated region
      $region25: #{_lambda_.5} parent=23 // pred_check
        %p144 = pneg %p43
      $region26: #{_lambda_.5} parent=23 // pred_check_branch
        %146 = sbr.rel (%p144) target = $region28
      $region27: #{_lambda_.5} parent=23 // pred_region
        %s147 = smul.u32 16, %s17
        %p148 = scmp.lt.s32.totalorder %s16, 3
        %s149 = scalar_select %p148, %s16, 3
        %p150 = scmp.lt.s32.totalorder %s147, 15
        %s151 = scalar_select %p150, %s147, 15
        %s152 = smul.addr %s149, 16
        %s153 = sadd.s32 %s151, %s152
        %s154 = smul.addr %s153, 4
        %s155 = scalar_lea.vmem %s0, %s154
        %s156 = smul.u32 16, %s17
      $region28: #{_lambda_.5} parent=23 // pred_fallthru
        _
    $region24: #{_lambda_.5} parent=5 // pred_fallthru
      _
    %p157 = scmp.le.s32.totalorder 1, %s9
    %p158 = scmp.lt.s32.totalorder %s9, 5
    %p159 = pnand %p157, %p158
    %p160 = pneg %p159
    // Predicated region
    $region29: #{_lambda_.5} parent=5 // pred_check
      _
    $region30: #{_lambda_.5} parent=5 // pred_check_branch
      %162 = sbr.rel (%p159) target = $region32
    $region31: #{_lambda_.5} parent=5 // pred_region
      %s163 = ssub.s32 %s9, 1
      %s164 = smul.u32 16, %s19
      %p165 = scmp.lt.s32.totalorder %s18, 3
      %s166 = scalar_select %p165, %s18, 3
      %p167 = scmp.lt.s32.totalorder %s164, 15
      %s168 = scalar_select %p167, %s164, 15
      %s169 = smul.addr %s166, 16
      %s170 = sadd.s32 %s168, %s169
      %s171 = smul.addr %s170, 4
      %s172 = scalar_lea.vmem %s0, %s171
      %p173 = pneg %p49
      %p174 = pneg %p46
      %p175 = pneg %p70
      %p176 = pneg %p67
      %p177 = pneg %p91
      %p178 = pneg %p88
      %p179 = pneg %p119
      %p180 = pneg %p116
      %s181 = smul.u32 16, %s19
      %p182 = scmp.lt.s32.totalorder %s18, 3
      %s183 = scalar_select %p182, %s18, 3
      %p184 = scmp.lt.s32.totalorder %s181, 15
      %s185 = scalar_select %p184, %s181, 15
      %s186 = smul.addr %s183, 16
      %s187 = sadd.s32 %s185, %s186
      %s188 = smul.addr %s187, 4
      %s189 = scalar_lea.vmem %s3, %s188
      %s190 = smul.u32 16, %s19
      %p191 = scmp.lt.s32.totalorder %s18, 3
      %s192 = scalar_select %p191, %s18, 3
      %p193 = scmp.lt.s32.totalorder %s190, 15
      %s194 = scalar_select %p193, %s190, 15
      %s195 = smul.addr %s192, 16
      %s196 = sadd.s32 %s194, %s195
      %s197 = smul.addr %s196, 4
      %s198 = scalar_lea.vmem %s0, %s197
      %s199 = smul.u32 16, %s19
      %s200 = smul.u32 16, %s19
      %p201 = scmp.lt.s32.totalorder %s18, 3
      %s202 = scalar_select %p201, %s18, 3
      %p203 = scmp.lt.s32.totalorder %s200, 15
      %s204 = scalar_select %p203, %s200, 15
      %s205 = smul.addr %s202, 16
      %s206 = sadd.s32 %s204, %s205
      %s207 = smul.addr %s206, 4
      %s208 = scalar_lea.vmem %s3, %s207
      %s209 = smul.u32 16, %s19
      %v211 = vld [vmem:[%s198] sm:$0xf]
      %v212 = vld [vmem:[%s198 + $0x4] sm:$0xf]
      %v213 = vld [vmem:[%s198 + $0x8] sm:$0xf]
      %v214 = vld [vmem:[%s198 + $0xc] sm:$0xf]
      %v215 = vld [vmem:[%s198 + $0x10] sm:$0xf]
      %v216 = vld [vmem:[%s198 + $0x14] sm:$0xf]
      %v217 = vld [vmem:[%s198 + $0x18] sm:$0xf]
      %v218 = vld [vmem:[%s198 + $0x1c] sm:$0xf]
      %v219 = vld [vmem:[%s198 + $0x20] sm:$0xf]
      %v220 = vld [vmem:[%s198 + $0x24] sm:$0xf]
      %v221 = vld [vmem:[%s198 + $0x28] sm:$0xf]
      %v222 = vld [vmem:[%s198 + $0x2c] sm:$0xf]
      %v223 = vld [vmem:[%s198 + $0x30] sm:$0xf]
      %v224 = vld [vmem:[%s198 + $0x34] sm:$0xf]
      %v225 = vld [vmem:[%s198 + $0x38] sm:$0xf]
      %v226 = vld [vmem:[%s198 + $0x3c] sm:$0xf]
      %v227 = vld [vmem:[%s1] sm:$0xf]
      %v228 = vld [vmem:[%s1 + $0x4] sm:$0xf]
      %v229 = vld [vmem:[%s1 + $0x8] sm:$0xf]
      %v230 = vld [vmem:[%s1 + $0xc] sm:$0xf]
      %v231 = vld [vmem:[%s1 + $0x10] sm:$0xf]
      %v232 = vld [vmem:[%s1 + $0x14] sm:$0xf]
      %v233 = vld [vmem:[%s1 + $0x18] sm:$0xf]
      %v234 = vld [vmem:[%s1 + $0x1c] sm:$0xf]
      %v235 = vld [vmem:[%s2] sm:$0x1]
      %v237 = vlaneseq
      %v238 = vshrl.u32 %v237, 7
      %v239 = vsub.s32 0, %v238
      %v240 = vrot.slane %v235, %v239
      %v258 = vunpack.c.l.b16 %v211
      %v259 = vunpack.c.l.b16 %v212
      %v260 = vunpack.c.l.b16 %v213
      %v261 = vunpack.c.l.b16 %v214
      %v262 = vunpack.c.l.b16 %v215
      %v263 = vunpack.c.l.b16 %v216
      %v264 = vunpack.c.l.b16 %v217
      %v265 = vunpack.c.l.b16 %v218
      %v266 = vunpack.c.l.b16 %v219
      %v267 = vunpack.c.l.b16 %v220
      %v268 = vunpack.c.l.b16 %v221
      %v269 = vunpack.c.l.b16 %v222
      %v270 = vunpack.c.l.b16 %v223
      %v271 = vunpack.c.l.b16 %v224
      %v272 = vunpack.c.l.b16 %v225
      %v273 = vunpack.c.l.b16 %v226
      %v274 = vpack.c.b16 %v259, %v258
      %v275 = vpack.c.b16 %v261, %v260
      %v276 = vpack.c.b16 %v263, %v262
      %v277 = vpack.c.b16 %v265, %v264
      %v278 = vpack.c.b16 %v267, %v266
      %v279 = vpack.c.b16 %v269, %v268
      %v280 = vpack.c.b16 %v271, %v270
      %v281 = vpack.c.b16 %v273, %v272
      %v290 = vunpack.c.l.b16 %v227
      %v291 = vunpack.c.l.b16 %v228
      %v292 = vunpack.c.l.b16 %v229
      %v293 = vunpack.c.l.b16 %v230
      %v294 = vunpack.c.l.b16 %v231
      %v295 = vunpack.c.l.b16 %v232
      %v296 = vunpack.c.l.b16 %v233
      %v297 = vunpack.c.l.b16 %v234
      %v298 = vpack.c.b16 %v291, %v290
      %v299 = vpack.c.b16 %v293, %v292
      %v300 = vpack.c.b16 %v295, %v294
      %v301 = vpack.c.b16 %v297, %v296
      %vm306 = vcmask 523264
      %v308 = vsel %vm306, %v274, 0
      %v311 = vsel %vm306, %v275, 0
      %v314 = vsel %vm306, %v276, 0
      %v317 = vsel %vm306, %v277, 0
      %v320 = vsel %vm306, %v278, 0
      %v323 = vsel %vm306, %v279, 0
      %v326 = vsel %vm306, %v280, 0
      %v329 = vsel %vm306, %v281, 0
      %331 = vmatprep.subr.bf16.mxu0 0
      %332 = vmatpush1.bf16.msra.mxu0 %v298
      %333 = vmatprep.subr.bf16.mxu0 0
      %334 = vmatpush1.bf16.msra.mxu0 %v299
      %335 = vmatprep.subr.bf16.mxu0 0
      %336 = vmatpush1.bf16.msra.mxu0 %v300
      %337 = vmatprep.subr.bf16.mxu0 0
      %338 = vmatpush1.bf16.msra.mxu0 %v301
      %339 = vmatprep.subr.bf16.mxu0 0
      %340 = vmatpush1.bf16.msra.mxu0 0
      %341 = vmatprep.subr.bf16.mxu0 0
      %342 = vmatpush1.bf16.msra.mxu0 0
      %343 = vmatprep.subr.bf16.mxu0 0
      %344 = vmatpush1.bf16.msra.mxu0 0
      %345 = vmatprep.subr.bf16.mxu0 0
      %346 = vmatpush1.bf16.msra.mxu0 0
      %347 = vmatprep.subr.bf16.mxu0 0
      %348 = vmatpush1.bf16.msra.mxu0 0
      %349 = vmatprep.subr.bf16.mxu0 0
      %350 = vmatpush1.bf16.msra.mxu0 0
      %351 = vmatprep.subr.bf16.mxu0 0
      %352 = vmatpush1.bf16.msra.mxu0 0
      %353 = vmatprep.subr.bf16.mxu0 0
      %354 = vmatpush1.bf16.msra.mxu0 0
      %355 = vmatprep.subr.bf16.mxu0 0
      %356 = vmatpush1.bf16.msra.mxu0 0
      %357 = vmatprep.subr.bf16.mxu0 0
      %358 = vmatpush1.bf16.msra.mxu0 0
      %359 = vmatprep.subr.bf16.mxu0 0
      %360 = vmatpush1.bf16.msra.mxu0 0
      %361 = vmatprep.subr.bf16.mxu0 0
      %362 = vmatpush1.bf16.msra.mxu0 0
      %363 = vmatprep.mubr.bf16.mxu0 0
      %364 = vmatmul.mubr.bf16.gmra.mrb[0].mxu0 %v308
      %v365 = vpop.f32.mrb[0].mxu0
      %v366 = vadd.f32 %v240, %v365
      %v367 = vpop.f32.mrb[0].mxu0
      %v368 = vpop.f32.mrb[0].mxu0
      %v369 = vadd.f32 %v240, %v368
      %v370 = vpop.f32.mrb[0].mxu0
      %371 = vmatprep.mubr.bf16.mxu0 0
      %372 = vmatmul.mubr.bf16.gmra.mrb[0].mxu0 %v311
      %v373 = vpop.f32.mrb[0].mxu0
      %v374 = vadd.f32 %v240, %v373
      %v375 = vpop.f32.mrb[0].mxu0
      %v376 = vpop.f32.mrb[0].mxu0
      %v377 = vadd.f32 %v240, %v376
      %v378 = vpop.f32.mrb[0].mxu0
      %379 = vmatprep.mubr.bf16.mxu0 0
      %380 = vmatmul.mubr.bf16.gmra.mrb[0].mxu0 %v314
      %v381 = vpop.f32.mrb[0].mxu0
      %v382 = vadd.f32 %v240, %v381
      %v383 = vpop.f32.mrb[0].mxu0
      %v384 = vpop.f32.mrb[0].mxu0
      %v385 = vadd.f32 %v240, %v384
      %v386 = vpop.f32.mrb[0].mxu0
      %387 = vmatprep.mubr.bf16.mxu0 0
      %388 = vmatmul.mubr.bf16.gmra.mrb[0].mxu0 %v317
      %v389 = vpop.f32.mrb[0].mxu0
      %v390 = vadd.f32 %v240, %v389
      %v391 = vpop.f32.mrb[0].mxu0
      %v392 = vpop.f32.mrb[0].mxu0
      %v393 = vadd.f32 %v240, %v392
      %v394 = vpop.f32.mrb[0].mxu0
      %395 = vmatprep.mubr.bf16.mxu0 0
      %396 = vmatmul.mubr.bf16.gmra.mrb[0].mxu0 %v320
      %v397 = vpop.f32.mrb[0].mxu0
      %v398 = vadd.f32 %v240, %v397
      %v399 = vpop.f32.mrb[0].mxu0
      %v400 = vpop.f32.mrb[0].mxu0
      %v401 = vadd.f32 %v240, %v400
      %v402 = vpop.f32.mrb[0].mxu0
      %403 = vmatprep.mubr.bf16.mxu0 0
      %404 = vmatmul.mubr.bf16.gmra.mrb[0].mxu0 %v323
      %v405 = vpop.f32.mrb[0].mxu0
      %v406 = vadd.f32 %v240, %v405
      %v407 = vpop.f32.mrb[0].mxu0
      %v408 = vpop.f32.mrb[0].mxu0
      %v409 = vadd.f32 %v240, %v408
      %v410 = vpop.f32.mrb[0].mxu0
      %411 = vmatprep.mubr.bf16.mxu0 0
      %412 = vmatmul.mubr.bf16.gmra.mrb[0].mxu0 %v326
      %v413 = vpop.f32.mrb[0].mxu0
      %v414 = vadd.f32 %v240, %v413
      %v415 = vpop.f32.mrb[0].mxu0
      %v416 = vpop.f32.mrb[0].mxu0
      %v417 = vadd.f32 %v240, %v416
      %v418 = vpop.f32.mrb[0].mxu0
      %419 = vmatprep.mubr.bf16.mxu0 0
      %420 = vmatmul.mubr.bf16.gmra.mrb[0].mxu0 %v329
      %v421 = vpop.f32.mrb[0].mxu0
      %v422 = vadd.f32 %v240, %v421
      %v423 = vpop.f32.mrb[0].mxu0
      %v424 = vpop.f32.mrb[0].mxu0
      %v425 = vadd.f32 %v240, %v424
      %v426 = vpop.f32.mrb[0].mxu0
      %427 = vdwg.mxu0
      %v428 = vmax.f32 %v366, 0.0
      %v429 = vmax.f32 %v369, 0.0
      %v430 = vmax.f32 %v374, 0.0
      %v431 = vmax.f32 %v377, 0.0
      %v432 = vmax.f32 %v382, 0.0
      %v433 = vmax.f32 %v385, 0.0
      %v434 = vmax.f32 %v390, 0.0
      %v435 = vmax.f32 %v393, 0.0
      %v436 = vmax.f32 %v398, 0.0
      %v437 = vmax.f32 %v401, 0.0
      %v438 = vmax.f32 %v406, 0.0
      %v439 = vmax.f32 %v409, 0.0
      %v440 = vmax.f32 %v414, 0.0
      %v441 = vmax.f32 %v417, 0.0
      %v442 = vmax.f32 %v422, 0.0
      %v443 = vmax.f32 %v425, 0.0
      %v444 = vpack.c.bf16 %v428, %v428
      %v445 = vpack.c.bf16 %v429, %v429
      %v446 = vpack.c.bf16 %v430, %v430
      %v447 = vpack.c.bf16 %v431, %v431
      %v448 = vpack.c.bf16 %v432, %v432
      %v449 = vpack.c.bf16 %v433, %v433
      %v450 = vpack.c.bf16 %v434, %v434
      %v451 = vpack.c.bf16 %v435, %v435
      %v452 = vpack.c.bf16 %v436, %v436
      %v453 = vpack.c.bf16 %v437, %v437
      %v454 = vpack.c.bf16 %v438, %v438
      %v455 = vpack.c.bf16 %v439, %v439
      %v456 = vpack.c.bf16 %v440, %v440
      %v457 = vpack.c.bf16 %v441, %v441
      %v458 = vpack.c.bf16 %v442, %v442
      %v459 = vpack.c.bf16 %v443, %v443
      %460 = vst [vmem:[%s208] sm:$0xf] %v444
      %461 = vst [vmem:[%s208 + $0x4] sm:$0xf] %v445
      %462 = vst [vmem:[%s208 + $0x8] sm:$0xf] %v446
      %463 = vst [vmem:[%s208 + $0xc] sm:$0xf] %v447
      %464 = vst [vmem:[%s208 + $0x10] sm:$0xf] %v448
      %465 = vst [vmem:[%s208 + $0x14] sm:$0xf] %v449
      %466 = vst [vmem:[%s208 + $0x18] sm:$0xf] %v450
      %467 = vst [vmem:[%s208 + $0x1c] sm:$0xf] %v451
      %468 = vst [vmem:[%s208 + $0x20] sm:$0xf] %v452
      %469 = vst [vmem:[%s208 + $0x24] sm:$0xf] %v453
      %470 = vst [vmem:[%s208 + $0x28] sm:$0xf] %v454
      %471 = vst [vmem:[%s208 + $0x2c] sm:$0xf] %v455
      %472 = vst [vmem:[%s208 + $0x30] sm:$0xf] %v456
      %473 = vst [vmem:[%s208 + $0x34] sm:$0xf] %v457
      %474 = vst [vmem:[%s208 + $0x38] sm:$0xf] %v458
      %475 = vst [vmem:[%s208 + $0x3c] sm:$0xf] %v459
      %s476 = smul.u32 16, %s19
      %p477 = scmp.lt.s32.totalorder %s18, 3
      %s478 = scalar_select %p477, %s18, 3
      %p479 = scmp.lt.s32.totalorder %s476, 15
      %s480 = scalar_select %p479, %s476, 15
      %s481 = smul.addr %s478, 16
      %s482 = sadd.s32 %s480, %s481
      %s483 = smul.addr %s482, 4
      %s484 = scalar_lea.vmem %s3, %s483
      // Predicated region
      $region33: #{_lambda_.5} parent=31 // pred_check
        %p485 = pneg %p116
      $region34: #{_lambda_.5} parent=31 // pred_check_branch
        %487 = sbr.rel (%p485) target = $region36
      $region35: #{_lambda_.5} parent=31 // pred_region
        %s488 = smul.u32 16, %s19
      $region36: #{_lambda_.5} parent=31 // pred_fallthru
        _
    $region32: #{_lambda_.5} parent=5 // pred_fallthru
      _
    %p489 = scmp.le.s32.totalorder 2, %s9
    // Predicated region
    $region37: #{_lambda_.5} parent=5 // pred_check
      %p490 = pneg %p489
    $region38: #{_lambda_.5} parent=5 // pred_check_branch
      %492 = sbr.rel (%p490) target = $region40
    $region39: #{_lambda_.5} parent=5 // pred_region
      %s493 = ssub.s32 %s9, 2
      // Predicated region
      $region41: #{_lambda_.5} parent=39 // pred_check
        %p494 = pneg %p122
      $region42: #{_lambda_.5} parent=39 // pred_check_branch
        %496 = sbr.rel (%p494) target = $region44
      $region43: #{_lambda_.5} parent=39 // pred_region
        %s497 = smul.u32 16, %s21
        %p498 = scmp.lt.s32.totalorder %s20, 3
        %s499 = scalar_select %p498, %s20, 3
        %p500 = scmp.lt.s32.totalorder %s497, 15
        %s501 = scalar_select %p500, %s497, 15
        %s502 = smul.addr %s499, 16
        %s503 = sadd.s32 %s501, %s502
        %s504 = smul.addr %s503, 4
        %s505 = scalar_lea.vmem %s3, %s504
      $region44: #{_lambda_.5} parent=39 // pred_fallthru
        _
    $region40: #{_lambda_.5} parent=5 // pred_fallthru
      _
  $region6: #{_lambda_.5} parent=0 // loop_footer
    %s13 = sadd.s32 1, %s9
  $region7: #{_lambda_.5} parent=0 // loop_footer_branch
    %8 = sbr.rel target = $region3
  $region8: #{_lambda_.5} parent=0 // loop_exit
    _

// kernel: _lambda_.7
$region0: #{_lambda_.7}
  #allocation0 [shape = 'u32[]', space=smem, size = 0x4, offset = 0x4, fixed_abs, tag = 'smem constant byte address 0x4 - core index']
  #allocation1 [shape = 'u32[144,128]{1,0:T(1,128)}', space=vmem, size = 0x12000, scoped, tag = 'internal scratch']
  #allocation2 [shape = 'bf16[10,10,64]{2,1,0:T(8,128)(2,1)}', space=vmem, size = 0xa000, scoped, tag = 'scratch operand']
  %s0 = inlined_call_operand.vmem [shape: bf16[4,8,8,64], index: 0, kind: input, shape index: {}]
  %s1 = inlined_call_operand.vmem [shape: bf16[3,192,128], index: 1, kind: input, shape index: {}]
  %s2 = inlined_call_operand.vmem [shape: f32[1,128], index: 2, kind: input, shape index: {}]
  %s3 = inlined_call_operand.vmem [shape: bf16[4,8,8,128], index: 3, kind: output, shape index: {}]
  %s4 = sld [smem:[#allocation0]]
  $region45: #{_lambda_.7} parent=0
    _
  %s6 = ssub.s32 1, %s4
  %s7 = scalar_select 0, %s6, %s4
  loop: start=0, step=1, limit=6
  $region2: #{_lambda_.7} parent=0 // loop_pre_header
    _
  $region3: #{_lambda_.7} parent=0 // loop_header
    %s9 = sphi 0, %s13
    %p10 = scmp.ge.s32.totalorder %s9, 6
    %s19 = sphi 0, %s21
    %s22 = sphi 0, %s19
    %s23 = sphi 0, %s22
    %s39 = sphi 0, %s23
    %s43 = sphi 0, %s43
    %s45 = sphi 0, %s43
    %s46 = sphi 0, %s45
    %s60 = sphi 0, %s46
    %s64 = sphi 0, %s64
    %s66 = sphi 0, %s64
    %s67 = sphi 0, %s66
    %s81 = sphi 0, %s67
    %s87 = sphi 0, %s89
    %s90 = sphi 0, %s87
    %s91 = sphi 0, %s90
    %s107 = sphi 0, %s91
  $region4: #{_lambda_.7} parent=0 // loop_header_branch
    %12 = sbr.rel (%p10) target = $region8
  $region5: #{_lambda_.7} parent=0 // loop_body
    %s14 = ssub.s32 %s9, 1
    %s15 = ssub.s32 %s9, 2
    %s16 = sadd.s32 %s9, 1
    %s17 = ssub.s32 %s9, %s16
    %p18 = scmp.eq.s32.totalorder %s17, 0
    %s20 = sadd.s32 %s19, 1
    %s21 = scalar_select %p18, %s19, %s20
    %p24 = pneg %p18
    %p25 = scmp.eq.s32.totalorder %s9, 3
    %p26 = por %p24, %p25
    %p27 = scmp.ne.s32.totalorder %s19, %s22
    %p28 = scmp.eq.s32.totalorder %s9, 0
    %p29 = por %p27, %p28
    %p30 = scmp.ne.s32.totalorder %s19, %s22
    %p31 = scmp.eq.s32.totalorder %s14, 3
    %p32 = por %p30, %p31
    %p33 = scmp.ne.s32.totalorder %s22, %s23
    %p34 = scmp.eq.s32.totalorder %s14, 0
    %p35 = por %p33, %p34
    %p36 = scmp.ne.s32.totalorder %s22, %s23
    %p37 = scmp.eq.s32.totalorder %s15, 3
    %p38 = por %p36, %p37
    %p40 = scmp.ne.s32.totalorder %s23, %s39
    %p41 = scmp.eq.s32.totalorder %s15, 0
    %p42 = por %p40, %p41
    %s44 = sadd.s32 %s43, 1
    %p47 = scmp.eq.s32.totalorder %s9, 3
    %p48 = scmp.ne.s32.totalorder %s43, %s45
    %p49 = scmp.eq.s32.totalorder %s9, 0
    %p50 = por %p48, %p49
    %p51 = scmp.ne.s32.totalorder %s43, %s45
    %p52 = scmp.eq.s32.totalorder %s14, 3
    %p53 = por %p51, %p52
    %p54 = scmp.ne.s32.totalorder %s45, %s46
    %p55 = scmp.eq.s32.totalorder %s14, 0
    %p56 = por %p54, %p55
    %p57 = scmp.ne.s32.totalorder %s45, %s46
    %p58 = scmp.eq.s32.totalorder %s15, 3
    %p59 = por %p57, %p58
    %p61 = scmp.ne.s32.totalorder %s46, %s60
    %p62 = scmp.eq.s32.totalorder %s15, 0
    %p63 = por %p61, %p62
    %s65 = sadd.s32 %s64, 1
    %p68 = scmp.eq.s32.totalorder %s9, 3
    %p69 = scmp.ne.s32.totalorder %s64, %s66
    %p70 = scmp.eq.s32.totalorder %s9, 0
    %p71 = por %p69, %p70
    %p72 = scmp.ne.s32.totalorder %s64, %s66
    %p73 = scmp.eq.s32.totalorder %s14, 3
    %p74 = por %p72, %p73
    %p75 = scmp.ne.s32.totalorder %s66, %s67
    %p76 = scmp.eq.s32.totalorder %s14, 0
    %p77 = por %p75, %p76
    %p78 = scmp.ne.s32.totalorder %s66, %s67
    %p79 = scmp.eq.s32.totalorder %s15, 3
    %p80 = por %p78, %p79
    %p82 = scmp.ne.s32.totalorder %s67, %s81
    %p83 = scmp.eq.s32.totalorder %s15, 0
    %p84 = por %p82, %p83
    %s85 = ssub.s32 %s9, %s16
    %p86 = scmp.eq.s32.totalorder %s85, 0
    %s88 = sadd.s32 %s87, 1
    %s89 = scalar_select %p86, %s87, %s88
    %p92 = pneg %p86
    %p93 = scmp.eq.s32.totalorder %s9, 3
    %p94 = por %p92, %p93
    %p95 = scmp.ne.s32.totalorder %s87, %s90
    %p96 = scmp.eq.s32.totalorder %s9, 0
    %p97 = por %p95, %p96
    %p98 = scmp.ne.s32.totalorder %s87, %s90
    %p99 = scmp.eq.s32.totalorder %s14, 3
    %p100 = por %p98, %p99
    %p101 = scmp.ne.s32.totalorder %s90, %s91
    %p102 = scmp.eq.s32.totalorder %s14, 0
    %p103 = por %p101, %p102
    %p104 = scmp.ne.s32.totalorder %s90, %s91
    %p105 = scmp.eq.s32.totalorder %s15, 3
    %p106 = por %p104, %p105
    %p108 = scmp.ne.s32.totalorder %s91, %s107
    %p109 = scmp.eq.s32.totalorder %s15, 0
    %p110 = por %p108, %p109
    %p111 = scmp.le.s32.totalorder 1, %s9
    %p112 = scmp.lt.s32.totalorder %s9, 5
    %p113 = pnand %p111, %p112
    %p114 = pneg %p113
    // Predicated region
    $region9: #{_lambda_.7} parent=5 // pred_check
      _
    $region10: #{_lambda_.7} parent=5 // pred_check_branch
      %116 = sbr.rel (%p113) target = $region12
    $region11: #{_lambda_.7} parent=5 // pred_region
      %s117 = ssub.s32 %s9, 1
      // Predicated region
      $region13: #{_lambda_.7} parent=11 // pred_check
        %p118 = pneg %p56
      $region14: #{_lambda_.7} parent=11 // pred_check_branch
        %120 = sbr.rel (%p118) target = $region16
      $region15: #{_lambda_.7} parent=11 // pred_region
        _
      $region16: #{_lambda_.7} parent=11 // pred_fallthru
        _
      // Predicated region
      $region17: #{_lambda_.7} parent=11 // pred_check
        %p121 = pneg %p77
      $region18: #{_lambda_.7} parent=11 // pred_check_branch
        %123 = sbr.rel (%p121) target = $region20
      $region19: #{_lambda_.7} parent=11 // pred_region
        _
      $region20: #{_lambda_.7} parent=11 // pred_fallthru
        _
    $region12: #{_lambda_.7} parent=5 // pred_fallthru
      _
    %p124 = scmp.lt.s32.totalorder %s9, 4
    // Predicated region
    $region21: #{_lambda_.7} parent=5 // pred_check
      %p125 = pneg %p124
    $region22: #{_lambda_.7} parent=5 // pred_check_branch
      %127 = sbr.rel (%p125) target = $region24
    $region23: #{_lambda_.7} parent=5 // pred_region
      // Predicated region
      $region25: #{_lambda_.7} parent=23 // pred_check
        %p128 = pneg %p29
      $region26: #{_lambda_.7} parent=23 // pred_check_branch
        %130 = sbr.rel (%p128) target = $region28
      $region27: #{_lambda_.7} parent=23 // pred_region
        %p131 = scmp.lt.s32.totalorder %s9, 3
        %s132 = scalar_select %p131, %s9, 3
        %s133 = smul.addr %s132, 8
        %s134 = smul.addr %s133, 4
        %s135 = scalar_lea.vmem %s0, %s134
      $region28: #{_lambda_.7} parent=23 // pred_fallthru
        _
    $region24: #{_lambda_.7} parent=5 // pred_fallthru
      _
    %p136 = scmp.le.s32.totalorder 1, %s9
    %p137 = scmp.lt.s32.totalorder %s9, 5
    %p138 = pnand %p136, %p137
    %p139 = pneg %p138
    // Predicated region
    $region29: #{_lambda_.7} parent=5 // pred_check
      _
    $region30: #{_lambda_.7} parent=5 // pred_check_branch
      %141 = sbr.rel (%p138) target = $region32
    $region31: #{_lambda_.7} parent=5 // pred_region
      %s142 = ssub.s32 %s9, 1
      %p143 = scmp.lt.s32.totalorder %s14, 3
      %s144 = scalar_select %p143, %s14, 3
      %s145 = smul.addr %s144, 8
      %s146 = smul.addr %s145, 4
      %s147 = scalar_lea.vmem %s0, %s146
      %p148 = pneg %p35
      %p149 = pneg %p32
      %p150 = pneg %p56
      %p151 = pneg %p53
      %p152 = pneg %p77
      %p153 = pneg %p74
      %p154 = pneg %p103
      %p155 = pneg %p100
      %p156 = scmp.lt.s32.totalorder %s14, 3
      %s157 = scalar_select %p156, %s14, 3
      %s158 = smul.addr %s157, 8
      %s159 = smul.addr %s158, 4
      %s160 = scalar_lea.vmem %s3, %s159
      %p161 = scmp.lt.s32.totalorder %s14, 3
      %s162 = scalar_select %p161, %s14, 3
      %s163 = smul.addr %s162, 8
      %s164 = smul.addr %s163, 4
      %s165 = scalar_lea.vmem %s0, %s164
      %p166 = scmp.lt.s32.totalorder %s14, 3
      %s167 = scalar_select %p166, %s14, 3
      %s168 = smul.addr %s167, 8
      %s169 = smul.addr %s168, 4
      %s170 = scalar_lea.vmem %s3, %s169
      %vm172 = vcmask 519168
      %173 = vst.msk [vmem:[#allocation2] sm:$0xf] %vm172, 0
      %vm174 = vcmask 516096
      %175 = vst.msk [vmem:[#allocation2 + $0x4] sm:$0x1] %vm174, 0
      %176 = vst.msk [vmem:[#allocation2 + $0x8] sm:$0xf] %vm172, 0
      %177 = vst.msk [vmem:[#allocation2 + $0xc] sm:$0x1] %vm174, 0
      %178 = vst.msk [vmem:[#allocation2 + $0x10] sm:$0xf] %vm172, 0
      %179 = vst.msk [vmem:[#allocation2 + $0x14] sm:$0x1] %vm174, 0
      %180 = vst.msk [vmem:[#allocation2 + $0x18] sm:$0xf] %vm172, 0
      %181 = vst.msk [vmem:[#allocation2 + $0x1c] sm:$0x1] %vm174, 0
      %182 = vst.msk [vmem:[#allocation2 + $0x20] sm:$0xf] %vm172, 0
      %183 = vst.msk [vmem:[#allocation2 + $0x24] sm:$0x1] %vm174, 0
      %184 = vst.msk [vmem:[#allocation2 + $0x28] sm:$0xf] %vm172, 0
      %185 = vst.msk [vmem:[#allocation2 + $0x2c] sm:$0x1] %vm174, 0
      %186 = vst.msk [vmem:[#allocation2 + $0x30] sm:$0xf] %vm172, 0
      %187 = vst.msk [vmem:[#allocation2 + $0x34] sm:$0x1] %vm174, 0
      %188 = vst.msk [vmem:[#allocation2 + $0x38] sm:$0xf] %vm172, 0
      %189 = vst.msk [vmem:[#allocation2 + $0x3c] sm:$0x1] %vm174, 0
      %190 = vst.msk [vmem:[#allocation2 + $0x40] sm:$0xf] %vm172, 0
      %191 = vst.msk [vmem:[#allocation2 + $0x44] sm:$0x1] %vm174, 0
      %192 = vst.msk [vmem:[#allocation2 + $0x48] sm:$0xf] %vm172, 0
      %193 = vst.msk [vmem:[#allocation2 + $0x4c] sm:$0x1] %vm174, 0
      %v194 = vld [vmem:[%s165] sm:$0xf]
      %v195 = vld [vmem:[%s165 + $0x4] sm:$0xf]
      %v196 = vld [vmem:[%s165 + $0x8] sm:$0xf]
      %v197 = vld [vmem:[%s165 + $0xc] sm:$0xf]
      %v198 = vld [vmem:[%s165 + $0x10] sm:$0xf]
      %v199 = vld [vmem:[%s165 + $0x14] sm:$0xf]
      %v200 = vld [vmem:[%s165 + $0x18] sm:$0xf]
      %v201 = vld [vmem:[%s165 + $0x1c] sm:$0xf]
      %v203 = vshrl.u32 %v194, 16
      %v205 = vrot.slane %v203, 7
      %v206 = vshll.u32 %v194, 16
      %v208 = vor.u32 %v205, %v206
      %v209 = vrot.slane %v205, 4
      %v211 = vshrl.u32 %v195, 16
      %v213 = vrot.slane %v211, 7
      %v214 = vshll.u32 %v195, 16
      %v216 = vor.u32 %v213, %v214
      %v217 = vrot.slane %v213, 4
      %v219 = vshrl.u32 %v196, 16
      %v221 = vrot.slane %v219, 7
      %v222 = vshll.u32 %v196, 16
      %v224 = vor.u32 %v221, %v222
      %v225 = vrot.slane %v221, 4
      %v227 = vshrl.u32 %v197, 16
      %v229 = vrot.slane %v227, 7
      %v230 = vshll.u32 %v197, 16
      %v232 = vor.u32 %v229, %v230
      %v233 = vrot.slane %v229, 4
      %v235 = vshrl.u32 %v198, 16
      %v237 = vrot.slane %v235, 7
      %v238 = vshll.u32 %v198, 16
      %v240 = vor.u32 %v237, %v238
      %v241 = vrot.slane %v237, 4
      %v243 = vshrl.u32 %v199, 16
      %v245 = vrot.slane %v243, 7
      %v246 = vshll.u32 %v199, 16
      %v248 = vor.u32 %v245, %v246
      %v249 = vrot.slane %v245, 4
      %v251 = vshrl.u32 %v200, 16
      %v253 = vrot.slane %v251, 7
      %v254 = vshll.u32 %v200, 16
      %v256 = vor.u32 %v253, %v254
      %v257 = vrot.slane %v253, 4
      %v259 = vshrl.u32 %v201, 16
      %v261 = vrot.slane %v259, 7
      %v262 = vshll.u32 %v201, 16
      %v264 = vor.u32 %v261, %v262
      %v265 = vrot.slane %v261, 4
      %s282 = scalar_lea.vmem [#allocation2], 8
      %vm283 = vcmask 519168
      %vm284 = vsmask.f32 7938
      %vm285 = vmand %vm283, %vm284
      %v286 = vld [vmem:[%s282] sm:$0xf]
      %v287 = vsel %vm285, %v208, %v286
      %288 = vst [vmem:[%s282] sm:$0xf] %v287
      %vm289 = vcmask 516096
      %vm290 = vsmask.f32 256
      %vm291 = vmand %vm289, %vm290
      %v292 = vld [vmem:[%s282 + $0x4] sm:$0x1]
      %v293 = vsel %vm291, %v209, %v292
      %294 = vst [vmem:[%s282 + $0x4] sm:$0x1] %v293
      %v295 = vld [vmem:[%s282 + $0x8] sm:$0xf]
      %v296 = vsel %vm285, %v216, %v295
      %297 = vst [vmem:[%s282 + $0x8] sm:$0xf] %v296
      %v298 = vld [vmem:[%s282 + $0xc] sm:$0x1]
      %v299 = vsel %vm291, %v217, %v298
      %300 = vst [vmem:[%s282 + $0xc] sm:$0x1] %v299
      %v301 = vld [vmem:[%s282 + $0x10] sm:$0xf]
      %v302 = vsel %vm285, %v224, %v301
      %303 = vst [vmem:[%s282 + $0x10] sm:$0xf] %v302
      %v304 = vld [vmem:[%s282 + $0x14] sm:$0x1]
      %v305 = vsel %vm291, %v225, %v304
      %306 = vst [vmem:[%s282 + $0x14] sm:$0x1] %v305
      %v307 = vld [vmem:[%s282 + $0x18] sm:$0xf]
      %v308 = vsel %vm285, %v232, %v307
      %309 = vst [vmem:[%s282 + $0x18] sm:$0xf] %v308
      %v310 = vld [vmem:[%s282 + $0x1c] sm:$0x1]
      %v311 = vsel %vm291, %v233, %v310
      %312 = vst [vmem:[%s282 + $0x1c] sm:$0x1] %v311
      %v313 = vld [vmem:[%s282 + $0x20] sm:$0xf]
      %v314 = vsel %vm285, %v240, %v313
      %315 = vst [vmem:[%s282 + $0x20] sm:$0xf] %v314
      %v316 = vld [vmem:[%s282 + $0x24] sm:$0x1]
      %v317 = vsel %vm291, %v241, %v316
      %318 = vst [vmem:[%s282 + $0x24] sm:$0x1] %v317
      %v319 = vld [vmem:[%s282 + $0x28] sm:$0xf]
      %v320 = vsel %vm285, %v248, %v319
      %321 = vst [vmem:[%s282 + $0x28] sm:$0xf] %v320
      %v322 = vld [vmem:[%s282 + $0x2c] sm:$0x1]
      %v323 = vsel %vm291, %v249, %v322
      %324 = vst [vmem:[%s282 + $0x2c] sm:$0x1] %v323
      %v325 = vld [vmem:[%s282 + $0x30] sm:$0xf]
      %v326 = vsel %vm285, %v256, %v325
      %327 = vst [vmem:[%s282 + $0x30] sm:$0xf] %v326
      %v328 = vld [vmem:[%s282 + $0x34] sm:$0x1]
      %v329 = vsel %vm291, %v257, %v328
      %330 = vst [vmem:[%s282 + $0x34] sm:$0x1] %v329
      %v331 = vld [vmem:[%s282 + $0x38] sm:$0xf]
      %v332 = vsel %vm285, %v264, %v331
      %333 = vst [vmem:[%s282 + $0x38] sm:$0xf] %v332
      %v334 = vld [vmem:[%s282 + $0x3c] sm:$0x1]
      %v335 = vsel %vm291, %v265, %v334
      %336 = vst [vmem:[%s282 + $0x3c] sm:$0x1] %v335
      %v337 = vld [vmem:[%s2] sm:$0x1]
      %v338 = vld [vmem:[#allocation2] sm:$0xf]
      %v339 = vld [vmem:[#allocation2 + $0x8] sm:$0xf]
      %v340 = vld [vmem:[#allocation2 + $0x10] sm:$0xf]
      %v341 = vld [vmem:[#allocation2 + $0x18] sm:$0xf]
      %v342 = vld [vmem:[#allocation2 + $0x20] sm:$0xf]
      %v343 = vld [vmem:[#allocation2 + $0x28] sm:$0xf]
      %v344 = vld [vmem:[#allocation2 + $0x30] sm:$0xf]
      %v345 = vld [vmem:[#allocation2 + $0x38] sm:$0xf]
      %v346 = vld [vmem:[#allocation2 + $0x4] sm:$0x1]
      %v347 = vld [vmem:[#allocation2 + $0xc] sm:$0x1]
      %v348 = vld [vmem:[#allocation2 + $0x14] sm:$0x1]
      %v349 = vld [vmem:[#allocation2 + $0x1c] sm:$0x1]
      %v350 = vld [vmem:[#allocation2 + $0x24] sm:$0x1]
      %v351 = vld [vmem:[#allocation2 + $0x2c] sm:$0x1]
      %v352 = vld [vmem:[#allocation2 + $0x34] sm:$0x1]
      %v353 = vld [vmem:[#allocation2 + $0x3c] sm:$0x1]
      %v354 = vld [vmem:[#allocation2] sm:$0xe]
      %v355 = vld [vmem:[#allocation2 + $0x8] sm:$0xe]
      %v356 = vld [vmem:[#allocation2 + $0x10] sm:$0xe]
      %v357 = vld [vmem:[#allocation2 + $0x18] sm:$0xe]
      %v358 = vld [vmem:[#allocation2 + $0x20] sm:$0xe]
      %v359 = vld [vmem:[#allocation2 + $0x28] sm:$0xe]
      %v360 = vld [vmem:[#allocation2 + $0x30] sm:$0xe]
      %v361 = vld [vmem:[#allocation2 + $0x38] sm:$0xe]
      %v378 = vunpack.c.l.b16 %v338
      %v379 = vunpack.c.l.b16 %v346
      %v380 = vunpack.c.l.b16 %v339
      %v381 = vunpack.c.l.b16 %v347
      %v382 = vunpack.c.l.b16 %v340
      %v383 = vunpack.c.l.b16 %v348
      %v384 = vunpack.c.l.b16 %v341
      %v385 = vunpack.c.l.b16 %v349
      %v386 = vunpack.c.l.b16 %v342
      %v387 = vunpack.c.l.b16 %v350
      %v388 = vunpack.c.l.b16 %v343
      %v389 = vunpack.c.l.b16 %v351
      %v390 = vunpack.c.l.b16 %v344
      %v391 = vunpack.c.l.b16 %v352
      %v392 = vunpack.c.l.b16 %v345
      %v393 = vunpack.c.l.b16 %v353
      %v394 = vpack.c.b16 %v379, %v378
      %v395 = vpack.c.b16 %v381, %v380
      %v396 = vpack.c.b16 %v383, %v382
      %v397 = vpack.c.b16 %v385, %v384
      %v398 = vpack.c.b16 %v387, %v386
      %v399 = vpack.c.b16 %v389, %v388
      %v400 = vpack.c.b16 %v391, %v390
      %v401 = vpack.c.b16 %v393, %v392
      %v403 = vshrl.u32 %v394, 16
      %v405 = vshll.u32 %v394, 16
      %v407 = vrot.slane %v405, 1
      %v408 = vor.u32 %v403, %v407
      %v410 = vshrl.u32 %v395, 16
      %v412 = vshll.u32 %v395, 16
      %v414 = vrot.slane %v412, 1
      %v415 = vor.u32 %v410, %v414
      %v417 = vshrl.u32 %v396, 16
      %v419 = vshll.u32 %v396, 16
      %v421 = vrot.slane %v419, 1
      %v422 = vor.u32 %v417, %v421
      %v424 = vshrl.u32 %v397, 16
      %v426 = vshll.u32 %v397, 16
      %v428 = vrot.slane %v426, 1
      %v429 = vor.u32 %v424, %v428
      %v431 = vshrl.u32 %v398, 16
      %v433 = vshll.u32 %v398, 16
      %v435 = vrot.slane %v433, 1
      %v436 = vor.u32 %v431, %v435
      %v438 = vshrl.u32 %v399, 16
      %v440 = vshll.u32 %v399, 16
      %v442 = vrot.slane %v440, 1
      %v443 = vor.u32 %v438, %v442
      %v445 = vshrl.u32 %v400, 16
      %v447 = vshll.u32 %v400, 16
      %v449 = vrot.slane %v447, 1
      %v450 = vor.u32 %v445, %v449
      %v452 = vshrl.u32 %v401, 16
      %v454 = vshll.u32 %v401, 16
      %v456 = vrot.slane %v454, 1
      %v457 = vor.u32 %v452, %v456
      %458 = vrot.lane.b32.xlu0 %v408, 64
      %v459 = vpop.permute.xlu0 %458
      %460 = vrot.lane.b32.xlu0 %v415, 64
      %v461 = vpop.permute.xlu0 %460
      %462 = vrot.lane.b32.xlu0 %v422, 64
      %v463 = vpop.permute.xlu0 %462
      %464 = vrot.lane.b32.xlu0 %v429, 64
      %v465 = vpop.permute.xlu0 %464
      %466 = vrot.lane.b32.xlu0 %v436, 64
      %v467 = vpop.permute.xlu0 %466
      %468 = vrot.lane.b32.xlu0 %v443, 64
      %v469 = vpop.permute.xlu0 %468
      %470 = vrot.lane.b32.xlu0 %v450, 64
      %v471 = vpop.permute.xlu0 %470
      %472 = vrot.lane.b32.xlu0 %v457, 64
      %v473 = vpop.permute.xlu0 %472
      %v482 = vunpack.c.l.b16 %v354
      %v483 = vunpack.c.l.b16 %v355
      %v484 = vunpack.c.l.b16 %v356
      %v485 = vunpack.c.l.b16 %v357
      %v486 = vunpack.c.l.b16 %v358
      %v487 = vunpack.c.l.b16 %v359
      %v488 = vunpack.c.l.b16 %v360
      %v489 = vunpack.c.l.b16 %v361
      %v490 = vpack.c.b16 %v379, %v482
      %v491 = vpack.c.b16 %v381, %v483
      %v492 = vpack.c.b16 %v383, %v484
      %v493 = vpack.c.b16 %v385, %v485
      %v494 = vpack.c.b16 %v387, %v486
      %v495 = vpack.c.b16 %v389, %v487
      %v496 = vpack.c.b16 %v391, %v488
      %v497 = vpack.c.b16 %v393, %v489
      %v498 = vrot.slane %v490, 1
      %v499 = vrot.slane %v491, 1
      %v500 = vrot.slane %v492, 1
      %v501 = vrot.slane %v493, 1
      %v502 = vrot.slane %v494, 1
      %v503 = vrot.slane %v495, 1
      %v504 = vrot.slane %v496, 1
      %v505 = vrot.slane %v497, 1
      %vm506 = vcmask 523264
      %v509 = vsel %vm506, %v338, %v459
      %v512 = vsel %vm506, %v339, %v461
      %v515 = vsel %vm506, %v340, %v463
      %v518 = vsel %vm506, %v341, %v465
      %v521 = vsel %vm506, %v342, %v467
      %v524 = vsel %vm506, %v343, %v469
      %v527 = vsel %vm506, %v344, %v471
      %v530 = vsel %vm506, %v345, %v473
      %v539 = vunpack.c.l.b16 %v509
      %v540 = vunpack.c.l.b16 %v498
      %v541 = vunpack.c.l.b16 %v512
      %v542 = vunpack.c.l.b16 %v499
      %v543 = vunpack.c.l.b16 %v515
      %v544 = vunpack.c.l.b16 %v500
      %v545 = vunpack.c.l.b16 %v518
      %v546 = vunpack.c.l.b16 %v501
      %v547 = vunpack.c.l.b16 %v521
      %v548 = vunpack.c.l.b16 %v502
      %v549 = vunpack.c.l.b16 %v524
      %v550 = vunpack.c.l.b16 %v503
      %v551 = vunpack.c.l.b16 %v527
      %v552 = vunpack.c.l.b16 %v504
      %v553 = vunpack.c.l.b16 %v530
      %v554 = vunpack.c.l.b16 %v505
      %v555 = vld [vmem:[%s1] sm:$0xf]
      %v556 = vld [vmem:[%s1 + $0x4] sm:$0xf]
      %v557 = vld [vmem:[%s1 + $0x8] sm:$0xf]
      %v558 = vld [vmem:[%s1 + $0xc] sm:$0xf]
      %v559 = vld [vmem:[%s1 + $0x10] sm:$0xf]
      %v560 = vld [vmem:[%s1 + $0x14] sm:$0xf]
      %v561 = vld [vmem:[%s1 + $0x18] sm:$0xf]
      %v562 = vld [vmem:[%s1 + $0x1c] sm:$0xf]
      %v563 = vld [vmem:[%s1 + $0x20] sm:$0xf]
      %v564 = vld [vmem:[%s1 + $0x24] sm:$0xf]
      %v565 = vld [vmem:[%s1 + $0x28] sm:$0xf]
      %v566 = vld [vmem:[%s1 + $0x2c] sm:$0xf]
      %v567 = vld [vmem:[%s1 + $0x30] sm:$0xf]
      %v568 = vld [vmem:[%s1 + $0x34] sm:$0xf]
      %v569 = vld [vmem:[%s1 + $0x38] sm:$0xf]
      %v570 = vld [vmem:[%s1 + $0x3c] sm:$0xf]
      %v571 = vld [vmem:[%s1 + $0x40] sm:$0xf]
      %v572 = vld [vmem:[%s1 + $0x44] sm:$0xf]
      %v573 = vld [vmem:[%s1 + $0x48] sm:$0xf]
      %v574 = vld [vmem:[%s1 + $0x4c] sm:$0xf]
      %v575 = vld [vmem:[%s1 + $0x50] sm:$0xf]
      %v576 = vld [vmem:[%s1 + $0x54] sm:$0xf]
      %v577 = vld [vmem:[%s1 + $0x58] sm:$0xf]
      %v578 = vld [vmem:[%s1 + $0x5c] sm:$0xf]
      %v579 = vld [vmem:[%s282] sm:$0xf]
      %v580 = vld [vmem:[%s282 + $0x8] sm:$0xf]
      %v581 = vld [vmem:[%s282 + $0x10] sm:$0xf]
      %v582 = vld [vmem:[%s282 + $0x18] sm:$0xf]
      %v583 = vld [vmem:[%s282 + $0x20] sm:$0xf]
      %v584 = vld [vmem:[%s282 + $0x28] sm:$0xf]
      %v585 = vld [vmem:[%s282 + $0x30] sm:$0xf]
      %v586 = vld [vmem:[%s282 + $0x38] sm:$0xf]
      %v587 = vld [vmem:[%s282 + $0x4] sm:$0x1]
      %v588 = vld [vmem:[%s282 + $0xc] sm:$0x1]
      %v589 = vld [vmem:[%s282 + $0x14] sm:$0x1]
      %v590 = vld [vmem:[%s282 + $0x1c] sm:$0x1]
      %v591 = vld [vmem:[%s282 + $0x24] sm:$0x1]
      %v592 = vld [vmem:[%s282 + $0x2c] sm:$0x1]
      %v593 = vld [vmem:[%s282 + $0x34] sm:$0x1]
      %v594 = vld [vmem:[%s282 + $0x3c] sm:$0x1]
      %v595 = vld [vmem:[%s282] sm:$0xe]
      %v596 = vld [vmem:[%s282 + $0x8] sm:$0xe]
      %v597 = vld [vmem:[%s282 + $0x10] sm:$0xe]
      %v598 = vld [vmem:[%s282 + $0x18] sm:$0xe]
      %v599 = vld [vmem:[%s282 + $0x20] sm:$0xe]
      %v600 = vld [vmem:[%s282 + $0x28] sm:$0xe]
      %v601 = vld [vmem:[%s282 + $0x30] sm:$0xe]
      %v602 = vld [vmem:[%s282 + $0x38] sm:$0xe]
      %v619 = vunpack.c.l.b16 %v579
      %v620 = vunpack.c.l.b16 %v587
      %v621 = vunpack.c.l.b16 %v580
      %v622 = vunpack.c.l.b16 %v588
      %v623 = vunpack.c.l.b16 %v581
      %v624 = vunpack.c.l.b16 %v589
      %v625 = vunpack.c.l.b16 %v582
      %v626 = vunpack.c.l.b16 %v590
      %v627 = vunpack.c.l.b16 %v583
      %v628 = vunpack.c.l.b16 %v591
      %v629 = vunpack.c.l.b16 %v584
      %v630 = vunpack.c.l.b16 %v592
      %v631 = vunpack.c.l.b16 %v585
      %v632 = vunpack.c.l.b16 %v593
      %v633 = vunpack.c.l.b16 %v586
      %v634 = vunpack.c.l.b16 %v594
      %v635 = vpack.c.b16 %v620, %v619
      %v636 = vpack.c.b16 %v622, %v621
      %v637 = vpack.c.b16 %v624, %v623
      %v638 = vpack.c.b16 %v626, %v625
      %v639 = vpack.c.b16 %v628, %v627
      %v640 = vpack.c.b16 %v630, %v629
      %v641 = vpack.c.b16 %v632, %v631
      %v642 = vpack.c.b16 %v634, %v633
      %v644 = vshrl.u32 %v635, 16
      %v646 = vshll.u32 %v635, 16
      %v648 = vrot.slane %v646, 1
      %v649 = vor.u32 %v644, %v648
      %v651 = vshrl.u32 %v636, 16
      %v653 = vshll.u32 %v636, 16
      %v655 = vrot.slane %v653, 1
      %v656 = vor.u32 %v651, %v655
      %v658 = vshrl.u32 %v637, 16
      %v660 = vshll.u32 %v637, 16
      %v662 = vrot.slane %v660, 1
      %v663 = vor.u32 %v658, %v662
      %v665 = vshrl.u32 %v638, 16
      %v667 = vshll.u32 %v638, 16
      %v669 = vrot.slane %v667, 1
      %v670 = vor.u32 %v665, %v669
      %v672 = vshrl.u32 %v639, 16
      %v674 = vshll.u32 %v639, 16
      %v676 = vrot.slane %v674, 1
      %v677 = vor.u32 %v672, %v676
      %v679 = vshrl.u32 %v640, 16
      %v681 = vshll.u32 %v640, 16
      %v683 = vrot.slane %v681, 1
      %v684 = vor.u32 %v679, %v683
      %v686 = vshrl.u32 %v641, 16
      %v688 = vshll.u32 %v641, 16
      %v690 = vrot.slane %v688, 1
      %v691 = vor.u32 %v686, %v690
      %v693 = vshrl.u32 %v642, 16
      %v695 = vshll.u32 %v642, 16
      %v697 = vrot.slane %v695, 1
      %v698 = vor.u32 %v693, %v697
      %699 = vrot.lane.b32.xlu0 %v649, 64
      %v700 = vpop.permute.xlu0 %699
      %701 = vrot.lane.b32.xlu0 %v656, 64
      %v702 = vpop.permute.xlu0 %701
      %703 = vrot.lane.b32.xlu0 %v663, 64
      %v704 = vpop.permute.xlu0 %703
      %705 = vrot.lane.b32.xlu0 %v670, 64
      %v706 = vpop.permute.xlu0 %705
      %707 = vrot.lane.b32.xlu0 %v677, 64
      %v708 = vpop.permute.xlu0 %707
      %709 = vrot.lane.b32.xlu0 %v684, 64
      %v710 = vpop.permute.xlu0 %709
      %711 = vrot.lane.b32.xlu0 %v691, 64
      %v712 = vpop.permute.xlu0 %711
      %713 = vrot.lane.b32.xlu0 %v698, 64
      %v714 = vpop.permute.xlu0 %713
      %v723 = vunpack.c.l.b16 %v595
      %v724 = vunpack.c.l.b16 %v596
      %v725 = vunpack.c.l.b16 %v597
      %v726 = vunpack.c.l.b16 %v598
      %v727 = vunpack.c.l.b16 %v599
      %v728 = vunpack.c.l.b16 %v600
      %v729 = vunpack.c.l.b16 %v601
      %v730 = vunpack.c.l.b16 %v602
      %v731 = vpack.c.b16 %v620, %v723
      %v732 = vpack.c.b16 %v622, %v724
      %v733 = vpack.c.b16 %v624, %v725
      %v734 = vpack.c.b16 %v626, %v726
      %v735 = vpack.c.b16 %v628, %v727
      %v736 = vpack.c.b16 %v630, %v728
      %v737 = vpack.c.b16 %v632, %v729
      %v738 = vpack.c.b16 %v634, %v730
      %v739 = vrot.slane %v731, 1
      %v740 = vrot.slane %v732, 1
      %v741 = vrot.slane %v733, 1
      %v742 = vrot.slane %v734, 1
      %v743 = vrot.slane %v735, 1
      %v744 = vrot.slane %v736, 1
      %v745 = vrot.slane %v737, 1
      %v746 = vrot.slane %v738, 1
      %v749 = vsel %vm506, %v579, %v700
      %v752 = vsel %vm506, %v580, %v702
      %v755 = vsel %vm506, %v581, %v704
      %v758 = vsel %vm506, %v582, %v706
      %v761 = vsel %vm506, %v583, %v708
      %v764 = vsel %vm506, %v584, %v710
      %v767 = vsel %vm506, %v585, %v712
      %v770 = vsel %vm506, %v586, %v714
      %v779 = vunpack.c.l.b16 %v749
      %v780 = vunpack.c.l.b16 %v739
      %v781 = vunpack.c.l.b16 %v752
      %v782 = vunpack.c.l.b16 %v740
      %v783 = vunpack.c.l.b16 %v755
      %v784 = vunpack.c.l.b16 %v741
      %v785 = vunpack.c.l.b16 %v758
      %v786 = vunpack.c.l.b16 %v742
      %v787 = vunpack.c.l.b16 %v761
      %v788 = vunpack.c.l.b16 %v743
      %v789 = vunpack.c.l.b16 %v764
      %v790 = vunpack.c.l.b16 %v744
      %v791 = vunpack.c.l.b16 %v767
      %v792 = vunpack.c.l.b16 %v745
      %v793 = vunpack.c.l.b16 %v770
      %v794 = vunpack.c.l.b16 %v746
      %s795 = scalar_lea.vmem %s1, 96
      %v796 = vld [vmem:[%s795] sm:$0xf]
      %v797 = vld [vmem:[%s795 + $0x4] sm:$0xf]
      %v798 = vld [vmem:[%s795 + $0x8] sm:$0xf]
      %v799 = vld [vmem:[%s795 + $0xc] sm:$0xf]
      %v800 = vld [vmem:[%s795 + $0x10] sm:$0xf]
      %v801 = vld [vmem:[%s795 + $0x14] sm:$0xf]
      %v802 = vld [vmem:[%s795 + $0x18] sm:$0xf]
      %v803 = vld [vmem:[%s795 + $0x1c] sm:$0xf]
      %v804 = vld [vmem:[%s795 + $0x20] sm:$0xf]
      %v805 = vld [vmem:[%s795 + $0x24] sm:$0xf]
      %v806 = vld [vmem:[%s795 + $0x28] sm:$0xf]
      %v807 = vld [vmem:[%s795 + $0x2c] sm:$0xf]
      %v808 = vld [vmem:[%s795 + $0x30] sm:$0xf]
      %v809 = vld [vmem:[%s795 + $0x34] sm:$0xf]
      %v810 = vld [vmem:[%s795 + $0x38] sm:$0xf]
      %v811 = vld [vmem:[%s795 + $0x3c] sm:$0xf]
      %v812 = vld [vmem:[%s795 + $0x40] sm:$0xf]
      %v813 = vld [vmem:[%s795 + $0x44] sm:$0xf]
      %v814 = vld [vmem:[%s795 + $0x48] sm:$0xf]
      %v815 = vld [vmem:[%s795 + $0x4c] sm:$0xf]
      %v816 = vld [vmem:[%s795 + $0x50] sm:$0xf]
      %v817 = vld [vmem:[%s795 + $0x54] sm:$0xf]
      %v818 = vld [vmem:[%s795 + $0x58] sm:$0xf]
      %v819 = vld [vmem:[%s795 + $0x5c] sm:$0xf]
      %v820 = vpack.c.b16 %v781, %v779
      %v821 = vpack.c.b16 %v782, %v780
      %v822 = vpack.c.b16 %v785, %v783
      %v823 = vpack.c.b16 %v786, %v784
      %v824 = vpack.c.b16 %v789, %v787
      %v825 = vpack.c.b16 %v790, %v788
      %v826 = vpack.c.b16 %v793, %v791
      %v827 = vpack.c.b16 %v794, %v792
      %v856 = vunpack.c.l.b16 %v796
      %v857 = vunpack.c.l.b16 %v797
      %v858 = vunpack.c.l.b16 %v798
      %v859 = vunpack.c.l.b16 %v799
      %v860 = vunpack.c.l.b16 %v800
      %v861 = vunpack.c.l.b16 %v801
      %v862 = vunpack.c.l.b16 %v802
      %v863 = vunpack.c.l.b16 %v803
      %v864 = vunpack.c.l.b16 %v804
      %v865 = vunpack.c.l.b16 %v805
      %v866 = vunpack.c.l.b16 %v806
      %v867 = vunpack.c.l.b16 %v807
      %v868 = vunpack.c.l.b16 %v808
      %v869 = vunpack.c.l.b16 %v809
      %v870 = vunpack.c.l.b16 %v810
      %v871 = vunpack.c.l.b16 %v811
      %v872 = vunpack.c.l.b16 %v812
      %v873 = vunpack.c.l.b16 %v813
      %v874 = vunpack.c.l.b16 %v814
      %v875 = vunpack.c.l.b16 %v815
      %v876 = vunpack.c.l.b16 %v816
      %v877 = vunpack.c.l.b16 %v817
      %v878 = vunpack.c.l.b16 %v818
      %v879 = vunpack.c.l.b16 %v819
      %v880 = vpack.c.b16 %v857, %v856
      %v881 = vpack.c.b16 %v859, %v858
      %v882 = vpack.c.b16 %v861, %v860
      %v883 = vpack.c.b16 %v863, %v862
      %v884 = vpack.c.b16 %v865, %v864
      %v885 = vpack.c.b16 %v867, %v866
      %v886 = vpack.c.b16 %v869, %v868
      %v887 = vpack.c.b16 %v871, %v870
      %v888 = vpack.c.b16 %v873, %v872
      %v889 = vpack.c.b16 %v875, %v874
      %v890 = vpack.c.b16 %v877, %v876
      %v891 = vpack.c.b16 %v879, %v878
      %v905 = vsel %vm506, %v821, 0
      %v908 = vsel %vm506, %v823, 0
      %v911 = vsel %vm506, %v825, 0
      %v914 = vsel %vm506, %v827, 0
      %916 = vmatprep.subr.bf16.mxu0 0
      %917 = vmatpush1.bf16.msra.mxu0 %v880
      %918 = vmatprep.subr.bf16.mxu0 0
      %919 = vmatpush1.bf16.msra.mxu0 %v881
      %920 = vmatprep.subr.bf16.mxu0 0
      %921 = vmatpush1.bf16.msra.mxu0 %v882
      %922 = vmatprep.subr.bf16.mxu0 0
      %923 = vmatpush1.bf16.msra.mxu0 %v883
      %924 = vmatprep.subr.bf16.mxu0 0
      %925 = vmatpush1.bf16.msra.mxu0 %v884
      %926 = vmatprep.subr.bf16.mxu0 0
      %927 = vmatpush1.bf16.msra.mxu0 %v885
      %928 = vmatprep.subr.bf16.mxu0 0
      %929 = vmatpush1.bf16.msra.mxu0 %v886
      %930 = vmatprep.subr.bf16.mxu0 0
      %931 = vmatpush1.bf16.msra.mxu0 %v887
      %932 = vmatprep.subr.bf16.mxu0 0
      %933 = vmatpush1.bf16.msra.mxu0 %v888
      %934 = vmatprep.subr.bf16.mxu0 0
      %935 = vmatpush1.bf16.msra.mxu0 %v889
      %936 = vmatprep.subr.bf16.mxu0 0
      %937 = vmatpush1.bf16.msra.mxu0 %v890
      %938 = vmatprep.subr.bf16.mxu0 0
      %939 = vmatpush1.bf16.msra.mxu0 %v891
      %940 = vmatprep.subr.bf16.mxu0 0
      %941 = vmatpush1.bf16.msra.mxu0 0
      %942 = vmatprep.subr.bf16.mxu0 0
      %943 = vmatpush1.bf16.msra.mxu0 0
      %944 = vmatprep.subr.bf16.mxu0 0
      %945 = vmatpush1.bf16.msra.mxu0 0
      %946 = vmatprep.subr.bf16.mxu0 0
      %947 = vmatpush1.bf16.msra.mxu0 0
      %948 = vmatprep.mubr.bf16.mxu0 %v905
      %949 = vmatmul.mubr.bf16.gmra.mrb[0].mxu0 %v820
      %v950 = vpop.f32.mrb[0].mxu0
      %v951 = vadd.f32 0.0, %v950
      %v952 = vpop.f32.mrb[0].mxu0
      %v953 = vpop.f32.mrb[0].mxu0
      %v954 = vadd.f32 0.0, %v953
      %v955 = vpop.f32.mrb[0].mxu0
      %956 = vmatprep.mubr.bf16.mxu0 %v908
      %957 = vmatmul.mubr.bf16.gmra.mrb[0].mxu0 %v822
      %v958 = vpop.f32.mrb[0].mxu0
      %v959 = vadd.f32 0.0, %v958
      %v960 = vpop.f32.mrb[0].mxu0
      %v961 = vpop.f32.mrb[0].mxu0
      %v962 = vadd.f32 0.0, %v961
      %v963 = vpop.f32.mrb[0].mxu0
      %964 = vmatprep.mubr.bf16.mxu0 %v911
      %965 = vmatmul.mubr.bf16.gmra.mrb[0].mxu0 %v824
      %v966 = vpop.f32.mrb[0].mxu0
      %v967 = vadd.f32 0.0, %v966
      %v968 = vpop.f32.mrb[0].mxu0
      %v969 = vpop.f32.mrb[0].mxu0
      %v970 = vadd.f32 0.0, %v969
      %v971 = vpop.f32.mrb[0].mxu0
      %972 = vmatprep.mubr.bf16.mxu0 %v914
      %973 = vmatmul.mubr.bf16.gmra.mrb[0].mxu0 %v826
      %v974 = vpop.f32.mrb[0].mxu0
      %v975 = vadd.f32 0.0, %v974
      %v976 = vpop.f32.mrb[0].mxu0
      %v977 = vpop.f32.mrb[0].mxu0
      %v978 = vadd.f32 0.0, %v977
      %v979 = vpop.f32.mrb[0].mxu0
      %980 = vdwg.mxu0
      %v981 = vpack.c.b16 %v541, %v539
      %v982 = vpack.c.b16 %v542, %v540
      %v983 = vpack.c.b16 %v545, %v543
      %v984 = vpack.c.b16 %v546, %v544
      %v985 = vpack.c.b16 %v549, %v547
      %v986 = vpack.c.b16 %v550, %v548
      %v987 = vpack.c.b16 %v553, %v551
      %v988 = vpack.c.b16 %v554, %v552
      %v1017 = vunpack.c.l.b16 %v555
      %v1018 = vunpack.c.l.b16 %v556
      %v1019 = vunpack.c.l.b16 %v557
      %v1020 = vunpack.c.l.b16 %v558
      %v1021 = vunpack.c.l.b16 %v559
      %v1022 = vunpack.c.l.b16 %v560
      %v1023 = vunpack.c.l.b16 %v561
      %v1024 = vunpack.c.l.b16 %v562
      %v1025 = vunpack.c.l.b16 %v563
      %v1026 = vunpack.c.l.b16 %v564
      %v1027 = vunpack.c.l.b16 %v565
      %v1028 = vunpack.c.l.b16 %v566
      %v1029 = vunpack.c.l.b16 %v567
      %v1030 = vunpack.c.l.b16 %v568
      %v1031 = vunpack.c.l.b16 %v569
      %v1032 = vunpack.c.l.b16 %v570
      %v1033 = vunpack.c.l.b16 %v571
      %v1034 = vunpack.c.l.b16 %v572
      %v1035 = vunpack.c.l.b16 %v573
      %v1036 = vunpack.c.l.b16 %v574
      %v1037 = vunpack.c.l.b16 %v575
      %v1038 = vunpack.c.l.b16 %v576
      %v1039 = vunpack.c.l.b16 %v577
      %v1040 = vunpack.c.l.b16 %v578
      %v1041 = vpack.c.b16 %v1018, %v1017
      %v1042 = vpack.c.b16 %v1020, %v1019
      %v1043 = vpack.c.b16 %v1022, %v1021
      %v1044 = vpack.c.b16 %v1024, %v1023
      %v1045 = vpack.c.b16 %v1026, %v1025
      %v1046 = vpack.c.b16 %v1028, %v1027
      %v1047 = vpack.c.b16 %v1030, %v1029
      %v1048 = vpack.c.b16 %v1032, %v1031
      %v1049 = vpack.c.b16 %v1034, %v1033
      %v1050 = vpack.c.b16 %v1036, %v1035
      %v1051 = vpack.c.b16 %v1038, %v1037
      %v1052 = vpack.c.b16 %v1040, %v1039
      %v1066 = vsel %vm506, %v982, 0
      %v1069 = vsel %vm506, %v984, 0
      %v1072 = vsel %vm506, %v986, 0
      %v1075 = vsel %vm506, %v988, 0
      %1077 = vmatprep.subr.bf16.mxu0 0
      %1078 = vmatpush1.bf16.msra.mxu0 %v1041
      %1079 = vmatprep.subr.bf16.mxu0 0
      %1080 = vmatpush1.bf16.msra.mxu0 %v1042
      %1081 = vmatprep.subr.bf16.mxu0 0
      %1082 = vmatpush1.bf16.msra.mxu0 %v1043
      %1083 = vmatprep.subr.bf16.mxu0 0
      %1084 = vmatpush1.bf16.msra.mxu0 %v1044
      %1085 = vmatprep.subr.bf16.mxu0 0
      %1086 = vmatpush1.bf16.msra.mxu0 %v1045
      %1087 = vmatprep.subr.bf16.mxu0 0
      %1088 = vmatpush1.bf16.msra.mxu0 %v1046
      %1089 = vmatprep.subr.bf16.mxu0 0
      %1090 = vmatpush1.bf16.msra.mxu0 %v1047
      %1091 = vmatprep.subr.bf16.mxu0 0
      %1092 = vmatpush1.bf16.msra.mxu0 %v1048
      %1093 = vmatprep.subr.bf16.mxu0 0
      %1094 = vmatpush1.bf16.msra.mxu0 %v1049
      %1095 = vmatprep.subr.bf16.mxu0 0
      %1096 = vmatpush1.bf16.msra.mxu0 %v1050
      %1097 = vmatprep.subr.bf16.mxu0 0
      %1098 = vmatpush1.bf16.msra.mxu0 %v1051
      %1099 = vmatprep.subr.bf16.mxu0 0
      %1100 = vmatpush1.bf16.msra.mxu0 %v1052
      %1101 = vmatprep.subr.bf16.mxu0 0
      %1102 = vmatpush1.bf16.msra.mxu0 0
      %1103 = vmatprep.subr.bf16.mxu0 0
      %1104 = vmatpush1.bf16.msra.mxu0 0
      %1105 = vmatprep.subr.bf16.mxu0 0
      %1106 = vmatpush1.bf16.msra.mxu0 0
      %1107 = vmatprep.subr.bf16.mxu0 0
      %1108 = vmatpush1.bf16.msra.mxu0 0
      %1109 = vmatprep.mubr.bf16.mxu0 %v1066
      %1110 = vmatmul.mubr.bf16.gmra.mrb[0].mxu0 %v981
      %v1111 = vpop.f32.mrb[0].mxu0
      %v1112 = vadd.f32 %v951, %v1111
      %v1113 = vpop.f32.mrb[0].mxu0
      %v1114 = vpop.f32.mrb[0].mxu0
      %v1115 = vadd.f32 %v954, %v1114
      %v1116 = vpop.f32.mrb[0].mxu0
      %1117 = vmatprep.mubr.bf16.mxu0 %v1069
      %1118 = vmatmul.mubr.bf16.gmra.mrb[0].mxu0 %v983
      %v1119 = vpop.f32.mrb[0].mxu0
      %v1120 = vadd.f32 %v959, %v1119
      %v1121 = vpop.f32.mrb[0].mxu0
      %v1122 = vpop.f32.mrb[0].mxu0
      %v1123 = vadd.f32 %v962, %v1122
      %v1124 = vpop.f32.mrb[0].mxu0
      %1125 = vmatprep.mubr.bf16.mxu0 %v1072
      %1126 = vmatmul.mubr.bf16.gmra.mrb[0].mxu0 %v985
      %v1127 = vpop.f32.mrb[0].mxu0
      %v1128 = vadd.f32 %v967, %v1127
      %v1129 = vpop.f32.mrb[0].mxu0
      %v1130 = vpop.f32.mrb[0].mxu0
      %v1131 = vadd.f32 %v970, %v1130
      %v1132 = vpop.f32.mrb[0].mxu0
      %1133 = vmatprep.mubr.bf16.mxu0 %v1075
      %1134 = vmatmul.mubr.bf16.gmra.mrb[0].mxu0 %v987
      %v1135 = vpop.f32.mrb[0].mxu0
      %v1136 = vadd.f32 %v975, %v1135
      %v1137 = vpop.f32.mrb[0].mxu0
      %v1138 = vpop.f32.mrb[0].mxu0
      %v1139 = vadd.f32 %v978, %v1138
      %v1140 = vpop.f32.mrb[0].mxu0
      %1141 = vdwg.mxu0
      %s1142 = scalar_lea.vmem [#allocation2], 16
      %v1143 = vld [vmem:[%s1142] sm:$0xf]
      %v1144 = vld [vmem:[%s1142 + $0x8] sm:$0xf]
      %v1145 = vld [vmem:[%s1142 + $0x10] sm:$0xf]
      %v1146 = vld [vmem:[%s1142 + $0x18] sm:$0xf]
      %v1147 = vld [vmem:[%s1142 + $0x20] sm:$0xf]
      %v1148 = vld [vmem:[%s1142 + $0x28] sm:$0xf]
      %v1149 = vld [vmem:[%s1142 + $0x30] sm:$0xf]
      %v1150 = vld [vmem:[%s1142 + $0x38] sm:$0xf]
      %v1151 = vld [vmem:[%s1142 + $0x4] sm:$0x1]
      %v1152 = vld [vmem:[%s1142 + $0xc] sm:$0x1]
      %v1153 = vld [vmem:[%s1142 + $0x14] sm:$0x1]
      %v1154 = vld [vmem:[%s1142 + $0x1c] sm:$0x1]
      %v1155 = vld [vmem:[%s1142 + $0x24] sm:$0x1]
      %v1156 = vld [vmem:[%s1142 + $0x2c] sm:$0x1]
      %v1157 = vld [vmem:[%s1142 + $0x34] sm:$0x1]
      %v1158 = vld [vmem:[%s1142 + $0x3c] sm:$0x1]
      %v1159 = vld [vmem:[%s1142] sm:$0xe]
      %v1160 = vld [vmem:[%s1142 + $0x8] sm:$0xe]
      %v1161 = vld [vmem:[%s1142 + $0x10] sm:$0xe]
      %v1162 = vld [vmem:[%s1142 + $0x18] sm:$0xe]
      %v1163 = vld [vmem:[%s1142 + $0x20] sm:$0xe]
      %v1164 = vld [vmem:[%s1142 + $0x28] sm:$0xe]
      %v1165 = vld [vmem:[%s1142 + $0x30] sm:$0xe]
      %v1166 = vld [vmem:[%s1142 + $0x38] sm:$0xe]
      %v1183 = vunpack.c.l.b16 %v1143
      %v1184 = vunpack.c.l.b16 %v1151
      %v1185 = vunpack.c.l.b16 %v1144
      %v1186 = vunpack.c.l.b16 %v1152
      %v1187 = vunpack.c.l.b16 %v1145
      %v1188 = vunpack.c.l.b16 %v1153
      %v1189 = vunpack.c.l.b16 %v1146
      %v1190 = vunpack.c.l.b16 %v1154
      %v1191 = vunpack.c.l.b16 %v1147
      %v1192 = vunpack.c.l.b16 %v1155
      %v1193 = vunpack.c.l.b16 %v1148
      %v1194 = vunpack.c.l.b16 %v1156
      %v1195 = vunpack.c.l.b16 %v1149
      %v1196 = vunpack.c.l.b16 %v1157
      %v1197 = vunpack.c.l.b16 %v1150
      %v1198 = vunpack.c.l.b16 %v1158
      %v1199 = vpack.c.b16 %v1184, %v1183
      %v1200 = vpack.c.b16 %v1186, %v1185
      %v1201 = vpack.c.b16 %v1188, %v1187
      %v1202 = vpack.c.b16 %v1190, %v1189
      %v1203 = vpack.c.b16 %v1192, %v1191
      %v1204 = vpack.c.b16 %v1194, %v1193
      %v1205 = vpack.c.b16 %v1196, %v1195
      %v1206 = vpack.c.b16 %v1198, %v1197
      %v1208 = vshrl.u32 %v1199, 16
      %v1210 = vshll.u32 %v1199, 16
      %v1212 = vrot.slane %v1210, 1
      %v1213 = vor.u32 %v1208, %v1212
      %v1215 = vshrl.u32 %v1200, 16
      %v1217 = vshll.u32 %v1200, 16
      %v1219 = vrot.slane %v1217, 1
      %v1220 = vor.u32 %v1215, %v1219
      %v1222 = vshrl.u32 %v1201, 16
      %v1224 = vshll.u32 %v1201, 16
      %v1226 = vrot.slane %v1224, 1
      %v1227 = vor.u32 %v1222, %v1226
      %v1229 = vshrl.u32 %v1202, 16
      %v1231 = vshll.u32 %v1202, 16
      %v1233 = vrot.slane %v1231, 1
      %v1234 = vor.u32 %v1229, %v1233
      %v1236 = vshrl.u32 %v1203, 16
      %v1238 = vshll.u32 %v1203, 16
      %v1240 = vrot.slane %v1238, 1
      %v1241 = vor.u32 %v1236, %v1240
      %v1243 = vshrl.u32 %v1204, 16
      %v1245 = vshll.u32 %v1204, 16
      %v1247 = vrot.slane %v1245, 1
      %v1248 = vor.u32 %v1243, %v1247
      %v1250 = vshrl.u32 %v1205, 16
      %v1252 = vshll.u32 %v1205, 16
      %v1254 = vrot.slane %v1252, 1
      %v1255 = vor.u32 %v1250, %v1254
      %v1257 = vshrl.u32 %v1206, 16
      %v1259 = vshll.u32 %v1206, 16
      %v1261 = vrot.slane %v1259, 1
      %v1262 = vor.u32 %v1257, %v1261
      %1263 = vrot.lane.b32.xlu0 %v1213, 64
      %v1264 = vpop.permute.xlu0 %1263
      %1265 = vrot.lane.b32.xlu0 %v1220, 64
      %v1266 = vpop.permute.xlu0 %1265
      %1267 = vrot.lane.b32.xlu0 %v1227, 64
      %v1268 = vpop.permute.xlu0 %1267
      %1269 = vrot.lane.b32.xlu0 %v1234, 64
      %v1270 = vpop.permute.xlu0 %1269
      %1271 = vrot.lane.b32.xlu0 %v1241, 64
      %v1272 = vpop.permute.xlu0 %1271
      %1273 = vrot.lane.b32.xlu0 %v1248, 64
      %v1274 = vpop.permute.xlu0 %1273
      %1275 = vrot.lane.b32.xlu0 %v1255, 64
      %v1276 = vpop.permute.xlu0 %1275
      %1277 = vrot.lane.b32.xlu0 %v1262, 64
      %v1278 = vpop.permute.xlu0 %1277
      %v1287 = vunpack.c.l.b16 %v1159
      %v1288 = vunpack.c.l.b16 %v1160
      %v1289 = vunpack.c.l.b16 %v1161
      %v1290 = vunpack.c.l.b16 %v1162
      %v1291 = vunpack.c.l.b16 %v1163
      %v1292 = vunpack.c.l.b16 %v1164
      %v1293 = vunpack.c.l.b16 %v1165
      %v1294 = vunpack.c.l.b16 %v1166
      %v1295 = vpack.c.b16 %v1184, %v1287
      %v1296 = vpack.c.b16 %v1186, %v1288
      %v1297 = vpack.c.b16 %v1188, %v1289
      %v1298 = vpack.c.b16 %v1190, %v1290
      %v1299 = vpack.c.b16 %v1192, %v1291
      %v1300 = vpack.c.b16 %v1194, %v1292
      %v1301 = vpack.c.b16 %v1196, %v1293
      %v1302 = vpack.c.b16 %v1198, %v1294
      %v1303 = vrot.slane %v1295, 1
      %v1304 = vrot.slane %v1296, 1
      %v1305 = vrot.slane %v1297, 1
      %v1306 = vrot.slane %v1298, 1
      %v1307 = vrot.slane %v1299, 1
      %v1308 = vrot.slane %v1300, 1
      %v1309 = vrot.slane %v1301, 1
      %v1310 = vrot.slane %v1302, 1
      %v1313 = vsel %vm506, %v1143, %v1264
      %v1316 = vsel %vm506, %v1144, %v1266
      %v1319 = vsel %vm506, %v1145, %v1268
      %v1322 = vsel %vm506, %v1146, %v1270
      %v1325 = vsel %vm506, %v1147, %v1272
      %v1328 = vsel %vm506, %v1148, %v1274
      %v1331 = vsel %vm506, %v1149, %v1276
      %v1334 = vsel %vm506, %v1150, %v1278
      %v1343 = vunpack.c.l.b16 %v1313
      %v1344 = vunpack.c.l.b16 %v1303
      %v1345 = vunpack.c.l.b16 %v1316
      %v1346 = vunpack.c.l.b16 %v1304
      %v1347 = vunpack.c.l.b16 %v1319
      %v1348 = vunpack.c.l.b16 %v1305
      %v1349 = vunpack.c.l.b16 %v1322
      %v1350 = vunpack.c.l.b16 %v1306
      %v1351 = vunpack.c.l.b16 %v1325
      %v1352 = vunpack.c.l.b16 %v1307
      %v1353 = vunpack.c.l.b16 %v1328
      %v1354 = vunpack.c.l.b16 %v1308
      %v1355 = vunpack.c.l.b16 %v1331
      %v1356 = vunpack.c.l.b16 %v1309
      %v1357 = vunpack.c.l.b16 %v1334
      %v1358 = vunpack.c.l.b16 %v1310
      %s1359 = scalar_lea.vmem %s1, 192
      %v1360 = vld [vmem:[%s1359] sm:$0xf]
      %v1361 = vld [vmem:[%s1359 + $0x4] sm:$0xf]
      %v1362 = vld [vmem:[%s1359 + $0x8] sm:$0xf]
      %v1363 = vld [vmem:[%s1359 + $0xc] sm:$0xf]
      %v1364 = vld [vmem:[%s1359 + $0x10] sm:$0xf]
      %v1365 = vld [vmem:[%s1359 + $0x14] sm:$0xf]
      %v1366 = vld [vmem:[%s1359 + $0x18] sm:$0xf]
      %v1367 = vld [vmem:[%s1359 + $0x1c] sm:$0xf]
      %v1368 = vld [vmem:[%s1359 + $0x20] sm:$0xf]
      %v1369 = vld [vmem:[%s1359 + $0x24] sm:$0xf]
      %v1370 = vld [vmem:[%s1359 + $0x28] sm:$0xf]
      %v1371 = vld [vmem:[%s1359 + $0x2c] sm:$0xf]
      %v1372 = vld [vmem:[%s1359 + $0x30] sm:$0xf]
      %v1373 = vld [vmem:[%s1359 + $0x34] sm:$0xf]
      %v1374 = vld [vmem:[%s1359 + $0x38] sm:$0xf]
      %v1375 = vld [vmem:[%s1359 + $0x3c] sm:$0xf]
      %v1376 = vld [vmem:[%s1359 + $0x40] sm:$0xf]
      %v1377 = vld [vmem:[%s1359 + $0x44] sm:$0xf]
      %v1378 = vld [vmem:[%s1359 + $0x48] sm:$0xf]
      %v1379 = vld [vmem:[%s1359 + $0x4c] sm:$0xf]
      %v1380 = vld [vmem:[%s1359 + $0x50] sm:$0xf]
      %v1381 = vld [vmem:[%s1359 + $0x54] sm:$0xf]
      %v1382 = vld [vmem:[%s1359 + $0x58] sm:$0xf]
      %v1383 = vld [vmem:[%s1359 + $0x5c] sm:$0xf]
      %v1384 = vpack.c.b16 %v1345, %v1343
      %v1385 = vpack.c.b16 %v1346, %v1344
      %v1386 = vpack.c.b16 %v1349, %v1347
      %v1387 = vpack.c.b16 %v1350, %v1348
      %v1388 = vpack.c.b16 %v1353, %v1351
      %v1389 = vpack.c.b16 %v1354, %v1352
      %v1390 = vpack.c.b16 %v1357, %v1355
      %v1391 = vpack.c.b16 %v1358, %v1356
      %v1420 = vunpack.c.l.b16 %v1360
      %v1421 = vunpack.c.l.b16 %v1361
      %v1422 = vunpack.c.l.b16 %v1362
      %v1423 = vunpack.c.l.b16 %v1363
      %v1424 = vunpack.c.l.b16 %v1364
      %v1425 = vunpack.c.l.b16 %v1365
      %v1426 = vunpack.c.l.b16 %v1366
      %v1427 = vunpack.c.l.b16 %v1367
      %v1428 = vunpack.c.l.b16 %v1368
      %v1429 = vunpack.c.l.b16 %v1369
      %v1430 = vunpack.c.l.b16 %v1370
      %v1431 = vunpack.c.l.b16 %v1371
      %v1432 = vunpack.c.l.b16 %v1372
      %v1433 = vunpack.c.l.b16 %v1373
      %v1434 = vunpack.c.l.b16 %v1374
      %v1435 = vunpack.c.l.b16 %v1375
      %v1436 = vunpack.c.l.b16 %v1376
      %v1437 = vunpack.c.l.b16 %v1377
      %v1438 = vunpack.c.l.b16 %v1378
      %v1439 = vunpack.c.l.b16 %v1379
      %v1440 = vunpack.c.l.b16 %v1380
      %v1441 = vunpack.c.l.b16 %v1381
      %v1442 = vunpack.c.l.b16 %v1382
      %v1443 = vunpack.c.l.b16 %v1383
      %v1444 = vpack.c.b16 %v1421, %v1420
      %v1445 = vpack.c.b16 %v1423, %v1422
      %v1446 = vpack.c.b16 %v1425, %v1424
      %v1447 = vpack.c.b16 %v1427, %v1426
      %v1448 = vpack.c.b16 %v1429, %v1428
      %v1449 = vpack.c.b16 %v1431, %v1430
      %v1450 = vpack.c.b16 %v1433, %v1432
      %v1451 = vpack.c.b16 %v1435, %v1434
      %v1452 = vpack.c.b16 %v1437, %v1436
      %v1453 = vpack.c.b16 %v1439, %v1438
      %v1454 = vpack.c.b16 %v1441, %v1440
      %v1455 = vpack.c.b16 %v1443, %v1442
      %v1469 = vsel %vm506, %v1385, 0
      %v1472 = vsel %vm506, %v1387, 0
      %v1475 = vsel %vm506, %v1389, 0
      %v1478 = vsel %vm506, %v1391, 0
      %1480 = vmatprep.subr.bf16.mxu0 0
      %1481 = vmatpush1.bf16.msra.mxu0 %v1444
      %1482 = vmatprep.subr.bf16.mxu0 0
      %1483 = vmatpush1.bf16.msra.mxu0 %v1445
      %1484 = vmatprep.subr.bf16.mxu0 0
      %1485 = vmatpush1.bf16.msra.mxu0 %v1446
      %1486 = vmatprep.subr.bf16.mxu0 0
      %1487 = vmatpush1.bf16.msra.mxu0 %v1447
      %1488 = vmatprep.subr.bf16.mxu0 0
      %1489 = vmatpush1.bf16.msra.mxu0 %v1448
      %1490 = vmatprep.subr.bf16.mxu0 0
      %1491 = vmatpush1.bf16.msra.mxu0 %v1449
      %1492 = vmatprep.subr.bf16.mxu0 0
      %1493 = vmatpush1.bf16.msra.mxu0 %v1450
      %1494 = vmatprep.subr.bf16.mxu0 0
      %1495 = vmatpush1.bf16.msra.mxu0 %v1451
      %1496 = vmatprep.subr.bf16.mxu0 0
      %1497 = vmatpush1.bf16.msra.mxu0 %v1452
      %1498 = vmatprep.subr.bf16.mxu0 0
      %1499 = vmatpush1.bf16.msra.mxu0 %v1453
      %1500 = vmatprep.subr.bf16.mxu0 0
      %1501 = vmatpush1.bf16.msra.mxu0 %v1454
      %1502 = vmatprep.subr.bf16.mxu0 0
      %1503 = vmatpush1.bf16.msra.mxu0 %v1455
      %1504 = vmatprep.subr.bf16.mxu0 0
      %1505 = vmatpush1.bf16.msra.mxu0 0
      %1506 = vmatprep.subr.bf16.mxu0 0
      %1507 = vmatpush1.bf16.msra.mxu0 0
      %1508 = vmatprep.subr.bf16.mxu0 0
      %1509 = vmatpush1.bf16.msra.mxu0 0
      %1510 = vmatprep.subr.bf16.mxu0 0
      %1511 = vmatpush1.bf16.msra.mxu0 0
      %1512 = vmatprep.mubr.bf16.mxu0 %v1469
      %1513 = vmatmul.mubr.bf16.gmra.mrb[0].mxu0 %v1384
      %v1514 = vpop.f32.mrb[0].mxu0
      %v1515 = vadd.f32 0.0, %v1514
      %v1516 = vpop.f32.mrb[0].mxu0
      %v1517 = vpop.f32.mrb[0].mxu0
      %v1518 = vadd.f32 0.0, %v1517
      %v1519 = vpop.f32.mrb[0].mxu0
      %1520 = vmatprep.mubr.bf16.mxu0 %v1472
      %1521 = vmatmul.mubr.bf16.gmra.mrb[0].mxu0 %v1386
      %v1522 = vpop.f32.mrb[0].mxu0
      %v1523 = vadd.f32 0.0, %v1522
      %v1524 = vpop.f32.mrb[0].mxu0
      %v1525 = vpop.f32.mrb[0].mxu0
      %v1526 = vadd.f32 0.0, %v1525
      %v1527 = vpop.f32.mrb[0].mxu0
      %1528 = vmatprep.mubr.bf16.mxu0 %v1475
      %1529 = vmatmul.mubr.bf16.gmra.mrb[0].mxu0 %v1388
      %v1530 = vpop.f32.mrb[0].mxu0
      %v1531 = vadd.f32 0.0, %v1530
      %v1532 = vpop.f32.mrb[0].mxu0
      %v1533 = vpop.f32.mrb[0].mxu0
      %v1534 = vadd.f32 0.0, %v1533
      %v1535 = vpop.f32.mrb[0].mxu0
      %1536 = vmatprep.mubr.bf16.mxu0 %v1478
      %1537 = vmatmul.mubr.bf16.gmra.mrb[0].mxu0 %v1390
      %v1538 = vpop.f32.mrb[0].mxu0
      %v1539 = vadd.f32 0.0, %v1538
      %v1540 = vpop.f32.mrb[0].mxu0
      %v1541 = vpop.f32.mrb[0].mxu0
      %v1542 = vadd.f32 0.0, %v1541
      %v1543 = vpop.f32.mrb[0].mxu0
      %1544 = vdwg.mxu0
      %v1545 = vadd.f32 %v1112, %v1515
      %v1546 = vadd.f32 %v1115, %v1518
      %v1547 = vadd.f32 %v1120, %v1523
      %v1548 = vadd.f32 %v1123, %v1526
      %v1549 = vadd.f32 %v1128, %v1531
      %v1550 = vadd.f32 %v1131, %v1534
      %v1551 = vadd.f32 %v1136, %v1539
      %v1552 = vadd.f32 %v1139, %v1542
      %v1554 = vlaneseq
      %v1555 = vshrl.u32 %v1554, 7
      %v1556 = vsub.s32 0, %v1555
      %v1557 = vrot.slane %v337, %v1556
      %v1559 = vadd.f32 %v1545, %v1557
      %v1560 = vadd.f32 %v1546, %v1557
      %v1561 = vadd.f32 %v1547, %v1557
      %v1562 = vadd.f32 %v1548, %v1557
      %v1563 = vadd.f32 %v1549, %v1557
      %v1564 = vadd.f32 %v1550, %v1557
      %v1565 = vadd.f32 %v1551, %v1557
      %v1566 = vadd.f32 %v1552, %v1557
      %v1567 = vmax.f32 %v1559, 0.0
      %v1568 = vmax.f32 %v1560, 0.0
      %v1569 = vmax.f32 %v1561, 0.0
      %v1570 = vmax.f32 %v1562, 0.0
      %v1571 = vmax.f32 %v1563, 0.0
      %v1572 = vmax.f32 %v1564, 0.0
      %v1573 = vmax.f32 %v1565, 0.0
      %v1574 = vmax.f32 %v1566, 0.0
      %v1575 = vpack.c.bf16 %v1567, %v1567
      %v1576 = vpack.c.bf16 %v1568, %v1568
      %v1577 = vpack.c.bf16 %v1569, %v1569
      %v1578 = vpack.c.bf16 %v1570, %v1570
      %v1579 = vpack.c.bf16 %v1571, %v1571
      %v1580 = vpack.c.bf16 %v1572, %v1572
      %v1581 = vpack.c.bf16 %v1573, %v1573
      %v1582 = vpack.c.bf16 %v1574, %v1574
      %1583 = vst [vmem:[%s170] sm:$0xf] %v1575
      %1584 = vst [vmem:[%s170 + $0x4] sm:$0xf] %v1576
      %1585 = vst [vmem:[%s170 + $0x8] sm:$0xf] %v1577
      %1586 = vst [vmem:[%s170 + $0xc] sm:$0xf] %v1578
      %1587 = vst [vmem:[%s170 + $0x10] sm:$0xf] %v1579
      %1588 = vst [vmem:[%s170 + $0x14] sm:$0xf] %v1580
      %1589 = vst [vmem:[%s170 + $0x18] sm:$0xf] %v1581
      %1590 = vst [vmem:[%s170 + $0x1c] sm:$0xf] %v1582
      %p1591 = scmp.lt.s32.totalorder %s14, 3
      %s1592 = scalar_select %p1591, %s14, 3
      %s1593 = smul.addr %s1592, 8
      %s1594 = smul.addr %s1593, 4
      %s1595 = scalar_lea.vmem %s3, %s1594
      // Predicated region
      $region33: #{_lambda_.7} parent=31 // pred_check
        %p1596 = pneg %p100
      $region34: #{_lambda_.7} parent=31 // pred_check_branch
        %1598 = sbr.rel (%p1596) target = $region36
      $region35: #{_lambda_.7} parent=31 // pred_region
        _
      $region36: #{_lambda_.7} parent=31 // pred_fallthru
        _
    $region32: #{_lambda_.7} parent=5 // pred_fallthru
      _
    %p1599 = scmp.le.s32.totalorder 2, %s9
    // Predicated region
    $region37: #{_lambda_.7} parent=5 // pred_check
      %p1600 = pneg %p1599
    $region38: #{_lambda_.7} parent=5 // pred_check_branch
      %1602 = sbr.rel (%p1600) target = $region40
    $region39: #{_lambda_.7} parent=5 // pred_region
      %s1603 = ssub.s32 %s9, 2
      // Predicated region
      $region41: #{_lambda_.7} parent=39 // pred_check
        %p1604 = pneg %p106
      $region42: #{_lambda_.7} parent=39 // pred_check_branch
        %1606 = sbr.rel (%p1604) target = $region44
      $region43: #{_lambda_.7} parent=39 // pred_region
        %p1607 = scmp.lt.s32.totalorder %s15, 3
        %s1608 = scalar_select %p1607, %s15, 3
        %s1609 = smul.addr %s1608, 8
        %s1610 = smul.addr %s1609, 4
        %s1611 = scalar_lea.vmem %s3, %s1610
      $region44: #{_lambda_.7} parent=39 // pred_fallthru
        _
    $region40: #{_lambda_.7} parent=5 // pred_fallthru
      _
  $region6: #{_lambda_.7} parent=0 // loop_footer
    %s13 = sadd.s32 1, %s9
  $region7: #{_lambda_.7} parent=0 // loop_footer_branch
    %8 = sbr.rel target = $region3
  $region8: #{_lambda_.7} parent=0 // loop_exit
    _

// kernel: _lambda_.6
$region0: #{_lambda_.6}
  #allocation0 [shape = 'u32[]', space=smem, size = 0x4, offset = 0x4, fixed_abs, tag = 'smem constant byte address 0x4 - core index']
  #allocation1 [shape = 'u32[144,128]{1,0:T(1,128)}', space=vmem, size = 0x12000, scoped, tag = 'internal scratch']
  #allocation2 [shape = 'bf16[18,10,128]{2,1,0:T(8,128)(2,1)}', space=vmem, size = 0x12000, scoped, tag = 'scratch operand']
  %s0 = inlined_call_operand.vmem [shape: bf16[4,16,8,128], index: 0, kind: input, shape index: {}]
  %s1 = inlined_call_operand.vmem [shape: bf16[3,384,128], index: 1, kind: input, shape index: {}]
  %s2 = inlined_call_operand.vmem [shape: f32[1,128], index: 2, kind: input, shape index: {}]
  %s3 = inlined_call_operand.vmem [shape: bf16[4,8,8,64], index: 3, kind: output, shape index: {}]
  %s4 = sld [smem:[#allocation0]]
  $region45: #{_lambda_.6} parent=0
    _
  %s6 = ssub.s32 1, %s4
  %s7 = scalar_select 0, %s6, %s4
  loop: start=0, step=1, limit=6
  $region2: #{_lambda_.6} parent=0 // loop_pre_header
    _
  $region3: #{_lambda_.6} parent=0 // loop_header
    %s9 = sphi 0, %s13
    %p10 = scmp.ge.s32.totalorder %s9, 6
    %s19 = sphi 0, %s21
    %s22 = sphi 0, %s19
    %s23 = sphi 0, %s22
    %s39 = sphi 0, %s23
    %s43 = sphi 0, %s43
    %s45 = sphi 0, %s43
    %s46 = sphi 0, %s45
    %s60 = sphi 0, %s46
    %s64 = sphi 0, %s64
    %s66 = sphi 0, %s64
    %s67 = sphi 0, %s66
    %s81 = sphi 0, %s67
    %s87 = sphi 0, %s89
    %s90 = sphi 0, %s87
    %s91 = sphi 0, %s90
    %s107 = sphi 0, %s91
  $region4: #{_lambda_.6} parent=0 // loop_header_branch
    %12 = sbr.rel (%p10) target = $region8
  $region5: #{_lambda_.6} parent=0 // loop_body
    %s14 = ssub.s32 %s9, 1
    %s15 = ssub.s32 %s9, 2
    %s16 = sadd.s32 %s9, 1
    %s17 = ssub.s32 %s9, %s16
    %p18 = scmp.eq.s32.totalorder %s17, 0
    %s20 = sadd.s32 %s19, 1
    %s21 = scalar_select %p18, %s19, %s20
    %p24 = pneg %p18
    %p25 = scmp.eq.s32.totalorder %s9, 3
    %p26 = por %p24, %p25
    %p27 = scmp.ne.s32.totalorder %s19, %s22
    %p28 = scmp.eq.s32.totalorder %s9, 0
    %p29 = por %p27, %p28
    %p30 = scmp.ne.s32.totalorder %s19, %s22
    %p31 = scmp.eq.s32.totalorder %s14, 3
    %p32 = por %p30, %p31
    %p33 = scmp.ne.s32.totalorder %s22, %s23
    %p34 = scmp.eq.s32.totalorder %s14, 0
    %p35 = por %p33, %p34
    %p36 = scmp.ne.s32.totalorder %s22, %s23
    %p37 = scmp.eq.s32.totalorder %s15, 3
    %p38 = por %p36, %p37
    %p40 = scmp.ne.s32.totalorder %s23, %s39
    %p41 = scmp.eq.s32.totalorder %s15, 0
    %p42 = por %p40, %p41
    %s44 = sadd.s32 %s43, 1
    %p47 = scmp.eq.s32.totalorder %s9, 3
    %p48 = scmp.ne.s32.totalorder %s43, %s45
    %p49 = scmp.eq.s32.totalorder %s9, 0
    %p50 = por %p48, %p49
    %p51 = scmp.ne.s32.totalorder %s43, %s45
    %p52 = scmp.eq.s32.totalorder %s14, 3
    %p53 = por %p51, %p52
    %p54 = scmp.ne.s32.totalorder %s45, %s46
    %p55 = scmp.eq.s32.totalorder %s14, 0
    %p56 = por %p54, %p55
    %p57 = scmp.ne.s32.totalorder %s45, %s46
    %p58 = scmp.eq.s32.totalorder %s15, 3
    %p59 = por %p57, %p58
    %p61 = scmp.ne.s32.totalorder %s46, %s60
    %p62 = scmp.eq.s32.totalorder %s15, 0
    %p63 = por %p61, %p62
    %s65 = sadd.s32 %s64, 1
    %p68 = scmp.eq.s32.totalorder %s9, 3
    %p69 = scmp.ne.s32.totalorder %s64, %s66
    %p70 = scmp.eq.s32.totalorder %s9, 0
    %p71 = por %p69, %p70
    %p72 = scmp.ne.s32.totalorder %s64, %s66
    %p73 = scmp.eq.s32.totalorder %s14, 3
    %p74 = por %p72, %p73
    %p75 = scmp.ne.s32.totalorder %s66, %s67
    %p76 = scmp.eq.s32.totalorder %s14, 0
    %p77 = por %p75, %p76
    %p78 = scmp.ne.s32.totalorder %s66, %s67
    %p79 = scmp.eq.s32.totalorder %s15, 3
    %p80 = por %p78, %p79
    %p82 = scmp.ne.s32.totalorder %s67, %s81
    %p83 = scmp.eq.s32.totalorder %s15, 0
    %p84 = por %p82, %p83
    %s85 = ssub.s32 %s9, %s16
    %p86 = scmp.eq.s32.totalorder %s85, 0
    %s88 = sadd.s32 %s87, 1
    %s89 = scalar_select %p86, %s87, %s88
    %p92 = pneg %p86
    %p93 = scmp.eq.s32.totalorder %s9, 3
    %p94 = por %p92, %p93
    %p95 = scmp.ne.s32.totalorder %s87, %s90
    %p96 = scmp.eq.s32.totalorder %s9, 0
    %p97 = por %p95, %p96
    %p98 = scmp.ne.s32.totalorder %s87, %s90
    %p99 = scmp.eq.s32.totalorder %s14, 3
    %p100 = por %p98, %p99
    %p101 = scmp.ne.s32.totalorder %s90, %s91
    %p102 = scmp.eq.s32.totalorder %s14, 0
    %p103 = por %p101, %p102
    %p104 = scmp.ne.s32.totalorder %s90, %s91
    %p105 = scmp.eq.s32.totalorder %s15, 3
    %p106 = por %p104, %p105
    %p108 = scmp.ne.s32.totalorder %s91, %s107
    %p109 = scmp.eq.s32.totalorder %s15, 0
    %p110 = por %p108, %p109
    %p111 = scmp.le.s32.totalorder 1, %s9
    %p112 = scmp.lt.s32.totalorder %s9, 5
    %p113 = pnand %p111, %p112
    %p114 = pneg %p113
    // Predicated region
    $region9: #{_lambda_.6} parent=5 // pred_check
      _
    $region10: #{_lambda_.6} parent=5 // pred_check_branch
      %116 = sbr.rel (%p113) target = $region12
    $region11: #{_lambda_.6} parent=5 // pred_region
      %s117 = ssub.s32 %s9, 1
      // Predicated region
      $region13: #{_lambda_.6} parent=11 // pred_check
        %p118 = pneg %p56
      $region14: #{_lambda_.6} parent=11 // pred_check_branch
        %120 = sbr.rel (%p118) target = $region16
      $region15: #{_lambda_.6} parent=11 // pred_region
        _
      $region16: #{_lambda_.6} parent=11 // pred_fallthru
        _
      // Predicated region
      $region17: #{_lambda_.6} parent=11 // pred_check
        %p121 = pneg %p77
      $region18: #{_lambda_.6} parent=11 // pred_check_branch
        %123 = sbr.rel (%p121) target = $region20
      $region19: #{_lambda_.6} parent=11 // pred_region
        _
      $region20: #{_lambda_.6} parent=11 // pred_fallthru
        _
    $region12: #{_lambda_.6} parent=5 // pred_fallthru
      _
    %p124 = scmp.lt.s32.totalorder %s9, 4
    // Predicated region
    $region21: #{_lambda_.6} parent=5 // pred_check
      %p125 = pneg %p124
    $region22: #{_lambda_.6} parent=5 // pred_check_branch
      %127 = sbr.rel (%p125) target = $region24
    $region23: #{_lambda_.6} parent=5 // pred_region
      // Predicated region
      $region25: #{_lambda_.6} parent=23 // pred_check
        %p128 = pneg %p29
      $region26: #{_lambda_.6} parent=23 // pred_check_branch
        %130 = sbr.rel (%p128) target = $region28
      $region27: #{_lambda_.6} parent=23 // pred_region
        %p131 = scmp.lt.s32.totalorder %s9, 3
        %s132 = scalar_select %p131, %s9, 3
        %s133 = smul.addr %s132, 16
        %s134 = smul.addr %s133, 4
        %s135 = scalar_lea.vmem %s0, %s134
      $region28: #{_lambda_.6} parent=23 // pred_fallthru
        _
    $region24: #{_lambda_.6} parent=5 // pred_fallthru
      _
    %p136 = scmp.le.s32.totalorder 1, %s9
    %p137 = scmp.lt.s32.totalorder %s9, 5
    %p138 = pnand %p136, %p137
    %p139 = pneg %p138
    // Predicated region
    $region29: #{_lambda_.6} parent=5 // pred_check
      _
    $region30: #{_lambda_.6} parent=5 // pred_check_branch
      %141 = sbr.rel (%p138) target = $region32
    $region31: #{_lambda_.6} parent=5 // pred_region
      %s142 = ssub.s32 %s9, 1
      %p143 = scmp.lt.s32.totalorder %s14, 3
      %s144 = scalar_select %p143, %s14, 3
      %s145 = smul.addr %s144, 16
      %s146 = smul.addr %s145, 4
      %s147 = scalar_lea.vmem %s0, %s146
      %p148 = pneg %p35
      %p149 = pneg %p32
      %p150 = pneg %p56
      %p151 = pneg %p53
      %p152 = pneg %p77
      %p153 = pneg %p74
      %p154 = pneg %p103
      %p155 = pneg %p100
      %p156 = scmp.lt.s32.totalorder %s14, 3
      %s157 = scalar_select %p156, %s14, 3
      %s158 = smul.addr %s157, 8
      %s159 = smul.addr %s158, 4
      %s160 = scalar_lea.vmem %s3, %s159
      %p161 = scmp.lt.s32.totalorder %s14, 3
      %s162 = scalar_select %p161, %s14, 3
      %s163 = smul.addr %s162, 16
      %s164 = smul.addr %s163, 4
      %s165 = scalar_lea.vmem %s0, %s164
      %p166 = scmp.lt.s32.totalorder %s14, 3
      %s167 = scalar_select %p166, %s14, 3
      %s168 = smul.addr %s167, 8
      %s169 = smul.addr %s168, 4
      %s170 = scalar_lea.vmem %s3, %s169
      %172 = vst [vmem:[#allocation2] sm:$0xf] 0
      %173 = vst [vmem:[#allocation2 + $0x4] sm:$0x1] 0
      %174 = vst [vmem:[#allocation2 + $0x8] sm:$0xf] 0
      %175 = vst [vmem:[#allocation2 + $0xc] sm:$0x1] 0
      %176 = vst [vmem:[#allocation2 + $0x10] sm:$0xf] 0
      %177 = vst [vmem:[#allocation2 + $0x14] sm:$0x1] 0
      %178 = vst [vmem:[#allocation2 + $0x18] sm:$0xf] 0
      %179 = vst [vmem:[#allocation2 + $0x1c] sm:$0x1] 0
      %180 = vst [vmem:[#allocation2 + $0x20] sm:$0xf] 0
      %181 = vst [vmem:[#allocation2 + $0x24] sm:$0x1] 0
      %182 = vst [vmem:[#allocation2 + $0x28] sm:$0xf] 0
      %183 = vst [vmem:[#allocation2 + $0x2c] sm:$0x1] 0
      %184 = vst [vmem:[#allocation2 + $0x30] sm:$0xf] 0
      %185 = vst [vmem:[#allocation2 + $0x34] sm:$0x1] 0
      %186 = vst [vmem:[#allocation2 + $0x38] sm:$0xf] 0
      %187 = vst [vmem:[#allocation2 + $0x3c] sm:$0x1] 0
      %188 = vst [vmem:[#allocation2 + $0x40] sm:$0xf] 0
      %189 = vst [vmem:[#allocation2 + $0x44] sm:$0x1] 0
      %190 = vst [vmem:[#allocation2 + $0x48] sm:$0xf] 0
      %191 = vst [vmem:[#allocation2 + $0x4c] sm:$0x1] 0
      %192 = vst [vmem:[#allocation2 + $0x50] sm:$0xf] 0
      %193 = vst [vmem:[#allocation2 + $0x54] sm:$0x1] 0
      %194 = vst [vmem:[#allocation2 + $0x58] sm:$0xf] 0
      %195 = vst [vmem:[#allocation2 + $0x5c] sm:$0x1] 0
      %196 = vst [vmem:[#allocation2 + $0x60] sm:$0xf] 0
      %197 = vst [vmem:[#allocation2 + $0x64] sm:$0x1] 0
      %198 = vst [vmem:[#allocation2 + $0x68] sm:$0xf] 0
      %199 = vst [vmem:[#allocation2 + $0x6c] sm:$0x1] 0
      %200 = vst [vmem:[#allocation2 + $0x70] sm:$0xf] 0
      %201 = vst [vmem:[#allocation2 + $0x74] sm:$0x1] 0
      %202 = vst [vmem:[#allocation2 + $0x78] sm:$0xf] 0
      %203 = vst [vmem:[#allocation2 + $0x7c] sm:$0x1] 0
      %204 = vst [vmem:[#allocation2 + $0x80] sm:$0xf] 0
      %205 = vst [vmem:[#allocation2 + $0x84] sm:$0x1] 0
      %206 = vst [vmem:[#allocation2 + $0x88] sm:$0xf] 0
      %207 = vst [vmem:[#allocation2 + $0x8c] sm:$0x1] 0
      %v208 = vld [vmem:[%s165] sm:$0xf]
      %v209 = vld [vmem:[%s165 + $0x4] sm:$0xf]
      %v210 = vld [vmem:[%s165 + $0x8] sm:$0xf]
      %v211 = vld [vmem:[%s165 + $0xc] sm:$0xf]
      %v212 = vld [vmem:[%s165 + $0x10] sm:$0xf]
      %v213 = vld [vmem:[%s165 + $0x14] sm:$0xf]
      %v214 = vld [vmem:[%s165 + $0x18] sm:$0xf]
      %v215 = vld [vmem:[%s165 + $0x1c] sm:$0xf]
      %v216 = vld [vmem:[%s165 + $0x20] sm:$0xf]
      %v217 = vld [vmem:[%s165 + $0x24] sm:$0xf]
      %v218 = vld [vmem:[%s165 + $0x28] sm:$0xf]
      %v219 = vld [vmem:[%s165 + $0x2c] sm:$0xf]
      %v220 = vld [vmem:[%s165 + $0x30] sm:$0xf]
      %v221 = vld [vmem:[%s165 + $0x34] sm:$0xf]
      %v222 = vld [vmem:[%s165 + $0x38] sm:$0xf]
      %v223 = vld [vmem:[%s165 + $0x3c] sm:$0xf]
      %v225 = vshrl.u32 %v208, 16
      %v227 = vrot.slane %v225, 7
      %v228 = vshll.u32 %v208, 16
      %v230 = vor.u32 %v227, %v228
      %v231 = vrot.slane %v227, 4
      %v233 = vshrl.u32 %v209, 16
      %v235 = vrot.slane %v233, 7
      %v236 = vshll.u32 %v209, 16
      %v238 = vor.u32 %v235, %v236
      %v239 = vrot.slane %v235, 4
      %v241 = vshrl.u32 %v210, 16
      %v243 = vrot.slane %v241, 7
      %v244 = vshll.u32 %v210, 16
      %v246 = vor.u32 %v243, %v244
      %v247 = vrot.slane %v243, 4
      %v249 = vshrl.u32 %v211, 16
      %v251 = vrot.slane %v249, 7
      %v252 = vshll.u32 %v211, 16
      %v254 = vor.u32 %v251, %v252
      %v255 = vrot.slane %v251, 4
      %v257 = vshrl.u32 %v212, 16
      %v259 = vrot.slane %v257, 7
      %v260 = vshll.u32 %v212, 16
      %v262 = vor.u32 %v259, %v260
      %v263 = vrot.slane %v259, 4
      %v265 = vshrl.u32 %v213, 16
      %v267 = vrot.slane %v265, 7
      %v268 = vshll.u32 %v213, 16
      %v270 = vor.u32 %v267, %v268
      %v271 = vrot.slane %v267, 4
      %v273 = vshrl.u32 %v214, 16
      %v275 = vrot.slane %v273, 7
      %v276 = vshll.u32 %v214, 16
      %v278 = vor.u32 %v275, %v276
      %v279 = vrot.slane %v275, 4
      %v281 = vshrl.u32 %v215, 16
      %v283 = vrot.slane %v281, 7
      %v284 = vshll.u32 %v215, 16
      %v286 = vor.u32 %v283, %v284
      %v287 = vrot.slane %v283, 4
      %v289 = vshrl.u32 %v216, 16
      %v291 = vrot.slane %v289, 7
      %v292 = vshll.u32 %v216, 16
      %v294 = vor.u32 %v291, %v292
      %v295 = vrot.slane %v291, 4
      %v297 = vshrl.u32 %v217, 16
      %v299 = vrot.slane %v297, 7
      %v300 = vshll.u32 %v217, 16
      %v302 = vor.u32 %v299, %v300
      %v303 = vrot.slane %v299, 4
      %v305 = vshrl.u32 %v218, 16
      %v307 = vrot.slane %v305, 7
      %v308 = vshll.u32 %v218, 16
      %v310 = vor.u32 %v307, %v308
      %v311 = vrot.slane %v307, 4
      %v313 = vshrl.u32 %v219, 16
      %v315 = vrot.slane %v313, 7
      %v316 = vshll.u32 %v219, 16
      %v318 = vor.u32 %v315, %v316
      %v319 = vrot.slane %v315, 4
      %v321 = vshrl.u32 %v220, 16
      %v323 = vrot.slane %v321, 7
      %v324 = vshll.u32 %v220, 16
      %v326 = vor.u32 %v323, %v324
      %v327 = vrot.slane %v323, 4
      %v329 = vshrl.u32 %v221, 16
      %v331 = vrot.slane %v329, 7
      %v332 = vshll.u32 %v221, 16
      %v334 = vor.u32 %v331, %v332
      %v335 = vrot.slane %v331, 4
      %v337 = vshrl.u32 %v222, 16
      %v339 = vrot.slane %v337, 7
      %v340 = vshll.u32 %v222, 16
      %v342 = vor.u32 %v339, %v340
      %v343 = vrot.slane %v339, 4
      %v345 = vshrl.u32 %v223, 16
      %v347 = vrot.slane %v345, 7
      %v348 = vshll.u32 %v223, 16
      %v350 = vor.u32 %v347, %v348
      %v351 = vrot.slane %v347, 4
      %s384 = scalar_lea.vmem [#allocation2], 8
      %vm385 = vcmask 1043456
      %vm386 = vsmask.f32 7938
      %vm387 = vmand %vm385, %vm386
      %v388 = vld [vmem:[%s384] sm:$0xf]
      %v389 = vsel %vm387, %v230, %v388
      %390 = vst [vmem:[%s384] sm:$0xf] %v389
      %vm391 = vcmask 1040384
      %vm392 = vsmask.f32 256
      %vm393 = vmand %vm391, %vm392
      %v394 = vld [vmem:[%s384 + $0x4] sm:$0x1]
      %v395 = vsel %vm393, %v231, %v394
      %396 = vst [vmem:[%s384 + $0x4] sm:$0x1] %v395
      %v397 = vld [vmem:[%s384 + $0x8] sm:$0xf]
      %v398 = vsel %vm387, %v238, %v397
      %399 = vst [vmem:[%s384 + $0x8] sm:$0xf] %v398
      %v400 = vld [vmem:[%s384 + $0xc] sm:$0x1]
      %v401 = vsel %vm393, %v239, %v400
      %402 = vst [vmem:[%s384 + $0xc] sm:$0x1] %v401
      %v403 = vld [vmem:[%s384 + $0x10] sm:$0xf]
      %v404 = vsel %vm387, %v246, %v403
      %405 = vst [vmem:[%s384 + $0x10] sm:$0xf] %v404
      %v406 = vld [vmem:[%s384 + $0x14] sm:$0x1]
      %v407 = vsel %vm393, %v247, %v406
      %408 = vst [vmem:[%s384 + $0x14] sm:$0x1] %v407
      %v409 = vld [vmem:[%s384 + $0x18] sm:$0xf]
      %v410 = vsel %vm387, %v254, %v409
      %411 = vst [vmem:[%s384 + $0x18] sm:$0xf] %v410
      %v412 = vld [vmem:[%s384 + $0x1c] sm:$0x1]
      %v413 = vsel %vm393, %v255, %v412
      %414 = vst [vmem:[%s384 + $0x1c] sm:$0x1] %v413
      %v415 = vld [vmem:[%s384 + $0x20] sm:$0xf]
      %v416 = vsel %vm387, %v262, %v415
      %417 = vst [vmem:[%s384 + $0x20] sm:$0xf] %v416
      %v418 = vld [vmem:[%s384 + $0x24] sm:$0x1]
      %v419 = vsel %vm393, %v263, %v418
      %420 = vst [vmem:[%s384 + $0x24] sm:$0x1] %v419
      %v421 = vld [vmem:[%s384 + $0x28] sm:$0xf]
      %v422 = vsel %vm387, %v270, %v421
      %423 = vst [vmem:[%s384 + $0x28] sm:$0xf] %v422
      %v424 = vld [vmem:[%s384 + $0x2c] sm:$0x1]
      %v425 = vsel %vm393, %v271, %v424
      %426 = vst [vmem:[%s384 + $0x2c] sm:$0x1] %v425
      %v427 = vld [vmem:[%s384 + $0x30] sm:$0xf]
      %v428 = vsel %vm387, %v278, %v427
      %429 = vst [vmem:[%s384 + $0x30] sm:$0xf] %v428
      %v430 = vld [vmem:[%s384 + $0x34] sm:$0x1]
      %v431 = vsel %vm393, %v279, %v430
      %432 = vst [vmem:[%s384 + $0x34] sm:$0x1] %v431
      %v433 = vld [vmem:[%s384 + $0x38] sm:$0xf]
      %v434 = vsel %vm387, %v286, %v433
      %435 = vst [vmem:[%s384 + $0x38] sm:$0xf] %v434
      %v436 = vld [vmem:[%s384 + $0x3c] sm:$0x1]
      %v437 = vsel %vm393, %v287, %v436
      %438 = vst [vmem:[%s384 + $0x3c] sm:$0x1] %v437
      %v439 = vld [vmem:[%s384 + $0x40] sm:$0xf]
      %v440 = vsel %vm387, %v294, %v439
      %441 = vst [vmem:[%s384 + $0x40] sm:$0xf] %v440
      %v442 = vld [vmem:[%s384 + $0x44] sm:$0x1]
      %v443 = vsel %vm393, %v295, %v442
      %444 = vst [vmem:[%s384 + $0x44] sm:$0x1] %v443
      %v445 = vld [vmem:[%s384 + $0x48] sm:$0xf]
      %v446 = vsel %vm387, %v302, %v445
      %447 = vst [vmem:[%s384 + $0x48] sm:$0xf] %v446
      %v448 = vld [vmem:[%s384 + $0x4c] sm:$0x1]
      %v449 = vsel %vm393, %v303, %v448
      %450 = vst [vmem:[%s384 + $0x4c] sm:$0x1] %v449
      %v451 = vld [vmem:[%s384 + $0x50] sm:$0xf]
      %v452 = vsel %vm387, %v310, %v451
      %453 = vst [vmem:[%s384 + $0x50] sm:$0xf] %v452
      %v454 = vld [vmem:[%s384 + $0x54] sm:$0x1]
      %v455 = vsel %vm393, %v311, %v454
      %456 = vst [vmem:[%s384 + $0x54] sm:$0x1] %v455
      %v457 = vld [vmem:[%s384 + $0x58] sm:$0xf]
      %v458 = vsel %vm387, %v318, %v457
      %459 = vst [vmem:[%s384 + $0x58] sm:$0xf] %v458
      %v460 = vld [vmem:[%s384 + $0x5c] sm:$0x1]
      %v461 = vsel %vm393, %v319, %v460
      %462 = vst [vmem:[%s384 + $0x5c] sm:$0x1] %v461
      %v463 = vld [vmem:[%s384 + $0x60] sm:$0xf]
      %v464 = vsel %vm387, %v326, %v463
      %465 = vst [vmem:[%s384 + $0x60] sm:$0xf] %v464
      %v466 = vld [vmem:[%s384 + $0x64] sm:$0x1]
      %v467 = vsel %vm393, %v327, %v466
      %468 = vst [vmem:[%s384 + $0x64] sm:$0x1] %v467
      %v469 = vld [vmem:[%s384 + $0x68] sm:$0xf]
      %v470 = vsel %vm387, %v334, %v469
      %471 = vst [vmem:[%s384 + $0x68] sm:$0xf] %v470
      %v472 = vld [vmem:[%s384 + $0x6c] sm:$0x1]
      %v473 = vsel %vm393, %v335, %v472
      %474 = vst [vmem:[%s384 + $0x6c] sm:$0x1] %v473
      %v475 = vld [vmem:[%s384 + $0x70] sm:$0xf]
      %v476 = vsel %vm387, %v342, %v475
      %477 = vst [vmem:[%s384 + $0x70] sm:$0xf] %v476
      %v478 = vld [vmem:[%s384 + $0x74] sm:$0x1]
      %v479 = vsel %vm393, %v343, %v478
      %480 = vst [vmem:[%s384 + $0x74] sm:$0x1] %v479
      %v481 = vld [vmem:[%s384 + $0x78] sm:$0xf]
      %v482 = vsel %vm387, %v350, %v481
      %483 = vst [vmem:[%s384 + $0x78] sm:$0xf] %v482
      %v484 = vld [vmem:[%s384 + $0x7c] sm:$0x1]
      %v485 = vsel %vm393, %v351, %v484
      %486 = vst [vmem:[%s384 + $0x7c] sm:$0x1] %v485
      %v487 = vld [vmem:[%s2] sm:$0x1]
      %v488 = vld [vmem:[#allocation2] sm:$0xf]
      %v489 = vld [vmem:[#allocation2 + $0x8] sm:$0xf]
      %v490 = vld [vmem:[#allocation2 + $0x10] sm:$0xf]
      %v491 = vld [vmem:[#allocation2 + $0x18] sm:$0xf]
      %v492 = vld [vmem:[#allocation2 + $0x20] sm:$0xf]
      %v493 = vld [vmem:[#allocation2 + $0x28] sm:$0xf]
      %v494 = vld [vmem:[#allocation2 + $0x30] sm:$0xf]
      %v495 = vld [vmem:[#allocation2 + $0x38] sm:$0xf]
      %v496 = vld [vmem:[#allocation2 + $0x40] sm:$0xf]
      %v497 = vld [vmem:[#allocation2 + $0x48] sm:$0xf]
      %v498 = vld [vmem:[#allocation2 + $0x50] sm:$0xf]
      %v499 = vld [vmem:[#allocation2 + $0x58] sm:$0xf]
      %v500 = vld [vmem:[#allocation2 + $0x60] sm:$0xf]
      %v501 = vld [vmem:[#allocation2 + $0x68] sm:$0xf]
      %v502 = vld [vmem:[#allocation2 + $0x70] sm:$0xf]
      %v503 = vld [vmem:[#allocation2 + $0x78] sm:$0xf]
      %v504 = vld [vmem:[#allocation2 + $0x4] sm:$0x1]
      %v505 = vld [vmem:[#allocation2 + $0xc] sm:$0x1]
      %v506 = vld [vmem:[#allocation2 + $0x14] sm:$0x1]
      %v507 = vld [vmem:[#allocation2 + $0x1c] sm:$0x1]
      %v508 = vld [vmem:[#allocation2 + $0x24] sm:$0x1]
      %v509 = vld [vmem:[#allocation2 + $0x2c] sm:$0x1]
      %v510 = vld [vmem:[#allocation2 + $0x34] sm:$0x1]
      %v511 = vld [vmem:[#allocation2 + $0x3c] sm:$0x1]
      %v512 = vld [vmem:[#allocation2 + $0x44] sm:$0x1]
      %v513 = vld [vmem:[#allocation2 + $0x4c] sm:$0x1]
      %v514 = vld [vmem:[#allocation2 + $0x54] sm:$0x1]
      %v515 = vld [vmem:[#allocation2 + $0x5c] sm:$0x1]
      %v516 = vld [vmem:[#allocation2 + $0x64] sm:$0x1]
      %v517 = vld [vmem:[#allocation2 + $0x6c] sm:$0x1]
      %v518 = vld [vmem:[#allocation2 + $0x74] sm:$0x1]
      %v519 = vld [vmem:[#allocation2 + $0x7c] sm:$0x1]
      %v520 = vld [vmem:[#allocation2] sm:$0xe]
      %v521 = vld [vmem:[#allocation2 + $0x8] sm:$0xe]
      %v522 = vld [vmem:[#allocation2 + $0x10] sm:$0xe]
      %v523 = vld [vmem:[#allocation2 + $0x18] sm:$0xe]
      %v524 = vld [vmem:[#allocation2 + $0x20] sm:$0xe]
      %v525 = vld [vmem:[#allocation2 + $0x28] sm:$0xe]
      %v526 = vld [vmem:[#allocation2 + $0x30] sm:$0xe]
      %v527 = vld [vmem:[#allocation2 + $0x38] sm:$0xe]
      %v528 = vld [vmem:[#allocation2 + $0x40] sm:$0xe]
      %v529 = vld [vmem:[#allocation2 + $0x48] sm:$0xe]
      %v530 = vld [vmem:[#allocation2 + $0x50] sm:$0xe]
      %v531 = vld [vmem:[#allocation2 + $0x58] sm:$0xe]
      %v532 = vld [vmem:[#allocation2 + $0x60] sm:$0xe]
      %v533 = vld [vmem:[#allocation2 + $0x68] sm:$0xe]
      %v534 = vld [vmem:[#allocation2 + $0x70] sm:$0xe]
      %v535 = vld [vmem:[#allocation2 + $0x78] sm:$0xe]
      %v568 = vunpack.c.l.b16 %v488
      %v569 = vunpack.c.l.b16 %v504
      %v570 = vunpack.c.l.b16 %v489
      %v571 = vunpack.c.l.b16 %v505
      %v572 = vunpack.c.l.b16 %v490
      %v573 = vunpack.c.l.b16 %v506
      %v574 = vunpack.c.l.b16 %v491
      %v575 = vunpack.c.l.b16 %v507
      %v576 = vunpack.c.l.b16 %v492
      %v577 = vunpack.c.l.b16 %v508
      %v578 = vunpack.c.l.b16 %v493
      %v579 = vunpack.c.l.b16 %v509
      %v580 = vunpack.c.l.b16 %v494
      %v581 = vunpack.c.l.b16 %v510
      %v582 = vunpack.c.l.b16 %v495
      %v583 = vunpack.c.l.b16 %v511
      %v584 = vunpack.c.l.b16 %v496
      %v585 = vunpack.c.l.b16 %v512
      %v586 = vunpack.c.l.b16 %v497
      %v587 = vunpack.c.l.b16 %v513
      %v588 = vunpack.c.l.b16 %v498
      %v589 = vunpack.c.l.b16 %v514
      %v590 = vunpack.c.l.b16 %v499
      %v591 = vunpack.c.l.b16 %v515
      %v592 = vunpack.c.l.b16 %v500
      %v593 = vunpack.c.l.b16 %v516
      %v594 = vunpack.c.l.b16 %v501
      %v595 = vunpack.c.l.b16 %v517
      %v596 = vunpack.c.l.b16 %v502
      %v597 = vunpack.c.l.b16 %v518
      %v598 = vunpack.c.l.b16 %v503
      %v599 = vunpack.c.l.b16 %v519
      %v600 = vpack.c.b16 %v569, %v568
      %v601 = vpack.c.b16 %v571, %v570
      %v602 = vpack.c.b16 %v573, %v572
      %v603 = vpack.c.b16 %v575, %v574
      %v604 = vpack.c.b16 %v577, %v576
      %v605 = vpack.c.b16 %v579, %v578
      %v606 = vpack.c.b16 %v581, %v580
      %v607 = vpack.c.b16 %v583, %v582
      %v608 = vpack.c.b16 %v585, %v584
      %v609 = vpack.c.b16 %v587, %v586
      %v610 = vpack.c.b16 %v589, %v588
      %v611 = vpack.c.b16 %v591, %v590
      %v612 = vpack.c.b16 %v593, %v592
      %v613 = vpack.c.b16 %v595, %v594
      %v614 = vpack.c.b16 %v597, %v596
      %v615 = vpack.c.b16 %v599, %v598
      %v617 = vshrl.u32 %v600, 16
      %v619 = vshll.u32 %v600, 16
      %v621 = vrot.slane %v619, 1
      %v622 = vor.u32 %v617, %v621
      %v624 = vshrl.u32 %v601, 16
      %v626 = vshll.u32 %v601, 16
      %v628 = vrot.slane %v626, 1
      %v629 = vor.u32 %v624, %v628
      %v631 = vshrl.u32 %v602, 16
      %v633 = vshll.u32 %v602, 16
      %v635 = vrot.slane %v633, 1
      %v636 = vor.u32 %v631, %v635
      %v638 = vshrl.u32 %v603, 16
      %v640 = vshll.u32 %v603, 16
      %v642 = vrot.slane %v640, 1
      %v643 = vor.u32 %v638, %v642
      %v645 = vshrl.u32 %v604, 16
      %v647 = vshll.u32 %v604, 16
      %v649 = vrot.slane %v647, 1
      %v650 = vor.u32 %v645, %v649
      %v652 = vshrl.u32 %v605, 16
      %v654 = vshll.u32 %v605, 16
      %v656 = vrot.slane %v654, 1
      %v657 = vor.u32 %v652, %v656
      %v659 = vshrl.u32 %v606, 16
      %v661 = vshll.u32 %v606, 16
      %v663 = vrot.slane %v661, 1
      %v664 = vor.u32 %v659, %v663
      %v666 = vshrl.u32 %v607, 16
      %v668 = vshll.u32 %v607, 16
      %v670 = vrot.slane %v668, 1
      %v671 = vor.u32 %v666, %v670
      %v673 = vshrl.u32 %v608, 16
      %v675 = vshll.u32 %v608, 16
      %v677 = vrot.slane %v675, 1
      %v678 = vor.u32 %v673, %v677
      %v680 = vshrl.u32 %v609, 16
      %v682 = vshll.u32 %v609, 16
      %v684 = vrot.slane %v682, 1
      %v685 = vor.u32 %v680, %v684
      %v687 = vshrl.u32 %v610, 16
      %v689 = vshll.u32 %v610, 16
      %v691 = vrot.slane %v689, 1
      %v692 = vor.u32 %v687, %v691
      %v694 = vshrl.u32 %v611, 16
      %v696 = vshll.u32 %v611, 16
      %v698 = vrot.slane %v696, 1
      %v699 = vor.u32 %v694, %v698
      %v701 = vshrl.u32 %v612, 16
      %v703 = vshll.u32 %v612, 16
      %v705 = vrot.slane %v703, 1
      %v706 = vor.u32 %v701, %v705
      %v708 = vshrl.u32 %v613, 16
      %v710 = vshll.u32 %v613, 16
      %v712 = vrot.slane %v710, 1
      %v713 = vor.u32 %v708, %v712
      %v715 = vshrl.u32 %v614, 16
      %v717 = vshll.u32 %v614, 16
      %v719 = vrot.slane %v717, 1
      %v720 = vor.u32 %v715, %v719
      %v722 = vshrl.u32 %v615, 16
      %v724 = vshll.u32 %v615, 16
      %v726 = vrot.slane %v724, 1
      %v727 = vor.u32 %v722, %v726
      %v744 = vunpack.c.l.b16 %v520
      %v745 = vunpack.c.l.b16 %v521
      %v746 = vunpack.c.l.b16 %v522
      %v747 = vunpack.c.l.b16 %v523
      %v748 = vunpack.c.l.b16 %v524
      %v749 = vunpack.c.l.b16 %v525
      %v750 = vunpack.c.l.b16 %v526
      %v751 = vunpack.c.l.b16 %v527
      %v752 = vunpack.c.l.b16 %v528
      %v753 = vunpack.c.l.b16 %v529
      %v754 = vunpack.c.l.b16 %v530
      %v755 = vunpack.c.l.b16 %v531
      %v756 = vunpack.c.l.b16 %v532
      %v757 = vunpack.c.l.b16 %v533
      %v758 = vunpack.c.l.b16 %v534
      %v759 = vunpack.c.l.b16 %v535
      %v760 = vpack.c.b16 %v569, %v744
      %v761 = vpack.c.b16 %v571, %v745
      %v762 = vpack.c.b16 %v573, %v746
      %v763 = vpack.c.b16 %v575, %v747
      %v764 = vpack.c.b16 %v577, %v748
      %v765 = vpack.c.b16 %v579, %v749
      %v766 = vpack.c.b16 %v581, %v750
      %v767 = vpack.c.b16 %v583, %v751
      %v768 = vpack.c.b16 %v585, %v752
      %v769 = vpack.c.b16 %v587, %v753
      %v770 = vpack.c.b16 %v589, %v754
      %v771 = vpack.c.b16 %v591, %v755
      %v772 = vpack.c.b16 %v593, %v756
      %v773 = vpack.c.b16 %v595, %v757
      %v774 = vpack.c.b16 %v597, %v758
      %v775 = vpack.c.b16 %v599, %v759
      %v776 = vrot.slane %v760, 1
      %v777 = vrot.slane %v761, 1
      %v778 = vrot.slane %v762, 1
      %v779 = vrot.slane %v763, 1
      %v780 = vrot.slane %v764, 1
      %v781 = vrot.slane %v765, 1
      %v782 = vrot.slane %v766, 1
      %v783 = vrot.slane %v767, 1
      %v784 = vrot.slane %v768, 1
      %v785 = vrot.slane %v769, 1
      %v786 = vrot.slane %v770, 1
      %v787 = vrot.slane %v771, 1
      %v788 = vrot.slane %v772, 1
      %v789 = vrot.slane %v773, 1
      %v790 = vrot.slane %v774, 1
      %v791 = vrot.slane %v775, 1
      %v792 = vunpack.c.l.b16 %v622
      %v793 = vunpack.c.l.b16 %v776
      %v794 = vunpack.c.l.b16 %v629
      %v795 = vunpack.c.l.b16 %v777
      %v796 = vunpack.c.l.b16 %v636
      %v797 = vunpack.c.l.b16 %v778
      %v798 = vunpack.c.l.b16 %v643
      %v799 = vunpack.c.l.b16 %v779
      %v800 = vunpack.c.l.b16 %v650
      %v801 = vunpack.c.l.b16 %v780
      %v802 = vunpack.c.l.b16 %v657
      %v803 = vunpack.c.l.b16 %v781
      %v804 = vunpack.c.l.b16 %v664
      %v805 = vunpack.c.l.b16 %v782
      %v806 = vunpack.c.l.b16 %v671
      %v807 = vunpack.c.l.b16 %v783
      %v808 = vunpack.c.l.b16 %v678
      %v809 = vunpack.c.l.b16 %v784
      %v810 = vunpack.c.l.b16 %v685
      %v811 = vunpack.c.l.b16 %v785
      %v812 = vunpack.c.l.b16 %v692
      %v813 = vunpack.c.l.b16 %v786
      %v814 = vunpack.c.l.b16 %v699
      %v815 = vunpack.c.l.b16 %v787
      %v816 = vunpack.c.l.b16 %v706
      %v817 = vunpack.c.l.b16 %v788
      %v818 = vunpack.c.l.b16 %v713
      %v819 = vunpack.c.l.b16 %v789
      %v820 = vunpack.c.l.b16 %v720
      %v821 = vunpack.c.l.b16 %v790
      %v822 = vunpack.c.l.b16 %v727
      %v823 = vunpack.c.l.b16 %v791
      %v824 = vld [vmem:[%s1] sm:$0xf]
      %v825 = vld [vmem:[%s1 + $0x4] sm:$0xf]
      %v826 = vld [vmem:[%s1 + $0x8] sm:$0xf]
      %v827 = vld [vmem:[%s1 + $0xc] sm:$0xf]
      %v828 = vld [vmem:[%s1 + $0x10] sm:$0xf]
      %v829 = vld [vmem:[%s1 + $0x14] sm:$0xf]
      %v830 = vld [vmem:[%s1 + $0x18] sm:$0xf]
      %v831 = vld [vmem:[%s1 + $0x1c] sm:$0xf]
      %v832 = vld [vmem:[%s1 + $0x20] sm:$0xf]
      %v833 = vld [vmem:[%s1 + $0x24] sm:$0xf]
      %v834 = vld [vmem:[%s1 + $0x28] sm:$0xf]
      %v835 = vld [vmem:[%s1 + $0x2c] sm:$0xf]
      %v836 = vld [vmem:[%s1 + $0x30] sm:$0xf]
      %v837 = vld [vmem:[%s1 + $0x34] sm:$0xf]
      %v838 = vld [vmem:[%s1 + $0x38] sm:$0xf]
      %v839 = vld [vmem:[%s1 + $0x3c] sm:$0xf]
      %v840 = vld [vmem:[%s1 + $0x40] sm:$0xf]
      %v841 = vld [vmem:[%s1 + $0x44] sm:$0xf]
      %v842 = vld [vmem:[%s1 + $0x48] sm:$0xf]
      %v843 = vld [vmem:[%s1 + $0x4c] sm:$0xf]
      %v844 = vld [vmem:[%s1 + $0x50] sm:$0xf]
      %v845 = vld [vmem:[%s1 + $0x54] sm:$0xf]
      %v846 = vld [vmem:[%s1 + $0x58] sm:$0xf]
      %v847 = vld [vmem:[%s1 + $0x5c] sm:$0xf]
      %v848 = vld [vmem:[%s1 + $0x60] sm:$0xf]
      %v849 = vld [vmem:[%s1 + $0x64] sm:$0xf]
      %v850 = vld [vmem:[%s1 + $0x68] sm:$0xf]
      %v851 = vld [vmem:[%s1 + $0x6c] sm:$0xf]
      %v852 = vld [vmem:[%s1 + $0x70] sm:$0xf]
      %v853 = vld [vmem:[%s1 + $0x74] sm:$0xf]
      %v854 = vld [vmem:[%s1 + $0x78] sm:$0xf]
      %v855 = vld [vmem:[%s1 + $0x7c] sm:$0xf]
      %v856 = vld [vmem:[%s1 + $0x80] sm:$0xf]
      %v857 = vld [vmem:[%s1 + $0x84] sm:$0xf]
      %v858 = vld [vmem:[%s1 + $0x88] sm:$0xf]
      %v859 = vld [vmem:[%s1 + $0x8c] sm:$0xf]
      %v860 = vld [vmem:[%s1 + $0x90] sm:$0xf]
      %v861 = vld [vmem:[%s1 + $0x94] sm:$0xf]
      %v862 = vld [vmem:[%s1 + $0x98] sm:$0xf]
      %v863 = vld [vmem:[%s1 + $0x9c] sm:$0xf]
      %v864 = vld [vmem:[%s1 + $0xa0] sm:$0xf]
      %v865 = vld [vmem:[%s1 + $0xa4] sm:$0xf]
      %v866 = vld [vmem:[%s1 + $0xa8] sm:$0xf]
      %v867 = vld [vmem:[%s1 + $0xac] sm:$0xf]
      %v868 = vld [vmem:[%s1 + $0xb0] sm:$0xf]
      %v869 = vld [vmem:[%s1 + $0xb4] sm:$0xf]
      %v870 = vld [vmem:[%s1 + $0xb8] sm:$0xf]
      %v871 = vld [vmem:[%s1 + $0xbc] sm:$0xf]
      %v872 = vld [vmem:[%s384] sm:$0xf]
      %v873 = vld [vmem:[%s384 + $0x8] sm:$0xf]
      %v874 = vld [vmem:[%s384 + $0x10] sm:$0xf]
      %v875 = vld [vmem:[%s384 + $0x18] sm:$0xf]
      %v876 = vld [vmem:[%s384 + $0x20] sm:$0xf]
      %v877 = vld [vmem:[%s384 + $0x28] sm:$0xf]
      %v878 = vld [vmem:[%s384 + $0x30] sm:$0xf]
      %v879 = vld [vmem:[%s384 + $0x38] sm:$0xf]
      %v880 = vld [vmem:[%s384 + $0x40] sm:$0xf]
      %v881 = vld [vmem:[%s384 + $0x48] sm:$0xf]
      %v882 = vld [vmem:[%s384 + $0x50] sm:$0xf]
      %v883 = vld [vmem:[%s384 + $0x58] sm:$0xf]
      %v884 = vld [vmem:[%s384 + $0x60] sm:$0xf]
      %v885 = vld [vmem:[%s384 + $0x68] sm:$0xf]
      %v886 = vld [vmem:[%s384 + $0x70] sm:$0xf]
      %v887 = vld [vmem:[%s384 + $0x78] sm:$0xf]
      %v888 = vld [vmem:[%s384 + $0x4] sm:$0x1]
      %v889 = vld [vmem:[%s384 + $0xc] sm:$0x1]
      %v890 = vld [vmem:[%s384 + $0x14] sm:$0x1]
      %v891 = vld [vmem:[%s384 + $0x1c] sm:$0x1]
      %v892 = vld [vmem:[%s384 + $0x24] sm:$0x1]
      %v893 = vld [vmem:[%s384 + $0x2c] sm:$0x1]
      %v894 = vld [vmem:[%s384 + $0x34] sm:$0x1]
      %v895 = vld [vmem:[%s384 + $0x3c] sm:$0x1]
      %v896 = vld [vmem:[%s384 + $0x44] sm:$0x1]
      %v897 = vld [vmem:[%s384 + $0x4c] sm:$0x1]
      %v898 = vld [vmem:[%s384 + $0x54] sm:$0x1]
      %v899 = vld [vmem:[%s384 + $0x5c] sm:$0x1]
      %v900 = vld [vmem:[%s384 + $0x64] sm:$0x1]
      %v901 = vld [vmem:[%s384 + $0x6c] sm:$0x1]
      %v902 = vld [vmem:[%s384 + $0x74] sm:$0x1]
      %v903 = vld [vmem:[%s384 + $0x7c] sm:$0x1]
      %v904 = vld [vmem:[%s384] sm:$0xe]
      %v905 = vld [vmem:[%s384 + $0x8] sm:$0xe]
      %v906 = vld [vmem:[%s384 + $0x10] sm:$0xe]
      %v907 = vld [vmem:[%s384 + $0x18] sm:$0xe]
      %v908 = vld [vmem:[%s384 + $0x20] sm:$0xe]
      %v909 = vld [vmem:[%s384 + $0x28] sm:$0xe]
      %v910 = vld [vmem:[%s384 + $0x30] sm:$0xe]
      %v911 = vld [vmem:[%s384 + $0x38] sm:$0xe]
      %v912 = vld [vmem:[%s384 + $0x40] sm:$0xe]
      %v913 = vld [vmem:[%s384 + $0x48] sm:$0xe]
      %v914 = vld [vmem:[%s384 + $0x50] sm:$0xe]
      %v915 = vld [vmem:[%s384 + $0x58] sm:$0xe]
      %v916 = vld [vmem:[%s384 + $0x60] sm:$0xe]
      %v917 = vld [vmem:[%s384 + $0x68] sm:$0xe]
      %v918 = vld [vmem:[%s384 + $0x70] sm:$0xe]
      %v919 = vld [vmem:[%s384 + $0x78] sm:$0xe]
      %v952 = vunpack.c.l.b16 %v872
      %v953 = vunpack.c.l.b16 %v888
      %v954 = vunpack.c.l.b16 %v873
      %v955 = vunpack.c.l.b16 %v889
      %v956 = vunpack.c.l.b16 %v874
      %v957 = vunpack.c.l.b16 %v890
      %v958 = vunpack.c.l.b16 %v875
      %v959 = vunpack.c.l.b16 %v891
      %v960 = vunpack.c.l.b16 %v876
      %v961 = vunpack.c.l.b16 %v892
      %v962 = vunpack.c.l.b16 %v877
      %v963 = vunpack.c.l.b16 %v893
      %v964 = vunpack.c.l.b16 %v878
      %v965 = vunpack.c.l.b16 %v894
      %v966 = vunpack.c.l.b16 %v879
      %v967 = vunpack.c.l.b16 %v895
      %v968 = vunpack.c.l.b16 %v880
      %v969 = vunpack.c.l.b16 %v896
      %v970 = vunpack.c.l.b16 %v881
      %v971 = vunpack.c.l.b16 %v897
      %v972 = vunpack.c.l.b16 %v882
      %v973 = vunpack.c.l.b16 %v898
      %v974 = vunpack.c.l.b16 %v883
      %v975 = vunpack.c.l.b16 %v899
      %v976 = vunpack.c.l.b16 %v884
      %v977 = vunpack.c.l.b16 %v900
      %v978 = vunpack.c.l.b16 %v885
      %v979 = vunpack.c.l.b16 %v901
      %v980 = vunpack.c.l.b16 %v886
      %v981 = vunpack.c.l.b16 %v902
      %v982 = vunpack.c.l.b16 %v887
      %v983 = vunpack.c.l.b16 %v903
      %v984 = vpack.c.b16 %v953, %v952
      %v985 = vpack.c.b16 %v955, %v954
      %v986 = vpack.c.b16 %v957, %v956
      %v987 = vpack.c.b16 %v959, %v958
      %v988 = vpack.c.b16 %v961, %v960
      %v989 = vpack.c.b16 %v963, %v962
      %v990 = vpack.c.b16 %v965, %v964
      %v991 = vpack.c.b16 %v967, %v966
      %v992 = vpack.c.b16 %v969, %v968
      %v993 = vpack.c.b16 %v971, %v970
      %v994 = vpack.c.b16 %v973, %v972
      %v995 = vpack.c.b16 %v975, %v974
      %v996 = vpack.c.b16 %v977, %v976
      %v997 = vpack.c.b16 %v979, %v978
      %v998 = vpack.c.b16 %v981, %v980
      %v999 = vpack.c.b16 %v983, %v982
      %v1001 = vshrl.u32 %v984, 16
      %v1003 = vshll.u32 %v984, 16
      %v1005 = vrot.slane %v1003, 1
      %v1006 = vor.u32 %v1001, %v1005
      %v1008 = vshrl.u32 %v985, 16
      %v1010 = vshll.u32 %v985, 16
      %v1012 = vrot.slane %v1010, 1
      %v1013 = vor.u32 %v1008, %v1012
      %v1015 = vshrl.u32 %v986, 16
      %v1017 = vshll.u32 %v986, 16
      %v1019 = vrot.slane %v1017, 1
      %v1020 = vor.u32 %v1015, %v1019
      %v1022 = vshrl.u32 %v987, 16
      %v1024 = vshll.u32 %v987, 16
      %v1026 = vrot.slane %v1024, 1
      %v1027 = vor.u32 %v1022, %v1026
      %v1029 = vshrl.u32 %v988, 16
      %v1031 = vshll.u32 %v988, 16
      %v1033 = vrot.slane %v1031, 1
      %v1034 = vor.u32 %v1029, %v1033
      %v1036 = vshrl.u32 %v989, 16
      %v1038 = vshll.u32 %v989, 16
      %v1040 = vrot.slane %v1038, 1
      %v1041 = vor.u32 %v1036, %v1040
      %v1043 = vshrl.u32 %v990, 16
      %v1045 = vshll.u32 %v990, 16
      %v1047 = vrot.slane %v1045, 1
      %v1048 = vor.u32 %v1043, %v1047
      %v1050 = vshrl.u32 %v991, 16
      %v1052 = vshll.u32 %v991, 16
      %v1054 = vrot.slane %v1052, 1
      %v1055 = vor.u32 %v1050, %v1054
      %v1057 = vshrl.u32 %v992, 16
      %v1059 = vshll.u32 %v992, 16
      %v1061 = vrot.slane %v1059, 1
      %v1062 = vor.u32 %v1057, %v1061
      %v1064 = vshrl.u32 %v993, 16
      %v1066 = vshll.u32 %v993, 16
      %v1068 = vrot.slane %v1066, 1
      %v1069 = vor.u32 %v1064, %v1068
      %v1071 = vshrl.u32 %v994, 16
      %v1073 = vshll.u32 %v994, 16
      %v1075 = vrot.slane %v1073, 1
      %v1076 = vor.u32 %v1071, %v1075
      %v1078 = vshrl.u32 %v995, 16
      %v1080 = vshll.u32 %v995, 16
      %v1082 = vrot.slane %v1080, 1
      %v1083 = vor.u32 %v1078, %v1082
      %v1085 = vshrl.u32 %v996, 16
      %v1087 = vshll.u32 %v996, 16
      %v1089 = vrot.slane %v1087, 1
      %v1090 = vor.u32 %v1085, %v1089
      %v1092 = vshrl.u32 %v997, 16
      %v1094 = vshll.u32 %v997, 16
      %v1096 = vrot.slane %v1094, 1
      %v1097 = vor.u32 %v1092, %v1096
      %v1099 = vshrl.u32 %v998, 16
      %v1101 = vshll.u32 %v998, 16
      %v1103 = vrot.slane %v1101, 1
      %v1104 = vor.u32 %v1099, %v1103
      %v1106 = vshrl.u32 %v999, 16
      %v1108 = vshll.u32 %v999, 16
      %v1110 = vrot.slane %v1108, 1
      %v1111 = vor.u32 %v1106, %v1110
      %v1128 = vunpack.c.l.b16 %v904
      %v1129 = vunpack.c.l.b16 %v905
      %v1130 = vunpack.c.l.b16 %v906
      %v1131 = vunpack.c.l.b16 %v907
      %v1132 = vunpack.c.l.b16 %v908
      %v1133 = vunpack.c.l.b16 %v909
      %v1134 = vunpack.c.l.b16 %v910
      %v1135 = vunpack.c.l.b16 %v911
      %v1136 = vunpack.c.l.b16 %v912
      %v1137 = vunpack.c.l.b16 %v913
      %v1138 = vunpack.c.l.b16 %v914
      %v1139 = vunpack.c.l.b16 %v915
      %v1140 = vunpack.c.l.b16 %v916
      %v1141 = vunpack.c.l.b16 %v917
      %v1142 = vunpack.c.l.b16 %v918
      %v1143 = vunpack.c.l.b16 %v919
      %v1144 = vpack.c.b16 %v953, %v1128
      %v1145 = vpack.c.b16 %v955, %v1129
      %v1146 = vpack.c.b16 %v957, %v1130
      %v1147 = vpack.c.b16 %v959, %v1131
      %v1148 = vpack.c.b16 %v961, %v1132
      %v1149 = vpack.c.b16 %v963, %v1133
      %v1150 = vpack.c.b16 %v965, %v1134
      %v1151 = vpack.c.b16 %v967, %v1135
      %v1152 = vpack.c.b16 %v969, %v1136
      %v1153 = vpack.c.b16 %v971, %v1137
      %v1154 = vpack.c.b16 %v973, %v1138
      %v1155 = vpack.c.b16 %v975, %v1139
      %v1156 = vpack.c.b16 %v977, %v1140
      %v1157 = vpack.c.b16 %v979, %v1141
      %v1158 = vpack.c.b16 %v981, %v1142
      %v1159 = vpack.c.b16 %v983, %v1143
      %v1160 = vrot.slane %v1144, 1
      %v1161 = vrot.slane %v1145, 1
      %v1162 = vrot.slane %v1146, 1
      %v1163 = vrot.slane %v1147, 1
      %v1164 = vrot.slane %v1148, 1
      %v1165 = vrot.slane %v1149, 1
      %v1166 = vrot.slane %v1150, 1
      %v1167 = vrot.slane %v1151, 1
      %v1168 = vrot.slane %v1152, 1
      %v1169 = vrot.slane %v1153, 1
      %v1170 = vrot.slane %v1154, 1
      %v1171 = vrot.slane %v1155, 1
      %v1172 = vrot.slane %v1156, 1
      %v1173 = vrot.slane %v1157, 1
      %v1174 = vrot.slane %v1158, 1
      %v1175 = vrot.slane %v1159, 1
      %v1176 = vunpack.c.l.b16 %v1006
      %v1177 = vunpack.c.l.b16 %v1160
      %v1178 = vunpack.c.l.b16 %v1013
      %v1179 = vunpack.c.l.b16 %v1161
      %v1180 = vunpack.c.l.b16 %v1020
      %v1181 = vunpack.c.l.b16 %v1162
      %v1182 = vunpack.c.l.b16 %v1027
      %v1183 = vunpack.c.l.b16 %v1163
      %v1184 = vunpack.c.l.b16 %v1034
      %v1185 = vunpack.c.l.b16 %v1164
      %v1186 = vunpack.c.l.b16 %v1041
      %v1187 = vunpack.c.l.b16 %v1165
      %v1188 = vunpack.c.l.b16 %v1048
      %v1189 = vunpack.c.l.b16 %v1166
      %v1190 = vunpack.c.l.b16 %v1055
      %v1191 = vunpack.c.l.b16 %v1167
      %v1192 = vunpack.c.l.b16 %v1062
      %v1193 = vunpack.c.l.b16 %v1168
      %v1194 = vunpack.c.l.b16 %v1069
      %v1195 = vunpack.c.l.b16 %v1169
      %v1196 = vunpack.c.l.b16 %v1076
      %v1197 = vunpack.c.l.b16 %v1170
      %v1198 = vunpack.c.l.b16 %v1083
      %v1199 = vunpack.c.l.b16 %v1171
      %v1200 = vunpack.c.l.b16 %v1090
      %v1201 = vunpack.c.l.b16 %v1172
      %v1202 = vunpack.c.l.b16 %v1097
      %v1203 = vunpack.c.l.b16 %v1173
      %v1204 = vunpack.c.l.b16 %v1104
      %v1205 = vunpack.c.l.b16 %v1174
      %v1206 = vunpack.c.l.b16 %v1111
      %v1207 = vunpack.c.l.b16 %v1175
      %s1208 = scalar_lea.vmem %s1, 192
      %v1209 = vld [vmem:[%s1208] sm:$0xf]
      %v1210 = vld [vmem:[%s1208 + $0x4] sm:$0xf]
      %v1211 = vld [vmem:[%s1208 + $0x8] sm:$0xf]
      %v1212 = vld [vmem:[%s1208 + $0xc] sm:$0xf]
      %v1213 = vld [vmem:[%s1208 + $0x10] sm:$0xf]
      %v1214 = vld [vmem:[%s1208 + $0x14] sm:$0xf]
      %v1215 = vld [vmem:[%s1208 + $0x18] sm:$0xf]
      %v1216 = vld [vmem:[%s1208 + $0x1c] sm:$0xf]
      %v1217 = vld [vmem:[%s1208 + $0x20] sm:$0xf]
      %v1218 = vld [vmem:[%s1208 + $0x24] sm:$0xf]
      %v1219 = vld [vmem:[%s1208 + $0x28] sm:$0xf]
      %v1220 = vld [vmem:[%s1208 + $0x2c] sm:$0xf]
      %v1221 = vld [vmem:[%s1208 + $0x30] sm:$0xf]
      %v1222 = vld [vmem:[%s1208 + $0x34] sm:$0xf]
      %v1223 = vld [vmem:[%s1208 + $0x38] sm:$0xf]
      %v1224 = vld [vmem:[%s1208 + $0x3c] sm:$0xf]
      %v1225 = vld [vmem:[%s1208 + $0x40] sm:$0xf]
      %v1226 = vld [vmem:[%s1208 + $0x44] sm:$0xf]
      %v1227 = vld [vmem:[%s1208 + $0x48] sm:$0xf]
      %v1228 = vld [vmem:[%s1208 + $0x4c] sm:$0xf]
      %v1229 = vld [vmem:[%s1208 + $0x50] sm:$0xf]
      %v1230 = vld [vmem:[%s1208 + $0x54] sm:$0xf]
      %v1231 = vld [vmem:[%s1208 + $0x58] sm:$0xf]
      %v1232 = vld [vmem:[%s1208 + $0x5c] sm:$0xf]
      %v1233 = vld [vmem:[%s1208 + $0x60] sm:$0xf]
      %v1234 = vld [vmem:[%s1208 + $0x64] sm:$0xf]
      %v1235 = vld [vmem:[%s1208 + $0x68] sm:$0xf]
      %v1236 = vld [vmem:[%s1208 + $0x6c] sm:$0xf]
      %v1237 = vld [vmem:[%s1208 + $0x70] sm:$0xf]
      %v1238 = vld [vmem:[%s1208 + $0x74] sm:$0xf]
      %v1239 = vld [vmem:[%s1208 + $0x78] sm:$0xf]
      %v1240 = vld [vmem:[%s1208 + $0x7c] sm:$0xf]
      %v1241 = vld [vmem:[%s1208 + $0x80] sm:$0xf]
      %v1242 = vld [vmem:[%s1208 + $0x84] sm:$0xf]
      %v1243 = vld [vmem:[%s1208 + $0x88] sm:$0xf]
      %v1244 = vld [vmem:[%s1208 + $0x8c] sm:$0xf]
      %v1245 = vld [vmem:[%s1208 + $0x90] sm:$0xf]
      %v1246 = vld [vmem:[%s1208 + $0x94] sm:$0xf]
      %v1247 = vld [vmem:[%s1208 + $0x98] sm:$0xf]
      %v1248 = vld [vmem:[%s1208 + $0x9c] sm:$0xf]
      %v1249 = vld [vmem:[%s1208 + $0xa0] sm:$0xf]
      %v1250 = vld [vmem:[%s1208 + $0xa4] sm:$0xf]
      %v1251 = vld [vmem:[%s1208 + $0xa8] sm:$0xf]
      %v1252 = vld [vmem:[%s1208 + $0xac] sm:$0xf]
      %v1253 = vld [vmem:[%s1208 + $0xb0] sm:$0xf]
      %v1254 = vld [vmem:[%s1208 + $0xb4] sm:$0xf]
      %v1255 = vld [vmem:[%s1208 + $0xb8] sm:$0xf]
      %v1256 = vld [vmem:[%s1208 + $0xbc] sm:$0xf]
      %v1257 = vpack.c.b16 %v954, %v952
      %v1258 = vpack.c.b16 %v1178, %v1176
      %v1259 = vpack.c.b16 %v1179, %v1177
      %v1260 = vpack.c.b16 %v958, %v956
      %v1261 = vpack.c.b16 %v1182, %v1180
      %v1262 = vpack.c.b16 %v1183, %v1181
      %v1263 = vpack.c.b16 %v962, %v960
      %v1264 = vpack.c.b16 %v1186, %v1184
      %v1265 = vpack.c.b16 %v1187, %v1185
      %v1266 = vpack.c.b16 %v966, %v964
      %v1267 = vpack.c.b16 %v1190, %v1188
      %v1268 = vpack.c.b16 %v1191, %v1189
      %v1269 = vpack.c.b16 %v970, %v968
      %v1270 = vpack.c.b16 %v1194, %v1192
      %v1271 = vpack.c.b16 %v1195, %v1193
      %v1272 = vpack.c.b16 %v974, %v972
      %v1273 = vpack.c.b16 %v1198, %v1196
      %v1274 = vpack.c.b16 %v1199, %v1197
      %v1275 = vpack.c.b16 %v978, %v976
      %v1276 = vpack.c.b16 %v1202, %v1200
      %v1277 = vpack.c.b16 %v1203, %v1201
      %v1278 = vpack.c.b16 %v982, %v980
      %v1279 = vpack.c.b16 %v1206, %v1204
      %v1280 = vpack.c.b16 %v1207, %v1205
      %v1353 = vunpack.c.l.b16 %v1209
      %v1354 = vunpack.c.l.b16 %v1210
      %v1355 = vunpack.c.l.b16 %v1211
      %v1356 = vunpack.c.l.b16 %v1212
      %v1357 = vunpack.c.l.b16 %v1213
      %v1358 = vunpack.c.l.b16 %v1214
      %v1359 = vunpack.c.l.b16 %v1215
      %v1360 = vunpack.c.l.b16 %v1216
      %v1361 = vunpack.c.l.b16 %v1217
      %v1362 = vunpack.c.l.b16 %v1218
      %v1363 = vunpack.c.l.b16 %v1219
      %v1364 = vunpack.c.l.b16 %v1220
      %v1365 = vunpack.c.l.b16 %v1221
      %v1366 = vunpack.c.l.b16 %v1222
      %v1367 = vunpack.c.l.b16 %v1223
      %v1368 = vunpack.c.l.b16 %v1224
      %v1369 = vunpack.c.l.b16 %v1225
      %v1370 = vunpack.c.l.b16 %v1226
      %v1371 = vunpack.c.l.b16 %v1227
      %v1372 = vunpack.c.l.b16 %v1228
      %v1373 = vunpack.c.l.b16 %v1229
      %v1374 = vunpack.c.l.b16 %v1230
      %v1375 = vunpack.c.l.b16 %v1231
      %v1376 = vunpack.c.l.b16 %v1232
      %v1377 = vunpack.c.l.b16 %v1233
      %v1378 = vunpack.c.l.b16 %v1234
      %v1379 = vunpack.c.l.b16 %v1235
      %v1380 = vunpack.c.l.b16 %v1236
      %v1381 = vunpack.c.l.b16 %v1237
      %v1382 = vunpack.c.l.b16 %v1238
      %v1383 = vunpack.c.l.b16 %v1239
      %v1384 = vunpack.c.l.b16 %v1240
      %v1385 = vunpack.c.l.b16 %v1241
      %v1386 = vunpack.c.l.b16 %v1242
      %v1387 = vunpack.c.l.b16 %v1243
      %v1388 = vunpack.c.l.b16 %v1244
      %v1389 = vunpack.c.l.b16 %v1245
      %v1390 = vunpack.c.l.b16 %v1246
      %v1391 = vunpack.c.l.b16 %v1247
      %v1392 = vunpack.c.l.b16 %v1248
      %v1393 = vunpack.c.l.b16 %v1249
      %v1394 = vunpack.c.l.b16 %v1250
      %v1395 = vunpack.c.l.b16 %v1251
      %v1396 = vunpack.c.l.b16 %v1252
      %v1397 = vunpack.c.l.b16 %v1253
      %v1398 = vunpack.c.l.b16 %v1254
      %v1399 = vunpack.c.l.b16 %v1255
      %v1400 = vunpack.c.l.b16 %v1256
      %v1401 = vpack.c.b16 %v1354, %v1353
      %v1402 = vpack.c.b16 %v1356, %v1355
      %v1403 = vpack.c.b16 %v1358, %v1357
      %v1404 = vpack.c.b16 %v1360, %v1359
      %v1405 = vpack.c.b16 %v1362, %v1361
      %v1406 = vpack.c.b16 %v1364, %v1363
      %v1407 = vpack.c.b16 %v1366, %v1365
      %v1408 = vpack.c.b16 %v1368, %v1367
      %v1409 = vpack.c.b16 %v1370, %v1369
      %v1410 = vpack.c.b16 %v1372, %v1371
      %v1411 = vpack.c.b16 %v1374, %v1373
      %v1412 = vpack.c.b16 %v1376, %v1375
      %v1413 = vpack.c.b16 %v1378, %v1377
      %v1414 = vpack.c.b16 %v1380, %v1379
      %v1415 = vpack.c.b16 %v1382, %v1381
      %v1416 = vpack.c.b16 %v1384, %v1383
      %v1417 = vpack.c.b16 %v1386, %v1385
      %v1418 = vpack.c.b16 %v1388, %v1387
      %v1419 = vpack.c.b16 %v1390, %v1389
      %v1420 = vpack.c.b16 %v1392, %v1391
      %v1421 = vpack.c.b16 %v1394, %v1393
      %v1422 = vpack.c.b16 %v1396, %v1395
      %v1423 = vpack.c.b16 %v1398, %v1397
      %v1424 = vpack.c.b16 %v1400, %v1399
      %1449 = vmatprep.subr.bf16.mxu0 0
      %1450 = vmatpush1.bf16.msra.mxu0 %v1401
      %1451 = vmatprep.subr.bf16.mxu0 0
      %1452 = vmatpush1.bf16.msra.mxu0 %v1402
      %1453 = vmatprep.subr.bf16.mxu0 0
      %1454 = vmatpush1.bf16.msra.mxu0 %v1403
      %1455 = vmatprep.subr.bf16.mxu0 0
      %1456 = vmatpush1.bf16.msra.mxu0 %v1404
      %1457 = vmatprep.subr.bf16.mxu0 0
      %1458 = vmatpush1.bf16.msra.mxu0 %v1405
      %1459 = vmatprep.subr.bf16.mxu0 0
      %1460 = vmatpush1.bf16.msra.mxu0 %v1406
      %1461 = vmatprep.subr.bf16.mxu0 0
      %1462 = vmatpush1.bf16.msra.mxu0 %v1407
      %1463 = vmatprep.subr.bf16.mxu0 0
      %1464 = vmatpush1.bf16.msra.mxu0 %v1408
      %1465 = vmatprep.subr.bf16.mxu0 0
      %1466 = vmatpush1.bf16.msra.mxu0 %v1409
      %1467 = vmatprep.subr.bf16.mxu0 0
      %1468 = vmatpush1.bf16.msra.mxu0 %v1410
      %1469 = vmatprep.subr.bf16.mxu0 0
      %1470 = vmatpush1.bf16.msra.mxu0 %v1411
      %1471 = vmatprep.subr.bf16.mxu0 0
      %1472 = vmatpush1.bf16.msra.mxu0 %v1412
      %1473 = vmatprep.subr.bf16.mxu0 0
      %1474 = vmatpush1.bf16.msra.mxu0 %v1413
      %1475 = vmatprep.subr.bf16.mxu0 0
      %1476 = vmatpush1.bf16.msra.mxu0 %v1414
      %1477 = vmatprep.subr.bf16.mxu0 0
      %1478 = vmatpush1.bf16.msra.mxu0 %v1415
      %1479 = vmatprep.subr.bf16.mxu0 0
      %1480 = vmatpush1.bf16.msra.mxu0 %v1416
      %1481 = vmatprep.mubr.bf16.mxu0 %v1258
      %1482 = vmatmul.mubr.bf16.gmra.mrb[0].mxu0 %v1257
      %v1483 = vpop.f32.mrb[0].mxu0
      %v1484 = vadd.f32 0.0, %v1483
      %v1485 = vpop.f32.mrb[0].mxu0
      %v1486 = vpop.f32.mrb[0].mxu0
      %v1487 = vadd.f32 0.0, %v1486
      %v1488 = vpop.f32.mrb[0].mxu0
      %1489 = vmatprep.mubr.bf16.mxu0 %v1261
      %1490 = vmatmul.mubr.bf16.gmra.mrb[0].mxu0 %v1260
      %v1491 = vpop.f32.mrb[0].mxu0
      %v1492 = vadd.f32 0.0, %v1491
      %v1493 = vpop.f32.mrb[0].mxu0
      %v1494 = vpop.f32.mrb[0].mxu0
      %v1495 = vadd.f32 0.0, %v1494
      %v1496 = vpop.f32.mrb[0].mxu0
      %1497 = vmatprep.mubr.bf16.mxu0 %v1264
      %1498 = vmatmul.mubr.bf16.gmra.mrb[0].mxu0 %v1263
      %v1499 = vpop.f32.mrb[0].mxu0
      %v1500 = vadd.f32 0.0, %v1499
      %v1501 = vpop.f32.mrb[0].mxu0
      %v1502 = vpop.f32.mrb[0].mxu0
      %v1503 = vadd.f32 0.0, %v1502
      %v1504 = vpop.f32.mrb[0].mxu0
      %1505 = vmatprep.mubr.bf16.mxu0 %v1267
      %1506 = vmatmul.mubr.bf16.gmra.mrb[0].mxu0 %v1266
      %v1507 = vpop.f32.mrb[0].mxu0
      %v1508 = vadd.f32 0.0, %v1507
      %v1509 = vpop.f32.mrb[0].mxu0
      %v1510 = vpop.f32.mrb[0].mxu0
      %v1511 = vadd.f32 0.0, %v1510
      %v1512 = vpop.f32.mrb[0].mxu0
      %1513 = vmatprep.mubr.bf16.mxu0 %v1270
      %1514 = vmatmul.mubr.bf16.gmra.mrb[0].mxu0 %v1269
      %v1515 = vpop.f32.mrb[0].mxu0
      %v1516 = vadd.f32 0.0, %v1515
      %v1517 = vpop.f32.mrb[0].mxu0
      %v1518 = vpop.f32.mrb[0].mxu0
      %v1519 = vadd.f32 0.0, %v1518
      %v1520 = vpop.f32.mrb[0].mxu0
      %1521 = vmatprep.mubr.bf16.mxu0 %v1273
      %1522 = vmatmul.mubr.bf16.gmra.mrb[0].mxu0 %v1272
      %v1523 = vpop.f32.mrb[0].mxu0
      %v1524 = vadd.f32 0.0, %v1523
      %v1525 = vpop.f32.mrb[0].mxu0
      %v1526 = vpop.f32.mrb[0].mxu0
      %v1527 = vadd.f32 0.0, %v1526
      %v1528 = vpop.f32.mrb[0].mxu0
      %1529 = vmatprep.mubr.bf16.mxu0 %v1276
      %1530 = vmatmul.mubr.bf16.gmra.mrb[0].mxu0 %v1275
      %v1531 = vpop.f32.mrb[0].mxu0
      %v1532 = vadd.f32 0.0, %v1531
      %v1533 = vpop.f32.mrb[0].mxu0
      %v1534 = vpop.f32.mrb[0].mxu0
      %v1535 = vadd.f32 0.0, %v1534
      %v1536 = vpop.f32.mrb[0].mxu0
      %1537 = vmatprep.mubr.bf16.mxu0 %v1279
      %1538 = vmatmul.mubr.bf16.gmra.mrb[0].mxu0 %v1278
      %v1539 = vpop.f32.mrb[0].mxu0
      %v1540 = vadd.f32 0.0, %v1539
      %v1541 = vpop.f32.mrb[0].mxu0
      %v1542 = vpop.f32.mrb[0].mxu0
      %v1543 = vadd.f32 0.0, %v1542
      %v1544 = vpop.f32.mrb[0].mxu0
      %1545 = vdwg.mxu0
      %1546 = vmatprep.subr.bf16.mxu0 0
      %1547 = vmatpush1.bf16.msra.mxu0 %v1417
      %1548 = vmatprep.subr.bf16.mxu0 0
      %1549 = vmatpush1.bf16.msra.mxu0 %v1418
      %1550 = vmatprep.subr.bf16.mxu0 0
      %1551 = vmatpush1.bf16.msra.mxu0 %v1419
      %1552 = vmatprep.subr.bf16.mxu0 0
      %1553 = vmatpush1.bf16.msra.mxu0 %v1420
      %1554 = vmatprep.subr.bf16.mxu0 0
      %1555 = vmatpush1.bf16.msra.mxu0 %v1421
      %1556 = vmatprep.subr.bf16.mxu0 0
      %1557 = vmatpush1.bf16.msra.mxu0 %v1422
      %1558 = vmatprep.subr.bf16.mxu0 0
      %1559 = vmatpush1.bf16.msra.mxu0 %v1423
      %1560 = vmatprep.subr.bf16.mxu0 0
      %1561 = vmatpush1.bf16.msra.mxu0 %v1424
      %1562 = vmatprep.subr.bf16.mxu0 0
      %1563 = vmatpush1.bf16.msra.mxu0 0
      %1564 = vmatprep.subr.bf16.mxu0 0
      %1565 = vmatpush1.bf16.msra.mxu0 0
      %1566 = vmatprep.subr.bf16.mxu0 0
      %1567 = vmatpush1.bf16.msra.mxu0 0
      %1568 = vmatprep.subr.bf16.mxu0 0
      %1569 = vmatpush1.bf16.msra.mxu0 0
      %1570 = vmatprep.subr.bf16.mxu0 0
      %1571 = vmatpush1.bf16.msra.mxu0 0
      %1572 = vmatprep.subr.bf16.mxu0 0
      %1573 = vmatpush1.bf16.msra.mxu0 0
      %1574 = vmatprep.subr.bf16.mxu0 0
      %1575 = vmatpush1.bf16.msra.mxu0 0
      %1576 = vmatprep.subr.bf16.mxu0 0
      %1577 = vmatpush1.bf16.msra.mxu0 0
      %1578 = vmatprep.mubr.bf16.mxu0 0
      %1579 = vmatmul.mubr.bf16.gmra.mrb[0].mxu0 %v1259
      %v1580 = vpop.f32.mrb[0].mxu0
      %v1581 = vadd.f32 %v1484, %v1580
      %v1582 = vpop.f32.mrb[0].mxu0
      %v1583 = vpop.f32.mrb[0].mxu0
      %v1584 = vadd.f32 %v1487, %v1583
      %v1585 = vpop.f32.mrb[0].mxu0
      %1586 = vmatprep.mubr.bf16.mxu0 0
      %1587 = vmatmul.mubr.bf16.gmra.mrb[0].mxu0 %v1262
      %v1588 = vpop.f32.mrb[0].mxu0
      %v1589 = vadd.f32 %v1492, %v1588
      %v1590 = vpop.f32.mrb[0].mxu0
      %v1591 = vpop.f32.mrb[0].mxu0
      %v1592 = vadd.f32 %v1495, %v1591
      %v1593 = vpop.f32.mrb[0].mxu0
      %1594 = vmatprep.mubr.bf16.mxu0 0
      %1595 = vmatmul.mubr.bf16.gmra.mrb[0].mxu0 %v1265
      %v1596 = vpop.f32.mrb[0].mxu0
      %v1597 = vadd.f32 %v1500, %v1596
      %v1598 = vpop.f32.mrb[0].mxu0
      %v1599 = vpop.f32.mrb[0].mxu0
      %v1600 = vadd.f32 %v1503, %v1599
      %v1601 = vpop.f32.mrb[0].mxu0
      %1602 = vmatprep.mubr.bf16.mxu0 0
      %1603 = vmatmul.mubr.bf16.gmra.mrb[0].mxu0 %v1268
      %v1604 = vpop.f32.mrb[0].mxu0
      %v1605 = vadd.f32 %v1508, %v1604
      %v1606 = vpop.f32.mrb[0].mxu0
      %v1607 = vpop.f32.mrb[0].mxu0
      %v1608 = vadd.f32 %v1511, %v1607
      %v1609 = vpop.f32.mrb[0].mxu0
      %1610 = vmatprep.mubr.bf16.mxu0 0
      %1611 = vmatmul.mubr.bf16.gmra.mrb[0].mxu0 %v1271
      %v1612 = vpop.f32.mrb[0].mxu0
      %v1613 = vadd.f32 %v1516, %v1612
      %v1614 = vpop.f32.mrb[0].mxu0
      %v1615 = vpop.f32.mrb[0].mxu0
      %v1616 = vadd.f32 %v1519, %v1615
      %v1617 = vpop.f32.mrb[0].mxu0
      %1618 = vmatprep.mubr.bf16.mxu0 0
      %1619 = vmatmul.mubr.bf16.gmra.mrb[0].mxu0 %v1274
      %v1620 = vpop.f32.mrb[0].mxu0
      %v1621 = vadd.f32 %v1524, %v1620
      %v1622 = vpop.f32.mrb[0].mxu0
      %v1623 = vpop.f32.mrb[0].mxu0
      %v1624 = vadd.f32 %v1527, %v1623
      %v1625 = vpop.f32.mrb[0].mxu0
      %1626 = vmatprep.mubr.bf16.mxu0 0
      %1627 = vmatmul.mubr.bf16.gmra.mrb[0].mxu0 %v1277
      %v1628 = vpop.f32.mrb[0].mxu0
      %v1629 = vadd.f32 %v1532, %v1628
      %v1630 = vpop.f32.mrb[0].mxu0
      %v1631 = vpop.f32.mrb[0].mxu0
      %v1632 = vadd.f32 %v1535, %v1631
      %v1633 = vpop.f32.mrb[0].mxu0
      %1634 = vmatprep.mubr.bf16.mxu0 0
      %1635 = vmatmul.mubr.bf16.gmra.mrb[0].mxu0 %v1280
      %v1636 = vpop.f32.mrb[0].mxu0
      %v1637 = vadd.f32 %v1540, %v1636
      %v1638 = vpop.f32.mrb[0].mxu0
      %v1639 = vpop.f32.mrb[0].mxu0
      %v1640 = vadd.f32 %v1543, %v1639
      %v1641 = vpop.f32.mrb[0].mxu0
      %1642 = vdwg.mxu0
      %v1643 = vpack.c.b16 %v570, %v568
      %v1644 = vpack.c.b16 %v794, %v792
      %v1645 = vpack.c.b16 %v795, %v793
      %v1646 = vpack.c.b16 %v574, %v572
      %v1647 = vpack.c.b16 %v798, %v796
      %v1648 = vpack.c.b16 %v799, %v797
      %v1649 = vpack.c.b16 %v578, %v576
      %v1650 = vpack.c.b16 %v802, %v800
      %v1651 = vpack.c.b16 %v803, %v801
      %v1652 = vpack.c.b16 %v582, %v580
      %v1653 = vpack.c.b16 %v806, %v804
      %v1654 = vpack.c.b16 %v807, %v805
      %v1655 = vpack.c.b16 %v586, %v584
      %v1656 = vpack.c.b16 %v810, %v808
      %v1657 = vpack.c.b16 %v811, %v809
      %v1658 = vpack.c.b16 %v590, %v588
      %v1659 = vpack.c.b16 %v814, %v812
      %v1660 = vpack.c.b16 %v815, %v813
      %v1661 = vpack.c.b16 %v594, %v592
      %v1662 = vpack.c.b16 %v818, %v816
      %v1663 = vpack.c.b16 %v819, %v817
      %v1664 = vpack.c.b16 %v598, %v596
      %v1665 = vpack.c.b16 %v822, %v820
      %v1666 = vpack.c.b16 %v823, %v821
      %v1739 = vunpack.c.l.b16 %v824
      %v1740 = vunpack.c.l.b16 %v825
      %v1741 = vunpack.c.l.b16 %v826
      %v1742 = vunpack.c.l.b16 %v827
      %v1743 = vunpack.c.l.b16 %v828
      %v1744 = vunpack.c.l.b16 %v829
      %v1745 = vunpack.c.l.b16 %v830
      %v1746 = vunpack.c.l.b16 %v831
      %v1747 = vunpack.c.l.b16 %v832
      %v1748 = vunpack.c.l.b16 %v833
      %v1749 = vunpack.c.l.b16 %v834
      %v1750 = vunpack.c.l.b16 %v835
      %v1751 = vunpack.c.l.b16 %v836
      %v1752 = vunpack.c.l.b16 %v837
      %v1753 = vunpack.c.l.b16 %v838
      %v1754 = vunpack.c.l.b16 %v839
      %v1755 = vunpack.c.l.b16 %v840
      %v1756 = vunpack.c.l.b16 %v841
      %v1757 = vunpack.c.l.b16 %v842
      %v1758 = vunpack.c.l.b16 %v843
      %v1759 = vunpack.c.l.b16 %v844
      %v1760 = vunpack.c.l.b16 %v845
      %v1761 = vunpack.c.l.b16 %v846
      %v1762 = vunpack.c.l.b16 %v847
      %v1763 = vunpack.c.l.b16 %v848
      %v1764 = vunpack.c.l.b16 %v849
      %v1765 = vunpack.c.l.b16 %v850
      %v1766 = vunpack.c.l.b16 %v851
      %v1767 = vunpack.c.l.b16 %v852
      %v1768 = vunpack.c.l.b16 %v853
      %v1769 = vunpack.c.l.b16 %v854
      %v1770 = vunpack.c.l.b16 %v855
      %v1771 = vunpack.c.l.b16 %v856
      %v1772 = vunpack.c.l.b16 %v857
      %v1773 = vunpack.c.l.b16 %v858
      %v1774 = vunpack.c.l.b16 %v859
      %v1775 = vunpack.c.l.b16 %v860
      %v1776 = vunpack.c.l.b16 %v861
      %v1777 = vunpack.c.l.b16 %v862
      %v1778 = vunpack.c.l.b16 %v863
      %v1779 = vunpack.c.l.b16 %v864
      %v1780 = vunpack.c.l.b16 %v865
      %v1781 = vunpack.c.l.b16 %v866
      %v1782 = vunpack.c.l.b16 %v867
      %v1783 = vunpack.c.l.b16 %v868
      %v1784 = vunpack.c.l.b16 %v869
      %v1785 = vunpack.c.l.b16 %v870
      %v1786 = vunpack.c.l.b16 %v871
      %v1787 = vpack.c.b16 %v1740, %v1739
      %v1788 = vpack.c.b16 %v1742, %v1741
      %v1789 = vpack.c.b16 %v1744, %v1743
      %v1790 = vpack.c.b16 %v1746, %v1745
      %v1791 = vpack.c.b16 %v1748, %v1747
      %v1792 = vpack.c.b16 %v1750, %v1749
      %v1793 = vpack.c.b16 %v1752, %v1751
      %v1794 = vpack.c.b16 %v1754, %v1753
      %v1795 = vpack.c.b16 %v1756, %v1755
      %v1796 = vpack.c.b16 %v1758, %v1757
      %v1797 = vpack.c.b16 %v1760, %v1759
      %v1798 = vpack.c.b16 %v1762, %v1761
      %v1799 = vpack.c.b16 %v1764, %v1763
      %v1800 = vpack.c.b16 %v1766, %v1765
      %v1801 = vpack.c.b16 %v1768, %v1767
      %v1802 = vpack.c.b16 %v1770, %v1769
      %v1803 = vpack.c.b16 %v1772, %v1771
      %v1804 = vpack.c.b16 %v1774, %v1773
      %v1805 = vpack.c.b16 %v1776, %v1775
      %v1806 = vpack.c.b16 %v1778, %v1777
      %v1807 = vpack.c.b16 %v1780, %v1779
      %v1808 = vpack.c.b16 %v1782, %v1781
      %v1809 = vpack.c.b16 %v1784, %v1783
      %v1810 = vpack.c.b16 %v1786, %v1785
      %1835 = vmatprep.subr.bf16.mxu0 0
      %1836 = vmatpush1.bf16.msra.mxu0 %v1787
      %1837 = vmatprep.subr.bf16.mxu0 0
      %1838 = vmatpush1.bf16.msra.mxu0 %v1788
      %1839 = vmatprep.subr.bf16.mxu0 0
      %1840 = vmatpush1.bf16.msra.mxu0 %v1789
      %1841 = vmatprep.subr.bf16.mxu0 0
      %1842 = vmatpush1.bf16.msra.mxu0 %v1790
      %1843 = vmatprep.subr.bf16.mxu0 0
      %1844 = vmatpush1.bf16.msra.mxu0 %v1791
      %1845 = vmatprep.subr.bf16.mxu0 0
      %1846 = vmatpush1.bf16.msra.mxu0 %v1792
      %1847 = vmatprep.subr.bf16.mxu0 0
      %1848 = vmatpush1.bf16.msra.mxu0 %v1793
      %1849 = vmatprep.subr.bf16.mxu0 0
      %1850 = vmatpush1.bf16.msra.mxu0 %v1794
      %1851 = vmatprep.subr.bf16.mxu0 0
      %1852 = vmatpush1.bf16.msra.mxu0 %v1795
      %1853 = vmatprep.subr.bf16.mxu0 0
      %1854 = vmatpush1.bf16.msra.mxu0 %v1796
      %1855 = vmatprep.subr.bf16.mxu0 0
      %1856 = vmatpush1.bf16.msra.mxu0 %v1797
      %1857 = vmatprep.subr.bf16.mxu0 0
      %1858 = vmatpush1.bf16.msra.mxu0 %v1798
      %1859 = vmatprep.subr.bf16.mxu0 0
      %1860 = vmatpush1.bf16.msra.mxu0 %v1799
      %1861 = vmatprep.subr.bf16.mxu0 0
      %1862 = vmatpush1.bf16.msra.mxu0 %v1800
      %1863 = vmatprep.subr.bf16.mxu0 0
      %1864 = vmatpush1.bf16.msra.mxu0 %v1801
      %1865 = vmatprep.subr.bf16.mxu0 0
      %1866 = vmatpush1.bf16.msra.mxu0 %v1802
      %1867 = vmatprep.mubr.bf16.mxu0 %v1644
      %1868 = vmatmul.mubr.bf16.gmra.mrb[0].mxu0 %v1643
      %v1869 = vpop.f32.mrb[0].mxu0
      %v1870 = vadd.f32 %v1581, %v1869
      %v1871 = vpop.f32.mrb[0].mxu0
      %v1872 = vpop.f32.mrb[0].mxu0
      %v1873 = vadd.f32 %v1584, %v1872
      %v1874 = vpop.f32.mrb[0].mxu0
      %1875 = vmatprep.mubr.bf16.mxu0 %v1647
      %1876 = vmatmul.mubr.bf16.gmra.mrb[0].mxu0 %v1646
      %v1877 = vpop.f32.mrb[0].mxu0
      %v1878 = vadd.f32 %v1589, %v1877
      %v1879 = vpop.f32.mrb[0].mxu0
      %v1880 = vpop.f32.mrb[0].mxu0
      %v1881 = vadd.f32 %v1592, %v1880
      %v1882 = vpop.f32.mrb[0].mxu0
      %1883 = vmatprep.mubr.bf16.mxu0 %v1650
      %1884 = vmatmul.mubr.bf16.gmra.mrb[0].mxu0 %v1649
      %v1885 = vpop.f32.mrb[0].mxu0
      %v1886 = vadd.f32 %v1597, %v1885
      %v1887 = vpop.f32.mrb[0].mxu0
      %v1888 = vpop.f32.mrb[0].mxu0
      %v1889 = vadd.f32 %v1600, %v1888
      %v1890 = vpop.f32.mrb[0].mxu0
      %1891 = vmatprep.mubr.bf16.mxu0 %v1653
      %1892 = vmatmul.mubr.bf16.gmra.mrb[0].mxu0 %v1652
      %v1893 = vpop.f32.mrb[0].mxu0
      %v1894 = vadd.f32 %v1605, %v1893
      %v1895 = vpop.f32.mrb[0].mxu0
      %v1896 = vpop.f32.mrb[0].mxu0
      %v1897 = vadd.f32 %v1608, %v1896
      %v1898 = vpop.f32.mrb[0].mxu0
      %1899 = vmatprep.mubr.bf16.mxu0 %v1656
      %1900 = vmatmul.mubr.bf16.gmra.mrb[0].mxu0 %v1655
      %v1901 = vpop.f32.mrb[0].mxu0
      %v1902 = vadd.f32 %v1613, %v1901
      %v1903 = vpop.f32.mrb[0].mxu0
      %v1904 = vpop.f32.mrb[0].mxu0
      %v1905 = vadd.f32 %v1616, %v1904
      %v1906 = vpop.f32.mrb[0].mxu0
      %1907 = vmatprep.mubr.bf16.mxu0 %v1659
      %1908 = vmatmul.mubr.bf16.gmra.mrb[0].mxu0 %v1658
      %v1909 = vpop.f32.mrb[0].mxu0
      %v1910 = vadd.f32 %v1621, %v1909
      %v1911 = vpop.f32.mrb[0].mxu0
      %v1912 = vpop.f32.mrb[0].mxu0
      %v1913 = vadd.f32 %v1624, %v1912
      %v1914 = vpop.f32.mrb[0].mxu0
      %1915 = vmatprep.mubr.bf16.mxu0 %v1662
      %1916 = vmatmul.mubr.bf16.gmra.mrb[0].mxu0 %v1661
      %v1917 = vpop.f32.mrb[0].mxu0
      %v1918 = vadd.f32 %v1629, %v1917
      %v1919 = vpop.f32.mrb[0].mxu0
      %v1920 = vpop.f32.mrb[0].mxu0
      %v1921 = vadd.f32 %v1632, %v1920
      %v1922 = vpop.f32.mrb[0].mxu0
      %1923 = vmatprep.mubr.bf16.mxu0 %v1665
      %1924 = vmatmul.mubr.bf16.gmra.mrb[0].mxu0 %v1664
      %v1925 = vpop.f32.mrb[0].mxu0
      %v1926 = vadd.f32 %v1637, %v1925
      %v1927 = vpop.f32.mrb[0].mxu0
      %v1928 = vpop.f32.mrb[0].mxu0
      %v1929 = vadd.f32 %v1640, %v1928
      %v1930 = vpop.f32.mrb[0].mxu0
      %1931 = vdwg.mxu0
      %1932 = vmatprep.subr.bf16.mxu0 0
      %1933 = vmatpush1.bf16.msra.mxu0 %v1803
      %1934 = vmatprep.subr.bf16.mxu0 0
      %1935 = vmatpush1.bf16.msra.mxu0 %v1804
      %1936 = vmatprep.subr.bf16.mxu0 0
      %1937 = vmatpush1.bf16.msra.mxu0 %v1805
      %1938 = vmatprep.subr.bf16.mxu0 0
      %1939 = vmatpush1.bf16.msra.mxu0 %v1806
      %1940 = vmatprep.subr.bf16.mxu0 0
      %1941 = vmatpush1.bf16.msra.mxu0 %v1807
      %1942 = vmatprep.subr.bf16.mxu0 0
      %1943 = vmatpush1.bf16.msra.mxu0 %v1808
      %1944 = vmatprep.subr.bf16.mxu0 0
      %1945 = vmatpush1.bf16.msra.mxu0 %v1809
      %1946 = vmatprep.subr.bf16.mxu0 0
      %1947 = vmatpush1.bf16.msra.mxu0 %v1810
      %1948 = vmatprep.subr.bf16.mxu0 0
      %1949 = vmatpush1.bf16.msra.mxu0 0
      %1950 = vmatprep.subr.bf16.mxu0 0
      %1951 = vmatpush1.bf16.msra.mxu0 0
      %1952 = vmatprep.subr.bf16.mxu0 0
      %1953 = vmatpush1.bf16.msra.mxu0 0
      %1954 = vmatprep.subr.bf16.mxu0 0
      %1955 = vmatpush1.bf16.msra.mxu0 0
      %1956 = vmatprep.subr.bf16.mxu0 0
      %1957 = vmatpush1.bf16.msra.mxu0 0
      %1958 = vmatprep.subr.bf16.mxu0 0
      %1959 = vmatpush1.bf16.msra.mxu0 0
      %1960 = vmatprep.subr.bf16.mxu0 0
      %1961 = vmatpush1.bf16.msra.mxu0 0
      %1962 = vmatprep.subr.bf16.mxu0 0
      %1963 = vmatpush1.bf16.msra.mxu0 0
      %1964 = vmatprep.mubr.bf16.mxu0 0
      %1965 = vmatmul.mubr.bf16.gmra.mrb[0].mxu0 %v1645
      %v1966 = vpop.f32.mrb[0].mxu0
      %v1967 = vadd.f32 %v1870, %v1966
      %v1968 = vpop.f32.mrb[0].mxu0
      %v1969 = vpop.f32.mrb[0].mxu0
      %v1970 = vadd.f32 %v1873, %v1969
      %v1971 = vpop.f32.mrb[0].mxu0
      %1972 = vmatprep.mubr.bf16.mxu0 0
      %1973 = vmatmul.mubr.bf16.gmra.mrb[0].mxu0 %v1648
      %v1974 = vpop.f32.mrb[0].mxu0
      %v1975 = vadd.f32 %v1878, %v1974
      %v1976 = vpop.f32.mrb[0].mxu0
      %v1977 = vpop.f32.mrb[0].mxu0
      %v1978 = vadd.f32 %v1881, %v1977
      %v1979 = vpop.f32.mrb[0].mxu0
      %1980 = vmatprep.mubr.bf16.mxu0 0
      %1981 = vmatmul.mubr.bf16.gmra.mrb[0].mxu0 %v1651
      %v1982 = vpop.f32.mrb[0].mxu0
      %v1983 = vadd.f32 %v1886, %v1982
      %v1984 = vpop.f32.mrb[0].mxu0
      %v1985 = vpop.f32.mrb[0].mxu0
      %v1986 = vadd.f32 %v1889, %v1985
      %v1987 = vpop.f32.mrb[0].mxu0
      %1988 = vmatprep.mubr.bf16.mxu0 0
      %1989 = vmatmul.mubr.bf16.gmra.mrb[0].mxu0 %v1654
      %v1990 = vpop.f32.mrb[0].mxu0
      %v1991 = vadd.f32 %v1894, %v1990
      %v1992 = vpop.f32.mrb[0].mxu0
      %v1993 = vpop.f32.mrb[0].mxu0
      %v1994 = vadd.f32 %v1897, %v1993
      %v1995 = vpop.f32.mrb[0].mxu0
      %1996 = vmatprep.mubr.bf16.mxu0 0
      %1997 = vmatmul.mubr.bf16.gmra.mrb[0].mxu0 %v1657
      %v1998 = vpop.f32.mrb[0].mxu0
      %v1999 = vadd.f32 %v1902, %v1998
      %v2000 = vpop.f32.mrb[0].mxu0
      %v2001 = vpop.f32.mrb[0].mxu0
      %v2002 = vadd.f32 %v1905, %v2001
      %v2003 = vpop.f32.mrb[0].mxu0
      %2004 = vmatprep.mubr.bf16.mxu0 0
      %2005 = vmatmul.mubr.bf16.gmra.mrb[0].mxu0 %v1660
      %v2006 = vpop.f32.mrb[0].mxu0
      %v2007 = vadd.f32 %v1910, %v2006
      %v2008 = vpop.f32.mrb[0].mxu0
      %v2009 = vpop.f32.mrb[0].mxu0
      %v2010 = vadd.f32 %v1913, %v2009
      %v2011 = vpop.f32.mrb[0].mxu0
      %2012 = vmatprep.mubr.bf16.mxu0 0
      %2013 = vmatmul.mubr.bf16.gmra.mrb[0].mxu0 %v1663
      %v2014 = vpop.f32.mrb[0].mxu0
      %v2015 = vadd.f32 %v1918, %v2014
      %v2016 = vpop.f32.mrb[0].mxu0
      %v2017 = vpop.f32.mrb[0].mxu0
      %v2018 = vadd.f32 %v1921, %v2017
      %v2019 = vpop.f32.mrb[0].mxu0
      %2020 = vmatprep.mubr.bf16.mxu0 0
      %2021 = vmatmul.mubr.bf16.gmra.mrb[0].mxu0 %v1666
      %v2022 = vpop.f32.mrb[0].mxu0
      %v2023 = vadd.f32 %v1926, %v2022
      %v2024 = vpop.f32.mrb[0].mxu0
      %v2025 = vpop.f32.mrb[0].mxu0
      %v2026 = vadd.f32 %v1929, %v2025
      %v2027 = vpop.f32.mrb[0].mxu0
      %2028 = vdwg.mxu0
      %s2029 = scalar_lea.vmem [#allocation2], 16
      %v2030 = vld [vmem:[%s2029] sm:$0xf]
      %v2031 = vld [vmem:[%s2029 + $0x8] sm:$0xf]
      %v2032 = vld [vmem:[%s2029 + $0x10] sm:$0xf]
      %v2033 = vld [vmem:[%s2029 + $0x18] sm:$0xf]
      %v2034 = vld [vmem:[%s2029 + $0x20] sm:$0xf]
      %v2035 = vld [vmem:[%s2029 + $0x28] sm:$0xf]
      %v2036 = vld [vmem:[%s2029 + $0x30] sm:$0xf]
      %v2037 = vld [vmem:[%s2029 + $0x38] sm:$0xf]
      %v2038 = vld [vmem:[%s2029 + $0x40] sm:$0xf]
      %v2039 = vld [vmem:[%s2029 + $0x48] sm:$0xf]
      %v2040 = vld [vmem:[%s2029 + $0x50] sm:$0xf]
      %v2041 = vld [vmem:[%s2029 + $0x58] sm:$0xf]
      %v2042 = vld [vmem:[%s2029 + $0x60] sm:$0xf]
      %v2043 = vld [vmem:[%s2029 + $0x68] sm:$0xf]
      %v2044 = vld [vmem:[%s2029 + $0x70] sm:$0xf]
      %v2045 = vld [vmem:[%s2029 + $0x78] sm:$0xf]
      %v2046 = vld [vmem:[%s2029 + $0x4] sm:$0x1]
      %v2047 = vld [vmem:[%s2029 + $0xc] sm:$0x1]
      %v2048 = vld [vmem:[%s2029 + $0x14] sm:$0x1]
      %v2049 = vld [vmem:[%s2029 + $0x1c] sm:$0x1]
      %v2050 = vld [vmem:[%s2029 + $0x24] sm:$0x1]
      %v2051 = vld [vmem:[%s2029 + $0x2c] sm:$0x1]
      %v2052 = vld [vmem:[%s2029 + $0x34] sm:$0x1]
      %v2053 = vld [vmem:[%s2029 + $0x3c] sm:$0x1]
      %v2054 = vld [vmem:[%s2029 + $0x44] sm:$0x1]
      %v2055 = vld [vmem:[%s2029 + $0x4c] sm:$0x1]
      %v2056 = vld [vmem:[%s2029 + $0x54] sm:$0x1]
      %v2057 = vld [vmem:[%s2029 + $0x5c] sm:$0x1]
      %v2058 = vld [vmem:[%s2029 + $0x64] sm:$0x1]
      %v2059 = vld [vmem:[%s2029 + $0x6c] sm:$0x1]
      %v2060 = vld [vmem:[%s2029 + $0x74] sm:$0x1]
      %v2061 = vld [vmem:[%s2029 + $0x7c] sm:$0x1]
      %v2062 = vld [vmem:[%s2029] sm:$0xe]
      %v2063 = vld [vmem:[%s2029 + $0x8] sm:$0xe]
      %v2064 = vld [vmem:[%s2029 + $0x10] sm:$0xe]
      %v2065 = vld [vmem:[%s2029 + $0x18] sm:$0xe]
      %v2066 = vld [vmem:[%s2029 + $0x20] sm:$0xe]
      %v2067 = vld [vmem:[%s2029 + $0x28] sm:$0xe]
      %v2068 = vld [vmem:[%s2029 + $0x30] sm:$0xe]
      %v2069 = vld [vmem:[%s2029 + $0x38] sm:$0xe]
      %v2070 = vld [vmem:[%s2029 + $0x40] sm:$0xe]
      %v2071 = vld [vmem:[%s2029 + $0x48] sm:$0xe]
      %v2072 = vld [vmem:[%s2029 + $0x50] sm:$0xe]
      %v2073 = vld [vmem:[%s2029 + $0x58] sm:$0xe]
      %v2074 = vld [vmem:[%s2029 + $0x60] sm:$0xe]
      %v2075 = vld [vmem:[%s2029 + $0x68] sm:$0xe]
      %v2076 = vld [vmem:[%s2029 + $0x70] sm:$0xe]
      %v2077 = vld [vmem:[%s2029 + $0x78] sm:$0xe]
      %v2110 = vunpack.c.l.b16 %v2030
      %v2111 = vunpack.c.l.b16 %v2046
      %v2112 = vunpack.c.l.b16 %v2031
      %v2113 = vunpack.c.l.b16 %v2047
      %v2114 = vunpack.c.l.b16 %v2032
      %v2115 = vunpack.c.l.b16 %v2048
      %v2116 = vunpack.c.l.b16 %v2033
      %v2117 = vunpack.c.l.b16 %v2049
      %v2118 = vunpack.c.l.b16 %v2034
      %v2119 = vunpack.c.l.b16 %v2050
      %v2120 = vunpack.c.l.b16 %v2035
      %v2121 = vunpack.c.l.b16 %v2051
      %v2122 = vunpack.c.l.b16 %v2036
      %v2123 = vunpack.c.l.b16 %v2052
      %v2124 = vunpack.c.l.b16 %v2037
      %v2125 = vunpack.c.l.b16 %v2053
      %v2126 = vunpack.c.l.b16 %v2038
      %v2127 = vunpack.c.l.b16 %v2054
      %v2128 = vunpack.c.l.b16 %v2039
      %v2129 = vunpack.c.l.b16 %v2055
      %v2130 = vunpack.c.l.b16 %v2040
      %v2131 = vunpack.c.l.b16 %v2056
      %v2132 = vunpack.c.l.b16 %v2041
      %v2133 = vunpack.c.l.b16 %v2057
      %v2134 = vunpack.c.l.b16 %v2042
      %v2135 = vunpack.c.l.b16 %v2058
      %v2136 = vunpack.c.l.b16 %v2043
      %v2137 = vunpack.c.l.b16 %v2059
      %v2138 = vunpack.c.l.b16 %v2044
      %v2139 = vunpack.c.l.b16 %v2060
      %v2140 = vunpack.c.l.b16 %v2045
      %v2141 = vunpack.c.l.b16 %v2061
      %v2142 = vpack.c.b16 %v2111, %v2110
      %v2143 = vpack.c.b16 %v2113, %v2112
      %v2144 = vpack.c.b16 %v2115, %v2114
      %v2145 = vpack.c.b16 %v2117, %v2116
      %v2146 = vpack.c.b16 %v2119, %v2118
      %v2147 = vpack.c.b16 %v2121, %v2120
      %v2148 = vpack.c.b16 %v2123, %v2122
      %v2149 = vpack.c.b16 %v2125, %v2124
      %v2150 = vpack.c.b16 %v2127, %v2126
      %v2151 = vpack.c.b16 %v2129, %v2128
      %v2152 = vpack.c.b16 %v2131, %v2130
      %v2153 = vpack.c.b16 %v2133, %v2132
      %v2154 = vpack.c.b16 %v2135, %v2134
      %v2155 = vpack.c.b16 %v2137, %v2136
      %v2156 = vpack.c.b16 %v2139, %v2138
      %v2157 = vpack.c.b16 %v2141, %v2140
      %v2159 = vshrl.u32 %v2142, 16
      %v2161 = vshll.u32 %v2142, 16
      %v2163 = vrot.slane %v2161, 1
      %v2164 = vor.u32 %v2159, %v2163
      %v2166 = vshrl.u32 %v2143, 16
      %v2168 = vshll.u32 %v2143, 16
      %v2170 = vrot.slane %v2168, 1
      %v2171 = vor.u32 %v2166, %v2170
      %v2173 = vshrl.u32 %v2144, 16
      %v2175 = vshll.u32 %v2144, 16
      %v2177 = vrot.slane %v2175, 1
      %v2178 = vor.u32 %v2173, %v2177
      %v2180 = vshrl.u32 %v2145, 16
      %v2182 = vshll.u32 %v2145, 16
      %v2184 = vrot.slane %v2182, 1
      %v2185 = vor.u32 %v2180, %v2184
      %v2187 = vshrl.u32 %v2146, 16
      %v2189 = vshll.u32 %v2146, 16
      %v2191 = vrot.slane %v2189, 1
      %v2192 = vor.u32 %v2187, %v2191
      %v2194 = vshrl.u32 %v2147, 16
      %v2196 = vshll.u32 %v2147, 16
      %v2198 = vrot.slane %v2196, 1
      %v2199 = vor.u32 %v2194, %v2198
      %v2201 = vshrl.u32 %v2148, 16
      %v2203 = vshll.u32 %v2148, 16
      %v2205 = vrot.slane %v2203, 1
      %v2206 = vor.u32 %v2201, %v2205
      %v2208 = vshrl.u32 %v2149, 16
      %v2210 = vshll.u32 %v2149, 16
      %v2212 = vrot.slane %v2210, 1
      %v2213 = vor.u32 %v2208, %v2212
      %v2215 = vshrl.u32 %v2150, 16
      %v2217 = vshll.u32 %v2150, 16
      %v2219 = vrot.slane %v2217, 1
      %v2220 = vor.u32 %v2215, %v2219
      %v2222 = vshrl.u32 %v2151, 16
      %v2224 = vshll.u32 %v2151, 16
      %v2226 = vrot.slane %v2224, 1
      %v2227 = vor.u32 %v2222, %v2226
      %v2229 = vshrl.u32 %v2152, 16
      %v2231 = vshll.u32 %v2152, 16
      %v2233 = vrot.slane %v2231, 1
      %v2234 = vor.u32 %v2229, %v2233
      %v2236 = vshrl.u32 %v2153, 16
      %v2238 = vshll.u32 %v2153, 16
      %v2240 = vrot.slane %v2238, 1
      %v2241 = vor.u32 %v2236, %v2240
      %v2243 = vshrl.u32 %v2154, 16
      %v2245 = vshll.u32 %v2154, 16
      %v2247 = vrot.slane %v2245, 1
      %v2248 = vor.u32 %v2243, %v2247
      %v2250 = vshrl.u32 %v2155, 16
      %v2252 = vshll.u32 %v2155, 16
      %v2254 = vrot.slane %v2252, 1
      %v2255 = vor.u32 %v2250, %v2254
      %v2257 = vshrl.u32 %v2156, 16
      %v2259 = vshll.u32 %v2156, 16
      %v2261 = vrot.slane %v2259, 1
      %v2262 = vor.u32 %v2257, %v2261
      %v2264 = vshrl.u32 %v2157, 16
      %v2266 = vshll.u32 %v2157, 16
      %v2268 = vrot.slane %v2266, 1
      %v2269 = vor.u32 %v2264, %v2268
      %v2286 = vunpack.c.l.b16 %v2062
      %v2287 = vunpack.c.l.b16 %v2063
      %v2288 = vunpack.c.l.b16 %v2064
      %v2289 = vunpack.c.l.b16 %v2065
      %v2290 = vunpack.c.l.b16 %v2066
      %v2291 = vunpack.c.l.b16 %v2067
      %v2292 = vunpack.c.l.b16 %v2068
      %v2293 = vunpack.c.l.b16 %v2069
      %v2294 = vunpack.c.l.b16 %v2070
      %v2295 = vunpack.c.l.b16 %v2071
      %v2296 = vunpack.c.l.b16 %v2072
      %v2297 = vunpack.c.l.b16 %v2073
      %v2298 = vunpack.c.l.b16 %v2074
      %v2299 = vunpack.c.l.b16 %v2075
      %v2300 = vunpack.c.l.b16 %v2076
      %v2301 = vunpack.c.l.b16 %v2077
      %v2302 = vpack.c.b16 %v2111, %v2286
      %v2303 = vpack.c.b16 %v2113, %v2287
      %v2304 = vpack.c.b16 %v2115, %v2288
      %v2305 = vpack.c.b16 %v2117, %v2289
      %v2306 = vpack.c.b16 %v2119, %v2290
      %v2307 = vpack.c.b16 %v2121, %v2291
      %v2308 = vpack.c.b16 %v2123, %v2292
      %v2309 = vpack.c.b16 %v2125, %v2293
      %v2310 = vpack.c.b16 %v2127, %v2294
      %v2311 = vpack.c.b16 %v2129, %v2295
      %v2312 = vpack.c.b16 %v2131, %v2296
      %v2313 = vpack.c.b16 %v2133, %v2297
      %v2314 = vpack.c.b16 %v2135, %v2298
      %v2315 = vpack.c.b16 %v2137, %v2299
      %v2316 = vpack.c.b16 %v2139, %v2300
      %v2317 = vpack.c.b16 %v2141, %v2301
      %v2318 = vrot.slane %v2302, 1
      %v2319 = vrot.slane %v2303, 1
      %v2320 = vrot.slane %v2304, 1
      %v2321 = vrot.slane %v2305, 1
      %v2322 = vrot.slane %v2306, 1
      %v2323 = vrot.slane %v2307, 1
      %v2324 = vrot.slane %v2308, 1
      %v2325 = vrot.slane %v2309, 1
      %v2326 = vrot.slane %v2310, 1
      %v2327 = vrot.slane %v2311, 1
      %v2328 = vrot.slane %v2312, 1
      %v2329 = vrot.slane %v2313, 1
      %v2330 = vrot.slane %v2314, 1
      %v2331 = vrot.slane %v2315, 1
      %v2332 = vrot.slane %v2316, 1
      %v2333 = vrot.slane %v2317, 1
      %v2334 = vunpack.c.l.b16 %v2164
      %v2335 = vunpack.c.l.b16 %v2318
      %v2336 = vunpack.c.l.b16 %v2171
      %v2337 = vunpack.c.l.b16 %v2319
      %v2338 = vunpack.c.l.b16 %v2178
      %v2339 = vunpack.c.l.b16 %v2320
      %v2340 = vunpack.c.l.b16 %v2185
      %v2341 = vunpack.c.l.b16 %v2321
      %v2342 = vunpack.c.l.b16 %v2192
      %v2343 = vunpack.c.l.b16 %v2322
      %v2344 = vunpack.c.l.b16 %v2199
      %v2345 = vunpack.c.l.b16 %v2323
      %v2346 = vunpack.c.l.b16 %v2206
      %v2347 = vunpack.c.l.b16 %v2324
      %v2348 = vunpack.c.l.b16 %v2213
      %v2349 = vunpack.c.l.b16 %v2325
      %v2350 = vunpack.c.l.b16 %v2220
      %v2351 = vunpack.c.l.b16 %v2326
      %v2352 = vunpack.c.l.b16 %v2227
      %v2353 = vunpack.c.l.b16 %v2327
      %v2354 = vunpack.c.l.b16 %v2234
      %v2355 = vunpack.c.l.b16 %v2328
      %v2356 = vunpack.c.l.b16 %v2241
      %v2357 = vunpack.c.l.b16 %v2329
      %v2358 = vunpack.c.l.b16 %v2248
      %v2359 = vunpack.c.l.b16 %v2330
      %v2360 = vunpack.c.l.b16 %v2255
      %v2361 = vunpack.c.l.b16 %v2331
      %v2362 = vunpack.c.l.b16 %v2262
      %v2363 = vunpack.c.l.b16 %v2332
      %v2364 = vunpack.c.l.b16 %v2269
      %v2365 = vunpack.c.l.b16 %v2333
      %s2366 = scalar_lea.vmem %s1, 384
      %v2367 = vld [vmem:[%s2366] sm:$0xf]
      %v2368 = vld [vmem:[%s2366 + $0x4] sm:$0xf]
      %v2369 = vld [vmem:[%s2366 + $0x8] sm:$0xf]
      %v2370 = vld [vmem:[%s2366 + $0xc] sm:$0xf]
      %v2371 = vld [vmem:[%s2366 + $0x10] sm:$0xf]
      %v2372 = vld [vmem:[%s2366 + $0x14] sm:$0xf]
      %v2373 = vld [vmem:[%s2366 + $0x18] sm:$0xf]
      %v2374 = vld [vmem:[%s2366 + $0x1c] sm:$0xf]
      %v2375 = vld [vmem:[%s2366 + $0x20] sm:$0xf]
      %v2376 = vld [vmem:[%s2366 + $0x24] sm:$0xf]
      %v2377 = vld [vmem:[%s2366 + $0x28] sm:$0xf]
      %v2378 = vld [vmem:[%s2366 + $0x2c] sm:$0xf]
      %v2379 = vld [vmem:[%s2366 + $0x30] sm:$0xf]
      %v2380 = vld [vmem:[%s2366 + $0x34] sm:$0xf]
      %v2381 = vld [vmem:[%s2366 + $0x38] sm:$0xf]
      %v2382 = vld [vmem:[%s2366 + $0x3c] sm:$0xf]
      %v2383 = vld [vmem:[%s2366 + $0x40] sm:$0xf]
      %v2384 = vld [vmem:[%s2366 + $0x44] sm:$0xf]
      %v2385 = vld [vmem:[%s2366 + $0x48] sm:$0xf]
      %v2386 = vld [vmem:[%s2366 + $0x4c] sm:$0xf]
      %v2387 = vld [vmem:[%s2366 + $0x50] sm:$0xf]
      %v2388 = vld [vmem:[%s2366 + $0x54] sm:$0xf]
      %v2389 = vld [vmem:[%s2366 + $0x58] sm:$0xf]
      %v2390 = vld [vmem:[%s2366 + $0x5c] sm:$0xf]
      %v2391 = vld [vmem:[%s2366 + $0x60] sm:$0xf]
      %v2392 = vld [vmem:[%s2366 + $0x64] sm:$0xf]
      %v2393 = vld [vmem:[%s2366 + $0x68] sm:$0xf]
      %v2394 = vld [vmem:[%s2366 + $0x6c] sm:$0xf]
      %v2395 = vld [vmem:[%s2366 + $0x70] sm:$0xf]
      %v2396 = vld [vmem:[%s2366 + $0x74] sm:$0xf]
      %v2397 = vld [vmem:[%s2366 + $0x78] sm:$0xf]
      %v2398 = vld [vmem:[%s2366 + $0x7c] sm:$0xf]
      %v2399 = vld [vmem:[%s2366 + $0x80] sm:$0xf]
      %v2400 = vld [vmem:[%s2366 + $0x84] sm:$0xf]
      %v2401 = vld [vmem:[%s2366 + $0x88] sm:$0xf]
      %v2402 = vld [vmem:[%s2366 + $0x8c] sm:$0xf]
      %v2403 = vld [vmem:[%s2366 + $0x90] sm:$0xf]
      %v2404 = vld [vmem:[%s2366 + $0x94] sm:$0xf]
      %v2405 = vld [vmem:[%s2366 + $0x98] sm:$0xf]
      %v2406 = vld [vmem:[%s2366 + $0x9c] sm:$0xf]
      %v2407 = vld [vmem:[%s2366 + $0xa0] sm:$0xf]
      %v2408 = vld [vmem:[%s2366 + $0xa4] sm:$0xf]
      %v2409 = vld [vmem:[%s2366 + $0xa8] sm:$0xf]
      %v2410 = vld [vmem:[%s2366 + $0xac] sm:$0xf]
      %v2411 = vld [vmem:[%s2366 + $0xb0] sm:$0xf]
      %v2412 = vld [vmem:[%s2366 + $0xb4] sm:$0xf]
      %v2413 = vld [vmem:[%s2366 + $0xb8] sm:$0xf]
      %v2414 = vld [vmem:[%s2366 + $0xbc] sm:$0xf]
      %v2415 = vpack.c.b16 %v2112, %v2110
      %v2416 = vpack.c.b16 %v2336, %v2334
      %v2417 = vpack.c.b16 %v2337, %v2335
      %v2418 = vpack.c.b16 %v2116, %v2114
      %v2419 = vpack.c.b16 %v2340, %v2338
      %v2420 = vpack.c.b16 %v2341, %v2339
      %v2421 = vpack.c.b16 %v2120, %v2118
      %v2422 = vpack.c.b16 %v2344, %v2342
      %v2423 = vpack.c.b16 %v2345, %v2343
      %v2424 = vpack.c.b16 %v2124, %v2122
      %v2425 = vpack.c.b16 %v2348, %v2346
      %v2426 = vpack.c.b16 %v2349, %v2347
      %v2427 = vpack.c.b16 %v2128, %v2126
      %v2428 = vpack.c.b16 %v2352, %v2350
      %v2429 = vpack.c.b16 %v2353, %v2351
      %v2430 = vpack.c.b16 %v2132, %v2130
      %v2431 = vpack.c.b16 %v2356, %v2354
      %v2432 = vpack.c.b16 %v2357, %v2355
      %v2433 = vpack.c.b16 %v2136, %v2134
      %v2434 = vpack.c.b16 %v2360, %v2358
      %v2435 = vpack.c.b16 %v2361, %v2359
      %v2436 = vpack.c.b16 %v2140, %v2138
      %v2437 = vpack.c.b16 %v2364, %v2362
      %v2438 = vpack.c.b16 %v2365, %v2363
      %v2511 = vunpack.c.l.b16 %v2367
      %v2512 = vunpack.c.l.b16 %v2368
      %v2513 = vunpack.c.l.b16 %v2369
      %v2514 = vunpack.c.l.b16 %v2370
      %v2515 = vunpack.c.l.b16 %v2371
      %v2516 = vunpack.c.l.b16 %v2372
      %v2517 = vunpack.c.l.b16 %v2373
      %v2518 = vunpack.c.l.b16 %v2374
      %v2519 = vunpack.c.l.b16 %v2375
      %v2520 = vunpack.c.l.b16 %v2376
      %v2521 = vunpack.c.l.b16 %v2377
      %v2522 = vunpack.c.l.b16 %v2378
      %v2523 = vunpack.c.l.b16 %v2379
      %v2524 = vunpack.c.l.b16 %v2380
      %v2525 = vunpack.c.l.b16 %v2381
      %v2526 = vunpack.c.l.b16 %v2382
      %v2527 = vunpack.c.l.b16 %v2383
      %v2528 = vunpack.c.l.b16 %v2384
      %v2529 = vunpack.c.l.b16 %v2385
      %v2530 = vunpack.c.l.b16 %v2386
      %v2531 = vunpack.c.l.b16 %v2387
      %v2532 = vunpack.c.l.b16 %v2388
      %v2533 = vunpack.c.l.b16 %v2389
      %v2534 = vunpack.c.l.b16 %v2390
      %v2535 = vunpack.c.l.b16 %v2391
      %v2536 = vunpack.c.l.b16 %v2392
      %v2537 = vunpack.c.l.b16 %v2393
      %v2538 = vunpack.c.l.b16 %v2394
      %v2539 = vunpack.c.l.b16 %v2395
      %v2540 = vunpack.c.l.b16 %v2396
      %v2541 = vunpack.c.l.b16 %v2397
      %v2542 = vunpack.c.l.b16 %v2398
      %v2543 = vunpack.c.l.b16 %v2399
      %v2544 = vunpack.c.l.b16 %v2400
      %v2545 = vunpack.c.l.b16 %v2401
      %v2546 = vunpack.c.l.b16 %v2402
      %v2547 = vunpack.c.l.b16 %v2403
      %v2548 = vunpack.c.l.b16 %v2404
      %v2549 = vunpack.c.l.b16 %v2405
      %v2550 = vunpack.c.l.b16 %v2406
      %v2551 = vunpack.c.l.b16 %v2407
      %v2552 = vunpack.c.l.b16 %v2408
      %v2553 = vunpack.c.l.b16 %v2409
      %v2554 = vunpack.c.l.b16 %v2410
      %v2555 = vunpack.c.l.b16 %v2411
      %v2556 = vunpack.c.l.b16 %v2412
      %v2557 = vunpack.c.l.b16 %v2413
      %v2558 = vunpack.c.l.b16 %v2414
      %v2559 = vpack.c.b16 %v2512, %v2511
      %v2560 = vpack.c.b16 %v2514, %v2513
      %v2561 = vpack.c.b16 %v2516, %v2515
      %v2562 = vpack.c.b16 %v2518, %v2517
      %v2563 = vpack.c.b16 %v2520, %v2519
      %v2564 = vpack.c.b16 %v2522, %v2521
      %v2565 = vpack.c.b16 %v2524, %v2523
      %v2566 = vpack.c.b16 %v2526, %v2525
      %v2567 = vpack.c.b16 %v2528, %v2527
      %v2568 = vpack.c.b16 %v2530, %v2529
      %v2569 = vpack.c.b16 %v2532, %v2531
      %v2570 = vpack.c.b16 %v2534, %v2533
      %v2571 = vpack.c.b16 %v2536, %v2535
      %v2572 = vpack.c.b16 %v2538, %v2537
      %v2573 = vpack.c.b16 %v2540, %v2539
      %v2574 = vpack.c.b16 %v2542, %v2541
      %v2575 = vpack.c.b16 %v2544, %v2543
      %v2576 = vpack.c.b16 %v2546, %v2545
      %v2577 = vpack.c.b16 %v2548, %v2547
      %v2578 = vpack.c.b16 %v2550, %v2549
      %v2579 = vpack.c.b16 %v2552, %v2551
      %v2580 = vpack.c.b16 %v2554, %v2553
      %v2581 = vpack.c.b16 %v2556, %v2555
      %v2582 = vpack.c.b16 %v2558, %v2557
      %2607 = vmatprep.subr.bf16.mxu0 0
      %2608 = vmatpush1.bf16.msra.mxu0 %v2559
      %2609 = vmatprep.subr.bf16.mxu0 0
      %2610 = vmatpush1.bf16.msra.mxu0 %v2560
      %2611 = vmatprep.subr.bf16.mxu0 0
      %2612 = vmatpush1.bf16.msra.mxu0 %v2561
      %2613 = vmatprep.subr.bf16.mxu0 0
      %2614 = vmatpush1.bf16.msra.mxu0 %v2562
      %2615 = vmatprep.subr.bf16.mxu0 0
      %2616 = vmatpush1.bf16.msra.mxu0 %v2563
      %2617 = vmatprep.subr.bf16.mxu0 0
      %2618 = vmatpush1.bf16.msra.mxu0 %v2564
      %2619 = vmatprep.subr.bf16.mxu0 0
      %2620 = vmatpush1.bf16.msra.mxu0 %v2565
      %2621 = vmatprep.subr.bf16.mxu0 0
      %2622 = vmatpush1.bf16.msra.mxu0 %v2566
      %2623 = vmatprep.subr.bf16.mxu0 0
      %2624 = vmatpush1.bf16.msra.mxu0 %v2567
      %2625 = vmatprep.subr.bf16.mxu0 0
      %2626 = vmatpush1.bf16.msra.mxu0 %v2568
      %2627 = vmatprep.subr.bf16.mxu0 0
      %2628 = vmatpush1.bf16.msra.mxu0 %v2569
      %2629 = vmatprep.subr.bf16.mxu0 0
      %2630 = vmatpush1.bf16.msra.mxu0 %v2570
      %2631 = vmatprep.subr.bf16.mxu0 0
      %2632 = vmatpush1.bf16.msra.mxu0 %v2571
      %2633 = vmatprep.subr.bf16.mxu0 0
      %2634 = vmatpush1.bf16.msra.mxu0 %v2572
      %2635 = vmatprep.subr.bf16.mxu0 0
      %2636 = vmatpush1.bf16.msra.mxu0 %v2573
      %2637 = vmatprep.subr.bf16.mxu0 0
      %2638 = vmatpush1.bf16.msra.mxu0 %v2574
      %2639 = vmatprep.mubr.bf16.mxu0 %v2416
      %2640 = vmatmul.mubr.bf16.gmra.mrb[0].mxu0 %v2415
      %v2641 = vpop.f32.mrb[0].mxu0
      %v2642 = vadd.f32 0.0, %v2641
      %v2643 = vpop.f32.mrb[0].mxu0
      %v2644 = vpop.f32.mrb[0].mxu0
      %v2645 = vadd.f32 0.0, %v2644
      %v2646 = vpop.f32.mrb[0].mxu0
      %2647 = vmatprep.mubr.bf16.mxu0 %v2419
      %2648 = vmatmul.mubr.bf16.gmra.mrb[0].mxu0 %v2418
      %v2649 = vpop.f32.mrb[0].mxu0
      %v2650 = vadd.f32 0.0, %v2649
      %v2651 = vpop.f32.mrb[0].mxu0
      %v2652 = vpop.f32.mrb[0].mxu0
      %v2653 = vadd.f32 0.0, %v2652
      %v2654 = vpop.f32.mrb[0].mxu0
      %2655 = vmatprep.mubr.bf16.mxu0 %v2422
      %2656 = vmatmul.mubr.bf16.gmra.mrb[0].mxu0 %v2421
      %v2657 = vpop.f32.mrb[0].mxu0
      %v2658 = vadd.f32 0.0, %v2657
      %v2659 = vpop.f32.mrb[0].mxu0
      %v2660 = vpop.f32.mrb[0].mxu0
      %v2661 = vadd.f32 0.0, %v2660
      %v2662 = vpop.f32.mrb[0].mxu0
      %2663 = vmatprep.mubr.bf16.mxu0 %v2425
      %2664 = vmatmul.mubr.bf16.gmra.mrb[0].mxu0 %v2424
      %v2665 = vpop.f32.mrb[0].mxu0
      %v2666 = vadd.f32 0.0, %v2665
      %v2667 = vpop.f32.mrb[0].mxu0
      %v2668 = vpop.f32.mrb[0].mxu0
      %v2669 = vadd.f32 0.0, %v2668
      %v2670 = vpop.f32.mrb[0].mxu0
      %2671 = vmatprep.mubr.bf16.mxu0 %v2428
      %2672 = vmatmul.mubr.bf16.gmra.mrb[0].mxu0 %v2427
      %v2673 = vpop.f32.mrb[0].mxu0
      %v2674 = vadd.f32 0.0, %v2673
      %v2675 = vpop.f32.mrb[0].mxu0
      %v2676 = vpop.f32.mrb[0].mxu0
      %v2677 = vadd.f32 0.0, %v2676
      %v2678 = vpop.f32.mrb[0].mxu0
      %2679 = vmatprep.mubr.bf16.mxu0 %v2431
      %2680 = vmatmul.mubr.bf16.gmra.mrb[0].mxu0 %v2430
      %v2681 = vpop.f32.mrb[0].mxu0
      %v2682 = vadd.f32 0.0, %v2681
      %v2683 = vpop.f32.mrb[0].mxu0
      %v2684 = vpop.f32.mrb[0].mxu0
      %v2685 = vadd.f32 0.0, %v2684
      %v2686 = vpop.f32.mrb[0].mxu0
      %2687 = vmatprep.mubr.bf16.mxu0 %v2434
      %2688 = vmatmul.mubr.bf16.gmra.mrb[0].mxu0 %v2433
      %v2689 = vpop.f32.mrb[0].mxu0
      %v2690 = vadd.f32 0.0, %v2689
      %v2691 = vpop.f32.mrb[0].mxu0
      %v2692 = vpop.f32.mrb[0].mxu0
      %v2693 = vadd.f32 0.0, %v2692
      %v2694 = vpop.f32.mrb[0].mxu0
      %2695 = vmatprep.mubr.bf16.mxu0 %v2437
      %2696 = vmatmul.mubr.bf16.gmra.mrb[0].mxu0 %v2436
      %v2697 = vpop.f32.mrb[0].mxu0
      %v2698 = vadd.f32 0.0, %v2697
      %v2699 = vpop.f32.mrb[0].mxu0
      %v2700 = vpop.f32.mrb[0].mxu0
      %v2701 = vadd.f32 0.0, %v2700
      %v2702 = vpop.f32.mrb[0].mxu0
      %2703 = vdwg.mxu0
      %2704 = vmatprep.subr.bf16.mxu0 0
      %2705 = vmatpush1.bf16.msra.mxu0 %v2575
      %2706 = vmatprep.subr.bf16.mxu0 0
      %2707 = vmatpush1.bf16.msra.mxu0 %v2576
      %2708 = vmatprep.subr.bf16.mxu0 0
      %2709 = vmatpush1.bf16.msra.mxu0 %v2577
      %2710 = vmatprep.subr.bf16.mxu0 0
      %2711 = vmatpush1.bf16.msra.mxu0 %v2578
      %2712 = vmatprep.subr.bf16.mxu0 0
      %2713 = vmatpush1.bf16.msra.mxu0 %v2579
      %2714 = vmatprep.subr.bf16.mxu0 0
      %2715 = vmatpush1.bf16.msra.mxu0 %v2580
      %2716 = vmatprep.subr.bf16.mxu0 0
      %2717 = vmatpush1.bf16.msra.mxu0 %v2581
      %2718 = vmatprep.subr.bf16.mxu0 0
      %2719 = vmatpush1.bf16.msra.mxu0 %v2582
      %2720 = vmatprep.subr.bf16.mxu0 0
      %2721 = vmatpush1.bf16.msra.mxu0 0
      %2722 = vmatprep.subr.bf16.mxu0 0
      %2723 = vmatpush1.bf16.msra.mxu0 0
      %2724 = vmatprep.subr.bf16.mxu0 0
      %2725 = vmatpush1.bf16.msra.mxu0 0
      %2726 = vmatprep.subr.bf16.mxu0 0
      %2727 = vmatpush1.bf16.msra.mxu0 0
      %2728 = vmatprep.subr.bf16.mxu0 0
      %2729 = vmatpush1.bf16.msra.mxu0 0
      %2730 = vmatprep.subr.bf16.mxu0 0
      %2731 = vmatpush1.bf16.msra.mxu0 0
      %2732 = vmatprep.subr.bf16.mxu0 0
      %2733 = vmatpush1.bf16.msra.mxu0 0
      %2734 = vmatprep.subr.bf16.mxu0 0
      %2735 = vmatpush1.bf16.msra.mxu0 0
      %2736 = vmatprep.mubr.bf16.mxu0 0
      %2737 = vmatmul.mubr.bf16.gmra.mrb[0].mxu0 %v2417
      %v2738 = vpop.f32.mrb[0].mxu0
      %v2739 = vadd.f32 %v2642, %v2738
      %v2740 = vpop.f32.mrb[0].mxu0
      %v2741 = vpop.f32.mrb[0].mxu0
      %v2742 = vadd.f32 %v2645, %v2741
      %v2743 = vpop.f32.mrb[0].mxu0
      %2744 = vmatprep.mubr.bf16.mxu0 0
      %2745 = vmatmul.mubr.bf16.gmra.mrb[0].mxu0 %v2420
      %v2746 = vpop.f32.mrb[0].mxu0
      %v2747 = vadd.f32 %v2650, %v2746
      %v2748 = vpop.f32.mrb[0].mxu0
      %v2749 = vpop.f32.mrb[0].mxu0
      %v2750 = vadd.f32 %v2653, %v2749
      %v2751 = vpop.f32.mrb[0].mxu0
      %2752 = vmatprep.mubr.bf16.mxu0 0
      %2753 = vmatmul.mubr.bf16.gmra.mrb[0].mxu0 %v2423
      %v2754 = vpop.f32.mrb[0].mxu0
      %v2755 = vadd.f32 %v2658, %v2754
      %v2756 = vpop.f32.mrb[0].mxu0
      %v2757 = vpop.f32.mrb[0].mxu0
      %v2758 = vadd.f32 %v2661, %v2757
      %v2759 = vpop.f32.mrb[0].mxu0
      %2760 = vmatprep.mubr.bf16.mxu0 0
      %2761 = vmatmul.mubr.bf16.gmra.mrb[0].mxu0 %v2426
      %v2762 = vpop.f32.mrb[0].mxu0
      %v2763 = vadd.f32 %v2666, %v2762
      %v2764 = vpop.f32.mrb[0].mxu0
      %v2765 = vpop.f32.mrb[0].mxu0
      %v2766 = vadd.f32 %v2669, %v2765
      %v2767 = vpop.f32.mrb[0].mxu0
      %2768 = vmatprep.mubr.bf16.mxu0 0
      %2769 = vmatmul.mubr.bf16.gmra.mrb[0].mxu0 %v2429
      %v2770 = vpop.f32.mrb[0].mxu0
      %v2771 = vadd.f32 %v2674, %v2770
      %v2772 = vpop.f32.mrb[0].mxu0
      %v2773 = vpop.f32.mrb[0].mxu0
      %v2774 = vadd.f32 %v2677, %v2773
      %v2775 = vpop.f32.mrb[0].mxu0
      %2776 = vmatprep.mubr.bf16.mxu0 0
      %2777 = vmatmul.mubr.bf16.gmra.mrb[0].mxu0 %v2432
      %v2778 = vpop.f32.mrb[0].mxu0
      %v2779 = vadd.f32 %v2682, %v2778
      %v2780 = vpop.f32.mrb[0].mxu0
      %v2781 = vpop.f32.mrb[0].mxu0
      %v2782 = vadd.f32 %v2685, %v2781
      %v2783 = vpop.f32.mrb[0].mxu0
      %2784 = vmatprep.mubr.bf16.mxu0 0
      %2785 = vmatmul.mubr.bf16.gmra.mrb[0].mxu0 %v2435
      %v2786 = vpop.f32.mrb[0].mxu0
      %v2787 = vadd.f32 %v2690, %v2786
      %v2788 = vpop.f32.mrb[0].mxu0
      %v2789 = vpop.f32.mrb[0].mxu0
      %v2790 = vadd.f32 %v2693, %v2789
      %v2791 = vpop.f32.mrb[0].mxu0
      %2792 = vmatprep.mubr.bf16.mxu0 0
      %2793 = vmatmul.mubr.bf16.gmra.mrb[0].mxu0 %v2438
      %v2794 = vpop.f32.mrb[0].mxu0
      %v2795 = vadd.f32 %v2698, %v2794
      %v2796 = vpop.f32.mrb[0].mxu0
      %v2797 = vpop.f32.mrb[0].mxu0
      %v2798 = vadd.f32 %v2701, %v2797
      %v2799 = vpop.f32.mrb[0].mxu0
      %2800 = vdwg.mxu0
      %v2801 = vadd.f32 %v1967, %v2739
      %v2802 = vadd.f32 %v1970, %v2742
      %v2803 = vadd.f32 %v1975, %v2747
      %v2804 = vadd.f32 %v1978, %v2750
      %v2805 = vadd.f32 %v1983, %v2755
      %v2806 = vadd.f32 %v1986, %v2758
      %v2807 = vadd.f32 %v1991, %v2763
      %v2808 = vadd.f32 %v1994, %v2766
      %v2809 = vadd.f32 %v1999, %v2771
      %v2810 = vadd.f32 %v2002, %v2774
      %v2811 = vadd.f32 %v2007, %v2779
      %v2812 = vadd.f32 %v2010, %v2782
      %v2813 = vadd.f32 %v2015, %v2787
      %v2814 = vadd.f32 %v2018, %v2790
      %v2815 = vadd.f32 %v2023, %v2795
      %v2816 = vadd.f32 %v2026, %v2798
      %v2818 = vlaneseq
      %v2819 = vshrl.u32 %v2818, 7
      %v2820 = vsub.s32 0, %v2819
      %v2821 = vrot.slane %v487, %v2820
      %v2823 = vadd.f32 %v2801, %v2821
      %v2824 = vadd.f32 %v2802, %v2821
      %v2825 = vadd.f32 %v2803, %v2821
      %v2826 = vadd.f32 %v2804, %v2821
      %v2827 = vadd.f32 %v2805, %v2821
      %v2828 = vadd.f32 %v2806, %v2821
      %v2829 = vadd.f32 %v2807, %v2821
      %v2830 = vadd.f32 %v2808, %v2821
      %v2831 = vadd.f32 %v2809, %v2821
      %v2832 = vadd.f32 %v2810, %v2821
      %v2833 = vadd.f32 %v2811, %v2821
      %v2834 = vadd.f32 %v2812, %v2821
      %v2835 = vadd.f32 %v2813, %v2821
      %v2836 = vadd.f32 %v2814, %v2821
      %v2837 = vadd.f32 %v2815, %v2821
      %v2838 = vadd.f32 %v2816, %v2821
      %v2839 = vmax.f32 %v2823, 0.0
      %v2840 = vmax.f32 %v2824, 0.0
      %v2841 = vmax.f32 %v2825, 0.0
      %v2842 = vmax.f32 %v2826, 0.0
      %v2843 = vmax.f32 %v2827, 0.0
      %v2844 = vmax.f32 %v2828, 0.0
      %v2845 = vmax.f32 %v2829, 0.0
      %v2846 = vmax.f32 %v2830, 0.0
      %v2847 = vmax.f32 %v2831, 0.0
      %v2848 = vmax.f32 %v2832, 0.0
      %v2849 = vmax.f32 %v2833, 0.0
      %v2850 = vmax.f32 %v2834, 0.0
      %v2851 = vmax.f32 %v2835, 0.0
      %v2852 = vmax.f32 %v2836, 0.0
      %v2853 = vmax.f32 %v2837, 0.0
      %v2854 = vmax.f32 %v2838, 0.0
      %v2855 = vmax.f32 %v2839, %v2840
      %v2856 = vmax.f32 %v2841, %v2842
      %v2857 = vmax.f32 %v2843, %v2844
      %v2858 = vmax.f32 %v2845, %v2846
      %v2859 = vmax.f32 %v2847, %v2848
      %v2860 = vmax.f32 %v2849, %v2850
      %v2861 = vmax.f32 %v2851, %v2852
      %v2862 = vmax.f32 %v2853, %v2854
      %2871 = vrot.lane.b32.xlu0 %v2855, 64
      %v2872 = vpop.permute.xlu0 %2871
      %2873 = vrot.lane.b32.xlu0 %v2856, 64
      %v2874 = vpop.permute.xlu0 %2873
      %2875 = vrot.lane.b32.xlu0 %v2857, 64
      %v2876 = vpop.permute.xlu0 %2875
      %2877 = vrot.lane.b32.xlu0 %v2858, 64
      %v2878 = vpop.permute.xlu0 %2877
      %2879 = vrot.lane.b32.xlu0 %v2859, 64
      %v2880 = vpop.permute.xlu0 %2879
      %2881 = vrot.lane.b32.xlu0 %v2860, 64
      %v2882 = vpop.permute.xlu0 %2881
      %2883 = vrot.lane.b32.xlu0 %v2861, 64
      %v2884 = vpop.permute.xlu0 %2883
      %2885 = vrot.lane.b32.xlu0 %v2862, 64
      %v2886 = vpop.permute.xlu0 %2885
      %v2895 = vmax.f32 %v2855, %v2872
      %v2896 = vmax.f32 %v2856, %v2874
      %v2897 = vmax.f32 %v2857, %v2876
      %v2898 = vmax.f32 %v2858, %v2878
      %v2899 = vmax.f32 %v2859, %v2880
      %v2900 = vmax.f32 %v2860, %v2882
      %v2901 = vmax.f32 %v2861, %v2884
      %v2902 = vmax.f32 %v2862, %v2886
      %v2903 = vpack.c.bf16 %v2895, %v2895
      %v2904 = vpack.c.bf16 %v2896, %v2896
      %v2905 = vpack.c.bf16 %v2897, %v2897
      %v2906 = vpack.c.bf16 %v2898, %v2898
      %v2907 = vpack.c.bf16 %v2899, %v2899
      %v2908 = vpack.c.bf16 %v2900, %v2900
      %v2909 = vpack.c.bf16 %v2901, %v2901
      %v2910 = vpack.c.bf16 %v2902, %v2902
      %vm2911 = vcmask 519168
      %2912 = vst.msk [vmem:[%s170] sm:$0xf] %vm2911, %v2903
      %2913 = vst.msk [vmem:[%s170 + $0x4] sm:$0xf] %vm2911, %v2904
      %2914 = vst.msk [vmem:[%s170 + $0x8] sm:$0xf] %vm2911, %v2905
      %2915 = vst.msk [vmem:[%s170 + $0xc] sm:$0xf] %vm2911, %v2906
      %2916 = vst.msk [vmem:[%s170 + $0x10] sm:$0xf] %vm2911, %v2907
      %2917 = vst.msk [vmem:[%s170 + $0x14] sm:$0xf] %vm2911, %v2908
      %2918 = vst.msk [vmem:[%s170 + $0x18] sm:$0xf] %vm2911, %v2909
      %2919 = vst.msk [vmem:[%s170 + $0x1c] sm:$0xf] %vm2911, %v2910
      %p2920 = scmp.lt.s32.totalorder %s14, 3
      %s2921 = scalar_select %p2920, %s14, 3
      %s2922 = smul.addr %s2921, 8
      %s2923 = smul.addr %s2922, 4
      %s2924 = scalar_lea.vmem %s3, %s2923
      // Predicated region
      $region33: #{_lambda_.6} parent=31 // pred_check
        %p2925 = pneg %p100
      $region34: #{_lambda_.6} parent=31 // pred_check_branch
        %2927 = sbr.rel (%p2925) target = $region36
      $region35: #{_lambda_.6} parent=31 // pred_region
        _
      $region36: #{_lambda_.6} parent=31 // pred_fallthru
        _
    $region32: #{_lambda_.6} parent=5 // pred_fallthru
      _
    %p2928 = scmp.le.s32.totalorder 2, %s9
    // Predicated region
    $region37: #{_lambda_.6} parent=5 // pred_check
      %p2929 = pneg %p2928
    $region38: #{_lambda_.6} parent=5 // pred_check_branch
      %2931 = sbr.rel (%p2929) target = $region40
    $region39: #{_lambda_.6} parent=5 // pred_region
      %s2932 = ssub.s32 %s9, 2
      // Predicated region
      $region41: #{_lambda_.6} parent=39 // pred_check
        %p2933 = pneg %p106
      $region42: #{_lambda_.6} parent=39 // pred_check_branch
        %2935 = sbr.rel (%p2933) target = $region44
      $region43: #{_lambda_.6} parent=39 // pred_region
        %p2936 = scmp.lt.s32.totalorder %s15, 3
        %s2937 = scalar_select %p2936, %s15, 3
        %s2938 = smul.addr %s2937, 8
        %s2939 = smul.addr %s2938, 4
        %s2940 = scalar_lea.vmem %s3, %s2939
      $region44: #{_lambda_.6} parent=39 // pred_fallthru
        _
    $region40: #{_lambda_.6} parent=5 // pred_fallthru
      _
  $region6: #{_lambda_.6} parent=0 // loop_footer
    %s13 = sadd.s32 1, %s9
  $region7: #{_lambda_.6} parent=0 // loop_footer_branch
    %8 = sbr.rel target = $region3
  $region8: #{_lambda_.6} parent=0 // loop_exit
    _

// kernel: _lambda_.8
$region0: #{_lambda_.8}
  #allocation0 [shape = 'u32[]', space=smem, size = 0x4, offset = 0x4, fixed_abs, tag = 'smem constant byte address 0x4 - core index']
  #allocation1 [shape = 'u32[144,128]{1,0:T(1,128)}', space=vmem, size = 0x12000, scoped, tag = 'internal scratch']
  #allocation2 [shape = 'bf16[10,10,128]{2,1,0:T(8,128)(2,1)}', space=vmem, size = 0xa000, scoped, tag = 'scratch operand']
  %s0 = inlined_call_operand.vmem [shape: bf16[4,8,8,128], index: 0, kind: input, shape index: {}]
  %s1 = inlined_call_operand.vmem [shape: bf16[3,384,128], index: 1, kind: input, shape index: {}]
  %s2 = inlined_call_operand.vmem [shape: f32[1,128], index: 2, kind: input, shape index: {}]
  %s3 = inlined_call_operand.vmem [shape: bf16[4,8,8,128], index: 3, kind: output, shape index: {}]
  %s4 = sld [smem:[#allocation0]]
  $region45: #{_lambda_.8} parent=0
    _
  %s6 = ssub.s32 1, %s4
  %s7 = scalar_select 0, %s6, %s4
  loop: start=0, step=1, limit=6
  $region2: #{_lambda_.8} parent=0 // loop_pre_header
    _
  $region3: #{_lambda_.8} parent=0 // loop_header
    %s9 = sphi 0, %s13
    %p10 = scmp.ge.s32.totalorder %s9, 6
    %s19 = sphi 0, %s21
    %s22 = sphi 0, %s19
    %s23 = sphi 0, %s22
    %s39 = sphi 0, %s23
    %s43 = sphi 0, %s43
    %s45 = sphi 0, %s43
    %s46 = sphi 0, %s45
    %s60 = sphi 0, %s46
    %s64 = sphi 0, %s64
    %s66 = sphi 0, %s64
    %s67 = sphi 0, %s66
    %s81 = sphi 0, %s67
    %s87 = sphi 0, %s89
    %s90 = sphi 0, %s87
    %s91 = sphi 0, %s90
    %s107 = sphi 0, %s91
  $region4: #{_lambda_.8} parent=0 // loop_header_branch
    %12 = sbr.rel (%p10) target = $region8
  $region5: #{_lambda_.8} parent=0 // loop_body
    %s14 = ssub.s32 %s9, 1
    %s15 = ssub.s32 %s9, 2
    %s16 = sadd.s32 %s9, 1
    %s17 = ssub.s32 %s9, %s16
    %p18 = scmp.eq.s32.totalorder %s17, 0
    %s20 = sadd.s32 %s19, 1
    %s21 = scalar_select %p18, %s19, %s20
    %p24 = pneg %p18
    %p25 = scmp.eq.s32.totalorder %s9, 3
    %p26 = por %p24, %p25
    %p27 = scmp.ne.s32.totalorder %s19, %s22
    %p28 = scmp.eq.s32.totalorder %s9, 0
    %p29 = por %p27, %p28
    %p30 = scmp.ne.s32.totalorder %s19, %s22
    %p31 = scmp.eq.s32.totalorder %s14, 3
    %p32 = por %p30, %p31
    %p33 = scmp.ne.s32.totalorder %s22, %s23
    %p34 = scmp.eq.s32.totalorder %s14, 0
    %p35 = por %p33, %p34
    %p36 = scmp.ne.s32.totalorder %s22, %s23
    %p37 = scmp.eq.s32.totalorder %s15, 3
    %p38 = por %p36, %p37
    %p40 = scmp.ne.s32.totalorder %s23, %s39
    %p41 = scmp.eq.s32.totalorder %s15, 0
    %p42 = por %p40, %p41
    %s44 = sadd.s32 %s43, 1
    %p47 = scmp.eq.s32.totalorder %s9, 3
    %p48 = scmp.ne.s32.totalorder %s43, %s45
    %p49 = scmp.eq.s32.totalorder %s9, 0
    %p50 = por %p48, %p49
    %p51 = scmp.ne.s32.totalorder %s43, %s45
    %p52 = scmp.eq.s32.totalorder %s14, 3
    %p53 = por %p51, %p52
    %p54 = scmp.ne.s32.totalorder %s45, %s46
    %p55 = scmp.eq.s32.totalorder %s14, 0
    %p56 = por %p54, %p55
    %p57 = scmp.ne.s32.totalorder %s45, %s46
    %p58 = scmp.eq.s32.totalorder %s15, 3
    %p59 = por %p57, %p58
    %p61 = scmp.ne.s32.totalorder %s46, %s60
    %p62 = scmp.eq.s32.totalorder %s15, 0
    %p63 = por %p61, %p62
    %s65 = sadd.s32 %s64, 1
    %p68 = scmp.eq.s32.totalorder %s9, 3
    %p69 = scmp.ne.s32.totalorder %s64, %s66
    %p70 = scmp.eq.s32.totalorder %s9, 0
    %p71 = por %p69, %p70
    %p72 = scmp.ne.s32.totalorder %s64, %s66
    %p73 = scmp.eq.s32.totalorder %s14, 3
    %p74 = por %p72, %p73
    %p75 = scmp.ne.s32.totalorder %s66, %s67
    %p76 = scmp.eq.s32.totalorder %s14, 0
    %p77 = por %p75, %p76
    %p78 = scmp.ne.s32.totalorder %s66, %s67
    %p79 = scmp.eq.s32.totalorder %s15, 3
    %p80 = por %p78, %p79
    %p82 = scmp.ne.s32.totalorder %s67, %s81
    %p83 = scmp.eq.s32.totalorder %s15, 0
    %p84 = por %p82, %p83
    %s85 = ssub.s32 %s9, %s16
    %p86 = scmp.eq.s32.totalorder %s85, 0
    %s88 = sadd.s32 %s87, 1
    %s89 = scalar_select %p86, %s87, %s88
    %p92 = pneg %p86
    %p93 = scmp.eq.s32.totalorder %s9, 3
    %p94 = por %p92, %p93
    %p95 = scmp.ne.s32.totalorder %s87, %s90
    %p96 = scmp.eq.s32.totalorder %s9, 0
    %p97 = por %p95, %p96
    %p98 = scmp.ne.s32.totalorder %s87, %s90
    %p99 = scmp.eq.s32.totalorder %s14, 3
    %p100 = por %p98, %p99
    %p101 = scmp.ne.s32.totalorder %s90, %s91
    %p102 = scmp.eq.s32.totalorder %s14, 0
    %p103 = por %p101, %p102
    %p104 = scmp.ne.s32.totalorder %s90, %s91
    %p105 = scmp.eq.s32.totalorder %s15, 3
    %p106 = por %p104, %p105
    %p108 = scmp.ne.s32.totalorder %s91, %s107
    %p109 = scmp.eq.s32.totalorder %s15, 0
    %p110 = por %p108, %p109
    %p111 = scmp.le.s32.totalorder 1, %s9
    %p112 = scmp.lt.s32.totalorder %s9, 5
    %p113 = pnand %p111, %p112
    %p114 = pneg %p113
    // Predicated region
    $region9: #{_lambda_.8} parent=5 // pred_check
      _
    $region10: #{_lambda_.8} parent=5 // pred_check_branch
      %116 = sbr.rel (%p113) target = $region12
    $region11: #{_lambda_.8} parent=5 // pred_region
      %s117 = ssub.s32 %s9, 1
      // Predicated region
      $region13: #{_lambda_.8} parent=11 // pred_check
        %p118 = pneg %p56
      $region14: #{_lambda_.8} parent=11 // pred_check_branch
        %120 = sbr.rel (%p118) target = $region16
      $region15: #{_lambda_.8} parent=11 // pred_region
        _
      $region16: #{_lambda_.8} parent=11 // pred_fallthru
        _
      // Predicated region
      $region17: #{_lambda_.8} parent=11 // pred_check
        %p121 = pneg %p77
      $region18: #{_lambda_.8} parent=11 // pred_check_branch
        %123 = sbr.rel (%p121) target = $region20
      $region19: #{_lambda_.8} parent=11 // pred_region
        _
      $region20: #{_lambda_.8} parent=11 // pred_fallthru
        _
    $region12: #{_lambda_.8} parent=5 // pred_fallthru
      _
    %p124 = scmp.lt.s32.totalorder %s9, 4
    // Predicated region
    $region21: #{_lambda_.8} parent=5 // pred_check
      %p125 = pneg %p124
    $region22: #{_lambda_.8} parent=5 // pred_check_branch
      %127 = sbr.rel (%p125) target = $region24
    $region23: #{_lambda_.8} parent=5 // pred_region
      // Predicated region
      $region25: #{_lambda_.8} parent=23 // pred_check
        %p128 = pneg %p29
      $region26: #{_lambda_.8} parent=23 // pred_check_branch
        %130 = sbr.rel (%p128) target = $region28
      $region27: #{_lambda_.8} parent=23 // pred_region
        %p131 = scmp.lt.s32.totalorder %s9, 3
        %s132 = scalar_select %p131, %s9, 3
        %s133 = smul.addr %s132, 8
        %s134 = smul.addr %s133, 4
        %s135 = scalar_lea.vmem %s0, %s134
      $region28: #{_lambda_.8} parent=23 // pred_fallthru
        _
    $region24: #{_lambda_.8} parent=5 // pred_fallthru
      _
    %p136 = scmp.le.s32.totalorder 1, %s9
    %p137 = scmp.lt.s32.totalorder %s9, 5
    %p138 = pnand %p136, %p137
    %p139 = pneg %p138
    // Predicated region
    $region29: #{_lambda_.8} parent=5 // pred_check
      _
    $region30: #{_lambda_.8} parent=5 // pred_check_branch
      %141 = sbr.rel (%p138) target = $region32
    $region31: #{_lambda_.8} parent=5 // pred_region
      %s142 = ssub.s32 %s9, 1
      %p143 = scmp.lt.s32.totalorder %s14, 3
      %s144 = scalar_select %p143, %s14, 3
      %s145 = smul.addr %s144, 8
      %s146 = smul.addr %s145, 4
      %s147 = scalar_lea.vmem %s0, %s146
      %p148 = pneg %p35
      %p149 = pneg %p32
      %p150 = pneg %p56
      %p151 = pneg %p53
      %p152 = pneg %p77
      %p153 = pneg %p74
      %p154 = pneg %p103
      %p155 = pneg %p100
      %p156 = scmp.lt.s32.totalorder %s14, 3
      %s157 = scalar_select %p156, %s14, 3
      %s158 = smul.addr %s157, 8
      %s159 = smul.addr %s158, 4
      %s160 = scalar_lea.vmem %s3, %s159
      %p161 = scmp.lt.s32.totalorder %s14, 3
      %s162 = scalar_select %p161, %s14, 3
      %s163 = smul.addr %s162, 8
      %s164 = smul.addr %s163, 4
      %s165 = scalar_lea.vmem %s0, %s164
      %p166 = scmp.lt.s32.totalorder %s14, 3
      %s167 = scalar_select %p166, %s14, 3
      %s168 = smul.addr %s167, 8
      %s169 = smul.addr %s168, 4
      %s170 = scalar_lea.vmem %s3, %s169
      %172 = vst [vmem:[#allocation2] sm:$0xf] 0
      %173 = vst [vmem:[#allocation2 + $0x4] sm:$0x1] 0
      %174 = vst [vmem:[#allocation2 + $0x8] sm:$0xf] 0
      %175 = vst [vmem:[#allocation2 + $0xc] sm:$0x1] 0
      %176 = vst [vmem:[#allocation2 + $0x10] sm:$0xf] 0
      %177 = vst [vmem:[#allocation2 + $0x14] sm:$0x1] 0
      %178 = vst [vmem:[#allocation2 + $0x18] sm:$0xf] 0
      %179 = vst [vmem:[#allocation2 + $0x1c] sm:$0x1] 0
      %180 = vst [vmem:[#allocation2 + $0x20] sm:$0xf] 0
      %181 = vst [vmem:[#allocation2 + $0x24] sm:$0x1] 0
      %182 = vst [vmem:[#allocation2 + $0x28] sm:$0xf] 0
      %183 = vst [vmem:[#allocation2 + $0x2c] sm:$0x1] 0
      %184 = vst [vmem:[#allocation2 + $0x30] sm:$0xf] 0
      %185 = vst [vmem:[#allocation2 + $0x34] sm:$0x1] 0
      %186 = vst [vmem:[#allocation2 + $0x38] sm:$0xf] 0
      %187 = vst [vmem:[#allocation2 + $0x3c] sm:$0x1] 0
      %188 = vst [vmem:[#allocation2 + $0x40] sm:$0xf] 0
      %189 = vst [vmem:[#allocation2 + $0x44] sm:$0x1] 0
      %190 = vst [vmem:[#allocation2 + $0x48] sm:$0xf] 0
      %191 = vst [vmem:[#allocation2 + $0x4c] sm:$0x1] 0
      %v192 = vld [vmem:[%s165] sm:$0xf]
      %v193 = vld [vmem:[%s165 + $0x4] sm:$0xf]
      %v194 = vld [vmem:[%s165 + $0x8] sm:$0xf]
      %v195 = vld [vmem:[%s165 + $0xc] sm:$0xf]
      %v196 = vld [vmem:[%s165 + $0x10] sm:$0xf]
      %v197 = vld [vmem:[%s165 + $0x14] sm:$0xf]
      %v198 = vld [vmem:[%s165 + $0x18] sm:$0xf]
      %v199 = vld [vmem:[%s165 + $0x1c] sm:$0xf]
      %v201 = vshrl.u32 %v192, 16
      %v203 = vrot.slane %v201, 7
      %v204 = vshll.u32 %v192, 16
      %v206 = vor.u32 %v203, %v204
      %v207 = vrot.slane %v203, 4
      %v209 = vshrl.u32 %v193, 16
      %v211 = vrot.slane %v209, 7
      %v212 = vshll.u32 %v193, 16
      %v214 = vor.u32 %v211, %v212
      %v215 = vrot.slane %v211, 4
      %v217 = vshrl.u32 %v194, 16
      %v219 = vrot.slane %v217, 7
      %v220 = vshll.u32 %v194, 16
      %v222 = vor.u32 %v219, %v220
      %v223 = vrot.slane %v219, 4
      %v225 = vshrl.u32 %v195, 16
      %v227 = vrot.slane %v225, 7
      %v228 = vshll.u32 %v195, 16
      %v230 = vor.u32 %v227, %v228
      %v231 = vrot.slane %v227, 4
      %v233 = vshrl.u32 %v196, 16
      %v235 = vrot.slane %v233, 7
      %v236 = vshll.u32 %v196, 16
      %v238 = vor.u32 %v235, %v236
      %v239 = vrot.slane %v235, 4
      %v241 = vshrl.u32 %v197, 16
      %v243 = vrot.slane %v241, 7
      %v244 = vshll.u32 %v197, 16
      %v246 = vor.u32 %v243, %v244
      %v247 = vrot.slane %v243, 4
      %v249 = vshrl.u32 %v198, 16
      %v251 = vrot.slane %v249, 7
      %v252 = vshll.u32 %v198, 16
      %v254 = vor.u32 %v251, %v252
      %v255 = vrot.slane %v251, 4
      %v257 = vshrl.u32 %v199, 16
      %v259 = vrot.slane %v257, 7
      %v260 = vshll.u32 %v199, 16
      %v262 = vor.u32 %v259, %v260
      %v263 = vrot.slane %v259, 4
      %s280 = scalar_lea.vmem [#allocation2], 8
      %vm281 = vcmask 1043456
      %vm282 = vsmask.f32 7938
      %vm283 = vmand %vm281, %vm282
      %v284 = vld [vmem:[%s280] sm:$0xf]
      %v285 = vsel %vm283, %v206, %v284
      %286 = vst [vmem:[%s280] sm:$0xf] %v285
      %vm287 = vcmask 1040384
      %vm288 = vsmask.f32 256
      %vm289 = vmand %vm287, %vm288
      %v290 = vld [vmem:[%s280 + $0x4] sm:$0x1]
      %v291 = vsel %vm289, %v207, %v290
      %292 = vst [vmem:[%s280 + $0x4] sm:$0x1] %v291
      %v293 = vld [vmem:[%s280 + $0x8] sm:$0xf]
      %v294 = vsel %vm283, %v214, %v293
      %295 = vst [vmem:[%s280 + $0x8] sm:$0xf] %v294
      %v296 = vld [vmem:[%s280 + $0xc] sm:$0x1]
      %v297 = vsel %vm289, %v215, %v296
      %298 = vst [vmem:[%s280 + $0xc] sm:$0x1] %v297
      %v299 = vld [vmem:[%s280 + $0x10] sm:$0xf]
      %v300 = vsel %vm283, %v222, %v299
      %301 = vst [vmem:[%s280 + $0x10] sm:$0xf] %v300
      %v302 = vld [vmem:[%s280 + $0x14] sm:$0x1]
      %v303 = vsel %vm289, %v223, %v302
      %304 = vst [vmem:[%s280 + $0x14] sm:$0x1] %v303
      %v305 = vld [vmem:[%s280 + $0x18] sm:$0xf]
      %v306 = vsel %vm283, %v230, %v305
      %307 = vst [vmem:[%s280 + $0x18] sm:$0xf] %v306
      %v308 = vld [vmem:[%s280 + $0x1c] sm:$0x1]
      %v309 = vsel %vm289, %v231, %v308
      %310 = vst [vmem:[%s280 + $0x1c] sm:$0x1] %v309
      %v311 = vld [vmem:[%s280 + $0x20] sm:$0xf]
      %v312 = vsel %vm283, %v238, %v311
      %313 = vst [vmem:[%s280 + $0x20] sm:$0xf] %v312
      %v314 = vld [vmem:[%s280 + $0x24] sm:$0x1]
      %v315 = vsel %vm289, %v239, %v314
      %316 = vst [vmem:[%s280 + $0x24] sm:$0x1] %v315
      %v317 = vld [vmem:[%s280 + $0x28] sm:$0xf]
      %v318 = vsel %vm283, %v246, %v317
      %319 = vst [vmem:[%s280 + $0x28] sm:$0xf] %v318
      %v320 = vld [vmem:[%s280 + $0x2c] sm:$0x1]
      %v321 = vsel %vm289, %v247, %v320
      %322 = vst [vmem:[%s280 + $0x2c] sm:$0x1] %v321
      %v323 = vld [vmem:[%s280 + $0x30] sm:$0xf]
      %v324 = vsel %vm283, %v254, %v323
      %325 = vst [vmem:[%s280 + $0x30] sm:$0xf] %v324
      %v326 = vld [vmem:[%s280 + $0x34] sm:$0x1]
      %v327 = vsel %vm289, %v255, %v326
      %328 = vst [vmem:[%s280 + $0x34] sm:$0x1] %v327
      %v329 = vld [vmem:[%s280 + $0x38] sm:$0xf]
      %v330 = vsel %vm283, %v262, %v329
      %331 = vst [vmem:[%s280 + $0x38] sm:$0xf] %v330
      %v332 = vld [vmem:[%s280 + $0x3c] sm:$0x1]
      %v333 = vsel %vm289, %v263, %v332
      %334 = vst [vmem:[%s280 + $0x3c] sm:$0x1] %v333
      %v335 = vld [vmem:[%s2] sm:$0x1]
      %v336 = vld [vmem:[#allocation2] sm:$0xf]
      %v337 = vld [vmem:[#allocation2 + $0x8] sm:$0xf]
      %v338 = vld [vmem:[#allocation2 + $0x10] sm:$0xf]
      %v339 = vld [vmem:[#allocation2 + $0x18] sm:$0xf]
      %v340 = vld [vmem:[#allocation2 + $0x20] sm:$0xf]
      %v341 = vld [vmem:[#allocation2 + $0x28] sm:$0xf]
      %v342 = vld [vmem:[#allocation2 + $0x30] sm:$0xf]
      %v343 = vld [vmem:[#allocation2 + $0x38] sm:$0xf]
      %v344 = vld [vmem:[#allocation2 + $0x4] sm:$0x1]
      %v345 = vld [vmem:[#allocation2 + $0xc] sm:$0x1]
      %v346 = vld [vmem:[#allocation2 + $0x14] sm:$0x1]
      %v347 = vld [vmem:[#allocation2 + $0x1c] sm:$0x1]
      %v348 = vld [vmem:[#allocation2 + $0x24] sm:$0x1]
      %v349 = vld [vmem:[#allocation2 + $0x2c] sm:$0x1]
      %v350 = vld [vmem:[#allocation2 + $0x34] sm:$0x1]
      %v351 = vld [vmem:[#allocation2 + $0x3c] sm:$0x1]
      %v352 = vld [vmem:[#allocation2] sm:$0xe]
      %v353 = vld [vmem:[#allocation2 + $0x8] sm:$0xe]
      %v354 = vld [vmem:[#allocation2 + $0x10] sm:$0xe]
      %v355 = vld [vmem:[#allocation2 + $0x18] sm:$0xe]
      %v356 = vld [vmem:[#allocation2 + $0x20] sm:$0xe]
      %v357 = vld [vmem:[#allocation2 + $0x28] sm:$0xe]
      %v358 = vld [vmem:[#allocation2 + $0x30] sm:$0xe]
      %v359 = vld [vmem:[#allocation2 + $0x38] sm:$0xe]
      %v376 = vunpack.c.l.b16 %v336
      %v377 = vunpack.c.l.b16 %v344
      %v378 = vunpack.c.l.b16 %v337
      %v379 = vunpack.c.l.b16 %v345
      %v380 = vunpack.c.l.b16 %v338
      %v381 = vunpack.c.l.b16 %v346
      %v382 = vunpack.c.l.b16 %v339
      %v383 = vunpack.c.l.b16 %v347
      %v384 = vunpack.c.l.b16 %v340
      %v385 = vunpack.c.l.b16 %v348
      %v386 = vunpack.c.l.b16 %v341
      %v387 = vunpack.c.l.b16 %v349
      %v388 = vunpack.c.l.b16 %v342
      %v389 = vunpack.c.l.b16 %v350
      %v390 = vunpack.c.l.b16 %v343
      %v391 = vunpack.c.l.b16 %v351
      %v392 = vpack.c.b16 %v377, %v376
      %v393 = vpack.c.b16 %v379, %v378
      %v394 = vpack.c.b16 %v381, %v380
      %v395 = vpack.c.b16 %v383, %v382
      %v396 = vpack.c.b16 %v385, %v384
      %v397 = vpack.c.b16 %v387, %v386
      %v398 = vpack.c.b16 %v389, %v388
      %v399 = vpack.c.b16 %v391, %v390
      %v401 = vshrl.u32 %v392, 16
      %v403 = vshll.u32 %v392, 16
      %v405 = vrot.slane %v403, 1
      %v406 = vor.u32 %v401, %v405
      %v408 = vshrl.u32 %v393, 16
      %v410 = vshll.u32 %v393, 16
      %v412 = vrot.slane %v410, 1
      %v413 = vor.u32 %v408, %v412
      %v415 = vshrl.u32 %v394, 16
      %v417 = vshll.u32 %v394, 16
      %v419 = vrot.slane %v417, 1
      %v420 = vor.u32 %v415, %v419
      %v422 = vshrl.u32 %v395, 16
      %v424 = vshll.u32 %v395, 16
      %v426 = vrot.slane %v424, 1
      %v427 = vor.u32 %v422, %v426
      %v429 = vshrl.u32 %v396, 16
      %v431 = vshll.u32 %v396, 16
      %v433 = vrot.slane %v431, 1
      %v434 = vor.u32 %v429, %v433
      %v436 = vshrl.u32 %v397, 16
      %v438 = vshll.u32 %v397, 16
      %v440 = vrot.slane %v438, 1
      %v441 = vor.u32 %v436, %v440
      %v443 = vshrl.u32 %v398, 16
      %v445 = vshll.u32 %v398, 16
      %v447 = vrot.slane %v445, 1
      %v448 = vor.u32 %v443, %v447
      %v450 = vshrl.u32 %v399, 16
      %v452 = vshll.u32 %v399, 16
      %v454 = vrot.slane %v452, 1
      %v455 = vor.u32 %v450, %v454
      %v464 = vunpack.c.l.b16 %v352
      %v465 = vunpack.c.l.b16 %v353
      %v466 = vunpack.c.l.b16 %v354
      %v467 = vunpack.c.l.b16 %v355
      %v468 = vunpack.c.l.b16 %v356
      %v469 = vunpack.c.l.b16 %v357
      %v470 = vunpack.c.l.b16 %v358
      %v471 = vunpack.c.l.b16 %v359
      %v472 = vpack.c.b16 %v377, %v464
      %v473 = vpack.c.b16 %v379, %v465
      %v474 = vpack.c.b16 %v381, %v466
      %v475 = vpack.c.b16 %v383, %v467
      %v476 = vpack.c.b16 %v385, %v468
      %v477 = vpack.c.b16 %v387, %v469
      %v478 = vpack.c.b16 %v389, %v470
      %v479 = vpack.c.b16 %v391, %v471
      %v480 = vrot.slane %v472, 1
      %v481 = vrot.slane %v473, 1
      %v482 = vrot.slane %v474, 1
      %v483 = vrot.slane %v475, 1
      %v484 = vrot.slane %v476, 1
      %v485 = vrot.slane %v477, 1
      %v486 = vrot.slane %v478, 1
      %v487 = vrot.slane %v479, 1
      %v488 = vunpack.c.l.b16 %v406
      %v489 = vunpack.c.l.b16 %v480
      %v490 = vunpack.c.l.b16 %v413
      %v491 = vunpack.c.l.b16 %v481
      %v492 = vunpack.c.l.b16 %v420
      %v493 = vunpack.c.l.b16 %v482
      %v494 = vunpack.c.l.b16 %v427
      %v495 = vunpack.c.l.b16 %v483
      %v496 = vunpack.c.l.b16 %v434
      %v497 = vunpack.c.l.b16 %v484
      %v498 = vunpack.c.l.b16 %v441
      %v499 = vunpack.c.l.b16 %v485
      %v500 = vunpack.c.l.b16 %v448
      %v501 = vunpack.c.l.b16 %v486
      %v502 = vunpack.c.l.b16 %v455
      %v503 = vunpack.c.l.b16 %v487
      %v504 = vld [vmem:[%s1] sm:$0xf]
      %v505 = vld [vmem:[%s1 + $0x4] sm:$0xf]
      %v506 = vld [vmem:[%s1 + $0x8] sm:$0xf]
      %v507 = vld [vmem:[%s1 + $0xc] sm:$0xf]
      %v508 = vld [vmem:[%s1 + $0x10] sm:$0xf]
      %v509 = vld [vmem:[%s1 + $0x14] sm:$0xf]
      %v510 = vld [vmem:[%s1 + $0x18] sm:$0xf]
      %v511 = vld [vmem:[%s1 + $0x1c] sm:$0xf]
      %v512 = vld [vmem:[%s1 + $0x20] sm:$0xf]
      %v513 = vld [vmem:[%s1 + $0x24] sm:$0xf]
      %v514 = vld [vmem:[%s1 + $0x28] sm:$0xf]
      %v515 = vld [vmem:[%s1 + $0x2c] sm:$0xf]
      %v516 = vld [vmem:[%s1 + $0x30] sm:$0xf]
      %v517 = vld [vmem:[%s1 + $0x34] sm:$0xf]
      %v518 = vld [vmem:[%s1 + $0x38] sm:$0xf]
      %v519 = vld [vmem:[%s1 + $0x3c] sm:$0xf]
      %v520 = vld [vmem:[%s1 + $0x40] sm:$0xf]
      %v521 = vld [vmem:[%s1 + $0x44] sm:$0xf]
      %v522 = vld [vmem:[%s1 + $0x48] sm:$0xf]
      %v523 = vld [vmem:[%s1 + $0x4c] sm:$0xf]
      %v524 = vld [vmem:[%s1 + $0x50] sm:$0xf]
      %v525 = vld [vmem:[%s1 + $0x54] sm:$0xf]
      %v526 = vld [vmem:[%s1 + $0x58] sm:$0xf]
      %v527 = vld [vmem:[%s1 + $0x5c] sm:$0xf]
      %v528 = vld [vmem:[%s1 + $0x60] sm:$0xf]
      %v529 = vld [vmem:[%s1 + $0x64] sm:$0xf]
      %v530 = vld [vmem:[%s1 + $0x68] sm:$0xf]
      %v531 = vld [vmem:[%s1 + $0x6c] sm:$0xf]
      %v532 = vld [vmem:[%s1 + $0x70] sm:$0xf]
      %v533 = vld [vmem:[%s1 + $0x74] sm:$0xf]
      %v534 = vld [vmem:[%s1 + $0x78] sm:$0xf]
      %v535 = vld [vmem:[%s1 + $0x7c] sm:$0xf]
      %v536 = vld [vmem:[%s1 + $0x80] sm:$0xf]
      %v537 = vld [vmem:[%s1 + $0x84] sm:$0xf]
      %v538 = vld [vmem:[%s1 + $0x88] sm:$0xf]
      %v539 = vld [vmem:[%s1 + $0x8c] sm:$0xf]
      %v540 = vld [vmem:[%s1 + $0x90] sm:$0xf]
      %v541 = vld [vmem:[%s1 + $0x94] sm:$0xf]
      %v542 = vld [vmem:[%s1 + $0x98] sm:$0xf]
      %v543 = vld [vmem:[%s1 + $0x9c] sm:$0xf]
      %v544 = vld [vmem:[%s1 + $0xa0] sm:$0xf]
      %v545 = vld [vmem:[%s1 + $0xa4] sm:$0xf]
      %v546 = vld [vmem:[%s1 + $0xa8] sm:$0xf]
      %v547 = vld [vmem:[%s1 + $0xac] sm:$0xf]
      %v548 = vld [vmem:[%s1 + $0xb0] sm:$0xf]
      %v549 = vld [vmem:[%s1 + $0xb4] sm:$0xf]
      %v550 = vld [vmem:[%s1 + $0xb8] sm:$0xf]
      %v551 = vld [vmem:[%s1 + $0xbc] sm:$0xf]
      %v552 = vld [vmem:[%s280] sm:$0xf]
      %v553 = vld [vmem:[%s280 + $0x8] sm:$0xf]
      %v554 = vld [vmem:[%s280 + $0x10] sm:$0xf]
      %v555 = vld [vmem:[%s280 + $0x18] sm:$0xf]
      %v556 = vld [vmem:[%s280 + $0x20] sm:$0xf]
      %v557 = vld [vmem:[%s280 + $0x28] sm:$0xf]
      %v558 = vld [vmem:[%s280 + $0x30] sm:$0xf]
      %v559 = vld [vmem:[%s280 + $0x38] sm:$0xf]
      %v560 = vld [vmem:[%s280 + $0x4] sm:$0x1]
      %v561 = vld [vmem:[%s280 + $0xc] sm:$0x1]
      %v562 = vld [vmem:[%s280 + $0x14] sm:$0x1]
      %v563 = vld [vmem:[%s280 + $0x1c] sm:$0x1]
      %v564 = vld [vmem:[%s280 + $0x24] sm:$0x1]
      %v565 = vld [vmem:[%s280 + $0x2c] sm:$0x1]
      %v566 = vld [vmem:[%s280 + $0x34] sm:$0x1]
      %v567 = vld [vmem:[%s280 + $0x3c] sm:$0x1]
      %v568 = vld [vmem:[%s280] sm:$0xe]
      %v569 = vld [vmem:[%s280 + $0x8] sm:$0xe]
      %v570 = vld [vmem:[%s280 + $0x10] sm:$0xe]
      %v571 = vld [vmem:[%s280 + $0x18] sm:$0xe]
      %v572 = vld [vmem:[%s280 + $0x20] sm:$0xe]
      %v573 = vld [vmem:[%s280 + $0x28] sm:$0xe]
      %v574 = vld [vmem:[%s280 + $0x30] sm:$0xe]
      %v575 = vld [vmem:[%s280 + $0x38] sm:$0xe]
      %v592 = vunpack.c.l.b16 %v552
      %v593 = vunpack.c.l.b16 %v560
      %v594 = vunpack.c.l.b16 %v553
      %v595 = vunpack.c.l.b16 %v561
      %v596 = vunpack.c.l.b16 %v554
      %v597 = vunpack.c.l.b16 %v562
      %v598 = vunpack.c.l.b16 %v555
      %v599 = vunpack.c.l.b16 %v563
      %v600 = vunpack.c.l.b16 %v556
      %v601 = vunpack.c.l.b16 %v564
      %v602 = vunpack.c.l.b16 %v557
      %v603 = vunpack.c.l.b16 %v565
      %v604 = vunpack.c.l.b16 %v558
      %v605 = vunpack.c.l.b16 %v566
      %v606 = vunpack.c.l.b16 %v559
      %v607 = vunpack.c.l.b16 %v567
      %v608 = vpack.c.b16 %v593, %v592
      %v609 = vpack.c.b16 %v595, %v594
      %v610 = vpack.c.b16 %v597, %v596
      %v611 = vpack.c.b16 %v599, %v598
      %v612 = vpack.c.b16 %v601, %v600
      %v613 = vpack.c.b16 %v603, %v602
      %v614 = vpack.c.b16 %v605, %v604
      %v615 = vpack.c.b16 %v607, %v606
      %v617 = vshrl.u32 %v608, 16
      %v619 = vshll.u32 %v608, 16
      %v621 = vrot.slane %v619, 1
      %v622 = vor.u32 %v617, %v621
      %v624 = vshrl.u32 %v609, 16
      %v626 = vshll.u32 %v609, 16
      %v628 = vrot.slane %v626, 1
      %v629 = vor.u32 %v624, %v628
      %v631 = vshrl.u32 %v610, 16
      %v633 = vshll.u32 %v610, 16
      %v635 = vrot.slane %v633, 1
      %v636 = vor.u32 %v631, %v635
      %v638 = vshrl.u32 %v611, 16
      %v640 = vshll.u32 %v611, 16
      %v642 = vrot.slane %v640, 1
      %v643 = vor.u32 %v638, %v642
      %v645 = vshrl.u32 %v612, 16
      %v647 = vshll.u32 %v612, 16
      %v649 = vrot.slane %v647, 1
      %v650 = vor.u32 %v645, %v649
      %v652 = vshrl.u32 %v613, 16
      %v654 = vshll.u32 %v613, 16
      %v656 = vrot.slane %v654, 1
      %v657 = vor.u32 %v652, %v656
      %v659 = vshrl.u32 %v614, 16
      %v661 = vshll.u32 %v614, 16
      %v663 = vrot.slane %v661, 1
      %v664 = vor.u32 %v659, %v663
      %v666 = vshrl.u32 %v615, 16
      %v668 = vshll.u32 %v615, 16
      %v670 = vrot.slane %v668, 1
      %v671 = vor.u32 %v666, %v670
      %v680 = vunpack.c.l.b16 %v568
      %v681 = vunpack.c.l.b16 %v569
      %v682 = vunpack.c.l.b16 %v570
      %v683 = vunpack.c.l.b16 %v571
      %v684 = vunpack.c.l.b16 %v572
      %v685 = vunpack.c.l.b16 %v573
      %v686 = vunpack.c.l.b16 %v574
      %v687 = vunpack.c.l.b16 %v575
      %v688 = vpack.c.b16 %v593, %v680
      %v689 = vpack.c.b16 %v595, %v681
      %v690 = vpack.c.b16 %v597, %v682
      %v691 = vpack.c.b16 %v599, %v683
      %v692 = vpack.c.b16 %v601, %v684
      %v693 = vpack.c.b16 %v603, %v685
      %v694 = vpack.c.b16 %v605, %v686
      %v695 = vpack.c.b16 %v607, %v687
      %v696 = vrot.slane %v688, 1
      %v697 = vrot.slane %v689, 1
      %v698 = vrot.slane %v690, 1
      %v699 = vrot.slane %v691, 1
      %v700 = vrot.slane %v692, 1
      %v701 = vrot.slane %v693, 1
      %v702 = vrot.slane %v694, 1
      %v703 = vrot.slane %v695, 1
      %v704 = vunpack.c.l.b16 %v622
      %v705 = vunpack.c.l.b16 %v696
      %v706 = vunpack.c.l.b16 %v629
      %v707 = vunpack.c.l.b16 %v697
      %v708 = vunpack.c.l.b16 %v636
      %v709 = vunpack.c.l.b16 %v698
      %v710 = vunpack.c.l.b16 %v643
      %v711 = vunpack.c.l.b16 %v699
      %v712 = vunpack.c.l.b16 %v650
      %v713 = vunpack.c.l.b16 %v700
      %v714 = vunpack.c.l.b16 %v657
      %v715 = vunpack.c.l.b16 %v701
      %v716 = vunpack.c.l.b16 %v664
      %v717 = vunpack.c.l.b16 %v702
      %v718 = vunpack.c.l.b16 %v671
      %v719 = vunpack.c.l.b16 %v703
      %s720 = scalar_lea.vmem %s1, 192
      %v721 = vld [vmem:[%s720] sm:$0xf]
      %v722 = vld [vmem:[%s720 + $0x4] sm:$0xf]
      %v723 = vld [vmem:[%s720 + $0x8] sm:$0xf]
      %v724 = vld [vmem:[%s720 + $0xc] sm:$0xf]
      %v725 = vld [vmem:[%s720 + $0x10] sm:$0xf]
      %v726 = vld [vmem:[%s720 + $0x14] sm:$0xf]
      %v727 = vld [vmem:[%s720 + $0x18] sm:$0xf]
      %v728 = vld [vmem:[%s720 + $0x1c] sm:$0xf]
      %v729 = vld [vmem:[%s720 + $0x20] sm:$0xf]
      %v730 = vld [vmem:[%s720 + $0x24] sm:$0xf]
      %v731 = vld [vmem:[%s720 + $0x28] sm:$0xf]
      %v732 = vld [vmem:[%s720 + $0x2c] sm:$0xf]
      %v733 = vld [vmem:[%s720 + $0x30] sm:$0xf]
      %v734 = vld [vmem:[%s720 + $0x34] sm:$0xf]
      %v735 = vld [vmem:[%s720 + $0x38] sm:$0xf]
      %v736 = vld [vmem:[%s720 + $0x3c] sm:$0xf]
      %v737 = vld [vmem:[%s720 + $0x40] sm:$0xf]
      %v738 = vld [vmem:[%s720 + $0x44] sm:$0xf]
      %v739 = vld [vmem:[%s720 + $0x48] sm:$0xf]
      %v740 = vld [vmem:[%s720 + $0x4c] sm:$0xf]
      %v741 = vld [vmem:[%s720 + $0x50] sm:$0xf]
      %v742 = vld [vmem:[%s720 + $0x54] sm:$0xf]
      %v743 = vld [vmem:[%s720 + $0x58] sm:$0xf]
      %v744 = vld [vmem:[%s720 + $0x5c] sm:$0xf]
      %v745 = vld [vmem:[%s720 + $0x60] sm:$0xf]
      %v746 = vld [vmem:[%s720 + $0x64] sm:$0xf]
      %v747 = vld [vmem:[%s720 + $0x68] sm:$0xf]
      %v748 = vld [vmem:[%s720 + $0x6c] sm:$0xf]
      %v749 = vld [vmem:[%s720 + $0x70] sm:$0xf]
      %v750 = vld [vmem:[%s720 + $0x74] sm:$0xf]
      %v751 = vld [vmem:[%s720 + $0x78] sm:$0xf]
      %v752 = vld [vmem:[%s720 + $0x7c] sm:$0xf]
      %v753 = vld [vmem:[%s720 + $0x80] sm:$0xf]
      %v754 = vld [vmem:[%s720 + $0x84] sm:$0xf]
      %v755 = vld [vmem:[%s720 + $0x88] sm:$0xf]
      %v756 = vld [vmem:[%s720 + $0x8c] sm:$0xf]
      %v757 = vld [vmem:[%s720 + $0x90] sm:$0xf]
      %v758 = vld [vmem:[%s720 + $0x94] sm:$0xf]
      %v759 = vld [vmem:[%s720 + $0x98] sm:$0xf]
      %v760 = vld [vmem:[%s720 + $0x9c] sm:$0xf]
      %v761 = vld [vmem:[%s720 + $0xa0] sm:$0xf]
      %v762 = vld [vmem:[%s720 + $0xa4] sm:$0xf]
      %v763 = vld [vmem:[%s720 + $0xa8] sm:$0xf]
      %v764 = vld [vmem:[%s720 + $0xac] sm:$0xf]
      %v765 = vld [vmem:[%s720 + $0xb0] sm:$0xf]
      %v766 = vld [vmem:[%s720 + $0xb4] sm:$0xf]
      %v767 = vld [vmem:[%s720 + $0xb8] sm:$0xf]
      %v768 = vld [vmem:[%s720 + $0xbc] sm:$0xf]
      %v769 = vpack.c.b16 %v594, %v592
      %v770 = vpack.c.b16 %v706, %v704
      %v771 = vpack.c.b16 %v707, %v705
      %v772 = vpack.c.b16 %v598, %v596
      %v773 = vpack.c.b16 %v710, %v708
      %v774 = vpack.c.b16 %v711, %v709
      %v775 = vpack.c.b16 %v602, %v600
      %v776 = vpack.c.b16 %v714, %v712
      %v777 = vpack.c.b16 %v715, %v713
      %v778 = vpack.c.b16 %v606, %v604
      %v779 = vpack.c.b16 %v718, %v716
      %v780 = vpack.c.b16 %v719, %v717
      %v841 = vunpack.c.l.b16 %v721
      %v842 = vunpack.c.l.b16 %v722
      %v843 = vunpack.c.l.b16 %v723
      %v844 = vunpack.c.l.b16 %v724
      %v845 = vunpack.c.l.b16 %v725
      %v846 = vunpack.c.l.b16 %v726
      %v847 = vunpack.c.l.b16 %v727
      %v848 = vunpack.c.l.b16 %v728
      %v849 = vunpack.c.l.b16 %v729
      %v850 = vunpack.c.l.b16 %v730
      %v851 = vunpack.c.l.b16 %v731
      %v852 = vunpack.c.l.b16 %v732
      %v853 = vunpack.c.l.b16 %v733
      %v854 = vunpack.c.l.b16 %v734
      %v855 = vunpack.c.l.b16 %v735
      %v856 = vunpack.c.l.b16 %v736
      %v857 = vunpack.c.l.b16 %v737
      %v858 = vunpack.c.l.b16 %v738
      %v859 = vunpack.c.l.b16 %v739
      %v860 = vunpack.c.l.b16 %v740
      %v861 = vunpack.c.l.b16 %v741
      %v862 = vunpack.c.l.b16 %v742
      %v863 = vunpack.c.l.b16 %v743
      %v864 = vunpack.c.l.b16 %v744
      %v865 = vunpack.c.l.b16 %v745
      %v866 = vunpack.c.l.b16 %v746
      %v867 = vunpack.c.l.b16 %v747
      %v868 = vunpack.c.l.b16 %v748
      %v869 = vunpack.c.l.b16 %v749
      %v870 = vunpack.c.l.b16 %v750
      %v871 = vunpack.c.l.b16 %v751
      %v872 = vunpack.c.l.b16 %v752
      %v873 = vunpack.c.l.b16 %v753
      %v874 = vunpack.c.l.b16 %v754
      %v875 = vunpack.c.l.b16 %v755
      %v876 = vunpack.c.l.b16 %v756
      %v877 = vunpack.c.l.b16 %v757
      %v878 = vunpack.c.l.b16 %v758
      %v879 = vunpack.c.l.b16 %v759
      %v880 = vunpack.c.l.b16 %v760
      %v881 = vunpack.c.l.b16 %v761
      %v882 = vunpack.c.l.b16 %v762
      %v883 = vunpack.c.l.b16 %v763
      %v884 = vunpack.c.l.b16 %v764
      %v885 = vunpack.c.l.b16 %v765
      %v886 = vunpack.c.l.b16 %v766
      %v887 = vunpack.c.l.b16 %v767
      %v888 = vunpack.c.l.b16 %v768
      %v889 = vpack.c.b16 %v842, %v841
      %v890 = vpack.c.b16 %v844, %v843
      %v891 = vpack.c.b16 %v846, %v845
      %v892 = vpack.c.b16 %v848, %v847
      %v893 = vpack.c.b16 %v850, %v849
      %v894 = vpack.c.b16 %v852, %v851
      %v895 = vpack.c.b16 %v854, %v853
      %v896 = vpack.c.b16 %v856, %v855
      %v897 = vpack.c.b16 %v858, %v857
      %v898 = vpack.c.b16 %v860, %v859
      %v899 = vpack.c.b16 %v862, %v861
      %v900 = vpack.c.b16 %v864, %v863
      %v901 = vpack.c.b16 %v866, %v865
      %v902 = vpack.c.b16 %v868, %v867
      %v903 = vpack.c.b16 %v870, %v869
      %v904 = vpack.c.b16 %v872, %v871
      %v905 = vpack.c.b16 %v874, %v873
      %v906 = vpack.c.b16 %v876, %v875
      %v907 = vpack.c.b16 %v878, %v877
      %v908 = vpack.c.b16 %v880, %v879
      %v909 = vpack.c.b16 %v882, %v881
      %v910 = vpack.c.b16 %v884, %v883
      %v911 = vpack.c.b16 %v886, %v885
      %v912 = vpack.c.b16 %v888, %v887
      %937 = vmatprep.subr.bf16.mxu0 0
      %938 = vmatpush1.bf16.msra.mxu0 %v889
      %939 = vmatprep.subr.bf16.mxu0 0
      %940 = vmatpush1.bf16.msra.mxu0 %v890
      %941 = vmatprep.subr.bf16.mxu0 0
      %942 = vmatpush1.bf16.msra.mxu0 %v891
      %943 = vmatprep.subr.bf16.mxu0 0
      %944 = vmatpush1.bf16.msra.mxu0 %v892
      %945 = vmatprep.subr.bf16.mxu0 0
      %946 = vmatpush1.bf16.msra.mxu0 %v893
      %947 = vmatprep.subr.bf16.mxu0 0
      %948 = vmatpush1.bf16.msra.mxu0 %v894
      %949 = vmatprep.subr.bf16.mxu0 0
      %950 = vmatpush1.bf16.msra.mxu0 %v895
      %951 = vmatprep.subr.bf16.mxu0 0
      %952 = vmatpush1.bf16.msra.mxu0 %v896
      %953 = vmatprep.subr.bf16.mxu0 0
      %954 = vmatpush1.bf16.msra.mxu0 %v897
      %955 = vmatprep.subr.bf16.mxu0 0
      %956 = vmatpush1.bf16.msra.mxu0 %v898
      %957 = vmatprep.subr.bf16.mxu0 0
      %958 = vmatpush1.bf16.msra.mxu0 %v899
      %959 = vmatprep.subr.bf16.mxu0 0
      %960 = vmatpush1.bf16.msra.mxu0 %v900
      %961 = vmatprep.subr.bf16.mxu0 0
      %962 = vmatpush1.bf16.msra.mxu0 %v901
      %963 = vmatprep.subr.bf16.mxu0 0
      %964 = vmatpush1.bf16.msra.mxu0 %v902
      %965 = vmatprep.subr.bf16.mxu0 0
      %966 = vmatpush1.bf16.msra.mxu0 %v903
      %967 = vmatprep.subr.bf16.mxu0 0
      %968 = vmatpush1.bf16.msra.mxu0 %v904
      %969 = vmatprep.mubr.bf16.mxu0 %v770
      %970 = vmatmul.mubr.bf16.gmra.mrb[0].mxu0 %v769
      %v971 = vpop.f32.mrb[0].mxu0
      %v972 = vadd.f32 0.0, %v971
      %v973 = vpop.f32.mrb[0].mxu0
      %v974 = vpop.f32.mrb[0].mxu0
      %v975 = vadd.f32 0.0, %v974
      %v976 = vpop.f32.mrb[0].mxu0
      %977 = vmatprep.mubr.bf16.mxu0 %v773
      %978 = vmatmul.mubr.bf16.gmra.mrb[0].mxu0 %v772
      %v979 = vpop.f32.mrb[0].mxu0
      %v980 = vadd.f32 0.0, %v979
      %v981 = vpop.f32.mrb[0].mxu0
      %v982 = vpop.f32.mrb[0].mxu0
      %v983 = vadd.f32 0.0, %v982
      %v984 = vpop.f32.mrb[0].mxu0
      %985 = vmatprep.mubr.bf16.mxu0 %v776
      %986 = vmatmul.mubr.bf16.gmra.mrb[0].mxu0 %v775
      %v987 = vpop.f32.mrb[0].mxu0
      %v988 = vadd.f32 0.0, %v987
      %v989 = vpop.f32.mrb[0].mxu0
      %v990 = vpop.f32.mrb[0].mxu0
      %v991 = vadd.f32 0.0, %v990
      %v992 = vpop.f32.mrb[0].mxu0
      %993 = vmatprep.mubr.bf16.mxu0 %v779
      %994 = vmatmul.mubr.bf16.gmra.mrb[0].mxu0 %v778
      %v995 = vpop.f32.mrb[0].mxu0
      %v996 = vadd.f32 0.0, %v995
      %v997 = vpop.f32.mrb[0].mxu0
      %v998 = vpop.f32.mrb[0].mxu0
      %v999 = vadd.f32 0.0, %v998
      %v1000 = vpop.f32.mrb[0].mxu0
      %1001 = vdwg.mxu0
      %1002 = vmatprep.subr.bf16.mxu0 0
      %1003 = vmatpush1.bf16.msra.mxu0 %v905
      %1004 = vmatprep.subr.bf16.mxu0 0
      %1005 = vmatpush1.bf16.msra.mxu0 %v906
      %1006 = vmatprep.subr.bf16.mxu0 0
      %1007 = vmatpush1.bf16.msra.mxu0 %v907
      %1008 = vmatprep.subr.bf16.mxu0 0
      %1009 = vmatpush1.bf16.msra.mxu0 %v908
      %1010 = vmatprep.subr.bf16.mxu0 0
      %1011 = vmatpush1.bf16.msra.mxu0 %v909
      %1012 = vmatprep.subr.bf16.mxu0 0
      %1013 = vmatpush1.bf16.msra.mxu0 %v910
      %1014 = vmatprep.subr.bf16.mxu0 0
      %1015 = vmatpush1.bf16.msra.mxu0 %v911
      %1016 = vmatprep.subr.bf16.mxu0 0
      %1017 = vmatpush1.bf16.msra.mxu0 %v912
      %1018 = vmatprep.subr.bf16.mxu0 0
      %1019 = vmatpush1.bf16.msra.mxu0 0
      %1020 = vmatprep.subr.bf16.mxu0 0
      %1021 = vmatpush1.bf16.msra.mxu0 0
      %1022 = vmatprep.subr.bf16.mxu0 0
      %1023 = vmatpush1.bf16.msra.mxu0 0
      %1024 = vmatprep.subr.bf16.mxu0 0
      %1025 = vmatpush1.bf16.msra.mxu0 0
      %1026 = vmatprep.subr.bf16.mxu0 0
      %1027 = vmatpush1.bf16.msra.mxu0 0
      %1028 = vmatprep.subr.bf16.mxu0 0
      %1029 = vmatpush1.bf16.msra.mxu0 0
      %1030 = vmatprep.subr.bf16.mxu0 0
      %1031 = vmatpush1.bf16.msra.mxu0 0
      %1032 = vmatprep.subr.bf16.mxu0 0
      %1033 = vmatpush1.bf16.msra.mxu0 0
      %1034 = vmatprep.mubr.bf16.mxu0 0
      %1035 = vmatmul.mubr.bf16.gmra.mrb[0].mxu0 %v771
      %v1036 = vpop.f32.mrb[0].mxu0
      %v1037 = vadd.f32 %v972, %v1036
      %v1038 = vpop.f32.mrb[0].mxu0
      %v1039 = vpop.f32.mrb[0].mxu0
      %v1040 = vadd.f32 %v975, %v1039
      %v1041 = vpop.f32.mrb[0].mxu0
      %1042 = vmatprep.mubr.bf16.mxu0 0
      %1043 = vmatmul.mubr.bf16.gmra.mrb[0].mxu0 %v774
      %v1044 = vpop.f32.mrb[0].mxu0
      %v1045 = vadd.f32 %v980, %v1044
      %v1046 = vpop.f32.mrb[0].mxu0
      %v1047 = vpop.f32.mrb[0].mxu0
      %v1048 = vadd.f32 %v983, %v1047
      %v1049 = vpop.f32.mrb[0].mxu0
      %1050 = vmatprep.mubr.bf16.mxu0 0
      %1051 = vmatmul.mubr.bf16.gmra.mrb[0].mxu0 %v777
      %v1052 = vpop.f32.mrb[0].mxu0
      %v1053 = vadd.f32 %v988, %v1052
      %v1054 = vpop.f32.mrb[0].mxu0
      %v1055 = vpop.f32.mrb[0].mxu0
      %v1056 = vadd.f32 %v991, %v1055
      %v1057 = vpop.f32.mrb[0].mxu0
      %1058 = vmatprep.mubr.bf16.mxu0 0
      %1059 = vmatmul.mubr.bf16.gmra.mrb[0].mxu0 %v780
      %v1060 = vpop.f32.mrb[0].mxu0
      %v1061 = vadd.f32 %v996, %v1060
      %v1062 = vpop.f32.mrb[0].mxu0
      %v1063 = vpop.f32.mrb[0].mxu0
      %v1064 = vadd.f32 %v999, %v1063
      %v1065 = vpop.f32.mrb[0].mxu0
      %1066 = vdwg.mxu0
      %v1067 = vpack.c.b16 %v378, %v376
      %v1068 = vpack.c.b16 %v490, %v488
      %v1069 = vpack.c.b16 %v491, %v489
      %v1070 = vpack.c.b16 %v382, %v380
      %v1071 = vpack.c.b16 %v494, %v492
      %v1072 = vpack.c.b16 %v495, %v493
      %v1073 = vpack.c.b16 %v386, %v384
      %v1074 = vpack.c.b16 %v498, %v496
      %v1075 = vpack.c.b16 %v499, %v497
      %v1076 = vpack.c.b16 %v390, %v388
      %v1077 = vpack.c.b16 %v502, %v500
      %v1078 = vpack.c.b16 %v503, %v501
      %v1139 = vunpack.c.l.b16 %v504
      %v1140 = vunpack.c.l.b16 %v505
      %v1141 = vunpack.c.l.b16 %v506
      %v1142 = vunpack.c.l.b16 %v507
      %v1143 = vunpack.c.l.b16 %v508
      %v1144 = vunpack.c.l.b16 %v509
      %v1145 = vunpack.c.l.b16 %v510
      %v1146 = vunpack.c.l.b16 %v511
      %v1147 = vunpack.c.l.b16 %v512
      %v1148 = vunpack.c.l.b16 %v513
      %v1149 = vunpack.c.l.b16 %v514
      %v1150 = vunpack.c.l.b16 %v515
      %v1151 = vunpack.c.l.b16 %v516
      %v1152 = vunpack.c.l.b16 %v517
      %v1153 = vunpack.c.l.b16 %v518
      %v1154 = vunpack.c.l.b16 %v519
      %v1155 = vunpack.c.l.b16 %v520
      %v1156 = vunpack.c.l.b16 %v521
      %v1157 = vunpack.c.l.b16 %v522
      %v1158 = vunpack.c.l.b16 %v523
      %v1159 = vunpack.c.l.b16 %v524
      %v1160 = vunpack.c.l.b16 %v525
      %v1161 = vunpack.c.l.b16 %v526
      %v1162 = vunpack.c.l.b16 %v527
      %v1163 = vunpack.c.l.b16 %v528
      %v1164 = vunpack.c.l.b16 %v529
      %v1165 = vunpack.c.l.b16 %v530
      %v1166 = vunpack.c.l.b16 %v531
      %v1167 = vunpack.c.l.b16 %v532
      %v1168 = vunpack.c.l.b16 %v533
      %v1169 = vunpack.c.l.b16 %v534
      %v1170 = vunpack.c.l.b16 %v535
      %v1171 = vunpack.c.l.b16 %v536
      %v1172 = vunpack.c.l.b16 %v537
      %v1173 = vunpack.c.l.b16 %v538
      %v1174 = vunpack.c.l.b16 %v539
      %v1175 = vunpack.c.l.b16 %v540
      %v1176 = vunpack.c.l.b16 %v541
      %v1177 = vunpack.c.l.b16 %v542
      %v1178 = vunpack.c.l.b16 %v543
      %v1179 = vunpack.c.l.b16 %v544
      %v1180 = vunpack.c.l.b16 %v545
      %v1181 = vunpack.c.l.b16 %v546
      %v1182 = vunpack.c.l.b16 %v547
      %v1183 = vunpack.c.l.b16 %v548
      %v1184 = vunpack.c.l.b16 %v549
      %v1185 = vunpack.c.l.b16 %v550
      %v1186 = vunpack.c.l.b16 %v551
      %v1187 = vpack.c.b16 %v1140, %v1139
      %v1188 = vpack.c.b16 %v1142, %v1141
      %v1189 = vpack.c.b16 %v1144, %v1143
      %v1190 = vpack.c.b16 %v1146, %v1145
      %v1191 = vpack.c.b16 %v1148, %v1147
      %v1192 = vpack.c.b16 %v1150, %v1149
      %v1193 = vpack.c.b16 %v1152, %v1151
      %v1194 = vpack.c.b16 %v1154, %v1153
      %v1195 = vpack.c.b16 %v1156, %v1155
      %v1196 = vpack.c.b16 %v1158, %v1157
      %v1197 = vpack.c.b16 %v1160, %v1159
      %v1198 = vpack.c.b16 %v1162, %v1161
      %v1199 = vpack.c.b16 %v1164, %v1163
      %v1200 = vpack.c.b16 %v1166, %v1165
      %v1201 = vpack.c.b16 %v1168, %v1167
      %v1202 = vpack.c.b16 %v1170, %v1169
      %v1203 = vpack.c.b16 %v1172, %v1171
      %v1204 = vpack.c.b16 %v1174, %v1173
      %v1205 = vpack.c.b16 %v1176, %v1175
      %v1206 = vpack.c.b16 %v1178, %v1177
      %v1207 = vpack.c.b16 %v1180, %v1179
      %v1208 = vpack.c.b16 %v1182, %v1181
      %v1209 = vpack.c.b16 %v1184, %v1183
      %v1210 = vpack.c.b16 %v1186, %v1185
      %1235 = vmatprep.subr.bf16.mxu0 0
      %1236 = vmatpush1.bf16.msra.mxu0 %v1187
      %1237 = vmatprep.subr.bf16.mxu0 0
      %1238 = vmatpush1.bf16.msra.mxu0 %v1188
      %1239 = vmatprep.subr.bf16.mxu0 0
      %1240 = vmatpush1.bf16.msra.mxu0 %v1189
      %1241 = vmatprep.subr.bf16.mxu0 0
      %1242 = vmatpush1.bf16.msra.mxu0 %v1190
      %1243 = vmatprep.subr.bf16.mxu0 0
      %1244 = vmatpush1.bf16.msra.mxu0 %v1191
      %1245 = vmatprep.subr.bf16.mxu0 0
      %1246 = vmatpush1.bf16.msra.mxu0 %v1192
      %1247 = vmatprep.subr.bf16.mxu0 0
      %1248 = vmatpush1.bf16.msra.mxu0 %v1193
      %1249 = vmatprep.subr.bf16.mxu0 0
      %1250 = vmatpush1.bf16.msra.mxu0 %v1194
      %1251 = vmatprep.subr.bf16.mxu0 0
      %1252 = vmatpush1.bf16.msra.mxu0 %v1195
      %1253 = vmatprep.subr.bf16.mxu0 0
      %1254 = vmatpush1.bf16.msra.mxu0 %v1196
      %1255 = vmatprep.subr.bf16.mxu0 0
      %1256 = vmatpush1.bf16.msra.mxu0 %v1197
      %1257 = vmatprep.subr.bf16.mxu0 0
      %1258 = vmatpush1.bf16.msra.mxu0 %v1198
      %1259 = vmatprep.subr.bf16.mxu0 0
      %1260 = vmatpush1.bf16.msra.mxu0 %v1199
      %1261 = vmatprep.subr.bf16.mxu0 0
      %1262 = vmatpush1.bf16.msra.mxu0 %v1200
      %1263 = vmatprep.subr.bf16.mxu0 0
      %1264 = vmatpush1.bf16.msra.mxu0 %v1201
      %1265 = vmatprep.subr.bf16.mxu0 0
      %1266 = vmatpush1.bf16.msra.mxu0 %v1202
      %1267 = vmatprep.mubr.bf16.mxu0 %v1068
      %1268 = vmatmul.mubr.bf16.gmra.mrb[0].mxu0 %v1067
      %v1269 = vpop.f32.mrb[0].mxu0
      %v1270 = vadd.f32 %v1037, %v1269
      %v1271 = vpop.f32.mrb[0].mxu0
      %v1272 = vpop.f32.mrb[0].mxu0
      %v1273 = vadd.f32 %v1040, %v1272
      %v1274 = vpop.f32.mrb[0].mxu0
      %1275 = vmatprep.mubr.bf16.mxu0 %v1071
      %1276 = vmatmul.mubr.bf16.gmra.mrb[0].mxu0 %v1070
      %v1277 = vpop.f32.mrb[0].mxu0
      %v1278 = vadd.f32 %v1045, %v1277
      %v1279 = vpop.f32.mrb[0].mxu0
      %v1280 = vpop.f32.mrb[0].mxu0
      %v1281 = vadd.f32 %v1048, %v1280
      %v1282 = vpop.f32.mrb[0].mxu0
      %1283 = vmatprep.mubr.bf16.mxu0 %v1074
      %1284 = vmatmul.mubr.bf16.gmra.mrb[0].mxu0 %v1073
      %v1285 = vpop.f32.mrb[0].mxu0
      %v1286 = vadd.f32 %v1053, %v1285
      %v1287 = vpop.f32.mrb[0].mxu0
      %v1288 = vpop.f32.mrb[0].mxu0
      %v1289 = vadd.f32 %v1056, %v1288
      %v1290 = vpop.f32.mrb[0].mxu0
      %1291 = vmatprep.mubr.bf16.mxu0 %v1077
      %1292 = vmatmul.mubr.bf16.gmra.mrb[0].mxu0 %v1076
      %v1293 = vpop.f32.mrb[0].mxu0
      %v1294 = vadd.f32 %v1061, %v1293
      %v1295 = vpop.f32.mrb[0].mxu0
      %v1296 = vpop.f32.mrb[0].mxu0
      %v1297 = vadd.f32 %v1064, %v1296
      %v1298 = vpop.f32.mrb[0].mxu0
      %1299 = vdwg.mxu0
      %1300 = vmatprep.subr.bf16.mxu0 0
      %1301 = vmatpush1.bf16.msra.mxu0 %v1203
      %1302 = vmatprep.subr.bf16.mxu0 0
      %1303 = vmatpush1.bf16.msra.mxu0 %v1204
      %1304 = vmatprep.subr.bf16.mxu0 0
      %1305 = vmatpush1.bf16.msra.mxu0 %v1205
      %1306 = vmatprep.subr.bf16.mxu0 0
      %1307 = vmatpush1.bf16.msra.mxu0 %v1206
      %1308 = vmatprep.subr.bf16.mxu0 0
      %1309 = vmatpush1.bf16.msra.mxu0 %v1207
      %1310 = vmatprep.subr.bf16.mxu0 0
      %1311 = vmatpush1.bf16.msra.mxu0 %v1208
      %1312 = vmatprep.subr.bf16.mxu0 0
      %1313 = vmatpush1.bf16.msra.mxu0 %v1209
      %1314 = vmatprep.subr.bf16.mxu0 0
      %1315 = vmatpush1.bf16.msra.mxu0 %v1210
      %1316 = vmatprep.subr.bf16.mxu0 0
      %1317 = vmatpush1.bf16.msra.mxu0 0
      %1318 = vmatprep.subr.bf16.mxu0 0
      %1319 = vmatpush1.bf16.msra.mxu0 0
      %1320 = vmatprep.subr.bf16.mxu0 0
      %1321 = vmatpush1.bf16.msra.mxu0 0
      %1322 = vmatprep.subr.bf16.mxu0 0
      %1323 = vmatpush1.bf16.msra.mxu0 0
      %1324 = vmatprep.subr.bf16.mxu0 0
      %1325 = vmatpush1.bf16.msra.mxu0 0
      %1326 = vmatprep.subr.bf16.mxu0 0
      %1327 = vmatpush1.bf16.msra.mxu0 0
      %1328 = vmatprep.subr.bf16.mxu0 0
      %1329 = vmatpush1.bf16.msra.mxu0 0
      %1330 = vmatprep.subr.bf16.mxu0 0
      %1331 = vmatpush1.bf16.msra.mxu0 0
      %1332 = vmatprep.mubr.bf16.mxu0 0
      %1333 = vmatmul.mubr.bf16.gmra.mrb[0].mxu0 %v1069
      %v1334 = vpop.f32.mrb[0].mxu0
      %v1335 = vadd.f32 %v1270, %v1334
      %v1336 = vpop.f32.mrb[0].mxu0
      %v1337 = vpop.f32.mrb[0].mxu0
      %v1338 = vadd.f32 %v1273, %v1337
      %v1339 = vpop.f32.mrb[0].mxu0
      %1340 = vmatprep.mubr.bf16.mxu0 0
      %1341 = vmatmul.mubr.bf16.gmra.mrb[0].mxu0 %v1072
      %v1342 = vpop.f32.mrb[0].mxu0
      %v1343 = vadd.f32 %v1278, %v1342
      %v1344 = vpop.f32.mrb[0].mxu0
      %v1345 = vpop.f32.mrb[0].mxu0
      %v1346 = vadd.f32 %v1281, %v1345
      %v1347 = vpop.f32.mrb[0].mxu0
      %1348 = vmatprep.mubr.bf16.mxu0 0
      %1349 = vmatmul.mubr.bf16.gmra.mrb[0].mxu0 %v1075
      %v1350 = vpop.f32.mrb[0].mxu0
      %v1351 = vadd.f32 %v1286, %v1350
      %v1352 = vpop.f32.mrb[0].mxu0
      %v1353 = vpop.f32.mrb[0].mxu0
      %v1354 = vadd.f32 %v1289, %v1353
      %v1355 = vpop.f32.mrb[0].mxu0
      %1356 = vmatprep.mubr.bf16.mxu0 0
      %1357 = vmatmul.mubr.bf16.gmra.mrb[0].mxu0 %v1078
      %v1358 = vpop.f32.mrb[0].mxu0
      %v1359 = vadd.f32 %v1294, %v1358
      %v1360 = vpop.f32.mrb[0].mxu0
      %v1361 = vpop.f32.mrb[0].mxu0
      %v1362 = vadd.f32 %v1297, %v1361
      %v1363 = vpop.f32.mrb[0].mxu0
      %1364 = vdwg.mxu0
      %s1365 = scalar_lea.vmem [#allocation2], 16
      %v1366 = vld [vmem:[%s1365] sm:$0xf]
      %v1367 = vld [vmem:[%s1365 + $0x8] sm:$0xf]
      %v1368 = vld [vmem:[%s1365 + $0x10] sm:$0xf]
      %v1369 = vld [vmem:[%s1365 + $0x18] sm:$0xf]
      %v1370 = vld [vmem:[%s1365 + $0x20] sm:$0xf]
      %v1371 = vld [vmem:[%s1365 + $0x28] sm:$0xf]
      %v1372 = vld [vmem:[%s1365 + $0x30] sm:$0xf]
      %v1373 = vld [vmem:[%s1365 + $0x38] sm:$0xf]
      %v1374 = vld [vmem:[%s1365 + $0x4] sm:$0x1]
      %v1375 = vld [vmem:[%s1365 + $0xc] sm:$0x1]
      %v1376 = vld [vmem:[%s1365 + $0x14] sm:$0x1]
      %v1377 = vld [vmem:[%s1365 + $0x1c] sm:$0x1]
      %v1378 = vld [vmem:[%s1365 + $0x24] sm:$0x1]
      %v1379 = vld [vmem:[%s1365 + $0x2c] sm:$0x1]
      %v1380 = vld [vmem:[%s1365 + $0x34] sm:$0x1]
      %v1381 = vld [vmem:[%s1365 + $0x3c] sm:$0x1]
      %v1382 = vld [vmem:[%s1365] sm:$0xe]
      %v1383 = vld [vmem:[%s1365 + $0x8] sm:$0xe]
      %v1384 = vld [vmem:[%s1365 + $0x10] sm:$0xe]
      %v1385 = vld [vmem:[%s1365 + $0x18] sm:$0xe]
      %v1386 = vld [vmem:[%s1365 + $0x20] sm:$0xe]
      %v1387 = vld [vmem:[%s1365 + $0x28] sm:$0xe]
      %v1388 = vld [vmem:[%s1365 + $0x30] sm:$0xe]
      %v1389 = vld [vmem:[%s1365 + $0x38] sm:$0xe]
      %v1406 = vunpack.c.l.b16 %v1366
      %v1407 = vunpack.c.l.b16 %v1374
      %v1408 = vunpack.c.l.b16 %v1367
      %v1409 = vunpack.c.l.b16 %v1375
      %v1410 = vunpack.c.l.b16 %v1368
      %v1411 = vunpack.c.l.b16 %v1376
      %v1412 = vunpack.c.l.b16 %v1369
      %v1413 = vunpack.c.l.b16 %v1377
      %v1414 = vunpack.c.l.b16 %v1370
      %v1415 = vunpack.c.l.b16 %v1378
      %v1416 = vunpack.c.l.b16 %v1371
      %v1417 = vunpack.c.l.b16 %v1379
      %v1418 = vunpack.c.l.b16 %v1372
      %v1419 = vunpack.c.l.b16 %v1380
      %v1420 = vunpack.c.l.b16 %v1373
      %v1421 = vunpack.c.l.b16 %v1381
      %v1422 = vpack.c.b16 %v1407, %v1406
      %v1423 = vpack.c.b16 %v1409, %v1408
      %v1424 = vpack.c.b16 %v1411, %v1410
      %v1425 = vpack.c.b16 %v1413, %v1412
      %v1426 = vpack.c.b16 %v1415, %v1414
      %v1427 = vpack.c.b16 %v1417, %v1416
      %v1428 = vpack.c.b16 %v1419, %v1418
      %v1429 = vpack.c.b16 %v1421, %v1420
      %v1431 = vshrl.u32 %v1422, 16
      %v1433 = vshll.u32 %v1422, 16
      %v1435 = vrot.slane %v1433, 1
      %v1436 = vor.u32 %v1431, %v1435
      %v1438 = vshrl.u32 %v1423, 16
      %v1440 = vshll.u32 %v1423, 16
      %v1442 = vrot.slane %v1440, 1
      %v1443 = vor.u32 %v1438, %v1442
      %v1445 = vshrl.u32 %v1424, 16
      %v1447 = vshll.u32 %v1424, 16
      %v1449 = vrot.slane %v1447, 1
      %v1450 = vor.u32 %v1445, %v1449
      %v1452 = vshrl.u32 %v1425, 16
      %v1454 = vshll.u32 %v1425, 16
      %v1456 = vrot.slane %v1454, 1
      %v1457 = vor.u32 %v1452, %v1456
      %v1459 = vshrl.u32 %v1426, 16
      %v1461 = vshll.u32 %v1426, 16
      %v1463 = vrot.slane %v1461, 1
      %v1464 = vor.u32 %v1459, %v1463
      %v1466 = vshrl.u32 %v1427, 16
      %v1468 = vshll.u32 %v1427, 16
      %v1470 = vrot.slane %v1468, 1
      %v1471 = vor.u32 %v1466, %v1470
      %v1473 = vshrl.u32 %v1428, 16
      %v1475 = vshll.u32 %v1428, 16
      %v1477 = vrot.slane %v1475, 1
      %v1478 = vor.u32 %v1473, %v1477
      %v1480 = vshrl.u32 %v1429, 16
      %v1482 = vshll.u32 %v1429, 16
      %v1484 = vrot.slane %v1482, 1
      %v1485 = vor.u32 %v1480, %v1484
      %v1494 = vunpack.c.l.b16 %v1382
      %v1495 = vunpack.c.l.b16 %v1383
      %v1496 = vunpack.c.l.b16 %v1384
      %v1497 = vunpack.c.l.b16 %v1385
      %v1498 = vunpack.c.l.b16 %v1386
      %v1499 = vunpack.c.l.b16 %v1387
      %v1500 = vunpack.c.l.b16 %v1388
      %v1501 = vunpack.c.l.b16 %v1389
      %v1502 = vpack.c.b16 %v1407, %v1494
      %v1503 = vpack.c.b16 %v1409, %v1495
      %v1504 = vpack.c.b16 %v1411, %v1496
      %v1505 = vpack.c.b16 %v1413, %v1497
      %v1506 = vpack.c.b16 %v1415, %v1498
      %v1507 = vpack.c.b16 %v1417, %v1499
      %v1508 = vpack.c.b16 %v1419, %v1500
      %v1509 = vpack.c.b16 %v1421, %v1501
      %v1510 = vrot.slane %v1502, 1
      %v1511 = vrot.slane %v1503, 1
      %v1512 = vrot.slane %v1504, 1
      %v1513 = vrot.slane %v1505, 1
      %v1514 = vrot.slane %v1506, 1
      %v1515 = vrot.slane %v1507, 1
      %v1516 = vrot.slane %v1508, 1
      %v1517 = vrot.slane %v1509, 1
      %v1518 = vunpack.c.l.b16 %v1436
      %v1519 = vunpack.c.l.b16 %v1510
      %v1520 = vunpack.c.l.b16 %v1443
      %v1521 = vunpack.c.l.b16 %v1511
      %v1522 = vunpack.c.l.b16 %v1450
      %v1523 = vunpack.c.l.b16 %v1512
      %v1524 = vunpack.c.l.b16 %v1457
      %v1525 = vunpack.c.l.b16 %v1513
      %v1526 = vunpack.c.l.b16 %v1464
      %v1527 = vunpack.c.l.b16 %v1514
      %v1528 = vunpack.c.l.b16 %v1471
      %v1529 = vunpack.c.l.b16 %v1515
      %v1530 = vunpack.c.l.b16 %v1478
      %v1531 = vunpack.c.l.b16 %v1516
      %v1532 = vunpack.c.l.b16 %v1485
      %v1533 = vunpack.c.l.b16 %v1517
      %s1534 = scalar_lea.vmem %s1, 384
      %v1535 = vld [vmem:[%s1534] sm:$0xf]
      %v1536 = vld [vmem:[%s1534 + $0x4] sm:$0xf]
      %v1537 = vld [vmem:[%s1534 + $0x8] sm:$0xf]
      %v1538 = vld [vmem:[%s1534 + $0xc] sm:$0xf]
      %v1539 = vld [vmem:[%s1534 + $0x10] sm:$0xf]
      %v1540 = vld [vmem:[%s1534 + $0x14] sm:$0xf]
      %v1541 = vld [vmem:[%s1534 + $0x18] sm:$0xf]
      %v1542 = vld [vmem:[%s1534 + $0x1c] sm:$0xf]
      %v1543 = vld [vmem:[%s1534 + $0x20] sm:$0xf]
      %v1544 = vld [vmem:[%s1534 + $0x24] sm:$0xf]
      %v1545 = vld [vmem:[%s1534 + $0x28] sm:$0xf]
      %v1546 = vld [vmem:[%s1534 + $0x2c] sm:$0xf]
      %v1547 = vld [vmem:[%s1534 + $0x30] sm:$0xf]
      %v1548 = vld [vmem:[%s1534 + $0x34] sm:$0xf]
      %v1549 = vld [vmem:[%s1534 + $0x38] sm:$0xf]
      %v1550 = vld [vmem:[%s1534 + $0x3c] sm:$0xf]
      %v1551 = vld [vmem:[%s1534 + $0x40] sm:$0xf]
      %v1552 = vld [vmem:[%s1534 + $0x44] sm:$0xf]
      %v1553 = vld [vmem:[%s1534 + $0x48] sm:$0xf]
      %v1554 = vld [vmem:[%s1534 + $0x4c] sm:$0xf]
      %v1555 = vld [vmem:[%s1534 + $0x50] sm:$0xf]
      %v1556 = vld [vmem:[%s1534 + $0x54] sm:$0xf]
      %v1557 = vld [vmem:[%s1534 + $0x58] sm:$0xf]
      %v1558 = vld [vmem:[%s1534 + $0x5c] sm:$0xf]
      %v1559 = vld [vmem:[%s1534 + $0x60] sm:$0xf]
      %v1560 = vld [vmem:[%s1534 + $0x64] sm:$0xf]
      %v1561 = vld [vmem:[%s1534 + $0x68] sm:$0xf]
      %v1562 = vld [vmem:[%s1534 + $0x6c] sm:$0xf]
      %v1563 = vld [vmem:[%s1534 + $0x70] sm:$0xf]
      %v1564 = vld [vmem:[%s1534 + $0x74] sm:$0xf]
      %v1565 = vld [vmem:[%s1534 + $0x78] sm:$0xf]
      %v1566 = vld [vmem:[%s1534 + $0x7c] sm:$0xf]
      %v1567 = vld [vmem:[%s1534 + $0x80] sm:$0xf]
      %v1568 = vld [vmem:[%s1534 + $0x84] sm:$0xf]
      %v1569 = vld [vmem:[%s1534 + $0x88] sm:$0xf]
      %v1570 = vld [vmem:[%s1534 + $0x8c] sm:$0xf]
      %v1571 = vld [vmem:[%s1534 + $0x90] sm:$0xf]
      %v1572 = vld [vmem:[%s1534 + $0x94] sm:$0xf]
      %v1573 = vld [vmem:[%s1534 + $0x98] sm:$0xf]
      %v1574 = vld [vmem:[%s1534 + $0x9c] sm:$0xf]
      %v1575 = vld [vmem:[%s1534 + $0xa0] sm:$0xf]
      %v1576 = vld [vmem:[%s1534 + $0xa4] sm:$0xf]
      %v1577 = vld [vmem:[%s1534 + $0xa8] sm:$0xf]
      %v1578 = vld [vmem:[%s1534 + $0xac] sm:$0xf]
      %v1579 = vld [vmem:[%s1534 + $0xb0] sm:$0xf]
      %v1580 = vld [vmem:[%s1534 + $0xb4] sm:$0xf]
      %v1581 = vld [vmem:[%s1534 + $0xb8] sm:$0xf]
      %v1582 = vld [vmem:[%s1534 + $0xbc] sm:$0xf]
      %v1583 = vpack.c.b16 %v1408, %v1406
      %v1584 = vpack.c.b16 %v1520, %v1518
      %v1585 = vpack.c.b16 %v1521, %v1519
      %v1586 = vpack.c.b16 %v1412, %v1410
      %v1587 = vpack.c.b16 %v1524, %v1522
      %v1588 = vpack.c.b16 %v1525, %v1523
      %v1589 = vpack.c.b16 %v1416, %v1414
      %v1590 = vpack.c.b16 %v1528, %v1526
      %v1591 = vpack.c.b16 %v1529, %v1527
      %v1592 = vpack.c.b16 %v1420, %v1418
      %v1593 = vpack.c.b16 %v1532, %v1530
      %v1594 = vpack.c.b16 %v1533, %v1531
      %v1655 = vunpack.c.l.b16 %v1535
      %v1656 = vunpack.c.l.b16 %v1536
      %v1657 = vunpack.c.l.b16 %v1537
      %v1658 = vunpack.c.l.b16 %v1538
      %v1659 = vunpack.c.l.b16 %v1539
      %v1660 = vunpack.c.l.b16 %v1540
      %v1661 = vunpack.c.l.b16 %v1541
      %v1662 = vunpack.c.l.b16 %v1542
      %v1663 = vunpack.c.l.b16 %v1543
      %v1664 = vunpack.c.l.b16 %v1544
      %v1665 = vunpack.c.l.b16 %v1545
      %v1666 = vunpack.c.l.b16 %v1546
      %v1667 = vunpack.c.l.b16 %v1547
      %v1668 = vunpack.c.l.b16 %v1548
      %v1669 = vunpack.c.l.b16 %v1549
      %v1670 = vunpack.c.l.b16 %v1550
      %v1671 = vunpack.c.l.b16 %v1551
      %v1672 = vunpack.c.l.b16 %v1552
      %v1673 = vunpack.c.l.b16 %v1553
      %v1674 = vunpack.c.l.b16 %v1554
      %v1675 = vunpack.c.l.b16 %v1555
      %v1676 = vunpack.c.l.b16 %v1556
      %v1677 = vunpack.c.l.b16 %v1557
      %v1678 = vunpack.c.l.b16 %v1558
      %v1679 = vunpack.c.l.b16 %v1559
      %v1680 = vunpack.c.l.b16 %v1560
      %v1681 = vunpack.c.l.b16 %v1561
      %v1682 = vunpack.c.l.b16 %v1562
      %v1683 = vunpack.c.l.b16 %v1563
      %v1684 = vunpack.c.l.b16 %v1564
      %v1685 = vunpack.c.l.b16 %v1565
      %v1686 = vunpack.c.l.b16 %v1566
      %v1687 = vunpack.c.l.b16 %v1567
      %v1688 = vunpack.c.l.b16 %v1568
      %v1689 = vunpack.c.l.b16 %v1569
      %v1690 = vunpack.c.l.b16 %v1570
      %v1691 = vunpack.c.l.b16 %v1571
      %v1692 = vunpack.c.l.b16 %v1572
      %v1693 = vunpack.c.l.b16 %v1573
      %v1694 = vunpack.c.l.b16 %v1574
      %v1695 = vunpack.c.l.b16 %v1575
      %v1696 = vunpack.c.l.b16 %v1576
      %v1697 = vunpack.c.l.b16 %v1577
      %v1698 = vunpack.c.l.b16 %v1578
      %v1699 = vunpack.c.l.b16 %v1579
      %v1700 = vunpack.c.l.b16 %v1580
      %v1701 = vunpack.c.l.b16 %v1581
      %v1702 = vunpack.c.l.b16 %v1582
      %v1703 = vpack.c.b16 %v1656, %v1655
      %v1704 = vpack.c.b16 %v1658, %v1657
      %v1705 = vpack.c.b16 %v1660, %v1659
      %v1706 = vpack.c.b16 %v1662, %v1661
      %v1707 = vpack.c.b16 %v1664, %v1663
      %v1708 = vpack.c.b16 %v1666, %v1665
      %v1709 = vpack.c.b16 %v1668, %v1667
      %v1710 = vpack.c.b16 %v1670, %v1669
      %v1711 = vpack.c.b16 %v1672, %v1671
      %v1712 = vpack.c.b16 %v1674, %v1673
      %v1713 = vpack.c.b16 %v1676, %v1675
      %v1714 = vpack.c.b16 %v1678, %v1677
      %v1715 = vpack.c.b16 %v1680, %v1679
      %v1716 = vpack.c.b16 %v1682, %v1681
      %v1717 = vpack.c.b16 %v1684, %v1683
      %v1718 = vpack.c.b16 %v1686, %v1685
      %v1719 = vpack.c.b16 %v1688, %v1687
      %v1720 = vpack.c.b16 %v1690, %v1689
      %v1721 = vpack.c.b16 %v1692, %v1691
      %v1722 = vpack.c.b16 %v1694, %v1693
      %v1723 = vpack.c.b16 %v1696, %v1695
      %v1724 = vpack.c.b16 %v1698, %v1697
      %v1725 = vpack.c.b16 %v1700, %v1699
      %v1726 = vpack.c.b16 %v1702, %v1701
      %1751 = vmatprep.subr.bf16.mxu0 0
      %1752 = vmatpush1.bf16.msra.mxu0 %v1703
      %1753 = vmatprep.subr.bf16.mxu0 0
      %1754 = vmatpush1.bf16.msra.mxu0 %v1704
      %1755 = vmatprep.subr.bf16.mxu0 0
      %1756 = vmatpush1.bf16.msra.mxu0 %v1705
      %1757 = vmatprep.subr.bf16.mxu0 0
      %1758 = vmatpush1.bf16.msra.mxu0 %v1706
      %1759 = vmatprep.subr.bf16.mxu0 0
      %1760 = vmatpush1.bf16.msra.mxu0 %v1707
      %1761 = vmatprep.subr.bf16.mxu0 0
      %1762 = vmatpush1.bf16.msra.mxu0 %v1708
      %1763 = vmatprep.subr.bf16.mxu0 0
      %1764 = vmatpush1.bf16.msra.mxu0 %v1709
      %1765 = vmatprep.subr.bf16.mxu0 0
      %1766 = vmatpush1.bf16.msra.mxu0 %v1710
      %1767 = vmatprep.subr.bf16.mxu0 0
      %1768 = vmatpush1.bf16.msra.mxu0 %v1711
      %1769 = vmatprep.subr.bf16.mxu0 0
      %1770 = vmatpush1.bf16.msra.mxu0 %v1712
      %1771 = vmatprep.subr.bf16.mxu0 0
      %1772 = vmatpush1.bf16.msra.mxu0 %v1713
      %1773 = vmatprep.subr.bf16.mxu0 0
      %1774 = vmatpush1.bf16.msra.mxu0 %v1714
      %1775 = vmatprep.subr.bf16.mxu0 0
      %1776 = vmatpush1.bf16.msra.mxu0 %v1715
      %1777 = vmatprep.subr.bf16.mxu0 0
      %1778 = vmatpush1.bf16.msra.mxu0 %v1716
      %1779 = vmatprep.subr.bf16.mxu0 0
      %1780 = vmatpush1.bf16.msra.mxu0 %v1717
      %1781 = vmatprep.subr.bf16.mxu0 0
      %1782 = vmatpush1.bf16.msra.mxu0 %v1718
      %1783 = vmatprep.mubr.bf16.mxu0 %v1584
      %1784 = vmatmul.mubr.bf16.gmra.mrb[0].mxu0 %v1583
      %v1785 = vpop.f32.mrb[0].mxu0
      %v1786 = vadd.f32 0.0, %v1785
      %v1787 = vpop.f32.mrb[0].mxu0
      %v1788 = vpop.f32.mrb[0].mxu0
      %v1789 = vadd.f32 0.0, %v1788
      %v1790 = vpop.f32.mrb[0].mxu0
      %1791 = vmatprep.mubr.bf16.mxu0 %v1587
      %1792 = vmatmul.mubr.bf16.gmra.mrb[0].mxu0 %v1586
      %v1793 = vpop.f32.mrb[0].mxu0
      %v1794 = vadd.f32 0.0, %v1793
      %v1795 = vpop.f32.mrb[0].mxu0
      %v1796 = vpop.f32.mrb[0].mxu0
      %v1797 = vadd.f32 0.0, %v1796
      %v1798 = vpop.f32.mrb[0].mxu0
      %1799 = vmatprep.mubr.bf16.mxu0 %v1590
      %1800 = vmatmul.mubr.bf16.gmra.mrb[0].mxu0 %v1589
      %v1801 = vpop.f32.mrb[0].mxu0
      %v1802 = vadd.f32 0.0, %v1801
      %v1803 = vpop.f32.mrb[0].mxu0
      %v1804 = vpop.f32.mrb[0].mxu0
      %v1805 = vadd.f32 0.0, %v1804
      %v1806 = vpop.f32.mrb[0].mxu0
      %1807 = vmatprep.mubr.bf16.mxu0 %v1593
      %1808 = vmatmul.mubr.bf16.gmra.mrb[0].mxu0 %v1592
      %v1809 = vpop.f32.mrb[0].mxu0
      %v1810 = vadd.f32 0.0, %v1809
      %v1811 = vpop.f32.mrb[0].mxu0
      %v1812 = vpop.f32.mrb[0].mxu0
      %v1813 = vadd.f32 0.0, %v1812
      %v1814 = vpop.f32.mrb[0].mxu0
      %1815 = vdwg.mxu0
      %1816 = vmatprep.subr.bf16.mxu0 0
      %1817 = vmatpush1.bf16.msra.mxu0 %v1719
      %1818 = vmatprep.subr.bf16.mxu0 0
      %1819 = vmatpush1.bf16.msra.mxu0 %v1720
      %1820 = vmatprep.subr.bf16.mxu0 0
      %1821 = vmatpush1.bf16.msra.mxu0 %v1721
      %1822 = vmatprep.subr.bf16.mxu0 0
      %1823 = vmatpush1.bf16.msra.mxu0 %v1722
      %1824 = vmatprep.subr.bf16.mxu0 0
      %1825 = vmatpush1.bf16.msra.mxu0 %v1723
      %1826 = vmatprep.subr.bf16.mxu0 0
      %1827 = vmatpush1.bf16.msra.mxu0 %v1724
      %1828 = vmatprep.subr.bf16.mxu0 0
      %1829 = vmatpush1.bf16.msra.mxu0 %v1725
      %1830 = vmatprep.subr.bf16.mxu0 0
      %1831 = vmatpush1.bf16.msra.mxu0 %v1726
      %1832 = vmatprep.subr.bf16.mxu0 0
      %1833 = vmatpush1.bf16.msra.mxu0 0
      %1834 = vmatprep.subr.bf16.mxu0 0
      %1835 = vmatpush1.bf16.msra.mxu0 0
      %1836 = vmatprep.subr.bf16.mxu0 0
      %1837 = vmatpush1.bf16.msra.mxu0 0
      %1838 = vmatprep.subr.bf16.mxu0 0
      %1839 = vmatpush1.bf16.msra.mxu0 0
      %1840 = vmatprep.subr.bf16.mxu0 0
      %1841 = vmatpush1.bf16.msra.mxu0 0
      %1842 = vmatprep.subr.bf16.mxu0 0
      %1843 = vmatpush1.bf16.msra.mxu0 0
      %1844 = vmatprep.subr.bf16.mxu0 0
      %1845 = vmatpush1.bf16.msra.mxu0 0
      %1846 = vmatprep.subr.bf16.mxu0 0
      %1847 = vmatpush1.bf16.msra.mxu0 0
      %1848 = vmatprep.mubr.bf16.mxu0 0
      %1849 = vmatmul.mubr.bf16.gmra.mrb[0].mxu0 %v1585
      %v1850 = vpop.f32.mrb[0].mxu0
      %v1851 = vadd.f32 %v1786, %v1850
      %v1852 = vpop.f32.mrb[0].mxu0
      %v1853 = vpop.f32.mrb[0].mxu0
      %v1854 = vadd.f32 %v1789, %v1853
      %v1855 = vpop.f32.mrb[0].mxu0
      %1856 = vmatprep.mubr.bf16.mxu0 0
      %1857 = vmatmul.mubr.bf16.gmra.mrb[0].mxu0 %v1588
      %v1858 = vpop.f32.mrb[0].mxu0
      %v1859 = vadd.f32 %v1794, %v1858
      %v1860 = vpop.f32.mrb[0].mxu0
      %v1861 = vpop.f32.mrb[0].mxu0
      %v1862 = vadd.f32 %v1797, %v1861
      %v1863 = vpop.f32.mrb[0].mxu0
      %1864 = vmatprep.mubr.bf16.mxu0 0
      %1865 = vmatmul.mubr.bf16.gmra.mrb[0].mxu0 %v1591
      %v1866 = vpop.f32.mrb[0].mxu0
      %v1867 = vadd.f32 %v1802, %v1866
      %v1868 = vpop.f32.mrb[0].mxu0
      %v1869 = vpop.f32.mrb[0].mxu0
      %v1870 = vadd.f32 %v1805, %v1869
      %v1871 = vpop.f32.mrb[0].mxu0
      %1872 = vmatprep.mubr.bf16.mxu0 0
      %1873 = vmatmul.mubr.bf16.gmra.mrb[0].mxu0 %v1594
      %v1874 = vpop.f32.mrb[0].mxu0
      %v1875 = vadd.f32 %v1810, %v1874
      %v1876 = vpop.f32.mrb[0].mxu0
      %v1877 = vpop.f32.mrb[0].mxu0
      %v1878 = vadd.f32 %v1813, %v1877
      %v1879 = vpop.f32.mrb[0].mxu0
      %1880 = vdwg.mxu0
      %v1881 = vadd.f32 %v1335, %v1851
      %v1882 = vadd.f32 %v1338, %v1854
      %v1883 = vadd.f32 %v1343, %v1859
      %v1884 = vadd.f32 %v1346, %v1862
      %v1885 = vadd.f32 %v1351, %v1867
      %v1886 = vadd.f32 %v1354, %v1870
      %v1887 = vadd.f32 %v1359, %v1875
      %v1888 = vadd.f32 %v1362, %v1878
      %v1890 = vlaneseq
      %v1891 = vshrl.u32 %v1890, 7
      %v1892 = vsub.s32 0, %v1891
      %v1893 = vrot.slane %v335, %v1892
      %v1895 = vadd.f32 %v1881, %v1893
      %v1896 = vadd.f32 %v1882, %v1893
      %v1897 = vadd.f32 %v1883, %v1893
      %v1898 = vadd.f32 %v1884, %v1893
      %v1899 = vadd.f32 %v1885, %v1893
      %v1900 = vadd.f32 %v1886, %v1893
      %v1901 = vadd.f32 %v1887, %v1893
      %v1902 = vadd.f32 %v1888, %v1893
      %v1903 = vpack.c.bf16 %v1895, %v1895
      %v1904 = vpack.c.bf16 %v1896, %v1896
      %v1905 = vpack.c.bf16 %v1897, %v1897
      %v1906 = vpack.c.bf16 %v1898, %v1898
      %v1907 = vpack.c.bf16 %v1899, %v1899
      %v1908 = vpack.c.bf16 %v1900, %v1900
      %v1909 = vpack.c.bf16 %v1901, %v1901
      %v1910 = vpack.c.bf16 %v1902, %v1902
      %1911 = vst [vmem:[%s170] sm:$0xf] %v1903
      %1912 = vst [vmem:[%s170 + $0x4] sm:$0xf] %v1904
      %1913 = vst [vmem:[%s170 + $0x8] sm:$0xf] %v1905
      %1914 = vst [vmem:[%s170 + $0xc] sm:$0xf] %v1906
      %1915 = vst [vmem:[%s170 + $0x10] sm:$0xf] %v1907
      %1916 = vst [vmem:[%s170 + $0x14] sm:$0xf] %v1908
      %1917 = vst [vmem:[%s170 + $0x18] sm:$0xf] %v1909
      %1918 = vst [vmem:[%s170 + $0x1c] sm:$0xf] %v1910
      %p1919 = scmp.lt.s32.totalorder %s14, 3
      %s1920 = scalar_select %p1919, %s14, 3
      %s1921 = smul.addr %s1920, 8
      %s1922 = smul.addr %s1921, 4
      %s1923 = scalar_lea.vmem %s3, %s1922
      // Predicated region
      $region33: #{_lambda_.8} parent=31 // pred_check
        %p1924 = pneg %p100
      $region34: #{_lambda_.8} parent=31 // pred_check_branch
        %1926 = sbr.rel (%p1924) target = $region36
      $region35: #{_lambda_.8} parent=31 // pred_region
        _
      $region36: #{_lambda_.8} parent=31 // pred_fallthru
        _
    $region32: #{_lambda_.8} parent=5 // pred_fallthru
      _
    %p1927 = scmp.le.s32.totalorder 2, %s9
    // Predicated region
    $region37: #{_lambda_.8} parent=5 // pred_check
      %p1928 = pneg %p1927
    $region38: #{_lambda_.8} parent=5 // pred_check_branch
      %1930 = sbr.rel (%p1928) target = $region40
    $region39: #{_lambda_.8} parent=5 // pred_region
      %s1931 = ssub.s32 %s9, 2
      // Predicated region
      $region41: #{_lambda_.8} parent=39 // pred_check
        %p1932 = pneg %p106
      $region42: #{_lambda_.8} parent=39 // pred_check_branch
        %1934 = sbr.rel (%p1932) target = $region44
      $region43: #{_lambda_.8} parent=39 // pred_region
        %p1935 = scmp.lt.s32.totalorder %s15, 3
        %s1936 = scalar_select %p1935, %s15, 3
        %s1937 = smul.addr %s1936, 8
        %s1938 = smul.addr %s1937, 4
        %s1939 = scalar_lea.vmem %s3, %s1938
      $region44: #{_lambda_.8} parent=39 // pred_fallthru
        _
    $region40: #{_lambda_.8} parent=5 // pred_fallthru
      _
  $region6: #{_lambda_.8} parent=0 // loop_footer
    %s13 = sadd.s32 1, %s9
  $region7: #{_lambda_.8} parent=0 // loop_footer_branch
    %8 = sbr.rel target = $region3
  $region8: #{_lambda_.8} parent=0 // loop_exit
    _

// kernel: _lambda_.9
$region0: #{_lambda_.9}
  #allocation0 [shape = 'u32[]', space=smem, size = 0x4, offset = 0x4, fixed_abs, tag = 'smem constant byte address 0x4 - core index']
  #allocation1 [shape = 'u32[144,128]{1,0:T(1,128)}', space=vmem, size = 0x12000, scoped, tag = 'internal scratch']
  #allocation2 [shape = 'f32[1]{0:T(128)}', space=smem, size = 0x200, scoped, tag = 'scratch operand']
  %s0 = inlined_call_operand.vmem [shape: bf16[128,128], index: 0, kind: input, shape index: {}]
  %s1 = inlined_call_operand.vmem [shape: bf16[128,128], index: 1, kind: input, shape index: {}]
  %s2 = inlined_call_operand.hbm [shape: f32[1,1], index: 2, kind: output, shape index: {}]
  %s3 = sld [smem:[#allocation0]]
  $region22: #{_lambda_.9} parent=0
    _
  %s5 = ssub.s32 1, %s3
  %s6 = scalar_select 0, %s5, %s3
  $region1: #{_lambda_.9} parent=0
    #allocation3 [shape = 'u8[512]{0}', space=smem, size = 0x200, scoped, tag = 'output window, operand 0, single buffered']
    #allocation4 [shape = 's32[1]{0}', space=sflag, size = 0x4, scoped, tag = 'scoped memory for _lambda_.9']
    %7 = vsyncpa [#allocation4], 0
    // Predicated region
    $region2: #{_lambda_.9} parent=1 // pred_check
      _
    $region3: #{_lambda_.9} parent=1 // pred_check_branch
      %9 = sbr.rel (0) target = $region5
    $region4: #{_lambda_.9} parent=1 // pred_region
      _
    $region5: #{_lambda_.9} parent=1 // pred_fallthru
      _
    // Predicated region
    $region6: #{_lambda_.9} parent=1 // pred_check
      _
    $region7: #{_lambda_.9} parent=1 // pred_check_branch
      %11 = sbr.rel (0) target = $region9
    $region8: #{_lambda_.9} parent=1 // pred_region
      _
    $region9: #{_lambda_.9} parent=1 // pred_fallthru
      _
    %p12 = scmp.eq.s32.totalorder 0, 0
    // Predicated region
    $region10: #{_lambda_.9} parent=1 // pred_check
      %p13 = pneg %p12
    $region11: #{_lambda_.9} parent=1 // pred_check_branch
      %15 = sbr.rel (%p13) target = $region13
    $region12: #{_lambda_.9} parent=1 // pred_region
      %s16 = scalar_lea.smem [#allocation2], 0
      %17 = sst [smem:[%s16]] 0.0
    $region13: #{_lambda_.9} parent=1 // pred_fallthru
      _
    %v18 = vld [vmem:[%s0] sm:$0xf]
    %v19 = vld [vmem:[%s0 + $0x4] sm:$0xf]
    %v20 = vld [vmem:[%s0 + $0x8] sm:$0xf]
    %v21 = vld [vmem:[%s0 + $0xc] sm:$0xf]
    %v22 = vld [vmem:[%s0 + $0x10] sm:$0xf]
    %v23 = vld [vmem:[%s0 + $0x14] sm:$0xf]
    %v24 = vld [vmem:[%s0 + $0x18] sm:$0xf]
    %v25 = vld [vmem:[%s0 + $0x1c] sm:$0xf]
    %v26 = vld [vmem:[%s0 + $0x20] sm:$0xf]
    %v27 = vld [vmem:[%s0 + $0x24] sm:$0xf]
    %v28 = vld [vmem:[%s0 + $0x28] sm:$0xf]
    %v29 = vld [vmem:[%s0 + $0x2c] sm:$0xf]
    %v30 = vld [vmem:[%s0 + $0x30] sm:$0xf]
    %v31 = vld [vmem:[%s0 + $0x34] sm:$0xf]
    %v32 = vld [vmem:[%s0 + $0x38] sm:$0xf]
    %v33 = vld [vmem:[%s0 + $0x3c] sm:$0xf]
    %v34 = vunpack.c.l.bf16 %v18
    %v35 = vunpack.c.l.bf16 %v19
    %v36 = vunpack.c.l.bf16 %v20
    %v37 = vunpack.c.l.bf16 %v21
    %v38 = vunpack.c.l.bf16 %v22
    %v39 = vunpack.c.l.bf16 %v23
    %v40 = vunpack.c.l.bf16 %v24
    %v41 = vunpack.c.l.bf16 %v25
    %v42 = vunpack.c.l.bf16 %v26
    %v43 = vunpack.c.l.bf16 %v27
    %v44 = vunpack.c.l.bf16 %v28
    %v45 = vunpack.c.l.bf16 %v29
    %v46 = vunpack.c.l.bf16 %v30
    %v47 = vunpack.c.l.bf16 %v31
    %v48 = vunpack.c.l.bf16 %v32
    %v49 = vunpack.c.l.bf16 %v33
    %v50 = vld [vmem:[%s1] sm:$0xf]
    %v51 = vld [vmem:[%s1 + $0x4] sm:$0xf]
    %v52 = vld [vmem:[%s1 + $0x8] sm:$0xf]
    %v53 = vld [vmem:[%s1 + $0xc] sm:$0xf]
    %v54 = vld [vmem:[%s1 + $0x10] sm:$0xf]
    %v55 = vld [vmem:[%s1 + $0x14] sm:$0xf]
    %v56 = vld [vmem:[%s1 + $0x18] sm:$0xf]
    %v57 = vld [vmem:[%s1 + $0x1c] sm:$0xf]
    %v58 = vld [vmem:[%s1 + $0x20] sm:$0xf]
    %v59 = vld [vmem:[%s1 + $0x24] sm:$0xf]
    %v60 = vld [vmem:[%s1 + $0x28] sm:$0xf]
    %v61 = vld [vmem:[%s1 + $0x2c] sm:$0xf]
    %v62 = vld [vmem:[%s1 + $0x30] sm:$0xf]
    %v63 = vld [vmem:[%s1 + $0x34] sm:$0xf]
    %v64 = vld [vmem:[%s1 + $0x38] sm:$0xf]
    %v65 = vld [vmem:[%s1 + $0x3c] sm:$0xf]
    %v66 = vunpack.c.l.bf16 %v50
    %v67 = vunpack.c.l.bf16 %v51
    %v68 = vunpack.c.l.bf16 %v52
    %v69 = vunpack.c.l.bf16 %v53
    %v70 = vunpack.c.l.bf16 %v54
    %v71 = vunpack.c.l.bf16 %v55
    %v72 = vunpack.c.l.bf16 %v56
    %v73 = vunpack.c.l.bf16 %v57
    %v74 = vunpack.c.l.bf16 %v58
    %v75 = vunpack.c.l.bf16 %v59
    %v76 = vunpack.c.l.bf16 %v60
    %v77 = vunpack.c.l.bf16 %v61
    %v78 = vunpack.c.l.bf16 %v62
    %v79 = vunpack.c.l.bf16 %v63
    %v80 = vunpack.c.l.bf16 %v64
    %v81 = vunpack.c.l.bf16 %v65
    %v82 = vsub.f32 %v34, %v66
    %v83 = vsub.f32 %v35, %v67
    %v84 = vsub.f32 %v36, %v68
    %v85 = vsub.f32 %v37, %v69
    %v86 = vsub.f32 %v38, %v70
    %v87 = vsub.f32 %v39, %v71
    %v88 = vsub.f32 %v40, %v72
    %v89 = vsub.f32 %v41, %v73
    %v90 = vsub.f32 %v42, %v74
    %v91 = vsub.f32 %v43, %v75
    %v92 = vsub.f32 %v44, %v76
    %v93 = vsub.f32 %v45, %v77
    %v94 = vsub.f32 %v46, %v78
    %v95 = vsub.f32 %v47, %v79
    %v96 = vsub.f32 %v48, %v80
    %v97 = vsub.f32 %v49, %v81
    %s98 = sld [smem:[#allocation2]]
    %v99 = vmul.f32 %v82, %v82
    %v100 = vmul.f32 %v83, %v83
    %v101 = vmul.f32 %v84, %v84
    %v102 = vmul.f32 %v85, %v85
    %v103 = vmul.f32 %v86, %v86
    %v104 = vmul.f32 %v87, %v87
    %v105 = vmul.f32 %v88, %v88
    %v106 = vmul.f32 %v89, %v89
    %v107 = vmul.f32 %v90, %v90
    %v108 = vmul.f32 %v91, %v91
    %v109 = vmul.f32 %v92, %v92
    %v110 = vmul.f32 %v93, %v93
    %v111 = vmul.f32 %v94, %v94
    %v112 = vmul.f32 %v95, %v95
    %v113 = vmul.f32 %v96, %v96
    %v114 = vmul.f32 %v97, %v97
    %v115 = vadd.f32 %v99, %v100
    %v116 = vadd.f32 %v115, %v101
    %v117 = vadd.f32 %v116, %v102
    %v118 = vadd.f32 %v117, %v103
    %v119 = vadd.f32 %v118, %v104
    %v120 = vadd.f32 %v119, %v105
    %v121 = vadd.f32 %v120, %v106
    %v122 = vadd.f32 %v121, %v107
    %v123 = vadd.f32 %v122, %v108
    %v124 = vadd.f32 %v123, %v109
    %v125 = vadd.f32 %v124, %v110
    %v126 = vadd.f32 %v125, %v111
    %v127 = vadd.f32 %v126, %v112
    %v128 = vadd.f32 %v127, %v113
    %v129 = vadd.f32 %v128, %v114
    %130 = vadd.xlane.f32.xlu0 %v129
    %v131 = vpop.xlane.xlu0 %130
    %v132 = vrot.slane %v131, 4
    %v133 = vadd.f32 %v131, %v132
    %v134 = vrot.slane %v133, 2
    %v135 = vadd.f32 %v133, %v134
    %v136 = vrot.slane %v135, 1
    %v137 = vadd.f32 %v135, %v136
    %s138 = vtos %v137
    %s139 = sadd.f32 %s98, %s138
    %s140 = scalar_lea.smem [#allocation2], 0
    %141 = sst [smem:[%s140]] %s139
    %s142 = sld [smem:[#allocation2]]
    %s143 = smul.f32 %s142, 6.1035156e-05
    %s144 = scalar_lea.smem [#allocation3], 0
    %145 = sst [smem:[%s144]] %s143
    // Predicated region
    $region14: #{_lambda_.9} parent=1 // pred_check
      _
    $region15: #{_lambda_.9} parent=1 // pred_check_branch
      %147 = sbr.rel (0) target = $region17
    $region16: #{_lambda_.9} parent=1 // pred_region
      %s149 = ssub.s32 16, 16
      %150 = vsyncadd [#allocation4], %s149
      %153 = dma.smem_to_hbm [#allocation3], 16, %s2, [#allocation4]
    $region17: #{_lambda_.9} parent=1 // pred_fallthru
      _
    // Predicated region
    $region18: #{_lambda_.9} parent=1 // pred_check
      _
    $region19: #{_lambda_.9} parent=1 // pred_check_branch
      %155 = sbr.rel (0) target = $region21
    $region20: #{_lambda_.9} parent=1 // pred_region
      %156 = dma.done [#allocation4], 16
    $region21: #{_lambda_.9} parent=1 // pred_fallthru
      _
    %157 = sfence
    %158 = vsyncpa [#allocation4], 1

</llo_original>
